<compile_context>
chip_gen: v7x
topology: tpu7x:2x2x1
jax: 0.10.0
libtpu: 0.0.40
codegen_flags: <defaults>
</compile_context>

<pallas_src>
import functools

import numpy as np
import jax
import jax.numpy as jnp
from jax.experimental import pallas as pl
from jax.experimental.pallas import tpu as pltpu

EPS = 1e-5  # BatchNorm2d default eps

_VMEM = pl.BlockSpec(memory_space=pltpu.MemorySpace.VMEM)


# -----------------------------------------------------------------------------
# Static helpers (trace-time only)
# -----------------------------------------------------------------------------
def _bilinear_matrix(w_in, w_out):
    """(w_out, w_in) interpolation matrix for 1-D bilinear resize along W,
    align_corners=False — same math as torchvision Resize / F.interpolate.
    (Antialias only affects downscaling; this forward only upsamples.)"""
    j = np.arange(w_out, dtype=np.float64)
    src = np.clip((j + 0.5) * (w_in / w_out) - 0.5, 0.0, w_in - 1)
    lo = np.floor(src).astype(np.int64)
    hi = np.minimum(lo + 1, w_in - 1)
    frac = src - lo
    R = np.zeros((w_out, w_in), dtype=np.float32)
    rows = np.arange(w_out)
    R[rows, lo] += (1.0 - frac)
    R[rows, hi] += frac
    return jnp.asarray(R)


# -----------------------------------------------------------------------------
# Fused U-encoder kernel (single pallas_call)
# -----------------------------------------------------------------------------
def _build_u_encoder_kernel(*, K, depth, pooling_size, resize_plan,
                            n_resize, n_layers):
    pad_total = K - 1
    pad_l = pad_total // 2           # PyTorch padding='same' split
    pad_r = pad_total - pad_l

    def kernel(*refs):
        x_ref = refs[0]
        r_refs = refs[1:1 + n_resize]
        p_refs = refs[1 + n_resize:1 + n_resize + 4 * n_layers]
        o_ref = refs[-1]

        def layer_params(i):
            return p_refs[4 * i:4 * i + 4]

        def conv_bn(x, li):
            """Conv2d(1,K,'same') + BatchNorm2d (training batch stats), fused."""
            w_ref, b_ref, g_ref, bt_ref = layer_params(li)
            nh, w_len, cin = x.shape
            # 'same' zero padding along W done on the VMEM value (no HBM pad).
            parts = []
            if pad_l:
                parts.append(jnp.zeros((nh, pad_l, cin), jnp.float32))
            parts.append(x)
            if pad_r:
                parts.append(jnp.zeros((nh, pad_r, cin), jnp.float32))
            xp = jnp.concatenate(parts, axis=1) if len(parts) > 1 else x
            # im2col: one deep MXU contraction over K*Cin instead of K shallow ones.
            taps = [xp[:, k:k + w_len, :] for k in range(K)]
            xim = jnp.concatenate(taps, axis=-1) if K > 1 else taps[0]
            wmat = w_ref[...]                               # (K*Cin, Cout)
            acc = jnp.einsum('nwc,cd->nwd', xim, wmat,
                             preferred_element_type=jnp.float32)
            acc = acc + b_ref[...][None]                    # conv bias (1,1,Cout)
            # BatchNorm2d training mode: batch stats over (N,H,W) per channel,
            # biased variance, eps = 1e-5.
            cnt = acc.shape[0] * acc.shape[1]
            mean = jnp.sum(acc, axis=(0, 1), keepdims=True) * (1.0 / cnt)
            ctr = acc - mean
            var = jnp.sum(ctr * ctr, axis=(0, 1), keepdims=True) * (1.0 / cnt)
            inv = jax.lax.rsqrt(var + EPS)
            return ctr * inv * g_ref[...][None] + bt_ref[...][None]

        def maxpool_w(x, p):
            """MaxPool2d((1,p)): floor output size, drops the remainder."""
            nh, w_len, c = x.shape
            wo = w_len // p
            cols = [jnp.max(x[:, j * p:(j + 1) * p, :], axis=1, keepdims=True)
                    for j in range(wo)]
            return cols[0] if wo == 1 else jnp.concatenate(cols, axis=1)

        x = x_ref[...].astype(jnp.float32)

        cb0 = conv_bn(x, 0)                       # creat_bn_conv0
        cb = cb0
        skips = []
        li = 1
        for d in range(depth - 1):                # encoder
            cb = conv_bn(cb, li); li += 1         # creat_bn_conv1[d]
            skips.append(cb)
            if d != depth - 2:
                cb = maxpool_w(cb, pooling_size)
        cb = conv_bn(cb, li); li += 1             # creat_bn_conv2 (bottleneck)

        r_i = 0
        for step, d in enumerate(range(depth - 1, 0, -1)):   # decoder
            skip = skips.pop()
            w_in, w_out = resize_plan[step]
            if w_in != w_out:                     # bilinear resize as a matmul
                R = r_refs[r_i][...]; r_i += 1    # (w_out, w_in) static weights
                Rb = jnp.broadcast_to(R[None], (cb.shape[0], w_out, w_in))
                cb = jnp.einsum('nvw,nwc->nvc', Rb, cb,
                                preferred_element_type=jnp.float32)
            xcat = jnp.concatenate([cb, skip], axis=-1)       # channel concat
            cb = conv_bn(xcat, depth + d)                     # creat_bn_conv3[d-1]

        o_ref[...] = cb + cb0                     # fused residual add

    return kernel


# -----------------------------------------------------------------------------
# Parameter init (deterministic, PyTorch-like defaults)
# -----------------------------------------------------------------------------
def init_conv_bn_params(key, cin, cout, K):
    kw, kb = jax.random.split(key)
    fan_in = cin * 1 * K
    bound = 1.0 / (fan_in ** 0.5)
    # PyTorch conv weight is (Cout, Cin, 1, K); stored here as (K, Cin, Cout)
    # (i.e. transpose (3, 1, 0) of the squeezed PyTorch weight).
    w = jax.random.uniform(kw, (K, cin, cout), jnp.float32, -bound, bound)
    b = jax.random.uniform(kb, (cout,), jnp.float32, -bound, bound)
    gamma = jnp.ones((cout,), jnp.float32)   # BatchNorm2d default weight
    beta = jnp.zeros((cout,), jnp.float32)   # BatchNorm2d default bias
    return (w, b, gamma, beta)


def init_u_encoder_params(key, in_ch, final_filter, middle, K, depth=4):
    n = 2 + 2 * (depth - 1)
    ks = jax.random.split(key, n)
    i = 0
    conv0 = init_conv_bn_params(ks[i], in_ch, final_filter, K); i += 1
    conv1 = []
    for d in range(depth - 1):
        cin = final_filter if d == 0 else middle
        conv1.append(init_conv_bn_params(ks[i], cin, middle, K)); i += 1
    conv2 = init_conv_bn_params(ks[i], middle, middle, K); i += 1
    conv3 = []
    for d in range(depth - 1):
        cout = final_filter if d == 0 else middle
        conv3.append(init_conv_bn_params(ks[i], middle * 2, cout, K)); i += 1
    return {'conv0': conv0, 'conv1': conv1, 'conv2': conv2, 'conv3': conv3}


# -----------------------------------------------------------------------------
# creat_u_encoder forward
# -----------------------------------------------------------------------------
@functools.partial(jax.jit, static_argnums=(2, 3))
def creat_u_encoder_forward(x_nchw, params, depth, pooling_size):
    N, Cin, H, W = x_nchw.shape
    NH = N * H
    K = params['conv0'][0].shape[0]
    Fout = params['conv0'][0].shape[2]

    # NCHW -> (N*H, W, C): the conv kernel is (1,K) and pooling is (1,p), so H is
    # a pure batch axis folded into N; W is the conv/pool axis; C is the lane axis.
    x = jnp.transpose(x_nchw, (0, 2, 3, 1)).reshape(NH, W, Cin).astype(jnp.float32)

    # ---- static shape schedule mirroring the PyTorch forward ----
    enc_w = []
    w_cur = W
    for d in range(depth - 1):
        enc_w.append(w_cur)                       # conv1[d] keeps W
        if d != depth - 2:
            w_cur = w_cur // pooling_size         # MaxPool2d floors
    resize_plan = []                              # per decoder step: (w_in, w_out)
    w_dec = w_cur
    for d in range(depth - 1, 0, -1):
        w_tgt = enc_w[d - 1]
        resize_plan.append((w_dec, w_tgt))
        w_dec = w_tgt
    resize_mats = [_bilinear_matrix(a, b) for (a, b) in resize_plan if a != b]
    n_resize = len(resize_mats)

    # ---- flatten params in layer order: conv0, conv1[*], conv2, conv3[*] ----
    layers = ([params['conv0']] + list(params['conv1'][:depth - 1])
              + [params['conv2']] + list(params['conv3'][:depth - 1]))
    n_layers = len(layers)
    flat = []
    for (w, b, g, bt) in layers:
        k_, ci, co = w.shape
        flat += [w.reshape(k_ * ci, co),          # (K*Cin, Cout) for im2col matmul
                 b.reshape(1, co), g.reshape(1, co), bt.reshape(1, co)]

    kernel = _build_u_encoder_kernel(
        K=K, depth=depth, pooling_size=pooling_size,
        resize_plan=resize_plan, n_resize=n_resize, n_layers=n_layers)

    out = pl.pallas_call(
        kernel,
        out_shape=jax.ShapeDtypeStruct((NH, W, Fout), jnp.float32),
        in_specs=[_VMEM] * (1 + n_resize + 4 * n_layers),
        out_specs=_VMEM,
    )(x, *resize_mats, *flat)

    # (N*H, W, C) -> NCHW
    return jnp.transpose(out.reshape(N, H, W, Fout), (0, 3, 1, 2))


if __name__ == "__main__":
    key = jax.random.PRNGKey(0)
    # small shapes consistent with the module
    N, Cin, H, W = 2, 4, 4, 16
    final_filter, middle, K, pool, depth = 8, 8, 5, 2, 4

    kp, kx = jax.random.split(key)
    params = init_u_encoder_params(kp, Cin, final_filter, middle, K, depth)
    x = jax.random.normal(kx, (N, Cin, H, W), jnp.float32)

    out = creat_u_encoder_forward(x, params, depth, pool)
    out = jax.block_until_ready(out)
    assert out.shape == (N, final_filter, H, W), out.shape
    assert bool(jnp.all(jnp.isfinite(out)))
    print("KERNEL_OK")
</pallas_src>

<mosaic_0001>
module attributes {stable_mosaic.version = 11 : i64} {
  func.func @kernel(%arg0: memref<8x16x4xf32, #tpu.memory_space<vmem>>, %arg1: memref<8x4xf32, #tpu.memory_space<vmem>>, %arg2: memref<16x8xf32, #tpu.memory_space<vmem>>, %arg3: memref<20x8xf32, #tpu.memory_space<vmem>>, %arg4: memref<1x8xf32, #tpu.memory_space<vmem>>, %arg5: memref<1x8xf32, #tpu.memory_space<vmem>>, %arg6: memref<1x8xf32, #tpu.memory_space<vmem>>, %arg7: memref<40x8xf32, #tpu.memory_space<vmem>>, %arg8: memref<1x8xf32, #tpu.memory_space<vmem>>, %arg9: memref<1x8xf32, #tpu.memory_space<vmem>>, %arg10: memref<1x8xf32, #tpu.memory_space<vmem>>, %arg11: memref<40x8xf32, #tpu.memory_space<vmem>>, %arg12: memref<1x8xf32, #tpu.memory_space<vmem>>, %arg13: memref<1x8xf32, #tpu.memory_space<vmem>>, %arg14: memref<1x8xf32, #tpu.memory_space<vmem>>, %arg15: memref<40x8xf32, #tpu.memory_space<vmem>>, %arg16: memref<1x8xf32, #tpu.memory_space<vmem>>, %arg17: memref<1x8xf32, #tpu.memory_space<vmem>>, %arg18: memref<1x8xf32, #tpu.memory_space<vmem>>, %arg19: memref<40x8xf32, #tpu.memory_space<vmem>>, %arg20: memref<1x8xf32, #tpu.memory_space<vmem>>, %arg21: memref<1x8xf32, #tpu.memory_space<vmem>>, %arg22: memref<1x8xf32, #tpu.memory_space<vmem>>, %arg23: memref<80x8xf32, #tpu.memory_space<vmem>>, %arg24: memref<1x8xf32, #tpu.memory_space<vmem>>, %arg25: memref<1x8xf32, #tpu.memory_space<vmem>>, %arg26: memref<1x8xf32, #tpu.memory_space<vmem>>, %arg27: memref<80x8xf32, #tpu.memory_space<vmem>>, %arg28: memref<1x8xf32, #tpu.memory_space<vmem>>, %arg29: memref<1x8xf32, #tpu.memory_space<vmem>>, %arg30: memref<1x8xf32, #tpu.memory_space<vmem>>, %arg31: memref<80x8xf32, #tpu.memory_space<vmem>>, %arg32: memref<1x8xf32, #tpu.memory_space<vmem>>, %arg33: memref<1x8xf32, #tpu.memory_space<vmem>>, %arg34: memref<1x8xf32, #tpu.memory_space<vmem>>, %arg35: memref<8x16x8xf32, #tpu.memory_space<vmem>>) attributes {dimension_semantics = [], scalar_prefetch = 0 : i64, scratch_operands = 0 : i64, tpu.core_type = #tpu.core_type<tc>} {
    %c0 = arith.constant 0 : index
    %c0_0 = arith.constant 0 : index
    %c0_1 = arith.constant 0 : index
    %0 = vector.load %arg0[%c0, %c0_0, %c0_1] : memref<8x16x4xf32, #tpu.memory_space<vmem>>, vector<8x16x4xf32>
    %cst = arith.constant 0.000000e+00 : f32
    %1 = vector.broadcast %cst : f32 to vector<8x2x4xf32>
    %cst_2 = arith.constant 0.000000e+00 : f32
    %2 = vector.broadcast %cst_2 : f32 to vector<8x2x4xf32>
    %3 = tpu.concatenate %1, %0, %2 in 1 : vector<8x2x4xf32>, vector<8x16x4xf32>, vector<8x2x4xf32> -> vector<8x20x4xf32>
    %4 = vector.extract_strided_slice %3 {offsets = [0, 0, 0], sizes = [8, 16, 4], strides = [1, 1, 1]} : vector<8x20x4xf32> to vector<8x16x4xf32>
    %5 = vector.extract_strided_slice %3 {offsets = [0, 1, 0], sizes = [8, 16, 4], strides = [1, 1, 1]} : vector<8x20x4xf32> to vector<8x16x4xf32>
    %6 = vector.extract_strided_slice %3 {offsets = [0, 2, 0], sizes = [8, 16, 4], strides = [1, 1, 1]} : vector<8x20x4xf32> to vector<8x16x4xf32>
    %7 = vector.extract_strided_slice %3 {offsets = [0, 3, 0], sizes = [8, 16, 4], strides = [1, 1, 1]} : vector<8x20x4xf32> to vector<8x16x4xf32>
    %8 = vector.extract_strided_slice %3 {offsets = [0, 4, 0], sizes = [8, 16, 4], strides = [1, 1, 1]} : vector<8x20x4xf32> to vector<8x16x4xf32>
    %9 = tpu.concatenate %4, %5, %6, %7, %8 in 2 : vector<8x16x4xf32>, vector<8x16x4xf32>, vector<8x16x4xf32>, vector<8x16x4xf32>, vector<8x16x4xf32> -> vector<8x16x20xf32>
    %c0_3 = arith.constant 0 : index
    %c0_4 = arith.constant 0 : index
    %10 = vector.load %arg3[%c0_3, %c0_4] : memref<20x8xf32, #tpu.memory_space<vmem>>, vector<20x8xf32>
    "tpu.trace_start"() <{level = 10 : i32, message = "nwc,cd->nwd"}> : () -> ()
    %cst_5 = arith.constant dense<0.000000e+00> : vector<8x16x8xf32>
    %11 = tpu.matmul %9, %10, %cst_5 {dimension_numbers = #tpu.dot_dimension_numbers<[2], [0], [0, 1], [1], [0, 0, 0, 1, 1, 1], [], []>} : vector<8x16x20xf32>, vector<20x8xf32>, vector<8x16x8xf32> -> vector<8x16x8xf32>
    "tpu.trace_stop"() : () -> ()
    %c0_6 = arith.constant 0 : index
    %c0_7 = arith.constant 0 : index
    %12 = vector.load %arg4[%c0_6, %c0_7] : memref<1x8xf32, #tpu.memory_space<vmem>>, vector<1x8xf32>
    %13 = vector.shape_cast %12 : vector<1x8xf32> to vector<1x1x8xf32>
    %14 = vector.broadcast %13 : vector<1x1x8xf32> to vector<8x16x8xf32>
    %15 = arith.addf %11, %14 : vector<8x16x8xf32>
    %cst_8 = arith.constant dense<0.000000e+00> : vector<8xf32>
    %16 = vector.multi_reduction <add>, %15, %cst_8 [0, 1] : vector<8x16x8xf32> to vector<8xf32>
    %17 = vector.shape_cast %16 : vector<8xf32> to vector<1x1x8xf32>
    %cst_9 = arith.constant 7.812500e-03 : f32
    %18 = vector.broadcast %cst_9 : f32 to vector<1x1x8xf32>
    %19 = arith.mulf %17, %18 : vector<1x1x8xf32>
    %20 = vector.broadcast %19 : vector<1x1x8xf32> to vector<8x16x8xf32>
    %21 = arith.subf %15, %20 : vector<8x16x8xf32>
    %22 = arith.mulf %21, %21 : vector<8x16x8xf32>
    %cst_10 = arith.constant dense<0.000000e+00> : vector<8xf32>
    %23 = vector.multi_reduction <add>, %22, %cst_10 [0, 1] : vector<8x16x8xf32> to vector<8xf32>
    %24 = vector.shape_cast %23 : vector<8xf32> to vector<1x1x8xf32>
    %cst_11 = arith.constant 7.812500e-03 : f32
    %25 = vector.broadcast %cst_11 : f32 to vector<1x1x8xf32>
    %26 = arith.mulf %24, %25 : vector<1x1x8xf32>
    %cst_12 = arith.constant 9.99999974E-6 : f32
    %27 = vector.broadcast %cst_12 : f32 to vector<1x1x8xf32>
    %28 = arith.addf %26, %27 : vector<1x1x8xf32>
    %29 = math.rsqrt %28 : vector<1x1x8xf32>
    %30 = vector.broadcast %29 : vector<1x1x8xf32> to vector<8x16x8xf32>
    %31 = arith.mulf %21, %30 : vector<8x16x8xf32>
    %c0_13 = arith.constant 0 : index
    %c0_14 = arith.constant 0 : index
    %32 = vector.load %arg5[%c0_13, %c0_14] : memref<1x8xf32, #tpu.memory_space<vmem>>, vector<1x8xf32>
    %33 = vector.shape_cast %32 : vector<1x8xf32> to vector<1x1x8xf32>
    %34 = vector.broadcast %33 : vector<1x1x8xf32> to vector<8x16x8xf32>
    %35 = arith.mulf %31, %34 : vector<8x16x8xf32>
    %c0_15 = arith.constant 0 : index
    %c0_16 = arith.constant 0 : index
    %36 = vector.load %arg6[%c0_15, %c0_16] : memref<1x8xf32, #tpu.memory_space<vmem>>, vector<1x8xf32>
    %37 = vector.shape_cast %36 : vector<1x8xf32> to vector<1x1x8xf32>
    %38 = vector.broadcast %37 : vector<1x1x8xf32> to vector<8x16x8xf32>
    %39 = arith.addf %35, %38 : vector<8x16x8xf32>
    %cst_17 = arith.constant 0.000000e+00 : f32
    %40 = vector.broadcast %cst_17 : f32 to vector<8x2x8xf32>
    %cst_18 = arith.constant 0.000000e+00 : f32
    %41 = vector.broadcast %cst_18 : f32 to vector<8x2x8xf32>
    %42 = tpu.concatenate %40, %39, %41 in 1 : vector<8x2x8xf32>, vector<8x16x8xf32>, vector<8x2x8xf32> -> vector<8x20x8xf32>
    %43 = vector.extract_strided_slice %42 {offsets = [0, 0, 0], sizes = [8, 16, 8], strides = [1, 1, 1]} : vector<8x20x8xf32> to vector<8x16x8xf32>
    %44 = vector.extract_strided_slice %42 {offsets = [0, 1, 0], sizes = [8, 16, 8], strides = [1, 1, 1]} : vector<8x20x8xf32> to vector<8x16x8xf32>
    %45 = vector.extract_strided_slice %42 {offsets = [0, 2, 0], sizes = [8, 16, 8], strides = [1, 1, 1]} : vector<8x20x8xf32> to vector<8x16x8xf32>
    %46 = vector.extract_strided_slice %42 {offsets = [0, 3, 0], sizes = [8, 16, 8], strides = [1, 1, 1]} : vector<8x20x8xf32> to vector<8x16x8xf32>
    %47 = vector.extract_strided_slice %42 {offsets = [0, 4, 0], sizes = [8, 16, 8], strides = [1, 1, 1]} : vector<8x20x8xf32> to vector<8x16x8xf32>
    %48 = tpu.concatenate %43, %44, %45, %46, %47 in 2 : vector<8x16x8xf32>, vector<8x16x8xf32>, vector<8x16x8xf32>, vector<8x16x8xf32>, vector<8x16x8xf32> -> vector<8x16x40xf32>
    %c0_19 = arith.constant 0 : index
    %c0_20 = arith.constant 0 : index
    %49 = vector.load %arg7[%c0_19, %c0_20] : memref<40x8xf32, #tpu.memory_space<vmem>>, vector<40x8xf32>
    "tpu.trace_start"() <{level = 10 : i32, message = "nwc,cd->nwd"}> : () -> ()
    %cst_21 = arith.constant dense<0.000000e+00> : vector<8x16x8xf32>
    %50 = tpu.matmul %48, %49, %cst_21 {dimension_numbers = #tpu.dot_dimension_numbers<[2], [0], [0, 1], [1], [0, 0, 0, 1, 1, 1], [], []>} : vector<8x16x40xf32>, vector<40x8xf32>, vector<8x16x8xf32> -> vector<8x16x8xf32>
    "tpu.trace_stop"() : () -> ()
    %c0_22 = arith.constant 0 : index
    %c0_23 = arith.constant 0 : index
    %51 = vector.load %arg8[%c0_22, %c0_23] : memref<1x8xf32, #tpu.memory_space<vmem>>, vector<1x8xf32>
    %52 = vector.shape_cast %51 : vector<1x8xf32> to vector<1x1x8xf32>
    %53 = vector.broadcast %52 : vector<1x1x8xf32> to vector<8x16x8xf32>
    %54 = arith.addf %50, %53 : vector<8x16x8xf32>
    %cst_24 = arith.constant dense<0.000000e+00> : vector<8xf32>
    %55 = vector.multi_reduction <add>, %54, %cst_24 [0, 1] : vector<8x16x8xf32> to vector<8xf32>
    %56 = vector.shape_cast %55 : vector<8xf32> to vector<1x1x8xf32>
    %cst_25 = arith.constant 7.812500e-03 : f32
    %57 = vector.broadcast %cst_25 : f32 to vector<1x1x8xf32>
    %58 = arith.mulf %56, %57 : vector<1x1x8xf32>
    %59 = vector.broadcast %58 : vector<1x1x8xf32> to vector<8x16x8xf32>
    %60 = arith.subf %54, %59 : vector<8x16x8xf32>
    %61 = arith.mulf %60, %60 : vector<8x16x8xf32>
    %cst_26 = arith.constant dense<0.000000e+00> : vector<8xf32>
    %62 = vector.multi_reduction <add>, %61, %cst_26 [0, 1] : vector<8x16x8xf32> to vector<8xf32>
    %63 = vector.shape_cast %62 : vector<8xf32> to vector<1x1x8xf32>
    %cst_27 = arith.constant 7.812500e-03 : f32
    %64 = vector.broadcast %cst_27 : f32 to vector<1x1x8xf32>
    %65 = arith.mulf %63, %64 : vector<1x1x8xf32>
    %cst_28 = arith.constant 9.99999974E-6 : f32
    %66 = vector.broadcast %cst_28 : f32 to vector<1x1x8xf32>
    %67 = arith.addf %65, %66 : vector<1x1x8xf32>
    %68 = math.rsqrt %67 : vector<1x1x8xf32>
    %69 = vector.broadcast %68 : vector<1x1x8xf32> to vector<8x16x8xf32>
    %70 = arith.mulf %60, %69 : vector<8x16x8xf32>
    %c0_29 = arith.constant 0 : index
    %c0_30 = arith.constant 0 : index
    %71 = vector.load %arg9[%c0_29, %c0_30] : memref<1x8xf32, #tpu.memory_space<vmem>>, vector<1x8xf32>
    %72 = vector.shape_cast %71 : vector<1x8xf32> to vector<1x1x8xf32>
    %73 = vector.broadcast %72 : vector<1x1x8xf32> to vector<8x16x8xf32>
    %74 = arith.mulf %70, %73 : vector<8x16x8xf32>
    %c0_31 = arith.constant 0 : index
    %c0_32 = arith.constant 0 : index
    %75 = vector.load %arg10[%c0_31, %c0_32] : memref<1x8xf32, #tpu.memory_space<vmem>>, vector<1x8xf32>
    %76 = vector.shape_cast %75 : vector<1x8xf32> to vector<1x1x8xf32>
    %77 = vector.broadcast %76 : vector<1x1x8xf32> to vector<8x16x8xf32>
    %78 = arith.addf %74, %77 : vector<8x16x8xf32>
    %79 = vector.extract_strided_slice %78 {offsets = [0, 0, 0], sizes = [8, 2, 8], strides = [1, 1, 1]} : vector<8x16x8xf32> to vector<8x2x8xf32>
    %cst_33 = arith.constant dense<0xFF800000> : vector<8x8xf32>
    %80 = vector.multi_reduction <maximumf>, %79, %cst_33 [1] : vector<8x2x8xf32> to vector<8x8xf32>
    %81 = vector.shape_cast %80 : vector<8x8xf32> to vector<8x1x8xf32>
    %82 = vector.extract_strided_slice %78 {offsets = [0, 2, 0], sizes = [8, 2, 8], strides = [1, 1, 1]} : vector<8x16x8xf32> to vector<8x2x8xf32>
    %cst_34 = arith.constant dense<0xFF800000> : vector<8x8xf32>
    %83 = vector.multi_reduction <maximumf>, %82, %cst_34 [1] : vector<8x2x8xf32> to vector<8x8xf32>
    %84 = vector.shape_cast %83 : vector<8x8xf32> to vector<8x1x8xf32>
    %85 = vector.extract_strided_slice %78 {offsets = [0, 4, 0], sizes = [8, 2, 8], strides = [1, 1, 1]} : vector<8x16x8xf32> to vector<8x2x8xf32>
    %cst_35 = arith.constant dense<0xFF800000> : vector<8x8xf32>
    %86 = vector.multi_reduction <maximumf>, %85, %cst_35 [1] : vector<8x2x8xf32> to vector<8x8xf32>
    %87 = vector.shape_cast %86 : vector<8x8xf32> to vector<8x1x8xf32>
    %88 = vector.extract_strided_slice %78 {offsets = [0, 6, 0], sizes = [8, 2, 8], strides = [1, 1, 1]} : vector<8x16x8xf32> to vector<8x2x8xf32>
    %cst_36 = arith.constant dense<0xFF800000> : vector<8x8xf32>
    %89 = vector.multi_reduction <maximumf>, %88, %cst_36 [1] : vector<8x2x8xf32> to vector<8x8xf32>
    %90 = vector.shape_cast %89 : vector<8x8xf32> to vector<8x1x8xf32>
    %91 = vector.extract_strided_slice %78 {offsets = [0, 8, 0], sizes = [8, 2, 8], strides = [1, 1, 1]} : vector<8x16x8xf32> to vector<8x2x8xf32>
    %cst_37 = arith.constant dense<0xFF800000> : vector<8x8xf32>
    %92 = vector.multi_reduction <maximumf>, %91, %cst_37 [1] : vector<8x2x8xf32> to vector<8x8xf32>
    %93 = vector.shape_cast %92 : vector<8x8xf32> to vector<8x1x8xf32>
    %94 = vector.extract_strided_slice %78 {offsets = [0, 10, 0], sizes = [8, 2, 8], strides = [1, 1, 1]} : vector<8x16x8xf32> to vector<8x2x8xf32>
    %cst_38 = arith.constant dense<0xFF800000> : vector<8x8xf32>
    %95 = vector.multi_reduction <maximumf>, %94, %cst_38 [1] : vector<8x2x8xf32> to vector<8x8xf32>
    %96 = vector.shape_cast %95 : vector<8x8xf32> to vector<8x1x8xf32>
    %97 = vector.extract_strided_slice %78 {offsets = [0, 12, 0], sizes = [8, 2, 8], strides = [1, 1, 1]} : vector<8x16x8xf32> to vector<8x2x8xf32>
    %cst_39 = arith.constant dense<0xFF800000> : vector<8x8xf32>
    %98 = vector.multi_reduction <maximumf>, %97, %cst_39 [1] : vector<8x2x8xf32> to vector<8x8xf32>
    %99 = vector.shape_cast %98 : vector<8x8xf32> to vector<8x1x8xf32>
    %100 = vector.extract_strided_slice %78 {offsets = [0, 14, 0], sizes = [8, 2, 8], strides = [1, 1, 1]} : vector<8x16x8xf32> to vector<8x2x8xf32>
    %cst_40 = arith.constant dense<0xFF800000> : vector<8x8xf32>
    %101 = vector.multi_reduction <maximumf>, %100, %cst_40 [1] : vector<8x2x8xf32> to vector<8x8xf32>
    %102 = vector.shape_cast %101 : vector<8x8xf32> to vector<8x1x8xf32>
    %103 = tpu.concatenate %81, %84, %87, %90, %93, %96, %99, %102 in 1 : vector<8x1x8xf32>, vector<8x1x8xf32>, vector<8x1x8xf32>, vector<8x1x8xf32>, vector<8x1x8xf32>, vector<8x1x8xf32>, vector<8x1x8xf32>, vector<8x1x8xf32> -> vector<8x8x8xf32>
    %cst_41 = arith.constant 0.000000e+00 : f32
    %104 = vector.broadcast %cst_41 : f32 to vector<8x2x8xf32>
    %cst_42 = arith.constant 0.000000e+00 : f32
    %105 = vector.broadcast %cst_42 : f32 to vector<8x2x8xf32>
    %106 = tpu.concatenate %104, %103, %105 in 1 : vector<8x2x8xf32>, vector<8x8x8xf32>, vector<8x2x8xf32> -> vector<8x12x8xf32>
    %107 = vector.extract_strided_slice %106 {offsets = [0, 0, 0], sizes = [8, 8, 8], strides = [1, 1, 1]} : vector<8x12x8xf32> to vector<8x8x8xf32>
    %108 = vector.extract_strided_slice %106 {offsets = [0, 1, 0], sizes = [8, 8, 8], strides = [1, 1, 1]} : vector<8x12x8xf32> to vector<8x8x8xf32>
    %109 = vector.extract_strided_slice %106 {offsets = [0, 2, 0], sizes = [8, 8, 8], strides = [1, 1, 1]} : vector<8x12x8xf32> to vector<8x8x8xf32>
    %110 = vector.extract_strided_slice %106 {offsets = [0, 3, 0], sizes = [8, 8, 8], strides = [1, 1, 1]} : vector<8x12x8xf32> to vector<8x8x8xf32>
    %111 = vector.extract_strided_slice %106 {offsets = [0, 4, 0], sizes = [8, 8, 8], strides = [1, 1, 1]} : vector<8x12x8xf32> to vector<8x8x8xf32>
    %112 = tpu.concatenate %107, %108, %109, %110, %111 in 2 : vector<8x8x8xf32>, vector<8x8x8xf32>, vector<8x8x8xf32>, vector<8x8x8xf32>, vector<8x8x8xf32> -> vector<8x8x40xf32>
    %c0_43 = arith.constant 0 : index
    %c0_44 = arith.constant 0 : index
    %113 = vector.load %arg11[%c0_43, %c0_44] : memref<40x8xf32, #tpu.memory_space<vmem>>, vector<40x8xf32>
    "tpu.trace_start"() <{level = 10 : i32, message = "nwc,cd->nwd"}> : () -> ()
    %cst_45 = arith.constant dense<0.000000e+00> : vector<8x8x8xf32>
    %114 = tpu.matmul %112, %113, %cst_45 {dimension_numbers = #tpu.dot_dimension_numbers<[2], [0], [0, 1], [1], [0, 0, 0, 1, 1, 1], [], []>} : vector<8x8x40xf32>, vector<40x8xf32>, vector<8x8x8xf32> -> vector<8x8x8xf32>
    "tpu.trace_stop"() : () -> ()
    %c0_46 = arith.constant 0 : index
    %c0_47 = arith.constant 0 : index
    %115 = vector.load %arg12[%c0_46, %c0_47] : memref<1x8xf32, #tpu.memory_space<vmem>>, vector<1x8xf32>
    %116 = vector.shape_cast %115 : vector<1x8xf32> to vector<1x1x8xf32>
    %117 = vector.broadcast %116 : vector<1x1x8xf32> to vector<8x8x8xf32>
    %118 = arith.addf %114, %117 : vector<8x8x8xf32>
    %cst_48 = arith.constant dense<0.000000e+00> : vector<8xf32>
    %119 = vector.multi_reduction <add>, %118, %cst_48 [0, 1] : vector<8x8x8xf32> to vector<8xf32>
    %120 = vector.shape_cast %119 : vector<8xf32> to vector<1x1x8xf32>
    %cst_49 = arith.constant 1.562500e-02 : f32
    %121 = vector.broadcast %cst_49 : f32 to vector<1x1x8xf32>
    %122 = arith.mulf %120, %121 : vector<1x1x8xf32>
    %123 = vector.broadcast %122 : vector<1x1x8xf32> to vector<8x8x8xf32>
    %124 = arith.subf %118, %123 : vector<8x8x8xf32>
    %125 = arith.mulf %124, %124 : vector<8x8x8xf32>
    %cst_50 = arith.constant dense<0.000000e+00> : vector<8xf32>
    %126 = vector.multi_reduction <add>, %125, %cst_50 [0, 1] : vector<8x8x8xf32> to vector<8xf32>
    %127 = vector.shape_cast %126 : vector<8xf32> to vector<1x1x8xf32>
    %cst_51 = arith.constant 1.562500e-02 : f32
    %128 = vector.broadcast %cst_51 : f32 to vector<1x1x8xf32>
    %129 = arith.mulf %127, %128 : vector<1x1x8xf32>
    %cst_52 = arith.constant 9.99999974E-6 : f32
    %130 = vector.broadcast %cst_52 : f32 to vector<1x1x8xf32>
    %131 = arith.addf %129, %130 : vector<1x1x8xf32>
    %132 = math.rsqrt %131 : vector<1x1x8xf32>
    %133 = vector.broadcast %132 : vector<1x1x8xf32> to vector<8x8x8xf32>
    %134 = arith.mulf %124, %133 : vector<8x8x8xf32>
    %c0_53 = arith.constant 0 : index
    %c0_54 = arith.constant 0 : index
    %135 = vector.load %arg13[%c0_53, %c0_54] : memref<1x8xf32, #tpu.memory_space<vmem>>, vector<1x8xf32>
    %136 = vector.shape_cast %135 : vector<1x8xf32> to vector<1x1x8xf32>
    %137 = vector.broadcast %136 : vector<1x1x8xf32> to vector<8x8x8xf32>
    %138 = arith.mulf %134, %137 : vector<8x8x8xf32>
    %c0_55 = arith.constant 0 : index
    %c0_56 = arith.constant 0 : index
    %139 = vector.load %arg14[%c0_55, %c0_56] : memref<1x8xf32, #tpu.memory_space<vmem>>, vector<1x8xf32>
    %140 = vector.shape_cast %139 : vector<1x8xf32> to vector<1x1x8xf32>
    %141 = vector.broadcast %140 : vector<1x1x8xf32> to vector<8x8x8xf32>
    %142 = arith.addf %138, %141 : vector<8x8x8xf32>
    %143 = vector.extract_strided_slice %142 {offsets = [0, 0, 0], sizes = [8, 2, 8], strides = [1, 1, 1]} : vector<8x8x8xf32> to vector<8x2x8xf32>
    %cst_57 = arith.constant dense<0xFF800000> : vector<8x8xf32>
    %144 = vector.multi_reduction <maximumf>, %143, %cst_57 [1] : vector<8x2x8xf32> to vector<8x8xf32>
    %145 = vector.shape_cast %144 : vector<8x8xf32> to vector<8x1x8xf32>
    %146 = vector.extract_strided_slice %142 {offsets = [0, 2, 0], sizes = [8, 2, 8], strides = [1, 1, 1]} : vector<8x8x8xf32> to vector<8x2x8xf32>
    %cst_58 = arith.constant dense<0xFF800000> : vector<8x8xf32>
    %147 = vector.multi_reduction <maximumf>, %146, %cst_58 [1] : vector<8x2x8xf32> to vector<8x8xf32>
    %148 = vector.shape_cast %147 : vector<8x8xf32> to vector<8x1x8xf32>
    %149 = vector.extract_strided_slice %142 {offsets = [0, 4, 0], sizes = [8, 2, 8], strides = [1, 1, 1]} : vector<8x8x8xf32> to vector<8x2x8xf32>
    %cst_59 = arith.constant dense<0xFF800000> : vector<8x8xf32>
    %150 = vector.multi_reduction <maximumf>, %149, %cst_59 [1] : vector<8x2x8xf32> to vector<8x8xf32>
    %151 = vector.shape_cast %150 : vector<8x8xf32> to vector<8x1x8xf32>
    %152 = vector.extract_strided_slice %142 {offsets = [0, 6, 0], sizes = [8, 2, 8], strides = [1, 1, 1]} : vector<8x8x8xf32> to vector<8x2x8xf32>
    %cst_60 = arith.constant dense<0xFF800000> : vector<8x8xf32>
    %153 = vector.multi_reduction <maximumf>, %152, %cst_60 [1] : vector<8x2x8xf32> to vector<8x8xf32>
    %154 = vector.shape_cast %153 : vector<8x8xf32> to vector<8x1x8xf32>
    %155 = tpu.concatenate %145, %148, %151, %154 in 1 : vector<8x1x8xf32>, vector<8x1x8xf32>, vector<8x1x8xf32>, vector<8x1x8xf32> -> vector<8x4x8xf32>
    %cst_61 = arith.constant 0.000000e+00 : f32
    %156 = vector.broadcast %cst_61 : f32 to vector<8x2x8xf32>
    %cst_62 = arith.constant 0.000000e+00 : f32
    %157 = vector.broadcast %cst_62 : f32 to vector<8x2x8xf32>
    %158 = tpu.concatenate %156, %155, %157 in 1 : vector<8x2x8xf32>, vector<8x4x8xf32>, vector<8x2x8xf32> -> vector<8x8x8xf32>
    %159 = vector.extract_strided_slice %158 {offsets = [0, 0, 0], sizes = [8, 4, 8], strides = [1, 1, 1]} : vector<8x8x8xf32> to vector<8x4x8xf32>
    %160 = vector.extract_strided_slice %158 {offsets = [0, 1, 0], sizes = [8, 4, 8], strides = [1, 1, 1]} : vector<8x8x8xf32> to vector<8x4x8xf32>
    %161 = vector.extract_strided_slice %158 {offsets = [0, 2, 0], sizes = [8, 4, 8], strides = [1, 1, 1]} : vector<8x8x8xf32> to vector<8x4x8xf32>
    %162 = vector.extract_strided_slice %158 {offsets = [0, 3, 0], sizes = [8, 4, 8], strides = [1, 1, 1]} : vector<8x8x8xf32> to vector<8x4x8xf32>
    %163 = vector.extract_strided_slice %158 {offsets = [0, 4, 0], sizes = [8, 4, 8], strides = [1, 1, 1]} : vector<8x8x8xf32> to vector<8x4x8xf32>
    %164 = tpu.concatenate %159, %160, %161, %162, %163 in 2 : vector<8x4x8xf32>, vector<8x4x8xf32>, vector<8x4x8xf32>, vector<8x4x8xf32>, vector<8x4x8xf32> -> vector<8x4x40xf32>
    %c0_63 = arith.constant 0 : index
    %c0_64 = arith.constant 0 : index
    %165 = vector.load %arg15[%c0_63, %c0_64] : memref<40x8xf32, #tpu.memory_space<vmem>>, vector<40x8xf32>
    "tpu.trace_start"() <{level = 10 : i32, message = "nwc,cd->nwd"}> : () -> ()
    %cst_65 = arith.constant dense<0.000000e+00> : vector<8x4x8xf32>
    %166 = tpu.matmul %164, %165, %cst_65 {dimension_numbers = #tpu.dot_dimension_numbers<[2], [0], [0, 1], [1], [0, 0, 0, 1, 1, 1], [], []>} : vector<8x4x40xf32>, vector<40x8xf32>, vector<8x4x8xf32> -> vector<8x4x8xf32>
    "tpu.trace_stop"() : () -> ()
    %c0_66 = arith.constant 0 : index
    %c0_67 = arith.constant 0 : index
    %167 = vector.load %arg16[%c0_66, %c0_67] : memref<1x8xf32, #tpu.memory_space<vmem>>, vector<1x8xf32>
    %168 = vector.shape_cast %167 : vector<1x8xf32> to vector<1x1x8xf32>
    %169 = vector.broadcast %168 : vector<1x1x8xf32> to vector<8x4x8xf32>
    %170 = arith.addf %166, %169 : vector<8x4x8xf32>
    %cst_68 = arith.constant dense<0.000000e+00> : vector<8xf32>
    %171 = vector.multi_reduction <add>, %170, %cst_68 [0, 1] : vector<8x4x8xf32> to vector<8xf32>
    %172 = vector.shape_cast %171 : vector<8xf32> to vector<1x1x8xf32>
    %cst_69 = arith.constant 3.125000e-02 : f32
    %173 = vector.broadcast %cst_69 : f32 to vector<1x1x8xf32>
    %174 = arith.mulf %172, %173 : vector<1x1x8xf32>
    %175 = vector.broadcast %174 : vector<1x1x8xf32> to vector<8x4x8xf32>
    %176 = arith.subf %170, %175 : vector<8x4x8xf32>
    %177 = arith.mulf %176, %176 : vector<8x4x8xf32>
    %cst_70 = arith.constant dense<0.000000e+00> : vector<8xf32>
    %178 = vector.multi_reduction <add>, %177, %cst_70 [0, 1] : vector<8x4x8xf32> to vector<8xf32>
    %179 = vector.shape_cast %178 : vector<8xf32> to vector<1x1x8xf32>
    %cst_71 = arith.constant 3.125000e-02 : f32
    %180 = vector.broadcast %cst_71 : f32 to vector<1x1x8xf32>
    %181 = arith.mulf %179, %180 : vector<1x1x8xf32>
    %cst_72 = arith.constant 9.99999974E-6 : f32
    %182 = vector.broadcast %cst_72 : f32 to vector<1x1x8xf32>
    %183 = arith.addf %181, %182 : vector<1x1x8xf32>
    %184 = math.rsqrt %183 : vector<1x1x8xf32>
    %185 = vector.broadcast %184 : vector<1x1x8xf32> to vector<8x4x8xf32>
    %186 = arith.mulf %176, %185 : vector<8x4x8xf32>
    %c0_73 = arith.constant 0 : index
    %c0_74 = arith.constant 0 : index
    %187 = vector.load %arg17[%c0_73, %c0_74] : memref<1x8xf32, #tpu.memory_space<vmem>>, vector<1x8xf32>
    %188 = vector.shape_cast %187 : vector<1x8xf32> to vector<1x1x8xf32>
    %189 = vector.broadcast %188 : vector<1x1x8xf32> to vector<8x4x8xf32>
    %190 = arith.mulf %186, %189 : vector<8x4x8xf32>
    %c0_75 = arith.constant 0 : index
    %c0_76 = arith.constant 0 : index
    %191 = vector.load %arg18[%c0_75, %c0_76] : memref<1x8xf32, #tpu.memory_space<vmem>>, vector<1x8xf32>
    %192 = vector.shape_cast %191 : vector<1x8xf32> to vector<1x1x8xf32>
    %193 = vector.broadcast %192 : vector<1x1x8xf32> to vector<8x4x8xf32>
    %194 = arith.addf %190, %193 : vector<8x4x8xf32>
    %cst_77 = arith.constant 0.000000e+00 : f32
    %195 = vector.broadcast %cst_77 : f32 to vector<8x2x8xf32>
    %cst_78 = arith.constant 0.000000e+00 : f32
    %196 = vector.broadcast %cst_78 : f32 to vector<8x2x8xf32>
    %197 = tpu.concatenate %195, %194, %196 in 1 : vector<8x2x8xf32>, vector<8x4x8xf32>, vector<8x2x8xf32> -> vector<8x8x8xf32>
    %198 = vector.extract_strided_slice %197 {offsets = [0, 0, 0], sizes = [8, 4, 8], strides = [1, 1, 1]} : vector<8x8x8xf32> to vector<8x4x8xf32>
    %199 = vector.extract_strided_slice %197 {offsets = [0, 1, 0], sizes = [8, 4, 8], strides = [1, 1, 1]} : vector<8x8x8xf32> to vector<8x4x8xf32>
    %200 = vector.extract_strided_slice %197 {offsets = [0, 2, 0], sizes = [8, 4, 8], strides = [1, 1, 1]} : vector<8x8x8xf32> to vector<8x4x8xf32>
    %201 = vector.extract_strided_slice %197 {offsets = [0, 3, 0], sizes = [8, 4, 8], strides = [1, 1, 1]} : vector<8x8x8xf32> to vector<8x4x8xf32>
    %202 = vector.extract_strided_slice %197 {offsets = [0, 4, 0], sizes = [8, 4, 8], strides = [1, 1, 1]} : vector<8x8x8xf32> to vector<8x4x8xf32>
    %203 = tpu.concatenate %198, %199, %200, %201, %202 in 2 : vector<8x4x8xf32>, vector<8x4x8xf32>, vector<8x4x8xf32>, vector<8x4x8xf32>, vector<8x4x8xf32> -> vector<8x4x40xf32>
    %c0_79 = arith.constant 0 : index
    %c0_80 = arith.constant 0 : index
    %204 = vector.load %arg19[%c0_79, %c0_80] : memref<40x8xf32, #tpu.memory_space<vmem>>, vector<40x8xf32>
    "tpu.trace_start"() <{level = 10 : i32, message = "nwc,cd->nwd"}> : () -> ()
    %cst_81 = arith.constant dense<0.000000e+00> : vector<8x4x8xf32>
    %205 = tpu.matmul %203, %204, %cst_81 {dimension_numbers = #tpu.dot_dimension_numbers<[2], [0], [0, 1], [1], [0, 0, 0, 1, 1, 1], [], []>} : vector<8x4x40xf32>, vector<40x8xf32>, vector<8x4x8xf32> -> vector<8x4x8xf32>
    "tpu.trace_stop"() : () -> ()
    %c0_82 = arith.constant 0 : index
    %c0_83 = arith.constant 0 : index
    %206 = vector.load %arg20[%c0_82, %c0_83] : memref<1x8xf32, #tpu.memory_space<vmem>>, vector<1x8xf32>
    %207 = vector.shape_cast %206 : vector<1x8xf32> to vector<1x1x8xf32>
    %208 = vector.broadcast %207 : vector<1x1x8xf32> to vector<8x4x8xf32>
    %209 = arith.addf %205, %208 : vector<8x4x8xf32>
    %cst_84 = arith.constant dense<0.000000e+00> : vector<8xf32>
    %210 = vector.multi_reduction <add>, %209, %cst_84 [0, 1] : vector<8x4x8xf32> to vector<8xf32>
    %211 = vector.shape_cast %210 : vector<8xf32> to vector<1x1x8xf32>
    %cst_85 = arith.constant 3.125000e-02 : f32
    %212 = vector.broadcast %cst_85 : f32 to vector<1x1x8xf32>
    %213 = arith.mulf %211, %212 : vector<1x1x8xf32>
    %214 = vector.broadcast %213 : vector<1x1x8xf32> to vector<8x4x8xf32>
    %215 = arith.subf %209, %214 : vector<8x4x8xf32>
    %216 = arith.mulf %215, %215 : vector<8x4x8xf32>
    %cst_86 = arith.constant dense<0.000000e+00> : vector<8xf32>
    %217 = vector.multi_reduction <add>, %216, %cst_86 [0, 1] : vector<8x4x8xf32> to vector<8xf32>
    %218 = vector.shape_cast %217 : vector<8xf32> to vector<1x1x8xf32>
    %cst_87 = arith.constant 3.125000e-02 : f32
    %219 = vector.broadcast %cst_87 : f32 to vector<1x1x8xf32>
    %220 = arith.mulf %218, %219 : vector<1x1x8xf32>
    %cst_88 = arith.constant 9.99999974E-6 : f32
    %221 = vector.broadcast %cst_88 : f32 to vector<1x1x8xf32>
    %222 = arith.addf %220, %221 : vector<1x1x8xf32>
    %223 = math.rsqrt %222 : vector<1x1x8xf32>
    %224 = vector.broadcast %223 : vector<1x1x8xf32> to vector<8x4x8xf32>
    %225 = arith.mulf %215, %224 : vector<8x4x8xf32>
    %c0_89 = arith.constant 0 : index
    %c0_90 = arith.constant 0 : index
    %226 = vector.load %arg21[%c0_89, %c0_90] : memref<1x8xf32, #tpu.memory_space<vmem>>, vector<1x8xf32>
    %227 = vector.shape_cast %226 : vector<1x8xf32> to vector<1x1x8xf32>
    %228 = vector.broadcast %227 : vector<1x1x8xf32> to vector<8x4x8xf32>
    %229 = arith.mulf %225, %228 : vector<8x4x8xf32>
    %c0_91 = arith.constant 0 : index
    %c0_92 = arith.constant 0 : index
    %230 = vector.load %arg22[%c0_91, %c0_92] : memref<1x8xf32, #tpu.memory_space<vmem>>, vector<1x8xf32>
    %231 = vector.shape_cast %230 : vector<1x8xf32> to vector<1x1x8xf32>
    %232 = vector.broadcast %231 : vector<1x1x8xf32> to vector<8x4x8xf32>
    %233 = arith.addf %229, %232 : vector<8x4x8xf32>
    %234 = tpu.concatenate %233, %194 in 2 : vector<8x4x8xf32>, vector<8x4x8xf32> -> vector<8x4x16xf32>
    %cst_93 = arith.constant 0.000000e+00 : f32
    %235 = vector.broadcast %cst_93 : f32 to vector<8x2x16xf32>
    %cst_94 = arith.constant 0.000000e+00 : f32
    %236 = vector.broadcast %cst_94 : f32 to vector<8x2x16xf32>
    %237 = tpu.concatenate %235, %234, %236 in 1 : vector<8x2x16xf32>, vector<8x4x16xf32>, vector<8x2x16xf32> -> vector<8x8x16xf32>
    %238 = vector.extract_strided_slice %237 {offsets = [0, 0, 0], sizes = [8, 4, 16], strides = [1, 1, 1]} : vector<8x8x16xf32> to vector<8x4x16xf32>
    %239 = vector.extract_strided_slice %237 {offsets = [0, 1, 0], sizes = [8, 4, 16], strides = [1, 1, 1]} : vector<8x8x16xf32> to vector<8x4x16xf32>
    %240 = vector.extract_strided_slice %237 {offsets = [0, 2, 0], sizes = [8, 4, 16], strides = [1, 1, 1]} : vector<8x8x16xf32> to vector<8x4x16xf32>
    %241 = vector.extract_strided_slice %237 {offsets = [0, 3, 0], sizes = [8, 4, 16], strides = [1, 1, 1]} : vector<8x8x16xf32> to vector<8x4x16xf32>
    %242 = vector.extract_strided_slice %237 {offsets = [0, 4, 0], sizes = [8, 4, 16], strides = [1, 1, 1]} : vector<8x8x16xf32> to vector<8x4x16xf32>
    %243 = tpu.concatenate %238, %239, %240, %241, %242 in 2 : vector<8x4x16xf32>, vector<8x4x16xf32>, vector<8x4x16xf32>, vector<8x4x16xf32>, vector<8x4x16xf32> -> vector<8x4x80xf32>
    %c0_95 = arith.constant 0 : index
    %c0_96 = arith.constant 0 : index
    %244 = vector.load %arg31[%c0_95, %c0_96] : memref<80x8xf32, #tpu.memory_space<vmem>>, vector<80x8xf32>
    "tpu.trace_start"() <{level = 10 : i32, message = "nwc,cd->nwd"}> : () -> ()
    %cst_97 = arith.constant dense<0.000000e+00> : vector<8x4x8xf32>
    %245 = tpu.matmul %243, %244, %cst_97 {dimension_numbers = #tpu.dot_dimension_numbers<[2], [0], [0, 1], [1], [0, 0, 0, 1, 1, 1], [], []>} : vector<8x4x80xf32>, vector<80x8xf32>, vector<8x4x8xf32> -> vector<8x4x8xf32>
    "tpu.trace_stop"() : () -> ()
    %c0_98 = arith.constant 0 : index
    %c0_99 = arith.constant 0 : index
    %246 = vector.load %arg32[%c0_98, %c0_99] : memref<1x8xf32, #tpu.memory_space<vmem>>, vector<1x8xf32>
    %247 = vector.shape_cast %246 : vector<1x8xf32> to vector<1x1x8xf32>
    %248 = vector.broadcast %247 : vector<1x1x8xf32> to vector<8x4x8xf32>
    %249 = arith.addf %245, %248 : vector<8x4x8xf32>
    %cst_100 = arith.constant dense<0.000000e+00> : vector<8xf32>
    %250 = vector.multi_reduction <add>, %249, %cst_100 [0, 1] : vector<8x4x8xf32> to vector<8xf32>
    %251 = vector.shape_cast %250 : vector<8xf32> to vector<1x1x8xf32>
    %cst_101 = arith.constant 3.125000e-02 : f32
    %252 = vector.broadcast %cst_101 : f32 to vector<1x1x8xf32>
    %253 = arith.mulf %251, %252 : vector<1x1x8xf32>
    %254 = vector.broadcast %253 : vector<1x1x8xf32> to vector<8x4x8xf32>
    %255 = arith.subf %249, %254 : vector<8x4x8xf32>
    %256 = arith.mulf %255, %255 : vector<8x4x8xf32>
    %cst_102 = arith.constant dense<0.000000e+00> : vector<8xf32>
    %257 = vector.multi_reduction <add>, %256, %cst_102 [0, 1] : vector<8x4x8xf32> to vector<8xf32>
    %258 = vector.shape_cast %257 : vector<8xf32> to vector<1x1x8xf32>
    %cst_103 = arith.constant 3.125000e-02 : f32
    %259 = vector.broadcast %cst_103 : f32 to vector<1x1x8xf32>
    %260 = arith.mulf %258, %259 : vector<1x1x8xf32>
    %cst_104 = arith.constant 9.99999974E-6 : f32
    %261 = vector.broadcast %cst_104 : f32 to vector<1x1x8xf32>
    %262 = arith.addf %260, %261 : vector<1x1x8xf32>
    %263 = math.rsqrt %262 : vector<1x1x8xf32>
    %264 = vector.broadcast %263 : vector<1x1x8xf32> to vector<8x4x8xf32>
    %265 = arith.mulf %255, %264 : vector<8x4x8xf32>
    %c0_105 = arith.constant 0 : index
    %c0_106 = arith.constant 0 : index
    %266 = vector.load %arg33[%c0_105, %c0_106] : memref<1x8xf32, #tpu.memory_space<vmem>>, vector<1x8xf32>
    %267 = vector.shape_cast %266 : vector<1x8xf32> to vector<1x1x8xf32>
    %268 = vector.broadcast %267 : vector<1x1x8xf32> to vector<8x4x8xf32>
    %269 = arith.mulf %265, %268 : vector<8x4x8xf32>
    %c0_107 = arith.constant 0 : index
    %c0_108 = arith.constant 0 : index
    %270 = vector.load %arg34[%c0_107, %c0_108] : memref<1x8xf32, #tpu.memory_space<vmem>>, vector<1x8xf32>
    %271 = vector.shape_cast %270 : vector<1x8xf32> to vector<1x1x8xf32>
    %272 = vector.broadcast %271 : vector<1x1x8xf32> to vector<8x4x8xf32>
    %273 = arith.addf %269, %272 : vector<8x4x8xf32>
    %c0_109 = arith.constant 0 : index
    %c0_110 = arith.constant 0 : index
    %274 = vector.load %arg1[%c0_109, %c0_110] : memref<8x4xf32, #tpu.memory_space<vmem>>, vector<8x4xf32>
    %275 = vector.shape_cast %274 : vector<8x4xf32> to vector<1x8x4xf32>
    %276 = vector.shape_cast %275 : vector<1x8x4xf32> to vector<1x8x4xf32>
    %277 = vector.broadcast %276 : vector<1x8x4xf32> to vector<8x8x4xf32>
    "tpu.trace_start"() <{level = 10 : i32, message = "nvw,nwc->nvc"}> : () -> ()
    %cst_111 = arith.constant dense<0.000000e+00> : vector<8x8x8xf32>
    %278 = tpu.matmul %277, %273, %cst_111 {dimension_numbers = #tpu.dot_dimension_numbers<[2], [1], [1], [2], [0, 0, 0, 1, 1, 2], [0], [0]>} : vector<8x8x4xf32>, vector<8x4x8xf32>, vector<8x8x8xf32> -> vector<8x8x8xf32>
    "tpu.trace_stop"() : () -> ()
    %279 = tpu.concatenate %278, %142 in 2 : vector<8x8x8xf32>, vector<8x8x8xf32> -> vector<8x8x16xf32>
    %cst_112 = arith.constant 0.000000e+00 : f32
    %280 = vector.broadcast %cst_112 : f32 to vector<8x2x16xf32>
    %cst_113 = arith.constant 0.000000e+00 : f32
    %281 = vector.broadcast %cst_113 : f32 to vector<8x2x16xf32>
    %282 = tpu.concatenate %280, %279, %281 in 1 : vector<8x2x16xf32>, vector<8x8x16xf32>, vector<8x2x16xf32> -> vector<8x12x16xf32>
    %283 = vector.extract_strided_slice %282 {offsets = [0, 0, 0], sizes = [8, 8, 16], strides = [1, 1, 1]} : vector<8x12x16xf32> to vector<8x8x16xf32>
    %284 = vector.extract_strided_slice %282 {offsets = [0, 1, 0], sizes = [8, 8, 16], strides = [1, 1, 1]} : vector<8x12x16xf32> to vector<8x8x16xf32>
    %285 = vector.extract_strided_slice %282 {offsets = [0, 2, 0], sizes = [8, 8, 16], strides = [1, 1, 1]} : vector<8x12x16xf32> to vector<8x8x16xf32>
    %286 = vector.extract_strided_slice %282 {offsets = [0, 3, 0], sizes = [8, 8, 16], strides = [1, 1, 1]} : vector<8x12x16xf32> to vector<8x8x16xf32>
    %287 = vector.extract_strided_slice %282 {offsets = [0, 4, 0], sizes = [8, 8, 16], strides = [1, 1, 1]} : vector<8x12x16xf32> to vector<8x8x16xf32>
    %288 = tpu.concatenate %283, %284, %285, %286, %287 in 2 : vector<8x8x16xf32>, vector<8x8x16xf32>, vector<8x8x16xf32>, vector<8x8x16xf32>, vector<8x8x16xf32> -> vector<8x8x80xf32>
    %c0_114 = arith.constant 0 : index
    %c0_115 = arith.constant 0 : index
    %289 = vector.load %arg27[%c0_114, %c0_115] : memref<80x8xf32, #tpu.memory_space<vmem>>, vector<80x8xf32>
    "tpu.trace_start"() <{level = 10 : i32, message = "nwc,cd->nwd"}> : () -> ()
    %cst_116 = arith.constant dense<0.000000e+00> : vector<8x8x8xf32>
    %290 = tpu.matmul %288, %289, %cst_116 {dimension_numbers = #tpu.dot_dimension_numbers<[2], [0], [0, 1], [1], [0, 0, 0, 1, 1, 1], [], []>} : vector<8x8x80xf32>, vector<80x8xf32>, vector<8x8x8xf32> -> vector<8x8x8xf32>
    "tpu.trace_stop"() : () -> ()
    %c0_117 = arith.constant 0 : index
    %c0_118 = arith.constant 0 : index
    %291 = vector.load %arg28[%c0_117, %c0_118] : memref<1x8xf32, #tpu.memory_space<vmem>>, vector<1x8xf32>
    %292 = vector.shape_cast %291 : vector<1x8xf32> to vector<1x1x8xf32>
    %293 = vector.broadcast %292 : vector<1x1x8xf32> to vector<8x8x8xf32>
    %294 = arith.addf %290, %293 : vector<8x8x8xf32>
    %cst_119 = arith.constant dense<0.000000e+00> : vector<8xf32>
    %295 = vector.multi_reduction <add>, %294, %cst_119 [0, 1] : vector<8x8x8xf32> to vector<8xf32>
    %296 = vector.shape_cast %295 : vector<8xf32> to vector<1x1x8xf32>
    %cst_120 = arith.constant 1.562500e-02 : f32
    %297 = vector.broadcast %cst_120 : f32 to vector<1x1x8xf32>
    %298 = arith.mulf %296, %297 : vector<1x1x8xf32>
    %299 = vector.broadcast %298 : vector<1x1x8xf32> to vector<8x8x8xf32>
    %300 = arith.subf %294, %299 : vector<8x8x8xf32>
    %301 = arith.mulf %300, %300 : vector<8x8x8xf32>
    %cst_121 = arith.constant dense<0.000000e+00> : vector<8xf32>
    %302 = vector.multi_reduction <add>, %301, %cst_121 [0, 1] : vector<8x8x8xf32> to vector<8xf32>
    %303 = vector.shape_cast %302 : vector<8xf32> to vector<1x1x8xf32>
    %cst_122 = arith.constant 1.562500e-02 : f32
    %304 = vector.broadcast %cst_122 : f32 to vector<1x1x8xf32>
    %305 = arith.mulf %303, %304 : vector<1x1x8xf32>
    %cst_123 = arith.constant 9.99999974E-6 : f32
    %306 = vector.broadcast %cst_123 : f32 to vector<1x1x8xf32>
    %307 = arith.addf %305, %306 : vector<1x1x8xf32>
    %308 = math.rsqrt %307 : vector<1x1x8xf32>
    %309 = vector.broadcast %308 : vector<1x1x8xf32> to vector<8x8x8xf32>
    %310 = arith.mulf %300, %309 : vector<8x8x8xf32>
    %c0_124 = arith.constant 0 : index
    %c0_125 = arith.constant 0 : index
    %311 = vector.load %arg29[%c0_124, %c0_125] : memref<1x8xf32, #tpu.memory_space<vmem>>, vector<1x8xf32>
    %312 = vector.shape_cast %311 : vector<1x8xf32> to vector<1x1x8xf32>
    %313 = vector.broadcast %312 : vector<1x1x8xf32> to vector<8x8x8xf32>
    %314 = arith.mulf %310, %313 : vector<8x8x8xf32>
    %c0_126 = arith.constant 0 : index
    %c0_127 = arith.constant 0 : index
    %315 = vector.load %arg30[%c0_126, %c0_127] : memref<1x8xf32, #tpu.memory_space<vmem>>, vector<1x8xf32>
    %316 = vector.shape_cast %315 : vector<1x8xf32> to vector<1x1x8xf32>
    %317 = vector.broadcast %316 : vector<1x1x8xf32> to vector<8x8x8xf32>
    %318 = arith.addf %314, %317 : vector<8x8x8xf32>
    %c0_128 = arith.constant 0 : index
    %c0_129 = arith.constant 0 : index
    %319 = vector.load %arg2[%c0_128, %c0_129] : memref<16x8xf32, #tpu.memory_space<vmem>>, vector<16x8xf32>
    %320 = vector.shape_cast %319 : vector<16x8xf32> to vector<1x16x8xf32>
    %321 = vector.shape_cast %320 : vector<1x16x8xf32> to vector<1x16x8xf32>
    %322 = vector.broadcast %321 : vector<1x16x8xf32> to vector<8x16x8xf32>
    "tpu.trace_start"() <{level = 10 : i32, message = "nvw,nwc->nvc"}> : () -> ()
    %cst_130 = arith.constant dense<0.000000e+00> : vector<8x16x8xf32>
    %323 = tpu.matmul %322, %318, %cst_130 {dimension_numbers = #tpu.dot_dimension_numbers<[2], [1], [1], [2], [0, 0, 0, 1, 1, 2], [0], [0]>} : vector<8x16x8xf32>, vector<8x8x8xf32>, vector<8x16x8xf32> -> vector<8x16x8xf32>
    "tpu.trace_stop"() : () -> ()
    %324 = tpu.concatenate %323, %78 in 2 : vector<8x16x8xf32>, vector<8x16x8xf32> -> vector<8x16x16xf32>
    %cst_131 = arith.constant 0.000000e+00 : f32
    %325 = vector.broadcast %cst_131 : f32 to vector<8x2x16xf32>
    %cst_132 = arith.constant 0.000000e+00 : f32
    %326 = vector.broadcast %cst_132 : f32 to vector<8x2x16xf32>
    %327 = tpu.concatenate %325, %324, %326 in 1 : vector<8x2x16xf32>, vector<8x16x16xf32>, vector<8x2x16xf32> -> vector<8x20x16xf32>
    %328 = vector.extract_strided_slice %327 {offsets = [0, 0, 0], sizes = [8, 16, 16], strides = [1, 1, 1]} : vector<8x20x16xf32> to vector<8x16x16xf32>
    %329 = vector.extract_strided_slice %327 {offsets = [0, 1, 0], sizes = [8, 16, 16], strides = [1, 1, 1]} : vector<8x20x16xf32> to vector<8x16x16xf32>
    %330 = vector.extract_strided_slice %327 {offsets = [0, 2, 0], sizes = [8, 16, 16], strides = [1, 1, 1]} : vector<8x20x16xf32> to vector<8x16x16xf32>
    %331 = vector.extract_strided_slice %327 {offsets = [0, 3, 0], sizes = [8, 16, 16], strides = [1, 1, 1]} : vector<8x20x16xf32> to vector<8x16x16xf32>
    %332 = vector.extract_strided_slice %327 {offsets = [0, 4, 0], sizes = [8, 16, 16], strides = [1, 1, 1]} : vector<8x20x16xf32> to vector<8x16x16xf32>
    %333 = tpu.concatenate %328, %329, %330, %331, %332 in 2 : vector<8x16x16xf32>, vector<8x16x16xf32>, vector<8x16x16xf32>, vector<8x16x16xf32>, vector<8x16x16xf32> -> vector<8x16x80xf32>
    %c0_133 = arith.constant 0 : index
    %c0_134 = arith.constant 0 : index
    %334 = vector.load %arg23[%c0_133, %c0_134] : memref<80x8xf32, #tpu.memory_space<vmem>>, vector<80x8xf32>
    "tpu.trace_start"() <{level = 10 : i32, message = "nwc,cd->nwd"}> : () -> ()
    %cst_135 = arith.constant dense<0.000000e+00> : vector<8x16x8xf32>
    %335 = tpu.matmul %333, %334, %cst_135 {dimension_numbers = #tpu.dot_dimension_numbers<[2], [0], [0, 1], [1], [0, 0, 0, 1, 1, 1], [], []>} : vector<8x16x80xf32>, vector<80x8xf32>, vector<8x16x8xf32> -> vector<8x16x8xf32>
    "tpu.trace_stop"() : () -> ()
    %c0_136 = arith.constant 0 : index
    %c0_137 = arith.constant 0 : index
    %336 = vector.load %arg24[%c0_136, %c0_137] : memref<1x8xf32, #tpu.memory_space<vmem>>, vector<1x8xf32>
    %337 = vector.shape_cast %336 : vector<1x8xf32> to vector<1x1x8xf32>
    %338 = vector.broadcast %337 : vector<1x1x8xf32> to vector<8x16x8xf32>
    %339 = arith.addf %335, %338 : vector<8x16x8xf32>
    %cst_138 = arith.constant dense<0.000000e+00> : vector<8xf32>
    %340 = vector.multi_reduction <add>, %339, %cst_138 [0, 1] : vector<8x16x8xf32> to vector<8xf32>
    %341 = vector.shape_cast %340 : vector<8xf32> to vector<1x1x8xf32>
    %cst_139 = arith.constant 7.812500e-03 : f32
    %342 = vector.broadcast %cst_139 : f32 to vector<1x1x8xf32>
    %343 = arith.mulf %341, %342 : vector<1x1x8xf32>
    %344 = vector.broadcast %343 : vector<1x1x8xf32> to vector<8x16x8xf32>
    %345 = arith.subf %339, %344 : vector<8x16x8xf32>
    %346 = arith.mulf %345, %345 : vector<8x16x8xf32>
    %cst_140 = arith.constant dense<0.000000e+00> : vector<8xf32>
    %347 = vector.multi_reduction <add>, %346, %cst_140 [0, 1] : vector<8x16x8xf32> to vector<8xf32>
    %348 = vector.shape_cast %347 : vector<8xf32> to vector<1x1x8xf32>
    %cst_141 = arith.constant 7.812500e-03 : f32
    %349 = vector.broadcast %cst_141 : f32 to vector<1x1x8xf32>
    %350 = arith.mulf %348, %349 : vector<1x1x8xf32>
    %cst_142 = arith.constant 9.99999974E-6 : f32
    %351 = vector.broadcast %cst_142 : f32 to vector<1x1x8xf32>
    %352 = arith.addf %350, %351 : vector<1x1x8xf32>
    %353 = math.rsqrt %352 : vector<1x1x8xf32>
    %354 = vector.broadcast %353 : vector<1x1x8xf32> to vector<8x16x8xf32>
    %355 = arith.mulf %345, %354 : vector<8x16x8xf32>
    %c0_143 = arith.constant 0 : index
    %c0_144 = arith.constant 0 : index
    %356 = vector.load %arg25[%c0_143, %c0_144] : memref<1x8xf32, #tpu.memory_space<vmem>>, vector<1x8xf32>
    %357 = vector.shape_cast %356 : vector<1x8xf32> to vector<1x1x8xf32>
    %358 = vector.broadcast %357 : vector<1x1x8xf32> to vector<8x16x8xf32>
    %359 = arith.mulf %355, %358 : vector<8x16x8xf32>
    %c0_145 = arith.constant 0 : index
    %c0_146 = arith.constant 0 : index
    %360 = vector.load %arg26[%c0_145, %c0_146] : memref<1x8xf32, #tpu.memory_space<vmem>>, vector<1x8xf32>
    %361 = vector.shape_cast %360 : vector<1x8xf32> to vector<1x1x8xf32>
    %362 = vector.broadcast %361 : vector<1x1x8xf32> to vector<8x16x8xf32>
    %363 = arith.addf %359, %362 : vector<8x16x8xf32>
    %364 = arith.addf %363, %39 : vector<8x16x8xf32>
    %c0_147 = arith.constant 0 : index
    %c0_148 = arith.constant 0 : index
    %c0_149 = arith.constant 0 : index
    %365 = vector.load %arg35[%c0_147, %c0_148, %c0_149] : memref<8x16x8xf32, #tpu.memory_space<vmem>>, vector<8x16x8xf32>
    tpu.vector_store %arg35[%c0_147, %c0_148, %c0_149], %364 {strides = array<i32>} : memref<8x16x8xf32, #tpu.memory_space<vmem>>, vector<8x16x8xf32>,
    return
  }
}

</mosaic_0001>

<llo_original>
// kernel: creat_u_encoder_forward.1
$region0: #{creat_u_encoder_forward.1}
  #allocation0 [shape = 'u32[]', space=smem, size = 0x4, offset = 0x4, fixed_abs, tag = 'smem constant byte address 0x4 - core index']
  #allocation1 [shape = 'u32[144,128]{1,0:T(1,128)}', space=vmem, size = 0x12000, scoped, tag = 'internal scratch']
  %s0 = inlined_call_operand.smem [shape: u32[36], index: -1, kind: input, shape index: {}]
  %s1 = sld [smem:[%s0]]
  %s2 = scalar_lea.smem %s0, 1
  %s3 = sld [smem:[%s2]]
  %s4 = scalar_lea.smem %s0, 2
  %s5 = sld [smem:[%s4]]
  %s6 = scalar_lea.smem %s0, 3
  %s7 = sld [smem:[%s6]]
  %s8 = scalar_lea.smem %s0, 4
  %s9 = sld [smem:[%s8]]
  %s10 = scalar_lea.smem %s0, 5
  %s11 = sld [smem:[%s10]]
  %s12 = scalar_lea.smem %s0, 6
  %s13 = sld [smem:[%s12]]
  %s14 = scalar_lea.smem %s0, 7
  %s15 = sld [smem:[%s14]]
  %s16 = scalar_lea.smem %s0, 8
  %s17 = sld [smem:[%s16]]
  %s18 = scalar_lea.smem %s0, 9
  %s19 = sld [smem:[%s18]]
  %s20 = scalar_lea.smem %s0, 10
  %s21 = sld [smem:[%s20]]
  %s22 = scalar_lea.smem %s0, 11
  %s23 = sld [smem:[%s22]]
  %s24 = scalar_lea.smem %s0, 12
  %s25 = sld [smem:[%s24]]
  %s26 = scalar_lea.smem %s0, 13
  %s27 = sld [smem:[%s26]]
  %s28 = scalar_lea.smem %s0, 14
  %s29 = sld [smem:[%s28]]
  %s30 = scalar_lea.smem %s0, 15
  %s31 = sld [smem:[%s30]]
  %s32 = scalar_lea.smem %s0, 16
  %s33 = sld [smem:[%s32]]
  %s34 = scalar_lea.smem %s0, 17
  %s35 = sld [smem:[%s34]]
  %s36 = scalar_lea.smem %s0, 18
  %s37 = sld [smem:[%s36]]
  %s38 = scalar_lea.smem %s0, 19
  %s39 = sld [smem:[%s38]]
  %s40 = scalar_lea.smem %s0, 20
  %s41 = sld [smem:[%s40]]
  %s42 = scalar_lea.smem %s0, 21
  %s43 = sld [smem:[%s42]]
  %s44 = scalar_lea.smem %s0, 22
  %s45 = sld [smem:[%s44]]
  %s46 = scalar_lea.smem %s0, 23
  %s47 = sld [smem:[%s46]]
  %s48 = scalar_lea.smem %s0, 24
  %s49 = sld [smem:[%s48]]
  %s50 = scalar_lea.smem %s0, 25
  %s51 = sld [smem:[%s50]]
  %s52 = scalar_lea.smem %s0, 26
  %s53 = sld [smem:[%s52]]
  %s54 = scalar_lea.smem %s0, 27
  %s55 = sld [smem:[%s54]]
  %s56 = scalar_lea.smem %s0, 28
  %s57 = sld [smem:[%s56]]
  %s58 = scalar_lea.smem %s0, 29
  %s59 = sld [smem:[%s58]]
  %s60 = scalar_lea.smem %s0, 30
  %s61 = sld [smem:[%s60]]
  %s62 = scalar_lea.smem %s0, 31
  %s63 = sld [smem:[%s62]]
  %s64 = scalar_lea.smem %s0, 32
  %s65 = sld [smem:[%s64]]
  %s66 = scalar_lea.smem %s0, 33
  %s67 = sld [smem:[%s66]]
  %s68 = scalar_lea.smem %s0, 34
  %s69 = sld [smem:[%s68]]
  %s70 = scalar_lea.smem %s0, 35
  %s71 = sld [smem:[%s70]]
  %s72 = sld [smem:[#allocation0]]
  $region150: #{creat_u_encoder_forward.1} parent=0
    _
  %s74 = ssub.s32 1, %s72
  %s75 = scalar_select 0, %s74, %s72
  // Predicated region
  $region2: #{creat_u_encoder_forward.1} parent=0 // pred_check
    _
  $region3: #{creat_u_encoder_forward.1} parent=0 // pred_check_branch
    %77 = sbr.rel (0) target = $region5
  $region4: #{creat_u_encoder_forward.1} parent=0 // pred_region
    _
  $region5: #{creat_u_encoder_forward.1} parent=0 // pred_fallthru
    _
  // Predicated region
  $region6: #{creat_u_encoder_forward.1} parent=0 // pred_check
    _
  $region7: #{creat_u_encoder_forward.1} parent=0 // pred_check_branch
    %79 = sbr.rel (0) target = $region9
  $region8: #{creat_u_encoder_forward.1} parent=0 // pred_region
    _
  $region9: #{creat_u_encoder_forward.1} parent=0 // pred_fallthru
    _
  // Predicated region
  $region10: #{creat_u_encoder_forward.1} parent=0 // pred_check
    _
  $region11: #{creat_u_encoder_forward.1} parent=0 // pred_check_branch
    %81 = sbr.rel (0) target = $region13
  $region12: #{creat_u_encoder_forward.1} parent=0 // pred_region
    _
  $region13: #{creat_u_encoder_forward.1} parent=0 // pred_fallthru
    _
  // Predicated region
  $region14: #{creat_u_encoder_forward.1} parent=0 // pred_check
    _
  $region15: #{creat_u_encoder_forward.1} parent=0 // pred_check_branch
    %83 = sbr.rel (0) target = $region17
  $region16: #{creat_u_encoder_forward.1} parent=0 // pred_region
    _
  $region17: #{creat_u_encoder_forward.1} parent=0 // pred_fallthru
    _
  // Predicated region
  $region18: #{creat_u_encoder_forward.1} parent=0 // pred_check
    _
  $region19: #{creat_u_encoder_forward.1} parent=0 // pred_check_branch
    %85 = sbr.rel (0) target = $region21
  $region20: #{creat_u_encoder_forward.1} parent=0 // pred_region
    _
  $region21: #{creat_u_encoder_forward.1} parent=0 // pred_fallthru
    _
  // Predicated region
  $region22: #{creat_u_encoder_forward.1} parent=0 // pred_check
    _
  $region23: #{creat_u_encoder_forward.1} parent=0 // pred_check_branch
    %87 = sbr.rel (0) target = $region25
  $region24: #{creat_u_encoder_forward.1} parent=0 // pred_region
    _
  $region25: #{creat_u_encoder_forward.1} parent=0 // pred_fallthru
    _
  // Predicated region
  $region26: #{creat_u_encoder_forward.1} parent=0 // pred_check
    _
  $region27: #{creat_u_encoder_forward.1} parent=0 // pred_check_branch
    %89 = sbr.rel (0) target = $region29
  $region28: #{creat_u_encoder_forward.1} parent=0 // pred_region
    _
  $region29: #{creat_u_encoder_forward.1} parent=0 // pred_fallthru
    _
  // Predicated region
  $region30: #{creat_u_encoder_forward.1} parent=0 // pred_check
    _
  $region31: #{creat_u_encoder_forward.1} parent=0 // pred_check_branch
    %91 = sbr.rel (0) target = $region33
  $region32: #{creat_u_encoder_forward.1} parent=0 // pred_region
    _
  $region33: #{creat_u_encoder_forward.1} parent=0 // pred_fallthru
    _
  // Predicated region
  $region34: #{creat_u_encoder_forward.1} parent=0 // pred_check
    _
  $region35: #{creat_u_encoder_forward.1} parent=0 // pred_check_branch
    %93 = sbr.rel (0) target = $region37
  $region36: #{creat_u_encoder_forward.1} parent=0 // pred_region
    _
  $region37: #{creat_u_encoder_forward.1} parent=0 // pred_fallthru
    _
  // Predicated region
  $region38: #{creat_u_encoder_forward.1} parent=0 // pred_check
    _
  $region39: #{creat_u_encoder_forward.1} parent=0 // pred_check_branch
    %95 = sbr.rel (0) target = $region41
  $region40: #{creat_u_encoder_forward.1} parent=0 // pred_region
    _
  $region41: #{creat_u_encoder_forward.1} parent=0 // pred_fallthru
    _
  // Predicated region
  $region42: #{creat_u_encoder_forward.1} parent=0 // pred_check
    _
  $region43: #{creat_u_encoder_forward.1} parent=0 // pred_check_branch
    %97 = sbr.rel (0) target = $region45
  $region44: #{creat_u_encoder_forward.1} parent=0 // pred_region
    _
  $region45: #{creat_u_encoder_forward.1} parent=0 // pred_fallthru
    _
  // Predicated region
  $region46: #{creat_u_encoder_forward.1} parent=0 // pred_check
    _
  $region47: #{creat_u_encoder_forward.1} parent=0 // pred_check_branch
    %99 = sbr.rel (0) target = $region49
  $region48: #{creat_u_encoder_forward.1} parent=0 // pred_region
    _
  $region49: #{creat_u_encoder_forward.1} parent=0 // pred_fallthru
    _
  // Predicated region
  $region50: #{creat_u_encoder_forward.1} parent=0 // pred_check
    _
  $region51: #{creat_u_encoder_forward.1} parent=0 // pred_check_branch
    %101 = sbr.rel (0) target = $region53
  $region52: #{creat_u_encoder_forward.1} parent=0 // pred_region
    _
  $region53: #{creat_u_encoder_forward.1} parent=0 // pred_fallthru
    _
  // Predicated region
  $region54: #{creat_u_encoder_forward.1} parent=0 // pred_check
    _
  $region55: #{creat_u_encoder_forward.1} parent=0 // pred_check_branch
    %103 = sbr.rel (0) target = $region57
  $region56: #{creat_u_encoder_forward.1} parent=0 // pred_region
    _
  $region57: #{creat_u_encoder_forward.1} parent=0 // pred_fallthru
    _
  // Predicated region
  $region58: #{creat_u_encoder_forward.1} parent=0 // pred_check
    _
  $region59: #{creat_u_encoder_forward.1} parent=0 // pred_check_branch
    %105 = sbr.rel (0) target = $region61
  $region60: #{creat_u_encoder_forward.1} parent=0 // pred_region
    _
  $region61: #{creat_u_encoder_forward.1} parent=0 // pred_fallthru
    _
  // Predicated region
  $region62: #{creat_u_encoder_forward.1} parent=0 // pred_check
    _
  $region63: #{creat_u_encoder_forward.1} parent=0 // pred_check_branch
    %107 = sbr.rel (0) target = $region65
  $region64: #{creat_u_encoder_forward.1} parent=0 // pred_region
    _
  $region65: #{creat_u_encoder_forward.1} parent=0 // pred_fallthru
    _
  // Predicated region
  $region66: #{creat_u_encoder_forward.1} parent=0 // pred_check
    _
  $region67: #{creat_u_encoder_forward.1} parent=0 // pred_check_branch
    %109 = sbr.rel (0) target = $region69
  $region68: #{creat_u_encoder_forward.1} parent=0 // pred_region
    _
  $region69: #{creat_u_encoder_forward.1} parent=0 // pred_fallthru
    _
  // Predicated region
  $region70: #{creat_u_encoder_forward.1} parent=0 // pred_check
    _
  $region71: #{creat_u_encoder_forward.1} parent=0 // pred_check_branch
    %111 = sbr.rel (0) target = $region73
  $region72: #{creat_u_encoder_forward.1} parent=0 // pred_region
    _
  $region73: #{creat_u_encoder_forward.1} parent=0 // pred_fallthru
    _
  // Predicated region
  $region74: #{creat_u_encoder_forward.1} parent=0 // pred_check
    _
  $region75: #{creat_u_encoder_forward.1} parent=0 // pred_check_branch
    %113 = sbr.rel (0) target = $region77
  $region76: #{creat_u_encoder_forward.1} parent=0 // pred_region
    _
  $region77: #{creat_u_encoder_forward.1} parent=0 // pred_fallthru
    _
  // Predicated region
  $region78: #{creat_u_encoder_forward.1} parent=0 // pred_check
    _
  $region79: #{creat_u_encoder_forward.1} parent=0 // pred_check_branch
    %115 = sbr.rel (0) target = $region81
  $region80: #{creat_u_encoder_forward.1} parent=0 // pred_region
    _
  $region81: #{creat_u_encoder_forward.1} parent=0 // pred_fallthru
    _
  // Predicated region
  $region82: #{creat_u_encoder_forward.1} parent=0 // pred_check
    _
  $region83: #{creat_u_encoder_forward.1} parent=0 // pred_check_branch
    %117 = sbr.rel (0) target = $region85
  $region84: #{creat_u_encoder_forward.1} parent=0 // pred_region
    _
  $region85: #{creat_u_encoder_forward.1} parent=0 // pred_fallthru
    _
  // Predicated region
  $region86: #{creat_u_encoder_forward.1} parent=0 // pred_check
    _
  $region87: #{creat_u_encoder_forward.1} parent=0 // pred_check_branch
    %119 = sbr.rel (0) target = $region89
  $region88: #{creat_u_encoder_forward.1} parent=0 // pred_region
    _
  $region89: #{creat_u_encoder_forward.1} parent=0 // pred_fallthru
    _
  // Predicated region
  $region90: #{creat_u_encoder_forward.1} parent=0 // pred_check
    _
  $region91: #{creat_u_encoder_forward.1} parent=0 // pred_check_branch
    %121 = sbr.rel (0) target = $region93
  $region92: #{creat_u_encoder_forward.1} parent=0 // pred_region
    _
  $region93: #{creat_u_encoder_forward.1} parent=0 // pred_fallthru
    _
  // Predicated region
  $region94: #{creat_u_encoder_forward.1} parent=0 // pred_check
    _
  $region95: #{creat_u_encoder_forward.1} parent=0 // pred_check_branch
    %123 = sbr.rel (0) target = $region97
  $region96: #{creat_u_encoder_forward.1} parent=0 // pred_region
    _
  $region97: #{creat_u_encoder_forward.1} parent=0 // pred_fallthru
    _
  // Predicated region
  $region98: #{creat_u_encoder_forward.1} parent=0 // pred_check
    _
  $region99: #{creat_u_encoder_forward.1} parent=0 // pred_check_branch
    %125 = sbr.rel (0) target = $region101
  $region100: #{creat_u_encoder_forward.1} parent=0 // pred_region
    _
  $region101: #{creat_u_encoder_forward.1} parent=0 // pred_fallthru
    _
  // Predicated region
  $region102: #{creat_u_encoder_forward.1} parent=0 // pred_check
    _
  $region103: #{creat_u_encoder_forward.1} parent=0 // pred_check_branch
    %127 = sbr.rel (0) target = $region105
  $region104: #{creat_u_encoder_forward.1} parent=0 // pred_region
    _
  $region105: #{creat_u_encoder_forward.1} parent=0 // pred_fallthru
    _
  // Predicated region
  $region106: #{creat_u_encoder_forward.1} parent=0 // pred_check
    _
  $region107: #{creat_u_encoder_forward.1} parent=0 // pred_check_branch
    %129 = sbr.rel (0) target = $region109
  $region108: #{creat_u_encoder_forward.1} parent=0 // pred_region
    _
  $region109: #{creat_u_encoder_forward.1} parent=0 // pred_fallthru
    _
  // Predicated region
  $region110: #{creat_u_encoder_forward.1} parent=0 // pred_check
    _
  $region111: #{creat_u_encoder_forward.1} parent=0 // pred_check_branch
    %131 = sbr.rel (0) target = $region113
  $region112: #{creat_u_encoder_forward.1} parent=0 // pred_region
    _
  $region113: #{creat_u_encoder_forward.1} parent=0 // pred_fallthru
    _
  // Predicated region
  $region114: #{creat_u_encoder_forward.1} parent=0 // pred_check
    _
  $region115: #{creat_u_encoder_forward.1} parent=0 // pred_check_branch
    %133 = sbr.rel (0) target = $region117
  $region116: #{creat_u_encoder_forward.1} parent=0 // pred_region
    _
  $region117: #{creat_u_encoder_forward.1} parent=0 // pred_fallthru
    _
  // Predicated region
  $region118: #{creat_u_encoder_forward.1} parent=0 // pred_check
    _
  $region119: #{creat_u_encoder_forward.1} parent=0 // pred_check_branch
    %135 = sbr.rel (0) target = $region121
  $region120: #{creat_u_encoder_forward.1} parent=0 // pred_region
    _
  $region121: #{creat_u_encoder_forward.1} parent=0 // pred_fallthru
    _
  // Predicated region
  $region122: #{creat_u_encoder_forward.1} parent=0 // pred_check
    _
  $region123: #{creat_u_encoder_forward.1} parent=0 // pred_check_branch
    %137 = sbr.rel (0) target = $region125
  $region124: #{creat_u_encoder_forward.1} parent=0 // pred_region
    _
  $region125: #{creat_u_encoder_forward.1} parent=0 // pred_fallthru
    _
  // Predicated region
  $region126: #{creat_u_encoder_forward.1} parent=0 // pred_check
    _
  $region127: #{creat_u_encoder_forward.1} parent=0 // pred_check_branch
    %139 = sbr.rel (0) target = $region129
  $region128: #{creat_u_encoder_forward.1} parent=0 // pred_region
    _
  $region129: #{creat_u_encoder_forward.1} parent=0 // pred_fallthru
    _
  // Predicated region
  $region130: #{creat_u_encoder_forward.1} parent=0 // pred_check
    _
  $region131: #{creat_u_encoder_forward.1} parent=0 // pred_check_branch
    %141 = sbr.rel (0) target = $region133
  $region132: #{creat_u_encoder_forward.1} parent=0 // pred_region
    _
  $region133: #{creat_u_encoder_forward.1} parent=0 // pred_fallthru
    _
  // Predicated region
  $region134: #{creat_u_encoder_forward.1} parent=0 // pred_check
    _
  $region135: #{creat_u_encoder_forward.1} parent=0 // pred_check_branch
    %143 = sbr.rel (0) target = $region137
  $region136: #{creat_u_encoder_forward.1} parent=0 // pred_region
    _
  $region137: #{creat_u_encoder_forward.1} parent=0 // pred_fallthru
    _
  // Predicated region
  $region138: #{creat_u_encoder_forward.1} parent=0 // pred_check
    _
  $region139: #{creat_u_encoder_forward.1} parent=0 // pred_check_branch
    %145 = sbr.rel (0) target = $region141
  $region140: #{creat_u_encoder_forward.1} parent=0 // pred_region
    _
  $region141: #{creat_u_encoder_forward.1} parent=0 // pred_fallthru
    _
  %v146 = vld [vmem:[%s1] sm:$0xff]
  %v147 = vld [vmem:[%s1 + $0x8] sm:$0xff]
  %v148 = vld [vmem:[%s1 + $0x10] sm:$0xff]
  %v149 = vld [vmem:[%s1 + $0x18] sm:$0xff]
  %v150 = vld [vmem:[%s1 + $0x20] sm:$0xff]
  %v151 = vld [vmem:[%s1 + $0x28] sm:$0xff]
  %v152 = vld [vmem:[%s1 + $0x30] sm:$0xff]
  %v153 = vld [vmem:[%s1 + $0x38] sm:$0xff]
  %v154 = vld [vmem:[%s1 + $0x40] sm:$0xff]
  %v155 = vld [vmem:[%s1 + $0x48] sm:$0xff]
  %v156 = vld [vmem:[%s1 + $0x50] sm:$0xff]
  %v157 = vld [vmem:[%s1 + $0x58] sm:$0xff]
  %v158 = vld [vmem:[%s1 + $0x60] sm:$0xff]
  %v159 = vld [vmem:[%s1 + $0x68] sm:$0xff]
  %v160 = vld [vmem:[%s1 + $0x70] sm:$0xff]
  %v161 = vld [vmem:[%s1 + $0x78] sm:$0xff]
  %vm178 = vcmask 1041408
  %v179 = vrot.slane %v146, 6
  %v180 = vrot.slane %v147, 6
  %v181 = vsel %vm178, %v179, %v180
  %v182 = vrot.slane %v148, 6
  %v183 = vrot.slane %v149, 6
  %v184 = vsel %vm178, %v182, %v183
  %v185 = vrot.slane %v150, 6
  %v186 = vrot.slane %v151, 6
  %v187 = vsel %vm178, %v185, %v186
  %v188 = vrot.slane %v152, 6
  %v189 = vrot.slane %v153, 6
  %v190 = vsel %vm178, %v188, %v189
  %v191 = vrot.slane %v154, 6
  %v192 = vrot.slane %v155, 6
  %v193 = vsel %vm178, %v191, %v192
  %v194 = vrot.slane %v156, 6
  %v195 = vrot.slane %v157, 6
  %v196 = vsel %vm178, %v194, %v195
  %v197 = vrot.slane %v158, 6
  %v198 = vrot.slane %v159, 6
  %v199 = vsel %vm178, %v197, %v198
  %v200 = vrot.slane %v160, 6
  %v201 = vrot.slane %v161, 6
  %v202 = vsel %vm178, %v200, %v201
  %v227 = vsel %vm178, 0.0, %v179
  %v228 = vsel %vm178, 0.0, %v182
  %v229 = vsel %vm178, 0.0, %v185
  %v230 = vsel %vm178, 0.0, %v188
  %v231 = vsel %vm178, 0.0, %v191
  %v232 = vsel %vm178, 0.0, %v194
  %v233 = vsel %vm178, 0.0, %v197
  %v234 = vsel %vm178, 0.0, %v200
  %v235 = vsel %vm178, %v180, 0.0
  %v236 = vsel %vm178, %v183, 0.0
  %v237 = vsel %vm178, %v186, 0.0
  %v238 = vsel %vm178, %v189, 0.0
  %v239 = vsel %vm178, %v192, 0.0
  %v240 = vsel %vm178, %v195, 0.0
  %v241 = vsel %vm178, %v198, 0.0
  %v242 = vsel %vm178, %v201, 0.0
  %vm259 = vcmask 1046528
  %v260 = vrot.slane %v227, 1
  %v261 = vrot.slane %v181, 1
  %v262 = vsel %vm259, %v260, %v261
  %v263 = vrot.slane %v235, 1
  %v264 = vsel %vm259, %v261, %v263
  %v265 = vrot.slane %v228, 1
  %v266 = vrot.slane %v184, 1
  %v267 = vsel %vm259, %v265, %v266
  %v268 = vrot.slane %v236, 1
  %v269 = vsel %vm259, %v266, %v268
  %v270 = vrot.slane %v229, 1
  %v271 = vrot.slane %v187, 1
  %v272 = vsel %vm259, %v270, %v271
  %v273 = vrot.slane %v237, 1
  %v274 = vsel %vm259, %v271, %v273
  %v275 = vrot.slane %v230, 1
  %v276 = vrot.slane %v190, 1
  %v277 = vsel %vm259, %v275, %v276
  %v278 = vrot.slane %v238, 1
  %v279 = vsel %vm259, %v276, %v278
  %v280 = vrot.slane %v231, 1
  %v281 = vrot.slane %v193, 1
  %v282 = vsel %vm259, %v280, %v281
  %v283 = vrot.slane %v239, 1
  %v284 = vsel %vm259, %v281, %v283
  %v285 = vrot.slane %v232, 1
  %v286 = vrot.slane %v196, 1
  %v287 = vsel %vm259, %v285, %v286
  %v288 = vrot.slane %v240, 1
  %v289 = vsel %vm259, %v286, %v288
  %v290 = vrot.slane %v233, 1
  %v291 = vrot.slane %v199, 1
  %v292 = vsel %vm259, %v290, %v291
  %v293 = vrot.slane %v241, 1
  %v294 = vsel %vm259, %v291, %v293
  %v295 = vrot.slane %v234, 1
  %v296 = vrot.slane %v202, 1
  %v297 = vsel %vm259, %v295, %v296
  %v298 = vrot.slane %v242, 1
  %v299 = vsel %vm259, %v296, %v298
  %300 = vrot.lane.b32.xlu0 %v262, 4
  %v301 = vpop.permute.xlu0 %300
  %302 = vrot.lane.b32.xlu0 %v264, 4
  %v303 = vpop.permute.xlu0 %302
  %304 = vrot.lane.b32.xlu0 %v267, 4
  %v305 = vpop.permute.xlu0 %304
  %306 = vrot.lane.b32.xlu0 %v269, 4
  %v307 = vpop.permute.xlu0 %306
  %308 = vrot.lane.b32.xlu0 %v272, 4
  %v309 = vpop.permute.xlu0 %308
  %310 = vrot.lane.b32.xlu0 %v274, 4
  %v311 = vpop.permute.xlu0 %310
  %312 = vrot.lane.b32.xlu0 %v277, 4
  %v313 = vpop.permute.xlu0 %312
  %314 = vrot.lane.b32.xlu0 %v279, 4
  %v315 = vpop.permute.xlu0 %314
  %316 = vrot.lane.b32.xlu0 %v282, 4
  %v317 = vpop.permute.xlu0 %316
  %318 = vrot.lane.b32.xlu0 %v284, 4
  %v319 = vpop.permute.xlu0 %318
  %320 = vrot.lane.b32.xlu0 %v287, 4
  %v321 = vpop.permute.xlu0 %320
  %322 = vrot.lane.b32.xlu0 %v289, 4
  %v323 = vpop.permute.xlu0 %322
  %324 = vrot.lane.b32.xlu0 %v292, 4
  %v325 = vpop.permute.xlu0 %324
  %326 = vrot.lane.b32.xlu0 %v294, 4
  %v327 = vpop.permute.xlu0 %326
  %328 = vrot.lane.b32.xlu0 %v297, 4
  %v329 = vpop.permute.xlu0 %328
  %330 = vrot.lane.b32.xlu0 %v299, 4
  %v331 = vpop.permute.xlu0 %330
  %vm348 = vcmask 1045504
  %v349 = vrot.slane %v227, 2
  %v350 = vrot.slane %v181, 2
  %v351 = vsel %vm348, %v349, %v350
  %v352 = vrot.slane %v235, 2
  %v353 = vsel %vm348, %v350, %v352
  %v354 = vrot.slane %v228, 2
  %v355 = vrot.slane %v184, 2
  %v356 = vsel %vm348, %v354, %v355
  %v357 = vrot.slane %v236, 2
  %v358 = vsel %vm348, %v355, %v357
  %v359 = vrot.slane %v229, 2
  %v360 = vrot.slane %v187, 2
  %v361 = vsel %vm348, %v359, %v360
  %v362 = vrot.slane %v237, 2
  %v363 = vsel %vm348, %v360, %v362
  %v364 = vrot.slane %v230, 2
  %v365 = vrot.slane %v190, 2
  %v366 = vsel %vm348, %v364, %v365
  %v367 = vrot.slane %v238, 2
  %v368 = vsel %vm348, %v365, %v367
  %v369 = vrot.slane %v231, 2
  %v370 = vrot.slane %v193, 2
  %v371 = vsel %vm348, %v369, %v370
  %v372 = vrot.slane %v239, 2
  %v373 = vsel %vm348, %v370, %v372
  %v374 = vrot.slane %v232, 2
  %v375 = vrot.slane %v196, 2
  %v376 = vsel %vm348, %v374, %v375
  %v377 = vrot.slane %v240, 2
  %v378 = vsel %vm348, %v375, %v377
  %v379 = vrot.slane %v233, 2
  %v380 = vrot.slane %v199, 2
  %v381 = vsel %vm348, %v379, %v380
  %v382 = vrot.slane %v241, 2
  %v383 = vsel %vm348, %v380, %v382
  %v384 = vrot.slane %v234, 2
  %v385 = vrot.slane %v202, 2
  %v386 = vsel %vm348, %v384, %v385
  %v387 = vrot.slane %v242, 2
  %v388 = vsel %vm348, %v385, %v387
  %389 = vrot.lane.b32.xlu0 %v351, 8
  %v390 = vpop.permute.xlu0 %389
  %391 = vrot.lane.b32.xlu0 %v353, 8
  %v392 = vpop.permute.xlu0 %391
  %393 = vrot.lane.b32.xlu0 %v356, 8
  %v394 = vpop.permute.xlu0 %393
  %395 = vrot.lane.b32.xlu0 %v358, 8
  %v396 = vpop.permute.xlu0 %395
  %397 = vrot.lane.b32.xlu0 %v361, 8
  %v398 = vpop.permute.xlu0 %397
  %399 = vrot.lane.b32.xlu0 %v363, 8
  %v400 = vpop.permute.xlu0 %399
  %401 = vrot.lane.b32.xlu0 %v366, 8
  %v402 = vpop.permute.xlu0 %401
  %403 = vrot.lane.b32.xlu0 %v368, 8
  %v404 = vpop.permute.xlu0 %403
  %405 = vrot.lane.b32.xlu0 %v371, 8
  %v406 = vpop.permute.xlu0 %405
  %407 = vrot.lane.b32.xlu0 %v373, 8
  %v408 = vpop.permute.xlu0 %407
  %409 = vrot.lane.b32.xlu0 %v376, 8
  %v410 = vpop.permute.xlu0 %409
  %411 = vrot.lane.b32.xlu0 %v378, 8
  %v412 = vpop.permute.xlu0 %411
  %413 = vrot.lane.b32.xlu0 %v381, 8
  %v414 = vpop.permute.xlu0 %413
  %415 = vrot.lane.b32.xlu0 %v383, 8
  %v416 = vpop.permute.xlu0 %415
  %417 = vrot.lane.b32.xlu0 %v386, 8
  %v418 = vpop.permute.xlu0 %417
  %419 = vrot.lane.b32.xlu0 %v388, 8
  %v420 = vpop.permute.xlu0 %419
  %vm437 = vcmask 1044480
  %v438 = vrot.slane %v227, 3
  %v439 = vrot.slane %v181, 3
  %v440 = vsel %vm437, %v438, %v439
  %v441 = vrot.slane %v235, 3
  %v442 = vsel %vm437, %v439, %v441
  %v443 = vrot.slane %v228, 3
  %v444 = vrot.slane %v184, 3
  %v445 = vsel %vm437, %v443, %v444
  %v446 = vrot.slane %v236, 3
  %v447 = vsel %vm437, %v444, %v446
  %v448 = vrot.slane %v229, 3
  %v449 = vrot.slane %v187, 3
  %v450 = vsel %vm437, %v448, %v449
  %v451 = vrot.slane %v237, 3
  %v452 = vsel %vm437, %v449, %v451
  %v453 = vrot.slane %v230, 3
  %v454 = vrot.slane %v190, 3
  %v455 = vsel %vm437, %v453, %v454
  %v456 = vrot.slane %v238, 3
  %v457 = vsel %vm437, %v454, %v456
  %v458 = vrot.slane %v231, 3
  %v459 = vrot.slane %v193, 3
  %v460 = vsel %vm437, %v458, %v459
  %v461 = vrot.slane %v239, 3
  %v462 = vsel %vm437, %v459, %v461
  %v463 = vrot.slane %v232, 3
  %v464 = vrot.slane %v196, 3
  %v465 = vsel %vm437, %v463, %v464
  %v466 = vrot.slane %v240, 3
  %v467 = vsel %vm437, %v464, %v466
  %v468 = vrot.slane %v233, 3
  %v469 = vrot.slane %v199, 3
  %v470 = vsel %vm437, %v468, %v469
  %v471 = vrot.slane %v241, 3
  %v472 = vsel %vm437, %v469, %v471
  %v473 = vrot.slane %v234, 3
  %v474 = vrot.slane %v202, 3
  %v475 = vsel %vm437, %v473, %v474
  %v476 = vrot.slane %v242, 3
  %v477 = vsel %vm437, %v474, %v476
  %478 = vrot.lane.b32.xlu0 %v440, 12
  %v479 = vpop.permute.xlu0 %478
  %480 = vrot.lane.b32.xlu0 %v442, 12
  %v481 = vpop.permute.xlu0 %480
  %482 = vrot.lane.b32.xlu0 %v445, 12
  %v483 = vpop.permute.xlu0 %482
  %484 = vrot.lane.b32.xlu0 %v447, 12
  %v485 = vpop.permute.xlu0 %484
  %486 = vrot.lane.b32.xlu0 %v450, 12
  %v487 = vpop.permute.xlu0 %486
  %488 = vrot.lane.b32.xlu0 %v452, 12
  %v489 = vpop.permute.xlu0 %488
  %490 = vrot.lane.b32.xlu0 %v455, 12
  %v491 = vpop.permute.xlu0 %490
  %492 = vrot.lane.b32.xlu0 %v457, 12
  %v493 = vpop.permute.xlu0 %492
  %494 = vrot.lane.b32.xlu0 %v460, 12
  %v495 = vpop.permute.xlu0 %494
  %496 = vrot.lane.b32.xlu0 %v462, 12
  %v497 = vpop.permute.xlu0 %496
  %498 = vrot.lane.b32.xlu0 %v465, 12
  %v499 = vpop.permute.xlu0 %498
  %500 = vrot.lane.b32.xlu0 %v467, 12
  %v501 = vpop.permute.xlu0 %500
  %502 = vrot.lane.b32.xlu0 %v470, 12
  %v503 = vpop.permute.xlu0 %502
  %504 = vrot.lane.b32.xlu0 %v472, 12
  %v505 = vpop.permute.xlu0 %504
  %506 = vrot.lane.b32.xlu0 %v475, 12
  %v507 = vpop.permute.xlu0 %506
  %508 = vrot.lane.b32.xlu0 %v477, 12
  %v509 = vpop.permute.xlu0 %508
  %vm526 = vcmask 1043456
  %v527 = vrot.slane %v227, 4
  %v528 = vrot.slane %v181, 4
  %v529 = vsel %vm526, %v527, %v528
  %v530 = vrot.slane %v235, 4
  %v531 = vsel %vm526, %v528, %v530
  %v532 = vrot.slane %v228, 4
  %v533 = vrot.slane %v184, 4
  %v534 = vsel %vm526, %v532, %v533
  %v535 = vrot.slane %v236, 4
  %v536 = vsel %vm526, %v533, %v535
  %v537 = vrot.slane %v229, 4
  %v538 = vrot.slane %v187, 4
  %v539 = vsel %vm526, %v537, %v538
  %v540 = vrot.slane %v237, 4
  %v541 = vsel %vm526, %v538, %v540
  %v542 = vrot.slane %v230, 4
  %v543 = vrot.slane %v190, 4
  %v544 = vsel %vm526, %v542, %v543
  %v545 = vrot.slane %v238, 4
  %v546 = vsel %vm526, %v543, %v545
  %v547 = vrot.slane %v231, 4
  %v548 = vrot.slane %v193, 4
  %v549 = vsel %vm526, %v547, %v548
  %v550 = vrot.slane %v239, 4
  %v551 = vsel %vm526, %v548, %v550
  %v552 = vrot.slane %v232, 4
  %v553 = vrot.slane %v196, 4
  %v554 = vsel %vm526, %v552, %v553
  %v555 = vrot.slane %v240, 4
  %v556 = vsel %vm526, %v553, %v555
  %v557 = vrot.slane %v233, 4
  %v558 = vrot.slane %v199, 4
  %v559 = vsel %vm526, %v557, %v558
  %v560 = vrot.slane %v241, 4
  %v561 = vsel %vm526, %v558, %v560
  %v562 = vrot.slane %v234, 4
  %v563 = vrot.slane %v202, 4
  %v564 = vsel %vm526, %v562, %v563
  %v565 = vrot.slane %v242, 4
  %v566 = vsel %vm526, %v563, %v565
  %567 = vrot.lane.b32.xlu0 %v529, 16
  %v568 = vpop.permute.xlu0 %567
  %569 = vrot.lane.b32.xlu0 %v531, 16
  %v570 = vpop.permute.xlu0 %569
  %571 = vrot.lane.b32.xlu0 %v534, 16
  %v572 = vpop.permute.xlu0 %571
  %573 = vrot.lane.b32.xlu0 %v536, 16
  %v574 = vpop.permute.xlu0 %573
  %575 = vrot.lane.b32.xlu0 %v539, 16
  %v576 = vpop.permute.xlu0 %575
  %577 = vrot.lane.b32.xlu0 %v541, 16
  %v578 = vpop.permute.xlu0 %577
  %579 = vrot.lane.b32.xlu0 %v544, 16
  %v580 = vpop.permute.xlu0 %579
  %581 = vrot.lane.b32.xlu0 %v546, 16
  %v582 = vpop.permute.xlu0 %581
  %583 = vrot.lane.b32.xlu0 %v549, 16
  %v584 = vpop.permute.xlu0 %583
  %585 = vrot.lane.b32.xlu0 %v551, 16
  %v586 = vpop.permute.xlu0 %585
  %587 = vrot.lane.b32.xlu0 %v554, 16
  %v588 = vpop.permute.xlu0 %587
  %589 = vrot.lane.b32.xlu0 %v556, 16
  %v590 = vpop.permute.xlu0 %589
  %591 = vrot.lane.b32.xlu0 %v559, 16
  %v592 = vpop.permute.xlu0 %591
  %593 = vrot.lane.b32.xlu0 %v561, 16
  %v594 = vpop.permute.xlu0 %593
  %595 = vrot.lane.b32.xlu0 %v564, 16
  %v596 = vpop.permute.xlu0 %595
  %597 = vrot.lane.b32.xlu0 %v566, 16
  %v598 = vpop.permute.xlu0 %597
  %vm615 = vcmask 31744
  %v616 = vsel %vm615, %v227, %v301
  %v617 = vsel %vm615, %v181, %v303
  %v618 = vsel %vm615, %v228, %v305
  %v619 = vsel %vm615, %v184, %v307
  %v620 = vsel %vm615, %v229, %v309
  %v621 = vsel %vm615, %v187, %v311
  %v622 = vsel %vm615, %v230, %v313
  %v623 = vsel %vm615, %v190, %v315
  %v624 = vsel %vm615, %v231, %v317
  %v625 = vsel %vm615, %v193, %v319
  %v626 = vsel %vm615, %v232, %v321
  %v627 = vsel %vm615, %v196, %v323
  %v628 = vsel %vm615, %v233, %v325
  %v629 = vsel %vm615, %v199, %v327
  %v630 = vsel %vm615, %v234, %v329
  %v631 = vsel %vm615, %v202, %v331
  %vm632 = vcmask 64512
  %v633 = vsel %vm632, %v616, %v390
  %v634 = vsel %vm632, %v617, %v392
  %v635 = vsel %vm632, %v618, %v394
  %v636 = vsel %vm632, %v619, %v396
  %v637 = vsel %vm632, %v620, %v398
  %v638 = vsel %vm632, %v621, %v400
  %v639 = vsel %vm632, %v622, %v402
  %v640 = vsel %vm632, %v623, %v404
  %v641 = vsel %vm632, %v624, %v406
  %v642 = vsel %vm632, %v625, %v408
  %v643 = vsel %vm632, %v626, %v410
  %v644 = vsel %vm632, %v627, %v412
  %v645 = vsel %vm632, %v628, %v414
  %v646 = vsel %vm632, %v629, %v416
  %v647 = vsel %vm632, %v630, %v418
  %v648 = vsel %vm632, %v631, %v420
  %vm649 = vcmask 97280
  %v650 = vsel %vm649, %v633, %v479
  %v651 = vsel %vm649, %v634, %v481
  %v652 = vsel %vm649, %v635, %v483
  %v653 = vsel %vm649, %v636, %v485
  %v654 = vsel %vm649, %v637, %v487
  %v655 = vsel %vm649, %v638, %v489
  %v656 = vsel %vm649, %v639, %v491
  %v657 = vsel %vm649, %v640, %v493
  %v658 = vsel %vm649, %v641, %v495
  %v659 = vsel %vm649, %v642, %v497
  %v660 = vsel %vm649, %v643, %v499
  %v661 = vsel %vm649, %v644, %v501
  %v662 = vsel %vm649, %v645, %v503
  %v663 = vsel %vm649, %v646, %v505
  %v664 = vsel %vm649, %v647, %v507
  %v665 = vsel %vm649, %v648, %v509
  %vm666 = vcmask 130048
  %v667 = vsel %vm666, %v650, %v568
  %v668 = vsel %vm666, %v651, %v570
  %v669 = vsel %vm666, %v652, %v572
  %v670 = vsel %vm666, %v653, %v574
  %v671 = vsel %vm666, %v654, %v576
  %v672 = vsel %vm666, %v655, %v578
  %v673 = vsel %vm666, %v656, %v580
  %v674 = vsel %vm666, %v657, %v582
  %v675 = vsel %vm666, %v658, %v584
  %v676 = vsel %vm666, %v659, %v586
  %v677 = vsel %vm666, %v660, %v588
  %v678 = vsel %vm666, %v661, %v590
  %v679 = vsel %vm666, %v662, %v592
  %v680 = vsel %vm666, %v663, %v594
  %v681 = vsel %vm666, %v664, %v596
  %v682 = vsel %vm666, %v665, %v598
  %v683 = vld [vmem:[%s7] sm:$0xff]
  %v684 = vld [vmem:[%s7 + $0x8] sm:$0xff]
  %v685 = vld [vmem:[%s7 + $0x10] sm:$0xf]
  %v686 = vld [vmem:[%s9] sm:$0x1]
  %v688 = vlaneseq
  %v689 = vshrl.u32 %v688, 7
  %v690 = vsub.s32 0, %v689
  %v691 = vrot.slane %v686, %v690
  %vm693 = vcmask 162816
  %v695 = vsel %vm693, %v667, 0
  %v698 = vsel %vm693, %v668, 0
  %v701 = vsel %vm693, %v669, 0
  %v704 = vsel %vm693, %v670, 0
  %v707 = vsel %vm693, %v671, 0
  %v710 = vsel %vm693, %v672, 0
  %v713 = vsel %vm693, %v673, 0
  %v716 = vsel %vm693, %v674, 0
  %v719 = vsel %vm693, %v675, 0
  %v722 = vsel %vm693, %v676, 0
  %v725 = vsel %vm693, %v677, 0
  %v728 = vsel %vm693, %v678, 0
  %v731 = vsel %vm693, %v679, 0
  %v734 = vsel %vm693, %v680, 0
  %v737 = vsel %vm693, %v681, 0
  %v740 = vsel %vm693, %v682, 0
  %v743 = vsel %vm526, %v685, 0
  %745 = vmatprep.subr.mxu0 0.0
  %746 = vmatpush1.msra.mxu0 %v683
  %747 = vmatprep.subr.mxu0 0.0
  %748 = vmatpush1.msra.mxu0 %v684
  %749 = vmatprep.subr.mxu0 0.0
  %750 = vmatpush1.msra.mxu0 %v743
  %751 = vmatprep.subr.mxu0 0.0
  %752 = vmatpush1.msra.mxu0 0.0
  %753 = vmatprep.subr.mxu0 0.0
  %754 = vmatpush1.msra.mxu0 0.0
  %755 = vmatprep.subr.mxu0 0.0
  %756 = vmatpush1.msra.mxu0 0.0
  %757 = vmatprep.subr.mxu0 0.0
  %758 = vmatpush1.msra.mxu0 0.0
  %759 = vmatprep.subr.mxu0 0.0
  %760 = vmatpush1.msra.mxu0 0.0
  %761 = vmatprep.subr.mxu0 0.0
  %762 = vmatpush1.msra.mxu0 0.0
  %763 = vmatprep.subr.mxu0 0.0
  %764 = vmatpush1.msra.mxu0 0.0
  %765 = vmatprep.subr.mxu0 0.0
  %766 = vmatpush1.msra.mxu0 0.0
  %767 = vmatprep.subr.mxu0 0.0
  %768 = vmatpush1.msra.mxu0 0.0
  %769 = vmatprep.subr.mxu0 0.0
  %770 = vmatpush1.msra.mxu0 0.0
  %771 = vmatprep.subr.mxu0 0.0
  %772 = vmatpush1.msra.mxu0 0.0
  %773 = vmatprep.subr.mxu0 0.0
  %774 = vmatpush1.msra.mxu0 0.0
  %775 = vmatprep.subr.mxu0 0.0
  %776 = vmatpush1.msra.mxu0 0.0
  %777 = vmatprep.subr.mxu0 0.0
  %778 = vmatpush1.msra.mxu0 0.0
  %779 = vmatprep.subr.mxu0 0.0
  %780 = vmatpush1.msra.mxu0 0.0
  %781 = vmatprep.subr.mxu0 0.0
  %782 = vmatpush1.msra.mxu0 0.0
  %783 = vmatprep.subr.mxu0 0.0
  %784 = vmatpush1.msra.mxu0 0.0
  %785 = vmatprep.subr.mxu0 0.0
  %786 = vmatpush1.msra.mxu0 0.0
  %787 = vmatprep.subr.mxu0 0.0
  %788 = vmatpush1.msra.mxu0 0.0
  %789 = vmatprep.subr.mxu0 0.0
  %790 = vmatpush1.msra.mxu0 0.0
  %791 = vmatprep.subr.mxu0 0.0
  %792 = vmatpush1.msra.mxu0 0.0
  %793 = vmatprep.subr.mxu0 0.0
  %794 = vmatpush1.msra.mxu0 0.0
  %795 = vmatprep.subr.mxu0 0.0
  %796 = vmatpush1.msra.mxu0 0.0
  %797 = vmatprep.subr.mxu0 0.0
  %798 = vmatpush1.msra.mxu0 0.0
  %799 = vmatprep.subr.mxu0 0.0
  %800 = vmatpush1.msra.mxu0 0.0
  %801 = vmatprep.subr.mxu0 0.0
  %802 = vmatpush1.msra.mxu0 0.0
  %803 = vmatprep.subr.mxu0 0.0
  %804 = vmatpush1.msra.mxu0 0.0
  %805 = vmatprep.subr.mxu0 0.0
  %806 = vmatpush1.msra.mxu0 0.0
  %807 = vmatprep.subr.mxu0 0.0
  %808 = vmatpush1.msra.mxu0 0.0
  %809 = vmatprep.mubr.f32.mxu0 0.0
  %810 = vmatmul.mubr.f32.gmra.mrb[0].mxu0 %v695
  %v811 = vpop.f32.mrb[0].mxu0
  %v812 = vadd.f32 %v691, %v811
  %v813 = vpop.f32.mrb[0].mxu0
  %814 = vmatprep.mubr.f32.mxu0 0.0
  %815 = vmatmul.mubr.f32.gmra.mrb[0].mxu0 %v698
  %v816 = vpop.f32.mrb[0].mxu0
  %v817 = vadd.f32 %v691, %v816
  %v818 = vpop.f32.mrb[0].mxu0
  %819 = vmatprep.mubr.f32.mxu0 0.0
  %820 = vmatmul.mubr.f32.gmra.mrb[0].mxu0 %v701
  %v821 = vpop.f32.mrb[0].mxu0
  %v822 = vadd.f32 %v691, %v821
  %v823 = vpop.f32.mrb[0].mxu0
  %824 = vmatprep.mubr.f32.mxu0 0.0
  %825 = vmatmul.mubr.f32.gmra.mrb[0].mxu0 %v704
  %v826 = vpop.f32.mrb[0].mxu0
  %v827 = vadd.f32 %v691, %v826
  %v828 = vpop.f32.mrb[0].mxu0
  %829 = vmatprep.mubr.f32.mxu0 0.0
  %830 = vmatmul.mubr.f32.gmra.mrb[0].mxu0 %v707
  %v831 = vpop.f32.mrb[0].mxu0
  %v832 = vadd.f32 %v691, %v831
  %v833 = vpop.f32.mrb[0].mxu0
  %834 = vmatprep.mubr.f32.mxu0 0.0
  %835 = vmatmul.mubr.f32.gmra.mrb[0].mxu0 %v710
  %v836 = vpop.f32.mrb[0].mxu0
  %v837 = vadd.f32 %v691, %v836
  %v838 = vpop.f32.mrb[0].mxu0
  %839 = vmatprep.mubr.f32.mxu0 0.0
  %840 = vmatmul.mubr.f32.gmra.mrb[0].mxu0 %v713
  %v841 = vpop.f32.mrb[0].mxu0
  %v842 = vadd.f32 %v691, %v841
  %v843 = vpop.f32.mrb[0].mxu0
  %844 = vmatprep.mubr.f32.mxu0 0.0
  %845 = vmatmul.mubr.f32.gmra.mrb[0].mxu0 %v716
  %v846 = vpop.f32.mrb[0].mxu0
  %v847 = vadd.f32 %v691, %v846
  %v848 = vpop.f32.mrb[0].mxu0
  %849 = vmatprep.mubr.f32.mxu0 0.0
  %850 = vmatmul.mubr.f32.gmra.mrb[0].mxu0 %v719
  %v851 = vpop.f32.mrb[0].mxu0
  %v852 = vadd.f32 %v691, %v851
  %v853 = vpop.f32.mrb[0].mxu0
  %854 = vmatprep.mubr.f32.mxu0 0.0
  %855 = vmatmul.mubr.f32.gmra.mrb[0].mxu0 %v722
  %v856 = vpop.f32.mrb[0].mxu0
  %v857 = vadd.f32 %v691, %v856
  %v858 = vpop.f32.mrb[0].mxu0
  %859 = vmatprep.mubr.f32.mxu0 0.0
  %860 = vmatmul.mubr.f32.gmra.mrb[0].mxu0 %v725
  %v861 = vpop.f32.mrb[0].mxu0
  %v862 = vadd.f32 %v691, %v861
  %v863 = vpop.f32.mrb[0].mxu0
  %864 = vmatprep.mubr.f32.mxu0 0.0
  %865 = vmatmul.mubr.f32.gmra.mrb[0].mxu0 %v728
  %v866 = vpop.f32.mrb[0].mxu0
  %v867 = vadd.f32 %v691, %v866
  %v868 = vpop.f32.mrb[0].mxu0
  %869 = vmatprep.mubr.f32.mxu0 0.0
  %870 = vmatmul.mubr.f32.gmra.mrb[0].mxu0 %v731
  %v871 = vpop.f32.mrb[0].mxu0
  %v872 = vadd.f32 %v691, %v871
  %v873 = vpop.f32.mrb[0].mxu0
  %874 = vmatprep.mubr.f32.mxu0 0.0
  %875 = vmatmul.mubr.f32.gmra.mrb[0].mxu0 %v734
  %v876 = vpop.f32.mrb[0].mxu0
  %v877 = vadd.f32 %v691, %v876
  %v878 = vpop.f32.mrb[0].mxu0
  %879 = vmatprep.mubr.f32.mxu0 0.0
  %880 = vmatmul.mubr.f32.gmra.mrb[0].mxu0 %v737
  %v881 = vpop.f32.mrb[0].mxu0
  %v882 = vadd.f32 %v691, %v881
  %v883 = vpop.f32.mrb[0].mxu0
  %884 = vmatprep.mubr.f32.mxu0 0.0
  %885 = vmatmul.mubr.f32.gmra.mrb[0].mxu0 %v740
  %v886 = vpop.f32.mrb[0].mxu0
  %v887 = vadd.f32 %v691, %v886
  %v888 = vpop.f32.mrb[0].mxu0
  %889 = vdwg.mxu0
  %v890 = vsel %vm632, %v812, 0.0
  %v891 = vsel %vm632, %v817, 0.0
  %v892 = vadd.f32 %v890, %v891
  %v893 = vsel %vm632, %v822, 0.0
  %v894 = vadd.f32 %v892, %v893
  %v895 = vsel %vm632, %v827, 0.0
  %v896 = vadd.f32 %v894, %v895
  %v897 = vsel %vm632, %v832, 0.0
  %v898 = vadd.f32 %v896, %v897
  %v899 = vsel %vm632, %v837, 0.0
  %v900 = vadd.f32 %v898, %v899
  %v901 = vsel %vm632, %v842, 0.0
  %v902 = vadd.f32 %v900, %v901
  %v903 = vsel %vm632, %v847, 0.0
  %v904 = vadd.f32 %v902, %v903
  %v905 = vsel %vm632, %v852, 0.0
  %v906 = vadd.f32 %v904, %v905
  %v907 = vsel %vm632, %v857, 0.0
  %v908 = vadd.f32 %v906, %v907
  %v909 = vsel %vm632, %v862, 0.0
  %v910 = vadd.f32 %v908, %v909
  %v911 = vsel %vm632, %v867, 0.0
  %v912 = vadd.f32 %v910, %v911
  %v913 = vsel %vm632, %v872, 0.0
  %v914 = vadd.f32 %v912, %v913
  %v915 = vsel %vm632, %v877, 0.0
  %v916 = vadd.f32 %v914, %v915
  %v917 = vsel %vm632, %v882, 0.0
  %v918 = vadd.f32 %v916, %v917
  %v919 = vsel %vm632, %v887, 0.0
  %v920 = vadd.f32 %v918, %v919
  %v921 = vrot.slane %v920, 4
  %v922 = vadd.f32 %v920, %v921
  %v923 = vrot.slane %v922, 2
  %v924 = vadd.f32 %v922, %v923
  %v925 = vrot.slane %v924, 1
  %v926 = vadd.f32 %v924, %v925
  %v927 = vmul.f32 %v926, 0.0078125
  %v928 = vsub.f32 %v812, %v927
  %v929 = vsub.f32 %v817, %v927
  %v930 = vsub.f32 %v822, %v927
  %v931 = vsub.f32 %v827, %v927
  %v932 = vsub.f32 %v832, %v927
  %v933 = vsub.f32 %v837, %v927
  %v934 = vsub.f32 %v842, %v927
  %v935 = vsub.f32 %v847, %v927
  %v936 = vsub.f32 %v852, %v927
  %v937 = vsub.f32 %v857, %v927
  %v938 = vsub.f32 %v862, %v927
  %v939 = vsub.f32 %v867, %v927
  %v940 = vsub.f32 %v872, %v927
  %v941 = vsub.f32 %v877, %v927
  %v942 = vsub.f32 %v882, %v927
  %v943 = vsub.f32 %v887, %v927
  %v944 = vmul.f32 %v928, %v928
  %v945 = vmul.f32 %v929, %v929
  %v946 = vmul.f32 %v930, %v930
  %v947 = vmul.f32 %v931, %v931
  %v948 = vmul.f32 %v932, %v932
  %v949 = vmul.f32 %v933, %v933
  %v950 = vmul.f32 %v934, %v934
  %v951 = vmul.f32 %v935, %v935
  %v952 = vmul.f32 %v936, %v936
  %v953 = vmul.f32 %v937, %v937
  %v954 = vmul.f32 %v938, %v938
  %v955 = vmul.f32 %v939, %v939
  %v956 = vmul.f32 %v940, %v940
  %v957 = vmul.f32 %v941, %v941
  %v958 = vmul.f32 %v942, %v942
  %v959 = vmul.f32 %v943, %v943
  %v960 = vsel %vm632, %v944, 0.0
  %v961 = vsel %vm632, %v945, 0.0
  %v962 = vadd.f32 %v960, %v961
  %v963 = vsel %vm632, %v946, 0.0
  %v964 = vadd.f32 %v962, %v963
  %v965 = vsel %vm632, %v947, 0.0
  %v966 = vadd.f32 %v964, %v965
  %v967 = vsel %vm632, %v948, 0.0
  %v968 = vadd.f32 %v966, %v967
  %v969 = vsel %vm632, %v949, 0.0
  %v970 = vadd.f32 %v968, %v969
  %v971 = vsel %vm632, %v950, 0.0
  %v972 = vadd.f32 %v970, %v971
  %v973 = vsel %vm632, %v951, 0.0
  %v974 = vadd.f32 %v972, %v973
  %v975 = vsel %vm632, %v952, 0.0
  %v976 = vadd.f32 %v974, %v975
  %v977 = vsel %vm632, %v953, 0.0
  %v978 = vadd.f32 %v976, %v977
  %v979 = vsel %vm632, %v954, 0.0
  %v980 = vadd.f32 %v978, %v979
  %v981 = vsel %vm632, %v955, 0.0
  %v982 = vadd.f32 %v980, %v981
  %v983 = vsel %vm632, %v956, 0.0
  %v984 = vadd.f32 %v982, %v983
  %v985 = vsel %vm632, %v957, 0.0
  %v986 = vadd.f32 %v984, %v985
  %v987 = vsel %vm632, %v958, 0.0
  %v988 = vadd.f32 %v986, %v987
  %v989 = vsel %vm632, %v959, 0.0
  %v990 = vadd.f32 %v988, %v989
  %v991 = vrot.slane %v990, 4
  %v992 = vadd.f32 %v990, %v991
  %v993 = vrot.slane %v992, 2
  %v994 = vadd.f32 %v992, %v993
  %v995 = vrot.slane %v994, 1
  %v996 = vadd.f32 %v994, %v995
  %v997 = vmul.f32 %v996, 0.0078125
  %v998 = vadd.f32 %v997, 1e-05
  %v999 = vrsqrt.pop %v998
  %v1000 = vmul.f32 %v928, %v999
  %v1001 = vmul.f32 %v929, %v999
  %v1002 = vmul.f32 %v930, %v999
  %v1003 = vmul.f32 %v931, %v999
  %v1004 = vmul.f32 %v932, %v999
  %v1005 = vmul.f32 %v933, %v999
  %v1006 = vmul.f32 %v934, %v999
  %v1007 = vmul.f32 %v935, %v999
  %v1008 = vmul.f32 %v936, %v999
  %v1009 = vmul.f32 %v937, %v999
  %v1010 = vmul.f32 %v938, %v999
  %v1011 = vmul.f32 %v939, %v999
  %v1012 = vmul.f32 %v940, %v999
  %v1013 = vmul.f32 %v941, %v999
  %v1014 = vmul.f32 %v942, %v999
  %v1015 = vmul.f32 %v943, %v999
  %v1016 = vld [vmem:[%s11] sm:$0x1]
  %v1018 = vlaneseq
  %v1019 = vshrl.u32 %v1018, 7
  %v1020 = vsub.s32 0, %v1019
  %v1021 = vrot.slane %v1016, %v1020
  %v1023 = vmul.f32 %v1000, %v1021
  %v1024 = vmul.f32 %v1001, %v1021
  %v1025 = vmul.f32 %v1002, %v1021
  %v1026 = vmul.f32 %v1003, %v1021
  %v1027 = vmul.f32 %v1004, %v1021
  %v1028 = vmul.f32 %v1005, %v1021
  %v1029 = vmul.f32 %v1006, %v1021
  %v1030 = vmul.f32 %v1007, %v1021
  %v1031 = vmul.f32 %v1008, %v1021
  %v1032 = vmul.f32 %v1009, %v1021
  %v1033 = vmul.f32 %v1010, %v1021
  %v1034 = vmul.f32 %v1011, %v1021
  %v1035 = vmul.f32 %v1012, %v1021
  %v1036 = vmul.f32 %v1013, %v1021
  %v1037 = vmul.f32 %v1014, %v1021
  %v1038 = vmul.f32 %v1015, %v1021
  %v1039 = vld [vmem:[%s13] sm:$0x1]
  %v1041 = vlaneseq
  %v1042 = vshrl.u32 %v1041, 7
  %v1043 = vsub.s32 0, %v1042
  %v1044 = vrot.slane %v1039, %v1043
  %v1046 = vadd.f32 %v1023, %v1044
  %v1047 = vadd.f32 %v1024, %v1044
  %v1048 = vadd.f32 %v1025, %v1044
  %v1049 = vadd.f32 %v1026, %v1044
  %v1050 = vadd.f32 %v1027, %v1044
  %v1051 = vadd.f32 %v1028, %v1044
  %v1052 = vadd.f32 %v1029, %v1044
  %v1053 = vadd.f32 %v1030, %v1044
  %v1054 = vadd.f32 %v1031, %v1044
  %v1055 = vadd.f32 %v1032, %v1044
  %v1056 = vadd.f32 %v1033, %v1044
  %v1057 = vadd.f32 %v1034, %v1044
  %v1058 = vadd.f32 %v1035, %v1044
  %v1059 = vadd.f32 %v1036, %v1044
  %v1060 = vadd.f32 %v1037, %v1044
  %v1061 = vadd.f32 %v1038, %v1044
  %v1078 = vrot.slane %v1046, 6
  %v1079 = vrot.slane %v1047, 6
  %v1080 = vsel %vm178, %v1078, %v1079
  %v1081 = vrot.slane %v1048, 6
  %v1082 = vrot.slane %v1049, 6
  %v1083 = vsel %vm178, %v1081, %v1082
  %v1084 = vrot.slane %v1050, 6
  %v1085 = vrot.slane %v1051, 6
  %v1086 = vsel %vm178, %v1084, %v1085
  %v1087 = vrot.slane %v1052, 6
  %v1088 = vrot.slane %v1053, 6
  %v1089 = vsel %vm178, %v1087, %v1088
  %v1090 = vrot.slane %v1054, 6
  %v1091 = vrot.slane %v1055, 6
  %v1092 = vsel %vm178, %v1090, %v1091
  %v1093 = vrot.slane %v1056, 6
  %v1094 = vrot.slane %v1057, 6
  %v1095 = vsel %vm178, %v1093, %v1094
  %v1096 = vrot.slane %v1058, 6
  %v1097 = vrot.slane %v1059, 6
  %v1098 = vsel %vm178, %v1096, %v1097
  %v1099 = vrot.slane %v1060, 6
  %v1100 = vrot.slane %v1061, 6
  %v1101 = vsel %vm178, %v1099, %v1100
  %v1126 = vsel %vm178, 0.0, %v1078
  %v1127 = vsel %vm178, 0.0, %v1081
  %v1128 = vsel %vm178, 0.0, %v1084
  %v1129 = vsel %vm178, 0.0, %v1087
  %v1130 = vsel %vm178, 0.0, %v1090
  %v1131 = vsel %vm178, 0.0, %v1093
  %v1132 = vsel %vm178, 0.0, %v1096
  %v1133 = vsel %vm178, 0.0, %v1099
  %v1134 = vsel %vm178, %v1079, 0.0
  %v1135 = vsel %vm178, %v1082, 0.0
  %v1136 = vsel %vm178, %v1085, 0.0
  %v1137 = vsel %vm178, %v1088, 0.0
  %v1138 = vsel %vm178, %v1091, 0.0
  %v1139 = vsel %vm178, %v1094, 0.0
  %v1140 = vsel %vm178, %v1097, 0.0
  %v1141 = vsel %vm178, %v1100, 0.0
  %v1158 = vrot.slane %v1126, 1
  %v1159 = vrot.slane %v1080, 1
  %v1160 = vsel %vm259, %v1158, %v1159
  %v1161 = vrot.slane %v1134, 1
  %v1162 = vsel %vm259, %v1159, %v1161
  %v1163 = vrot.slane %v1127, 1
  %v1164 = vrot.slane %v1083, 1
  %v1165 = vsel %vm259, %v1163, %v1164
  %v1166 = vrot.slane %v1135, 1
  %v1167 = vsel %vm259, %v1164, %v1166
  %v1168 = vrot.slane %v1128, 1
  %v1169 = vrot.slane %v1086, 1
  %v1170 = vsel %vm259, %v1168, %v1169
  %v1171 = vrot.slane %v1136, 1
  %v1172 = vsel %vm259, %v1169, %v1171
  %v1173 = vrot.slane %v1129, 1
  %v1174 = vrot.slane %v1089, 1
  %v1175 = vsel %vm259, %v1173, %v1174
  %v1176 = vrot.slane %v1137, 1
  %v1177 = vsel %vm259, %v1174, %v1176
  %v1178 = vrot.slane %v1130, 1
  %v1179 = vrot.slane %v1092, 1
  %v1180 = vsel %vm259, %v1178, %v1179
  %v1181 = vrot.slane %v1138, 1
  %v1182 = vsel %vm259, %v1179, %v1181
  %v1183 = vrot.slane %v1131, 1
  %v1184 = vrot.slane %v1095, 1
  %v1185 = vsel %vm259, %v1183, %v1184
  %v1186 = vrot.slane %v1139, 1
  %v1187 = vsel %vm259, %v1184, %v1186
  %v1188 = vrot.slane %v1132, 1
  %v1189 = vrot.slane %v1098, 1
  %v1190 = vsel %vm259, %v1188, %v1189
  %v1191 = vrot.slane %v1140, 1
  %v1192 = vsel %vm259, %v1189, %v1191
  %v1193 = vrot.slane %v1133, 1
  %v1194 = vrot.slane %v1101, 1
  %v1195 = vsel %vm259, %v1193, %v1194
  %v1196 = vrot.slane %v1141, 1
  %v1197 = vsel %vm259, %v1194, %v1196
  %1198 = vrot.lane.b32.xlu0 %v1160, 8
  %v1199 = vpop.permute.xlu0 %1198
  %1200 = vrot.lane.b32.xlu0 %v1162, 8
  %v1201 = vpop.permute.xlu0 %1200
  %1202 = vrot.lane.b32.xlu0 %v1165, 8
  %v1203 = vpop.permute.xlu0 %1202
  %1204 = vrot.lane.b32.xlu0 %v1167, 8
  %v1205 = vpop.permute.xlu0 %1204
  %1206 = vrot.lane.b32.xlu0 %v1170, 8
  %v1207 = vpop.permute.xlu0 %1206
  %1208 = vrot.lane.b32.xlu0 %v1172, 8
  %v1209 = vpop.permute.xlu0 %1208
  %1210 = vrot.lane.b32.xlu0 %v1175, 8
  %v1211 = vpop.permute.xlu0 %1210
  %1212 = vrot.lane.b32.xlu0 %v1177, 8
  %v1213 = vpop.permute.xlu0 %1212
  %1214 = vrot.lane.b32.xlu0 %v1180, 8
  %v1215 = vpop.permute.xlu0 %1214
  %1216 = vrot.lane.b32.xlu0 %v1182, 8
  %v1217 = vpop.permute.xlu0 %1216
  %1218 = vrot.lane.b32.xlu0 %v1185, 8
  %v1219 = vpop.permute.xlu0 %1218
  %1220 = vrot.lane.b32.xlu0 %v1187, 8
  %v1221 = vpop.permute.xlu0 %1220
  %1222 = vrot.lane.b32.xlu0 %v1190, 8
  %v1223 = vpop.permute.xlu0 %1222
  %1224 = vrot.lane.b32.xlu0 %v1192, 8
  %v1225 = vpop.permute.xlu0 %1224
  %1226 = vrot.lane.b32.xlu0 %v1195, 8
  %v1227 = vpop.permute.xlu0 %1226
  %1228 = vrot.lane.b32.xlu0 %v1197, 8
  %v1229 = vpop.permute.xlu0 %1228
  %v1246 = vrot.slane %v1126, 2
  %v1247 = vrot.slane %v1080, 2
  %v1248 = vsel %vm348, %v1246, %v1247
  %v1249 = vrot.slane %v1134, 2
  %v1250 = vsel %vm348, %v1247, %v1249
  %v1251 = vrot.slane %v1127, 2
  %v1252 = vrot.slane %v1083, 2
  %v1253 = vsel %vm348, %v1251, %v1252
  %v1254 = vrot.slane %v1135, 2
  %v1255 = vsel %vm348, %v1252, %v1254
  %v1256 = vrot.slane %v1128, 2
  %v1257 = vrot.slane %v1086, 2
  %v1258 = vsel %vm348, %v1256, %v1257
  %v1259 = vrot.slane %v1136, 2
  %v1260 = vsel %vm348, %v1257, %v1259
  %v1261 = vrot.slane %v1129, 2
  %v1262 = vrot.slane %v1089, 2
  %v1263 = vsel %vm348, %v1261, %v1262
  %v1264 = vrot.slane %v1137, 2
  %v1265 = vsel %vm348, %v1262, %v1264
  %v1266 = vrot.slane %v1130, 2
  %v1267 = vrot.slane %v1092, 2
  %v1268 = vsel %vm348, %v1266, %v1267
  %v1269 = vrot.slane %v1138, 2
  %v1270 = vsel %vm348, %v1267, %v1269
  %v1271 = vrot.slane %v1131, 2
  %v1272 = vrot.slane %v1095, 2
  %v1273 = vsel %vm348, %v1271, %v1272
  %v1274 = vrot.slane %v1139, 2
  %v1275 = vsel %vm348, %v1272, %v1274
  %v1276 = vrot.slane %v1132, 2
  %v1277 = vrot.slane %v1098, 2
  %v1278 = vsel %vm348, %v1276, %v1277
  %v1279 = vrot.slane %v1140, 2
  %v1280 = vsel %vm348, %v1277, %v1279
  %v1281 = vrot.slane %v1133, 2
  %v1282 = vrot.slane %v1101, 2
  %v1283 = vsel %vm348, %v1281, %v1282
  %v1284 = vrot.slane %v1141, 2
  %v1285 = vsel %vm348, %v1282, %v1284
  %1286 = vrot.lane.b32.xlu0 %v1248, 16
  %v1287 = vpop.permute.xlu0 %1286
  %1288 = vrot.lane.b32.xlu0 %v1250, 16
  %v1289 = vpop.permute.xlu0 %1288
  %1290 = vrot.lane.b32.xlu0 %v1253, 16
  %v1291 = vpop.permute.xlu0 %1290
  %1292 = vrot.lane.b32.xlu0 %v1255, 16
  %v1293 = vpop.permute.xlu0 %1292
  %1294 = vrot.lane.b32.xlu0 %v1258, 16
  %v1295 = vpop.permute.xlu0 %1294
  %1296 = vrot.lane.b32.xlu0 %v1260, 16
  %v1297 = vpop.permute.xlu0 %1296
  %1298 = vrot.lane.b32.xlu0 %v1263, 16
  %v1299 = vpop.permute.xlu0 %1298
  %1300 = vrot.lane.b32.xlu0 %v1265, 16
  %v1301 = vpop.permute.xlu0 %1300
  %1302 = vrot.lane.b32.xlu0 %v1268, 16
  %v1303 = vpop.permute.xlu0 %1302
  %1304 = vrot.lane.b32.xlu0 %v1270, 16
  %v1305 = vpop.permute.xlu0 %1304
  %1306 = vrot.lane.b32.xlu0 %v1273, 16
  %v1307 = vpop.permute.xlu0 %1306
  %1308 = vrot.lane.b32.xlu0 %v1275, 16
  %v1309 = vpop.permute.xlu0 %1308
  %1310 = vrot.lane.b32.xlu0 %v1278, 16
  %v1311 = vpop.permute.xlu0 %1310
  %1312 = vrot.lane.b32.xlu0 %v1280, 16
  %v1313 = vpop.permute.xlu0 %1312
  %1314 = vrot.lane.b32.xlu0 %v1283, 16
  %v1315 = vpop.permute.xlu0 %1314
  %1316 = vrot.lane.b32.xlu0 %v1285, 16
  %v1317 = vpop.permute.xlu0 %1316
  %v1334 = vrot.slane %v1126, 3
  %v1335 = vrot.slane %v1080, 3
  %v1336 = vsel %vm437, %v1334, %v1335
  %v1337 = vrot.slane %v1134, 3
  %v1338 = vsel %vm437, %v1335, %v1337
  %v1339 = vrot.slane %v1127, 3
  %v1340 = vrot.slane %v1083, 3
  %v1341 = vsel %vm437, %v1339, %v1340
  %v1342 = vrot.slane %v1135, 3
  %v1343 = vsel %vm437, %v1340, %v1342
  %v1344 = vrot.slane %v1128, 3
  %v1345 = vrot.slane %v1086, 3
  %v1346 = vsel %vm437, %v1344, %v1345
  %v1347 = vrot.slane %v1136, 3
  %v1348 = vsel %vm437, %v1345, %v1347
  %v1349 = vrot.slane %v1129, 3
  %v1350 = vrot.slane %v1089, 3
  %v1351 = vsel %vm437, %v1349, %v1350
  %v1352 = vrot.slane %v1137, 3
  %v1353 = vsel %vm437, %v1350, %v1352
  %v1354 = vrot.slane %v1130, 3
  %v1355 = vrot.slane %v1092, 3
  %v1356 = vsel %vm437, %v1354, %v1355
  %v1357 = vrot.slane %v1138, 3
  %v1358 = vsel %vm437, %v1355, %v1357
  %v1359 = vrot.slane %v1131, 3
  %v1360 = vrot.slane %v1095, 3
  %v1361 = vsel %vm437, %v1359, %v1360
  %v1362 = vrot.slane %v1139, 3
  %v1363 = vsel %vm437, %v1360, %v1362
  %v1364 = vrot.slane %v1132, 3
  %v1365 = vrot.slane %v1098, 3
  %v1366 = vsel %vm437, %v1364, %v1365
  %v1367 = vrot.slane %v1140, 3
  %v1368 = vsel %vm437, %v1365, %v1367
  %v1369 = vrot.slane %v1133, 3
  %v1370 = vrot.slane %v1101, 3
  %v1371 = vsel %vm437, %v1369, %v1370
  %v1372 = vrot.slane %v1141, 3
  %v1373 = vsel %vm437, %v1370, %v1372
  %1374 = vrot.lane.b32.xlu0 %v1336, 24
  %v1375 = vpop.permute.xlu0 %1374
  %1376 = vrot.lane.b32.xlu0 %v1338, 24
  %v1377 = vpop.permute.xlu0 %1376
  %1378 = vrot.lane.b32.xlu0 %v1341, 24
  %v1379 = vpop.permute.xlu0 %1378
  %1380 = vrot.lane.b32.xlu0 %v1343, 24
  %v1381 = vpop.permute.xlu0 %1380
  %1382 = vrot.lane.b32.xlu0 %v1346, 24
  %v1383 = vpop.permute.xlu0 %1382
  %1384 = vrot.lane.b32.xlu0 %v1348, 24
  %v1385 = vpop.permute.xlu0 %1384
  %1386 = vrot.lane.b32.xlu0 %v1351, 24
  %v1387 = vpop.permute.xlu0 %1386
  %1388 = vrot.lane.b32.xlu0 %v1353, 24
  %v1389 = vpop.permute.xlu0 %1388
  %1390 = vrot.lane.b32.xlu0 %v1356, 24
  %v1391 = vpop.permute.xlu0 %1390
  %1392 = vrot.lane.b32.xlu0 %v1358, 24
  %v1393 = vpop.permute.xlu0 %1392
  %1394 = vrot.lane.b32.xlu0 %v1361, 24
  %v1395 = vpop.permute.xlu0 %1394
  %1396 = vrot.lane.b32.xlu0 %v1363, 24
  %v1397 = vpop.permute.xlu0 %1396
  %1398 = vrot.lane.b32.xlu0 %v1366, 24
  %v1399 = vpop.permute.xlu0 %1398
  %1400 = vrot.lane.b32.xlu0 %v1368, 24
  %v1401 = vpop.permute.xlu0 %1400
  %1402 = vrot.lane.b32.xlu0 %v1371, 24
  %v1403 = vpop.permute.xlu0 %1402
  %1404 = vrot.lane.b32.xlu0 %v1373, 24
  %v1405 = vpop.permute.xlu0 %1404
  %v1422 = vrot.slane %v1126, 4
  %v1423 = vrot.slane %v1080, 4
  %v1424 = vsel %vm526, %v1422, %v1423
  %v1425 = vrot.slane %v1134, 4
  %v1426 = vsel %vm526, %v1423, %v1425
  %v1427 = vrot.slane %v1127, 4
  %v1428 = vrot.slane %v1083, 4
  %v1429 = vsel %vm526, %v1427, %v1428
  %v1430 = vrot.slane %v1135, 4
  %v1431 = vsel %vm526, %v1428, %v1430
  %v1432 = vrot.slane %v1128, 4
  %v1433 = vrot.slane %v1086, 4
  %v1434 = vsel %vm526, %v1432, %v1433
  %v1435 = vrot.slane %v1136, 4
  %v1436 = vsel %vm526, %v1433, %v1435
  %v1437 = vrot.slane %v1129, 4
  %v1438 = vrot.slane %v1089, 4
  %v1439 = vsel %vm526, %v1437, %v1438
  %v1440 = vrot.slane %v1137, 4
  %v1441 = vsel %vm526, %v1438, %v1440
  %v1442 = vrot.slane %v1130, 4
  %v1443 = vrot.slane %v1092, 4
  %v1444 = vsel %vm526, %v1442, %v1443
  %v1445 = vrot.slane %v1138, 4
  %v1446 = vsel %vm526, %v1443, %v1445
  %v1447 = vrot.slane %v1131, 4
  %v1448 = vrot.slane %v1095, 4
  %v1449 = vsel %vm526, %v1447, %v1448
  %v1450 = vrot.slane %v1139, 4
  %v1451 = vsel %vm526, %v1448, %v1450
  %v1452 = vrot.slane %v1132, 4
  %v1453 = vrot.slane %v1098, 4
  %v1454 = vsel %vm526, %v1452, %v1453
  %v1455 = vrot.slane %v1140, 4
  %v1456 = vsel %vm526, %v1453, %v1455
  %v1457 = vrot.slane %v1133, 4
  %v1458 = vrot.slane %v1101, 4
  %v1459 = vsel %vm526, %v1457, %v1458
  %v1460 = vrot.slane %v1141, 4
  %v1461 = vsel %vm526, %v1458, %v1460
  %1462 = vrot.lane.b32.xlu0 %v1424, 32
  %v1463 = vpop.permute.xlu0 %1462
  %1464 = vrot.lane.b32.xlu0 %v1426, 32
  %v1465 = vpop.permute.xlu0 %1464
  %1466 = vrot.lane.b32.xlu0 %v1429, 32
  %v1467 = vpop.permute.xlu0 %1466
  %1468 = vrot.lane.b32.xlu0 %v1431, 32
  %v1469 = vpop.permute.xlu0 %1468
  %1470 = vrot.lane.b32.xlu0 %v1434, 32
  %v1471 = vpop.permute.xlu0 %1470
  %1472 = vrot.lane.b32.xlu0 %v1436, 32
  %v1473 = vpop.permute.xlu0 %1472
  %1474 = vrot.lane.b32.xlu0 %v1439, 32
  %v1475 = vpop.permute.xlu0 %1474
  %1476 = vrot.lane.b32.xlu0 %v1441, 32
  %v1477 = vpop.permute.xlu0 %1476
  %1478 = vrot.lane.b32.xlu0 %v1444, 32
  %v1479 = vpop.permute.xlu0 %1478
  %1480 = vrot.lane.b32.xlu0 %v1446, 32
  %v1481 = vpop.permute.xlu0 %1480
  %1482 = vrot.lane.b32.xlu0 %v1449, 32
  %v1483 = vpop.permute.xlu0 %1482
  %1484 = vrot.lane.b32.xlu0 %v1451, 32
  %v1485 = vpop.permute.xlu0 %1484
  %1486 = vrot.lane.b32.xlu0 %v1454, 32
  %v1487 = vpop.permute.xlu0 %1486
  %1488 = vrot.lane.b32.xlu0 %v1456, 32
  %v1489 = vpop.permute.xlu0 %1488
  %1490 = vrot.lane.b32.xlu0 %v1459, 32
  %v1491 = vpop.permute.xlu0 %1490
  %1492 = vrot.lane.b32.xlu0 %v1461, 32
  %v1493 = vpop.permute.xlu0 %1492
  %v1510 = vsel %vm632, %v1126, %v1199
  %v1511 = vsel %vm632, %v1080, %v1201
  %v1512 = vsel %vm632, %v1127, %v1203
  %v1513 = vsel %vm632, %v1083, %v1205
  %v1514 = vsel %vm632, %v1128, %v1207
  %v1515 = vsel %vm632, %v1086, %v1209
  %v1516 = vsel %vm632, %v1129, %v1211
  %v1517 = vsel %vm632, %v1089, %v1213
  %v1518 = vsel %vm632, %v1130, %v1215
  %v1519 = vsel %vm632, %v1092, %v1217
  %v1520 = vsel %vm632, %v1131, %v1219
  %v1521 = vsel %vm632, %v1095, %v1221
  %v1522 = vsel %vm632, %v1132, %v1223
  %v1523 = vsel %vm632, %v1098, %v1225
  %v1524 = vsel %vm632, %v1133, %v1227
  %v1525 = vsel %vm632, %v1101, %v1229
  %v1526 = vsel %vm666, %v1510, %v1287
  %v1527 = vsel %vm666, %v1511, %v1289
  %v1528 = vsel %vm666, %v1512, %v1291
  %v1529 = vsel %vm666, %v1513, %v1293
  %v1530 = vsel %vm666, %v1514, %v1295
  %v1531 = vsel %vm666, %v1515, %v1297
  %v1532 = vsel %vm666, %v1516, %v1299
  %v1533 = vsel %vm666, %v1517, %v1301
  %v1534 = vsel %vm666, %v1518, %v1303
  %v1535 = vsel %vm666, %v1519, %v1305
  %v1536 = vsel %vm666, %v1520, %v1307
  %v1537 = vsel %vm666, %v1521, %v1309
  %v1538 = vsel %vm666, %v1522, %v1311
  %v1539 = vsel %vm666, %v1523, %v1313
  %v1540 = vsel %vm666, %v1524, %v1315
  %v1541 = vsel %vm666, %v1525, %v1317
  %vm1542 = vcmask 195584
  %v1543 = vsel %vm1542, %v1526, %v1375
  %v1544 = vsel %vm1542, %v1527, %v1377
  %v1545 = vsel %vm1542, %v1528, %v1379
  %v1546 = vsel %vm1542, %v1529, %v1381
  %v1547 = vsel %vm1542, %v1530, %v1383
  %v1548 = vsel %vm1542, %v1531, %v1385
  %v1549 = vsel %vm1542, %v1532, %v1387
  %v1550 = vsel %vm1542, %v1533, %v1389
  %v1551 = vsel %vm1542, %v1534, %v1391
  %v1552 = vsel %vm1542, %v1535, %v1393
  %v1553 = vsel %vm1542, %v1536, %v1395
  %v1554 = vsel %vm1542, %v1537, %v1397
  %v1555 = vsel %vm1542, %v1538, %v1399
  %v1556 = vsel %vm1542, %v1539, %v1401
  %v1557 = vsel %vm1542, %v1540, %v1403
  %v1558 = vsel %vm1542, %v1541, %v1405
  %vm1559 = vcmask 261120
  %v1560 = vsel %vm1559, %v1543, %v1463
  %v1561 = vsel %vm1559, %v1544, %v1465
  %v1562 = vsel %vm1559, %v1545, %v1467
  %v1563 = vsel %vm1559, %v1546, %v1469
  %v1564 = vsel %vm1559, %v1547, %v1471
  %v1565 = vsel %vm1559, %v1548, %v1473
  %v1566 = vsel %vm1559, %v1549, %v1475
  %v1567 = vsel %vm1559, %v1550, %v1477
  %v1568 = vsel %vm1559, %v1551, %v1479
  %v1569 = vsel %vm1559, %v1552, %v1481
  %v1570 = vsel %vm1559, %v1553, %v1483
  %v1571 = vsel %vm1559, %v1554, %v1485
  %v1572 = vsel %vm1559, %v1555, %v1487
  %v1573 = vsel %vm1559, %v1556, %v1489
  %v1574 = vsel %vm1559, %v1557, %v1491
  %v1575 = vsel %vm1559, %v1558, %v1493
  %v1576 = vld [vmem:[%s15] sm:$0xff]
  %v1577 = vld [vmem:[%s15 + $0x8] sm:$0xff]
  %v1578 = vld [vmem:[%s15 + $0x10] sm:$0xff]
  %v1579 = vld [vmem:[%s15 + $0x18] sm:$0xff]
  %v1580 = vld [vmem:[%s15 + $0x20] sm:$0xff]
  %v1581 = vld [vmem:[%s17] sm:$0x1]
  %v1583 = vlaneseq
  %v1584 = vshrl.u32 %v1583, 7
  %v1585 = vsub.s32 0, %v1584
  %v1586 = vrot.slane %v1581, %v1585
  %vm1588 = vcmask 326656
  %v1590 = vsel %vm1588, %v1560, 0
  %v1593 = vsel %vm1588, %v1561, 0
  %v1596 = vsel %vm1588, %v1562, 0
  %v1599 = vsel %vm1588, %v1563, 0
  %v1602 = vsel %vm1588, %v1564, 0
  %v1605 = vsel %vm1588, %v1565, 0
  %v1608 = vsel %vm1588, %v1566, 0
  %v1611 = vsel %vm1588, %v1567, 0
  %v1614 = vsel %vm1588, %v1568, 0
  %v1617 = vsel %vm1588, %v1569, 0
  %v1620 = vsel %vm1588, %v1570, 0
  %v1623 = vsel %vm1588, %v1571, 0
  %v1626 = vsel %vm1588, %v1572, 0
  %v1629 = vsel %vm1588, %v1573, 0
  %v1632 = vsel %vm1588, %v1574, 0
  %v1635 = vsel %vm1588, %v1575, 0
  %1637 = vmatprep.subr.mxu0 0.0
  %1638 = vmatpush1.msra.mxu0 %v1576
  %1639 = vmatprep.subr.mxu0 0.0
  %1640 = vmatpush1.msra.mxu0 %v1577
  %1641 = vmatprep.subr.mxu0 0.0
  %1642 = vmatpush1.msra.mxu0 %v1578
  %1643 = vmatprep.subr.mxu0 0.0
  %1644 = vmatpush1.msra.mxu0 %v1579
  %1645 = vmatprep.subr.mxu0 0.0
  %1646 = vmatpush1.msra.mxu0 %v1580
  %1647 = vmatprep.subr.mxu0 0.0
  %1648 = vmatpush1.msra.mxu0 0.0
  %1649 = vmatprep.subr.mxu0 0.0
  %1650 = vmatpush1.msra.mxu0 0.0
  %1651 = vmatprep.subr.mxu0 0.0
  %1652 = vmatpush1.msra.mxu0 0.0
  %1653 = vmatprep.subr.mxu0 0.0
  %1654 = vmatpush1.msra.mxu0 0.0
  %1655 = vmatprep.subr.mxu0 0.0
  %1656 = vmatpush1.msra.mxu0 0.0
  %1657 = vmatprep.subr.mxu0 0.0
  %1658 = vmatpush1.msra.mxu0 0.0
  %1659 = vmatprep.subr.mxu0 0.0
  %1660 = vmatpush1.msra.mxu0 0.0
  %1661 = vmatprep.subr.mxu0 0.0
  %1662 = vmatpush1.msra.mxu0 0.0
  %1663 = vmatprep.subr.mxu0 0.0
  %1664 = vmatpush1.msra.mxu0 0.0
  %1665 = vmatprep.subr.mxu0 0.0
  %1666 = vmatpush1.msra.mxu0 0.0
  %1667 = vmatprep.subr.mxu0 0.0
  %1668 = vmatpush1.msra.mxu0 0.0
  %1669 = vmatprep.subr.mxu0 0.0
  %1670 = vmatpush1.msra.mxu0 0.0
  %1671 = vmatprep.subr.mxu0 0.0
  %1672 = vmatpush1.msra.mxu0 0.0
  %1673 = vmatprep.subr.mxu0 0.0
  %1674 = vmatpush1.msra.mxu0 0.0
  %1675 = vmatprep.subr.mxu0 0.0
  %1676 = vmatpush1.msra.mxu0 0.0
  %1677 = vmatprep.subr.mxu0 0.0
  %1678 = vmatpush1.msra.mxu0 0.0
  %1679 = vmatprep.subr.mxu0 0.0
  %1680 = vmatpush1.msra.mxu0 0.0
  %1681 = vmatprep.subr.mxu0 0.0
  %1682 = vmatpush1.msra.mxu0 0.0
  %1683 = vmatprep.subr.mxu0 0.0
  %1684 = vmatpush1.msra.mxu0 0.0
  %1685 = vmatprep.subr.mxu0 0.0
  %1686 = vmatpush1.msra.mxu0 0.0
  %1687 = vmatprep.subr.mxu0 0.0
  %1688 = vmatpush1.msra.mxu0 0.0
  %1689 = vmatprep.subr.mxu0 0.0
  %1690 = vmatpush1.msra.mxu0 0.0
  %1691 = vmatprep.subr.mxu0 0.0
  %1692 = vmatpush1.msra.mxu0 0.0
  %1693 = vmatprep.subr.mxu0 0.0
  %1694 = vmatpush1.msra.mxu0 0.0
  %1695 = vmatprep.subr.mxu0 0.0
  %1696 = vmatpush1.msra.mxu0 0.0
  %1697 = vmatprep.subr.mxu0 0.0
  %1698 = vmatpush1.msra.mxu0 0.0
  %1699 = vmatprep.subr.mxu0 0.0
  %1700 = vmatpush1.msra.mxu0 0.0
  %1701 = vmatprep.mubr.f32.mxu0 0.0
  %1702 = vmatmul.mubr.f32.gmra.mrb[0].mxu0 %v1590
  %v1703 = vpop.f32.mrb[0].mxu0
  %v1704 = vadd.f32 %v1586, %v1703
  %v1705 = vpop.f32.mrb[0].mxu0
  %1706 = vmatprep.mubr.f32.mxu0 0.0
  %1707 = vmatmul.mubr.f32.gmra.mrb[0].mxu0 %v1593
  %v1708 = vpop.f32.mrb[0].mxu0
  %v1709 = vadd.f32 %v1586, %v1708
  %v1710 = vpop.f32.mrb[0].mxu0
  %1711 = vmatprep.mubr.f32.mxu0 0.0
  %1712 = vmatmul.mubr.f32.gmra.mrb[0].mxu0 %v1596
  %v1713 = vpop.f32.mrb[0].mxu0
  %v1714 = vadd.f32 %v1586, %v1713
  %v1715 = vpop.f32.mrb[0].mxu0
  %1716 = vmatprep.mubr.f32.mxu0 0.0
  %1717 = vmatmul.mubr.f32.gmra.mrb[0].mxu0 %v1599
  %v1718 = vpop.f32.mrb[0].mxu0
  %v1719 = vadd.f32 %v1586, %v1718
  %v1720 = vpop.f32.mrb[0].mxu0
  %1721 = vmatprep.mubr.f32.mxu0 0.0
  %1722 = vmatmul.mubr.f32.gmra.mrb[0].mxu0 %v1602
  %v1723 = vpop.f32.mrb[0].mxu0
  %v1724 = vadd.f32 %v1586, %v1723
  %v1725 = vpop.f32.mrb[0].mxu0
  %1726 = vmatprep.mubr.f32.mxu0 0.0
  %1727 = vmatmul.mubr.f32.gmra.mrb[0].mxu0 %v1605
  %v1728 = vpop.f32.mrb[0].mxu0
  %v1729 = vadd.f32 %v1586, %v1728
  %v1730 = vpop.f32.mrb[0].mxu0
  %1731 = vmatprep.mubr.f32.mxu0 0.0
  %1732 = vmatmul.mubr.f32.gmra.mrb[0].mxu0 %v1608
  %v1733 = vpop.f32.mrb[0].mxu0
  %v1734 = vadd.f32 %v1586, %v1733
  %v1735 = vpop.f32.mrb[0].mxu0
  %1736 = vmatprep.mubr.f32.mxu0 0.0
  %1737 = vmatmul.mubr.f32.gmra.mrb[0].mxu0 %v1611
  %v1738 = vpop.f32.mrb[0].mxu0
  %v1739 = vadd.f32 %v1586, %v1738
  %v1740 = vpop.f32.mrb[0].mxu0
  %1741 = vmatprep.mubr.f32.mxu0 0.0
  %1742 = vmatmul.mubr.f32.gmra.mrb[0].mxu0 %v1614
  %v1743 = vpop.f32.mrb[0].mxu0
  %v1744 = vadd.f32 %v1586, %v1743
  %v1745 = vpop.f32.mrb[0].mxu0
  %1746 = vmatprep.mubr.f32.mxu0 0.0
  %1747 = vmatmul.mubr.f32.gmra.mrb[0].mxu0 %v1617
  %v1748 = vpop.f32.mrb[0].mxu0
  %v1749 = vadd.f32 %v1586, %v1748
  %v1750 = vpop.f32.mrb[0].mxu0
  %1751 = vmatprep.mubr.f32.mxu0 0.0
  %1752 = vmatmul.mubr.f32.gmra.mrb[0].mxu0 %v1620
  %v1753 = vpop.f32.mrb[0].mxu0
  %v1754 = vadd.f32 %v1586, %v1753
  %v1755 = vpop.f32.mrb[0].mxu0
  %1756 = vmatprep.mubr.f32.mxu0 0.0
  %1757 = vmatmul.mubr.f32.gmra.mrb[0].mxu0 %v1623
  %v1758 = vpop.f32.mrb[0].mxu0
  %v1759 = vadd.f32 %v1586, %v1758
  %v1760 = vpop.f32.mrb[0].mxu0
  %1761 = vmatprep.mubr.f32.mxu0 0.0
  %1762 = vmatmul.mubr.f32.gmra.mrb[0].mxu0 %v1626
  %v1763 = vpop.f32.mrb[0].mxu0
  %v1764 = vadd.f32 %v1586, %v1763
  %v1765 = vpop.f32.mrb[0].mxu0
  %1766 = vmatprep.mubr.f32.mxu0 0.0
  %1767 = vmatmul.mubr.f32.gmra.mrb[0].mxu0 %v1629
  %v1768 = vpop.f32.mrb[0].mxu0
  %v1769 = vadd.f32 %v1586, %v1768
  %v1770 = vpop.f32.mrb[0].mxu0
  %1771 = vmatprep.mubr.f32.mxu0 0.0
  %1772 = vmatmul.mubr.f32.gmra.mrb[0].mxu0 %v1632
  %v1773 = vpop.f32.mrb[0].mxu0
  %v1774 = vadd.f32 %v1586, %v1773
  %v1775 = vpop.f32.mrb[0].mxu0
  %1776 = vmatprep.mubr.f32.mxu0 0.0
  %1777 = vmatmul.mubr.f32.gmra.mrb[0].mxu0 %v1635
  %v1778 = vpop.f32.mrb[0].mxu0
  %v1779 = vadd.f32 %v1586, %v1778
  %v1780 = vpop.f32.mrb[0].mxu0
  %1781 = vdwg.mxu0
  %v1782 = vsel %vm632, %v1704, 0.0
  %v1783 = vsel %vm632, %v1709, 0.0
  %v1784 = vadd.f32 %v1782, %v1783
  %v1785 = vsel %vm632, %v1714, 0.0
  %v1786 = vadd.f32 %v1784, %v1785
  %v1787 = vsel %vm632, %v1719, 0.0
  %v1788 = vadd.f32 %v1786, %v1787
  %v1789 = vsel %vm632, %v1724, 0.0
  %v1790 = vadd.f32 %v1788, %v1789
  %v1791 = vsel %vm632, %v1729, 0.0
  %v1792 = vadd.f32 %v1790, %v1791
  %v1793 = vsel %vm632, %v1734, 0.0
  %v1794 = vadd.f32 %v1792, %v1793
  %v1795 = vsel %vm632, %v1739, 0.0
  %v1796 = vadd.f32 %v1794, %v1795
  %v1797 = vsel %vm632, %v1744, 0.0
  %v1798 = vadd.f32 %v1796, %v1797
  %v1799 = vsel %vm632, %v1749, 0.0
  %v1800 = vadd.f32 %v1798, %v1799
  %v1801 = vsel %vm632, %v1754, 0.0
  %v1802 = vadd.f32 %v1800, %v1801
  %v1803 = vsel %vm632, %v1759, 0.0
  %v1804 = vadd.f32 %v1802, %v1803
  %v1805 = vsel %vm632, %v1764, 0.0
  %v1806 = vadd.f32 %v1804, %v1805
  %v1807 = vsel %vm632, %v1769, 0.0
  %v1808 = vadd.f32 %v1806, %v1807
  %v1809 = vsel %vm632, %v1774, 0.0
  %v1810 = vadd.f32 %v1808, %v1809
  %v1811 = vsel %vm632, %v1779, 0.0
  %v1812 = vadd.f32 %v1810, %v1811
  %v1813 = vrot.slane %v1812, 4
  %v1814 = vadd.f32 %v1812, %v1813
  %v1815 = vrot.slane %v1814, 2
  %v1816 = vadd.f32 %v1814, %v1815
  %v1817 = vrot.slane %v1816, 1
  %v1818 = vadd.f32 %v1816, %v1817
  %v1819 = vmul.f32 %v1818, 0.0078125
  %v1820 = vsub.f32 %v1704, %v1819
  %v1821 = vsub.f32 %v1709, %v1819
  %v1822 = vsub.f32 %v1714, %v1819
  %v1823 = vsub.f32 %v1719, %v1819
  %v1824 = vsub.f32 %v1724, %v1819
  %v1825 = vsub.f32 %v1729, %v1819
  %v1826 = vsub.f32 %v1734, %v1819
  %v1827 = vsub.f32 %v1739, %v1819
  %v1828 = vsub.f32 %v1744, %v1819
  %v1829 = vsub.f32 %v1749, %v1819
  %v1830 = vsub.f32 %v1754, %v1819
  %v1831 = vsub.f32 %v1759, %v1819
  %v1832 = vsub.f32 %v1764, %v1819
  %v1833 = vsub.f32 %v1769, %v1819
  %v1834 = vsub.f32 %v1774, %v1819
  %v1835 = vsub.f32 %v1779, %v1819
  %v1836 = vmul.f32 %v1820, %v1820
  %v1837 = vmul.f32 %v1821, %v1821
  %v1838 = vmul.f32 %v1822, %v1822
  %v1839 = vmul.f32 %v1823, %v1823
  %v1840 = vmul.f32 %v1824, %v1824
  %v1841 = vmul.f32 %v1825, %v1825
  %v1842 = vmul.f32 %v1826, %v1826
  %v1843 = vmul.f32 %v1827, %v1827
  %v1844 = vmul.f32 %v1828, %v1828
  %v1845 = vmul.f32 %v1829, %v1829
  %v1846 = vmul.f32 %v1830, %v1830
  %v1847 = vmul.f32 %v1831, %v1831
  %v1848 = vmul.f32 %v1832, %v1832
  %v1849 = vmul.f32 %v1833, %v1833
  %v1850 = vmul.f32 %v1834, %v1834
  %v1851 = vmul.f32 %v1835, %v1835
  %v1852 = vsel %vm632, %v1836, 0.0
  %v1853 = vsel %vm632, %v1837, 0.0
  %v1854 = vadd.f32 %v1852, %v1853
  %v1855 = vsel %vm632, %v1838, 0.0
  %v1856 = vadd.f32 %v1854, %v1855
  %v1857 = vsel %vm632, %v1839, 0.0
  %v1858 = vadd.f32 %v1856, %v1857
  %v1859 = vsel %vm632, %v1840, 0.0
  %v1860 = vadd.f32 %v1858, %v1859
  %v1861 = vsel %vm632, %v1841, 0.0
  %v1862 = vadd.f32 %v1860, %v1861
  %v1863 = vsel %vm632, %v1842, 0.0
  %v1864 = vadd.f32 %v1862, %v1863
  %v1865 = vsel %vm632, %v1843, 0.0
  %v1866 = vadd.f32 %v1864, %v1865
  %v1867 = vsel %vm632, %v1844, 0.0
  %v1868 = vadd.f32 %v1866, %v1867
  %v1869 = vsel %vm632, %v1845, 0.0
  %v1870 = vadd.f32 %v1868, %v1869
  %v1871 = vsel %vm632, %v1846, 0.0
  %v1872 = vadd.f32 %v1870, %v1871
  %v1873 = vsel %vm632, %v1847, 0.0
  %v1874 = vadd.f32 %v1872, %v1873
  %v1875 = vsel %vm632, %v1848, 0.0
  %v1876 = vadd.f32 %v1874, %v1875
  %v1877 = vsel %vm632, %v1849, 0.0
  %v1878 = vadd.f32 %v1876, %v1877
  %v1879 = vsel %vm632, %v1850, 0.0
  %v1880 = vadd.f32 %v1878, %v1879
  %v1881 = vsel %vm632, %v1851, 0.0
  %v1882 = vadd.f32 %v1880, %v1881
  %v1883 = vrot.slane %v1882, 4
  %v1884 = vadd.f32 %v1882, %v1883
  %v1885 = vrot.slane %v1884, 2
  %v1886 = vadd.f32 %v1884, %v1885
  %v1887 = vrot.slane %v1886, 1
  %v1888 = vadd.f32 %v1886, %v1887
  %v1889 = vmul.f32 %v1888, 0.0078125
  %v1890 = vadd.f32 %v1889, 1e-05
  %v1891 = vrsqrt.pop %v1890
  %v1892 = vmul.f32 %v1820, %v1891
  %v1893 = vmul.f32 %v1821, %v1891
  %v1894 = vmul.f32 %v1822, %v1891
  %v1895 = vmul.f32 %v1823, %v1891
  %v1896 = vmul.f32 %v1824, %v1891
  %v1897 = vmul.f32 %v1825, %v1891
  %v1898 = vmul.f32 %v1826, %v1891
  %v1899 = vmul.f32 %v1827, %v1891
  %v1900 = vmul.f32 %v1828, %v1891
  %v1901 = vmul.f32 %v1829, %v1891
  %v1902 = vmul.f32 %v1830, %v1891
  %v1903 = vmul.f32 %v1831, %v1891
  %v1904 = vmul.f32 %v1832, %v1891
  %v1905 = vmul.f32 %v1833, %v1891
  %v1906 = vmul.f32 %v1834, %v1891
  %v1907 = vmul.f32 %v1835, %v1891
  %v1908 = vld [vmem:[%s19] sm:$0x1]
  %v1910 = vlaneseq
  %v1911 = vshrl.u32 %v1910, 7
  %v1912 = vsub.s32 0, %v1911
  %v1913 = vrot.slane %v1908, %v1912
  %v1915 = vmul.f32 %v1892, %v1913
  %v1916 = vmul.f32 %v1893, %v1913
  %v1917 = vmul.f32 %v1894, %v1913
  %v1918 = vmul.f32 %v1895, %v1913
  %v1919 = vmul.f32 %v1896, %v1913
  %v1920 = vmul.f32 %v1897, %v1913
  %v1921 = vmul.f32 %v1898, %v1913
  %v1922 = vmul.f32 %v1899, %v1913
  %v1923 = vmul.f32 %v1900, %v1913
  %v1924 = vmul.f32 %v1901, %v1913
  %v1925 = vmul.f32 %v1902, %v1913
  %v1926 = vmul.f32 %v1903, %v1913
  %v1927 = vmul.f32 %v1904, %v1913
  %v1928 = vmul.f32 %v1905, %v1913
  %v1929 = vmul.f32 %v1906, %v1913
  %v1930 = vmul.f32 %v1907, %v1913
  %v1931 = vld [vmem:[%s21] sm:$0x1]
  %v1933 = vlaneseq
  %v1934 = vshrl.u32 %v1933, 7
  %v1935 = vsub.s32 0, %v1934
  %v1936 = vrot.slane %v1931, %v1935
  %v1938 = vadd.f32 %v1915, %v1936
  %v1939 = vadd.f32 %v1916, %v1936
  %v1940 = vadd.f32 %v1917, %v1936
  %v1941 = vadd.f32 %v1918, %v1936
  %v1942 = vadd.f32 %v1919, %v1936
  %v1943 = vadd.f32 %v1920, %v1936
  %v1944 = vadd.f32 %v1921, %v1936
  %v1945 = vadd.f32 %v1922, %v1936
  %v1946 = vadd.f32 %v1923, %v1936
  %v1947 = vadd.f32 %v1924, %v1936
  %v1948 = vadd.f32 %v1925, %v1936
  %v1949 = vadd.f32 %v1926, %v1936
  %v1950 = vadd.f32 %v1927, %v1936
  %v1951 = vadd.f32 %v1928, %v1936
  %v1952 = vadd.f32 %v1929, %v1936
  %v1953 = vadd.f32 %v1930, %v1936
  %vm1954 = vcmask 58368
  %v1955 = vsel %vm1954, %v1938, -inf
  %v1956 = vrot.slane %v1955, 4
  %v1957 = vmax.f32 %v1955, %v1956
  %v1958 = vrot.slane %v1957, 2
  %v1959 = vmax.f32 %v1957, %v1958
  %v1960 = vrot.slane %v1959, 1
  %v1961 = vmax.f32 %v1959, %v1960
  %v1962 = vsel %vm1954, %v1940, -inf
  %v1963 = vrot.slane %v1962, 4
  %v1964 = vmax.f32 %v1962, %v1963
  %v1965 = vrot.slane %v1964, 2
  %v1966 = vmax.f32 %v1964, %v1965
  %v1967 = vrot.slane %v1966, 1
  %v1968 = vmax.f32 %v1966, %v1967
  %v1969 = vsel %vm1954, %v1942, -inf
  %v1970 = vrot.slane %v1969, 4
  %v1971 = vmax.f32 %v1969, %v1970
  %v1972 = vrot.slane %v1971, 2
  %v1973 = vmax.f32 %v1971, %v1972
  %v1974 = vrot.slane %v1973, 1
  %v1975 = vmax.f32 %v1973, %v1974
  %v1976 = vsel %vm1954, %v1944, -inf
  %v1977 = vrot.slane %v1976, 4
  %v1978 = vmax.f32 %v1976, %v1977
  %v1979 = vrot.slane %v1978, 2
  %v1980 = vmax.f32 %v1978, %v1979
  %v1981 = vrot.slane %v1980, 1
  %v1982 = vmax.f32 %v1980, %v1981
  %v1983 = vsel %vm1954, %v1946, -inf
  %v1984 = vrot.slane %v1983, 4
  %v1985 = vmax.f32 %v1983, %v1984
  %v1986 = vrot.slane %v1985, 2
  %v1987 = vmax.f32 %v1985, %v1986
  %v1988 = vrot.slane %v1987, 1
  %v1989 = vmax.f32 %v1987, %v1988
  %v1990 = vsel %vm1954, %v1948, -inf
  %v1991 = vrot.slane %v1990, 4
  %v1992 = vmax.f32 %v1990, %v1991
  %v1993 = vrot.slane %v1992, 2
  %v1994 = vmax.f32 %v1992, %v1993
  %v1995 = vrot.slane %v1994, 1
  %v1996 = vmax.f32 %v1994, %v1995
  %v1997 = vsel %vm1954, %v1950, -inf
  %v1998 = vrot.slane %v1997, 4
  %v1999 = vmax.f32 %v1997, %v1998
  %v2000 = vrot.slane %v1999, 2
  %v2001 = vmax.f32 %v1999, %v2000
  %v2002 = vrot.slane %v2001, 1
  %v2003 = vmax.f32 %v2001, %v2002
  %v2004 = vsel %vm1954, %v1952, -inf
  %v2005 = vrot.slane %v2004, 4
  %v2006 = vmax.f32 %v2004, %v2005
  %v2007 = vrot.slane %v2006, 2
  %v2008 = vmax.f32 %v2006, %v2007
  %v2009 = vrot.slane %v2008, 1
  %v2010 = vmax.f32 %v2008, %v2009
  %vm2011 = vcmask 60418
  %v2012 = vsel %vm2011, %v1938, -inf
  %v2013 = vrot.slane %v2012, 4
  %v2014 = vmax.f32 %v2012, %v2013
  %v2015 = vrot.slane %v2014, 2
  %v2016 = vmax.f32 %v2014, %v2015
  %v2017 = vrot.slane %v2016, 1
  %v2018 = vmax.f32 %v2016, %v2017
  %v2019 = vsel %vm2011, %v1940, -inf
  %v2020 = vrot.slane %v2019, 4
  %v2021 = vmax.f32 %v2019, %v2020
  %v2022 = vrot.slane %v2021, 2
  %v2023 = vmax.f32 %v2021, %v2022
  %v2024 = vrot.slane %v2023, 1
  %v2025 = vmax.f32 %v2023, %v2024
  %v2026 = vsel %vm2011, %v1942, -inf
  %v2027 = vrot.slane %v2026, 4
  %v2028 = vmax.f32 %v2026, %v2027
  %v2029 = vrot.slane %v2028, 2
  %v2030 = vmax.f32 %v2028, %v2029
  %v2031 = vrot.slane %v2030, 1
  %v2032 = vmax.f32 %v2030, %v2031
  %v2033 = vsel %vm2011, %v1944, -inf
  %v2034 = vrot.slane %v2033, 4
  %v2035 = vmax.f32 %v2033, %v2034
  %v2036 = vrot.slane %v2035, 2
  %v2037 = vmax.f32 %v2035, %v2036
  %v2038 = vrot.slane %v2037, 1
  %v2039 = vmax.f32 %v2037, %v2038
  %v2040 = vsel %vm2011, %v1946, -inf
  %v2041 = vrot.slane %v2040, 4
  %v2042 = vmax.f32 %v2040, %v2041
  %v2043 = vrot.slane %v2042, 2
  %v2044 = vmax.f32 %v2042, %v2043
  %v2045 = vrot.slane %v2044, 1
  %v2046 = vmax.f32 %v2044, %v2045
  %v2047 = vsel %vm2011, %v1948, -inf
  %v2048 = vrot.slane %v2047, 4
  %v2049 = vmax.f32 %v2047, %v2048
  %v2050 = vrot.slane %v2049, 2
  %v2051 = vmax.f32 %v2049, %v2050
  %v2052 = vrot.slane %v2051, 1
  %v2053 = vmax.f32 %v2051, %v2052
  %v2054 = vsel %vm2011, %v1950, -inf
  %v2055 = vrot.slane %v2054, 4
  %v2056 = vmax.f32 %v2054, %v2055
  %v2057 = vrot.slane %v2056, 2
  %v2058 = vmax.f32 %v2056, %v2057
  %v2059 = vrot.slane %v2058, 1
  %v2060 = vmax.f32 %v2058, %v2059
  %v2061 = vsel %vm2011, %v1952, -inf
  %v2062 = vrot.slane %v2061, 4
  %v2063 = vmax.f32 %v2061, %v2062
  %v2064 = vrot.slane %v2063, 2
  %v2065 = vmax.f32 %v2063, %v2064
  %v2066 = vrot.slane %v2065, 1
  %v2067 = vmax.f32 %v2065, %v2066
  %vm2068 = vcmask 62468
  %v2069 = vsel %vm2068, %v1938, -inf
  %v2070 = vrot.slane %v2069, 4
  %v2071 = vmax.f32 %v2069, %v2070
  %v2072 = vrot.slane %v2071, 2
  %v2073 = vmax.f32 %v2071, %v2072
  %v2074 = vrot.slane %v2073, 1
  %v2075 = vmax.f32 %v2073, %v2074
  %v2076 = vsel %vm2068, %v1940, -inf
  %v2077 = vrot.slane %v2076, 4
  %v2078 = vmax.f32 %v2076, %v2077
  %v2079 = vrot.slane %v2078, 2
  %v2080 = vmax.f32 %v2078, %v2079
  %v2081 = vrot.slane %v2080, 1
  %v2082 = vmax.f32 %v2080, %v2081
  %v2083 = vsel %vm2068, %v1942, -inf
  %v2084 = vrot.slane %v2083, 4
  %v2085 = vmax.f32 %v2083, %v2084
  %v2086 = vrot.slane %v2085, 2
  %v2087 = vmax.f32 %v2085, %v2086
  %v2088 = vrot.slane %v2087, 1
  %v2089 = vmax.f32 %v2087, %v2088
  %v2090 = vsel %vm2068, %v1944, -inf
  %v2091 = vrot.slane %v2090, 4
  %v2092 = vmax.f32 %v2090, %v2091
  %v2093 = vrot.slane %v2092, 2
  %v2094 = vmax.f32 %v2092, %v2093
  %v2095 = vrot.slane %v2094, 1
  %v2096 = vmax.f32 %v2094, %v2095
  %v2097 = vsel %vm2068, %v1946, -inf
  %v2098 = vrot.slane %v2097, 4
  %v2099 = vmax.f32 %v2097, %v2098
  %v2100 = vrot.slane %v2099, 2
  %v2101 = vmax.f32 %v2099, %v2100
  %v2102 = vrot.slane %v2101, 1
  %v2103 = vmax.f32 %v2101, %v2102
  %v2104 = vsel %vm2068, %v1948, -inf
  %v2105 = vrot.slane %v2104, 4
  %v2106 = vmax.f32 %v2104, %v2105
  %v2107 = vrot.slane %v2106, 2
  %v2108 = vmax.f32 %v2106, %v2107
  %v2109 = vrot.slane %v2108, 1
  %v2110 = vmax.f32 %v2108, %v2109
  %v2111 = vsel %vm2068, %v1950, -inf
  %v2112 = vrot.slane %v2111, 4
  %v2113 = vmax.f32 %v2111, %v2112
  %v2114 = vrot.slane %v2113, 2
  %v2115 = vmax.f32 %v2113, %v2114
  %v2116 = vrot.slane %v2115, 1
  %v2117 = vmax.f32 %v2115, %v2116
  %v2118 = vsel %vm2068, %v1952, -inf
  %v2119 = vrot.slane %v2118, 4
  %v2120 = vmax.f32 %v2118, %v2119
  %v2121 = vrot.slane %v2120, 2
  %v2122 = vmax.f32 %v2120, %v2121
  %v2123 = vrot.slane %v2122, 1
  %v2124 = vmax.f32 %v2122, %v2123
  %vm2125 = vcmask 64518
  %v2126 = vsel %vm2125, %v1938, -inf
  %v2127 = vrot.slane %v2126, 4
  %v2128 = vmax.f32 %v2126, %v2127
  %v2129 = vrot.slane %v2128, 2
  %v2130 = vmax.f32 %v2128, %v2129
  %v2131 = vrot.slane %v2130, 1
  %v2132 = vmax.f32 %v2130, %v2131
  %v2133 = vsel %vm2125, %v1940, -inf
  %v2134 = vrot.slane %v2133, 4
  %v2135 = vmax.f32 %v2133, %v2134
  %v2136 = vrot.slane %v2135, 2
  %v2137 = vmax.f32 %v2135, %v2136
  %v2138 = vrot.slane %v2137, 1
  %v2139 = vmax.f32 %v2137, %v2138
  %v2140 = vsel %vm2125, %v1942, -inf
  %v2141 = vrot.slane %v2140, 4
  %v2142 = vmax.f32 %v2140, %v2141
  %v2143 = vrot.slane %v2142, 2
  %v2144 = vmax.f32 %v2142, %v2143
  %v2145 = vrot.slane %v2144, 1
  %v2146 = vmax.f32 %v2144, %v2145
  %v2147 = vsel %vm2125, %v1944, -inf
  %v2148 = vrot.slane %v2147, 4
  %v2149 = vmax.f32 %v2147, %v2148
  %v2150 = vrot.slane %v2149, 2
  %v2151 = vmax.f32 %v2149, %v2150
  %v2152 = vrot.slane %v2151, 1
  %v2153 = vmax.f32 %v2151, %v2152
  %v2154 = vsel %vm2125, %v1946, -inf
  %v2155 = vrot.slane %v2154, 4
  %v2156 = vmax.f32 %v2154, %v2155
  %v2157 = vrot.slane %v2156, 2
  %v2158 = vmax.f32 %v2156, %v2157
  %v2159 = vrot.slane %v2158, 1
  %v2160 = vmax.f32 %v2158, %v2159
  %v2161 = vsel %vm2125, %v1948, -inf
  %v2162 = vrot.slane %v2161, 4
  %v2163 = vmax.f32 %v2161, %v2162
  %v2164 = vrot.slane %v2163, 2
  %v2165 = vmax.f32 %v2163, %v2164
  %v2166 = vrot.slane %v2165, 1
  %v2167 = vmax.f32 %v2165, %v2166
  %v2168 = vsel %vm2125, %v1950, -inf
  %v2169 = vrot.slane %v2168, 4
  %v2170 = vmax.f32 %v2168, %v2169
  %v2171 = vrot.slane %v2170, 2
  %v2172 = vmax.f32 %v2170, %v2171
  %v2173 = vrot.slane %v2172, 1
  %v2174 = vmax.f32 %v2172, %v2173
  %v2175 = vsel %vm2125, %v1952, -inf
  %v2176 = vrot.slane %v2175, 4
  %v2177 = vmax.f32 %v2175, %v2176
  %v2178 = vrot.slane %v2177, 2
  %v2179 = vmax.f32 %v2177, %v2178
  %v2180 = vrot.slane %v2179, 1
  %v2181 = vmax.f32 %v2179, %v2180
  %v2182 = vsel %vm1954, %v1939, -inf
  %v2183 = vrot.slane %v2182, 4
  %v2184 = vmax.f32 %v2182, %v2183
  %v2185 = vrot.slane %v2184, 2
  %v2186 = vmax.f32 %v2184, %v2185
  %v2187 = vrot.slane %v2186, 1
  %v2188 = vmax.f32 %v2186, %v2187
  %v2189 = vsel %vm1954, %v1941, -inf
  %v2190 = vrot.slane %v2189, 4
  %v2191 = vmax.f32 %v2189, %v2190
  %v2192 = vrot.slane %v2191, 2
  %v2193 = vmax.f32 %v2191, %v2192
  %v2194 = vrot.slane %v2193, 1
  %v2195 = vmax.f32 %v2193, %v2194
  %v2196 = vsel %vm1954, %v1943, -inf
  %v2197 = vrot.slane %v2196, 4
  %v2198 = vmax.f32 %v2196, %v2197
  %v2199 = vrot.slane %v2198, 2
  %v2200 = vmax.f32 %v2198, %v2199
  %v2201 = vrot.slane %v2200, 1
  %v2202 = vmax.f32 %v2200, %v2201
  %v2203 = vsel %vm1954, %v1945, -inf
  %v2204 = vrot.slane %v2203, 4
  %v2205 = vmax.f32 %v2203, %v2204
  %v2206 = vrot.slane %v2205, 2
  %v2207 = vmax.f32 %v2205, %v2206
  %v2208 = vrot.slane %v2207, 1
  %v2209 = vmax.f32 %v2207, %v2208
  %v2210 = vsel %vm1954, %v1947, -inf
  %v2211 = vrot.slane %v2210, 4
  %v2212 = vmax.f32 %v2210, %v2211
  %v2213 = vrot.slane %v2212, 2
  %v2214 = vmax.f32 %v2212, %v2213
  %v2215 = vrot.slane %v2214, 1
  %v2216 = vmax.f32 %v2214, %v2215
  %v2217 = vsel %vm1954, %v1949, -inf
  %v2218 = vrot.slane %v2217, 4
  %v2219 = vmax.f32 %v2217, %v2218
  %v2220 = vrot.slane %v2219, 2
  %v2221 = vmax.f32 %v2219, %v2220
  %v2222 = vrot.slane %v2221, 1
  %v2223 = vmax.f32 %v2221, %v2222
  %v2224 = vsel %vm1954, %v1951, -inf
  %v2225 = vrot.slane %v2224, 4
  %v2226 = vmax.f32 %v2224, %v2225
  %v2227 = vrot.slane %v2226, 2
  %v2228 = vmax.f32 %v2226, %v2227
  %v2229 = vrot.slane %v2228, 1
  %v2230 = vmax.f32 %v2228, %v2229
  %v2231 = vsel %vm1954, %v1953, -inf
  %v2232 = vrot.slane %v2231, 4
  %v2233 = vmax.f32 %v2231, %v2232
  %v2234 = vrot.slane %v2233, 2
  %v2235 = vmax.f32 %v2233, %v2234
  %v2236 = vrot.slane %v2235, 1
  %v2237 = vmax.f32 %v2235, %v2236
  %v2238 = vsel %vm2011, %v1939, -inf
  %v2239 = vrot.slane %v2238, 4
  %v2240 = vmax.f32 %v2238, %v2239
  %v2241 = vrot.slane %v2240, 2
  %v2242 = vmax.f32 %v2240, %v2241
  %v2243 = vrot.slane %v2242, 1
  %v2244 = vmax.f32 %v2242, %v2243
  %v2245 = vsel %vm2011, %v1941, -inf
  %v2246 = vrot.slane %v2245, 4
  %v2247 = vmax.f32 %v2245, %v2246
  %v2248 = vrot.slane %v2247, 2
  %v2249 = vmax.f32 %v2247, %v2248
  %v2250 = vrot.slane %v2249, 1
  %v2251 = vmax.f32 %v2249, %v2250
  %v2252 = vsel %vm2011, %v1943, -inf
  %v2253 = vrot.slane %v2252, 4
  %v2254 = vmax.f32 %v2252, %v2253
  %v2255 = vrot.slane %v2254, 2
  %v2256 = vmax.f32 %v2254, %v2255
  %v2257 = vrot.slane %v2256, 1
  %v2258 = vmax.f32 %v2256, %v2257
  %v2259 = vsel %vm2011, %v1945, -inf
  %v2260 = vrot.slane %v2259, 4
  %v2261 = vmax.f32 %v2259, %v2260
  %v2262 = vrot.slane %v2261, 2
  %v2263 = vmax.f32 %v2261, %v2262
  %v2264 = vrot.slane %v2263, 1
  %v2265 = vmax.f32 %v2263, %v2264
  %v2266 = vsel %vm2011, %v1947, -inf
  %v2267 = vrot.slane %v2266, 4
  %v2268 = vmax.f32 %v2266, %v2267
  %v2269 = vrot.slane %v2268, 2
  %v2270 = vmax.f32 %v2268, %v2269
  %v2271 = vrot.slane %v2270, 1
  %v2272 = vmax.f32 %v2270, %v2271
  %v2273 = vsel %vm2011, %v1949, -inf
  %v2274 = vrot.slane %v2273, 4
  %v2275 = vmax.f32 %v2273, %v2274
  %v2276 = vrot.slane %v2275, 2
  %v2277 = vmax.f32 %v2275, %v2276
  %v2278 = vrot.slane %v2277, 1
  %v2279 = vmax.f32 %v2277, %v2278
  %v2280 = vsel %vm2011, %v1951, -inf
  %v2281 = vrot.slane %v2280, 4
  %v2282 = vmax.f32 %v2280, %v2281
  %v2283 = vrot.slane %v2282, 2
  %v2284 = vmax.f32 %v2282, %v2283
  %v2285 = vrot.slane %v2284, 1
  %v2286 = vmax.f32 %v2284, %v2285
  %v2287 = vsel %vm2011, %v1953, -inf
  %v2288 = vrot.slane %v2287, 4
  %v2289 = vmax.f32 %v2287, %v2288
  %v2290 = vrot.slane %v2289, 2
  %v2291 = vmax.f32 %v2289, %v2290
  %v2292 = vrot.slane %v2291, 1
  %v2293 = vmax.f32 %v2291, %v2292
  %v2294 = vsel %vm2068, %v1939, -inf
  %v2295 = vrot.slane %v2294, 4
  %v2296 = vmax.f32 %v2294, %v2295
  %v2297 = vrot.slane %v2296, 2
  %v2298 = vmax.f32 %v2296, %v2297
  %v2299 = vrot.slane %v2298, 1
  %v2300 = vmax.f32 %v2298, %v2299
  %v2301 = vsel %vm2068, %v1941, -inf
  %v2302 = vrot.slane %v2301, 4
  %v2303 = vmax.f32 %v2301, %v2302
  %v2304 = vrot.slane %v2303, 2
  %v2305 = vmax.f32 %v2303, %v2304
  %v2306 = vrot.slane %v2305, 1
  %v2307 = vmax.f32 %v2305, %v2306
  %v2308 = vsel %vm2068, %v1943, -inf
  %v2309 = vrot.slane %v2308, 4
  %v2310 = vmax.f32 %v2308, %v2309
  %v2311 = vrot.slane %v2310, 2
  %v2312 = vmax.f32 %v2310, %v2311
  %v2313 = vrot.slane %v2312, 1
  %v2314 = vmax.f32 %v2312, %v2313
  %v2315 = vsel %vm2068, %v1945, -inf
  %v2316 = vrot.slane %v2315, 4
  %v2317 = vmax.f32 %v2315, %v2316
  %v2318 = vrot.slane %v2317, 2
  %v2319 = vmax.f32 %v2317, %v2318
  %v2320 = vrot.slane %v2319, 1
  %v2321 = vmax.f32 %v2319, %v2320
  %v2322 = vsel %vm2068, %v1947, -inf
  %v2323 = vrot.slane %v2322, 4
  %v2324 = vmax.f32 %v2322, %v2323
  %v2325 = vrot.slane %v2324, 2
  %v2326 = vmax.f32 %v2324, %v2325
  %v2327 = vrot.slane %v2326, 1
  %v2328 = vmax.f32 %v2326, %v2327
  %v2329 = vsel %vm2068, %v1949, -inf
  %v2330 = vrot.slane %v2329, 4
  %v2331 = vmax.f32 %v2329, %v2330
  %v2332 = vrot.slane %v2331, 2
  %v2333 = vmax.f32 %v2331, %v2332
  %v2334 = vrot.slane %v2333, 1
  %v2335 = vmax.f32 %v2333, %v2334
  %v2336 = vsel %vm2068, %v1951, -inf
  %v2337 = vrot.slane %v2336, 4
  %v2338 = vmax.f32 %v2336, %v2337
  %v2339 = vrot.slane %v2338, 2
  %v2340 = vmax.f32 %v2338, %v2339
  %v2341 = vrot.slane %v2340, 1
  %v2342 = vmax.f32 %v2340, %v2341
  %v2343 = vsel %vm2068, %v1953, -inf
  %v2344 = vrot.slane %v2343, 4
  %v2345 = vmax.f32 %v2343, %v2344
  %v2346 = vrot.slane %v2345, 2
  %v2347 = vmax.f32 %v2345, %v2346
  %v2348 = vrot.slane %v2347, 1
  %v2349 = vmax.f32 %v2347, %v2348
  %v2350 = vsel %vm2125, %v1939, -inf
  %v2351 = vrot.slane %v2350, 4
  %v2352 = vmax.f32 %v2350, %v2351
  %v2353 = vrot.slane %v2352, 2
  %v2354 = vmax.f32 %v2352, %v2353
  %v2355 = vrot.slane %v2354, 1
  %v2356 = vmax.f32 %v2354, %v2355
  %v2357 = vsel %vm2125, %v1941, -inf
  %v2358 = vrot.slane %v2357, 4
  %v2359 = vmax.f32 %v2357, %v2358
  %v2360 = vrot.slane %v2359, 2
  %v2361 = vmax.f32 %v2359, %v2360
  %v2362 = vrot.slane %v2361, 1
  %v2363 = vmax.f32 %v2361, %v2362
  %v2364 = vsel %vm2125, %v1943, -inf
  %v2365 = vrot.slane %v2364, 4
  %v2366 = vmax.f32 %v2364, %v2365
  %v2367 = vrot.slane %v2366, 2
  %v2368 = vmax.f32 %v2366, %v2367
  %v2369 = vrot.slane %v2368, 1
  %v2370 = vmax.f32 %v2368, %v2369
  %v2371 = vsel %vm2125, %v1945, -inf
  %v2372 = vrot.slane %v2371, 4
  %v2373 = vmax.f32 %v2371, %v2372
  %v2374 = vrot.slane %v2373, 2
  %v2375 = vmax.f32 %v2373, %v2374
  %v2376 = vrot.slane %v2375, 1
  %v2377 = vmax.f32 %v2375, %v2376
  %v2378 = vsel %vm2125, %v1947, -inf
  %v2379 = vrot.slane %v2378, 4
  %v2380 = vmax.f32 %v2378, %v2379
  %v2381 = vrot.slane %v2380, 2
  %v2382 = vmax.f32 %v2380, %v2381
  %v2383 = vrot.slane %v2382, 1
  %v2384 = vmax.f32 %v2382, %v2383
  %v2385 = vsel %vm2125, %v1949, -inf
  %v2386 = vrot.slane %v2385, 4
  %v2387 = vmax.f32 %v2385, %v2386
  %v2388 = vrot.slane %v2387, 2
  %v2389 = vmax.f32 %v2387, %v2388
  %v2390 = vrot.slane %v2389, 1
  %v2391 = vmax.f32 %v2389, %v2390
  %v2392 = vsel %vm2125, %v1951, -inf
  %v2393 = vrot.slane %v2392, 4
  %v2394 = vmax.f32 %v2392, %v2393
  %v2395 = vrot.slane %v2394, 2
  %v2396 = vmax.f32 %v2394, %v2395
  %v2397 = vrot.slane %v2396, 1
  %v2398 = vmax.f32 %v2396, %v2397
  %v2399 = vsel %vm2125, %v1953, -inf
  %v2400 = vrot.slane %v2399, 4
  %v2401 = vmax.f32 %v2399, %v2400
  %v2402 = vrot.slane %v2401, 2
  %v2403 = vmax.f32 %v2401, %v2402
  %v2404 = vrot.slane %v2403, 1
  %v2405 = vmax.f32 %v2403, %v2404
  %vm2406 = vcmask 1040384
  %v2407 = vsel %vm2406, %v1961, %v2018
  %v2408 = vsel %vm2406, %v1968, %v2025
  %v2409 = vsel %vm2406, %v1975, %v2032
  %v2410 = vsel %vm2406, %v1982, %v2039
  %v2411 = vsel %vm2406, %v1989, %v2046
  %v2412 = vsel %vm2406, %v1996, %v2053
  %v2413 = vsel %vm2406, %v2003, %v2060
  %v2414 = vsel %vm2406, %v2010, %v2067
  %v2415 = vsel %vm178, %v2407, %v2075
  %v2416 = vsel %vm178, %v2408, %v2082
  %v2417 = vsel %vm178, %v2409, %v2089
  %v2418 = vsel %vm178, %v2410, %v2096
  %v2419 = vsel %vm178, %v2411, %v2103
  %v2420 = vsel %vm178, %v2412, %v2110
  %v2421 = vsel %vm178, %v2413, %v2117
  %v2422 = vsel %vm178, %v2414, %v2124
  %vm2423 = vcmask 1042432
  %v2424 = vsel %vm2423, %v2415, %v2132
  %v2425 = vsel %vm2423, %v2416, %v2139
  %v2426 = vsel %vm2423, %v2417, %v2146
  %v2427 = vsel %vm2423, %v2418, %v2153
  %v2428 = vsel %vm2423, %v2419, %v2160
  %v2429 = vsel %vm2423, %v2420, %v2167
  %v2430 = vsel %vm2423, %v2421, %v2174
  %v2431 = vsel %vm2423, %v2422, %v2181
  %v2432 = vsel %vm526, %v2424, %v2188
  %v2433 = vsel %vm526, %v2425, %v2195
  %v2434 = vsel %vm526, %v2426, %v2202
  %v2435 = vsel %vm526, %v2427, %v2209
  %v2436 = vsel %vm526, %v2428, %v2216
  %v2437 = vsel %vm526, %v2429, %v2223
  %v2438 = vsel %vm526, %v2430, %v2230
  %v2439 = vsel %vm526, %v2431, %v2237
  %v2440 = vsel %vm437, %v2432, %v2244
  %v2441 = vsel %vm437, %v2433, %v2251
  %v2442 = vsel %vm437, %v2434, %v2258
  %v2443 = vsel %vm437, %v2435, %v2265
  %v2444 = vsel %vm437, %v2436, %v2272
  %v2445 = vsel %vm437, %v2437, %v2279
  %v2446 = vsel %vm437, %v2438, %v2286
  %v2447 = vsel %vm437, %v2439, %v2293
  %v2448 = vsel %vm348, %v2440, %v2300
  %v2449 = vsel %vm348, %v2441, %v2307
  %v2450 = vsel %vm348, %v2442, %v2314
  %v2451 = vsel %vm348, %v2443, %v2321
  %v2452 = vsel %vm348, %v2444, %v2328
  %v2453 = vsel %vm348, %v2445, %v2335
  %v2454 = vsel %vm348, %v2446, %v2342
  %v2455 = vsel %vm348, %v2447, %v2349
  %v2456 = vsel %vm259, %v2448, %v2356
  %v2457 = vsel %vm259, %v2449, %v2363
  %v2458 = vsel %vm259, %v2450, %v2370
  %v2459 = vsel %vm259, %v2451, %v2377
  %v2460 = vsel %vm259, %v2452, %v2384
  %v2461 = vsel %vm259, %v2453, %v2391
  %v2462 = vsel %vm259, %v2454, %v2398
  %v2463 = vsel %vm259, %v2455, %v2405
  %v2472 = vrot.slane %v2456, 6
  %v2473 = vrot.slane %v2457, 6
  %v2474 = vrot.slane %v2458, 6
  %v2475 = vrot.slane %v2459, 6
  %v2476 = vrot.slane %v2460, 6
  %v2477 = vrot.slane %v2461, 6
  %v2478 = vrot.slane %v2462, 6
  %v2479 = vrot.slane %v2463, 6
  %v2488 = vsel %vm178, 0.0, %v2472
  %v2489 = vsel %vm178, 0.0, %v2473
  %v2490 = vsel %vm178, 0.0, %v2474
  %v2491 = vsel %vm178, 0.0, %v2475
  %v2492 = vsel %vm178, 0.0, %v2476
  %v2493 = vsel %vm178, 0.0, %v2477
  %v2494 = vsel %vm178, 0.0, %v2478
  %v2495 = vsel %vm178, 0.0, %v2479
  %v2496 = vsel %vm178, %v2472, 0.0
  %v2497 = vsel %vm178, %v2473, 0.0
  %v2498 = vsel %vm178, %v2474, 0.0
  %v2499 = vsel %vm178, %v2475, 0.0
  %v2500 = vsel %vm178, %v2476, 0.0
  %v2501 = vsel %vm178, %v2477, 0.0
  %v2502 = vsel %vm178, %v2478, 0.0
  %v2503 = vsel %vm178, %v2479, 0.0
  %v2520 = vrot.slane %v2488, 1
  %v2521 = vrot.slane %v2496, 1
  %v2522 = vsel %vm259, %v2520, %v2521
  %v2523 = vrot.slane %v2489, 1
  %v2524 = vrot.slane %v2497, 1
  %v2525 = vsel %vm259, %v2523, %v2524
  %v2526 = vrot.slane %v2490, 1
  %v2527 = vrot.slane %v2498, 1
  %v2528 = vsel %vm259, %v2526, %v2527
  %v2529 = vrot.slane %v2491, 1
  %v2530 = vrot.slane %v2499, 1
  %v2531 = vsel %vm259, %v2529, %v2530
  %v2532 = vrot.slane %v2492, 1
  %v2533 = vrot.slane %v2500, 1
  %v2534 = vsel %vm259, %v2532, %v2533
  %v2535 = vrot.slane %v2493, 1
  %v2536 = vrot.slane %v2501, 1
  %v2537 = vsel %vm259, %v2535, %v2536
  %v2538 = vrot.slane %v2494, 1
  %v2539 = vrot.slane %v2502, 1
  %v2540 = vsel %vm259, %v2538, %v2539
  %v2541 = vrot.slane %v2495, 1
  %v2542 = vrot.slane %v2503, 1
  %v2543 = vsel %vm259, %v2541, %v2542
  %2544 = vrot.lane.b32.xlu0 %v2522, 8
  %v2545 = vpop.permute.xlu0 %2544
  %2546 = vrot.lane.b32.xlu0 %v2525, 8
  %v2547 = vpop.permute.xlu0 %2546
  %2548 = vrot.lane.b32.xlu0 %v2528, 8
  %v2549 = vpop.permute.xlu0 %2548
  %2550 = vrot.lane.b32.xlu0 %v2531, 8
  %v2551 = vpop.permute.xlu0 %2550
  %2552 = vrot.lane.b32.xlu0 %v2534, 8
  %v2553 = vpop.permute.xlu0 %2552
  %2554 = vrot.lane.b32.xlu0 %v2537, 8
  %v2555 = vpop.permute.xlu0 %2554
  %2556 = vrot.lane.b32.xlu0 %v2540, 8
  %v2557 = vpop.permute.xlu0 %2556
  %2558 = vrot.lane.b32.xlu0 %v2543, 8
  %v2559 = vpop.permute.xlu0 %2558
  %v2568 = vrot.slane %v2488, 2
  %v2569 = vrot.slane %v2496, 2
  %v2570 = vsel %vm348, %v2568, %v2569
  %v2571 = vrot.slane %v2489, 2
  %v2572 = vrot.slane %v2497, 2
  %v2573 = vsel %vm348, %v2571, %v2572
  %v2574 = vrot.slane %v2490, 2
  %v2575 = vrot.slane %v2498, 2
  %v2576 = vsel %vm348, %v2574, %v2575
  %v2577 = vrot.slane %v2491, 2
  %v2578 = vrot.slane %v2499, 2
  %v2579 = vsel %vm348, %v2577, %v2578
  %v2580 = vrot.slane %v2492, 2
  %v2581 = vrot.slane %v2500, 2
  %v2582 = vsel %vm348, %v2580, %v2581
  %v2583 = vrot.slane %v2493, 2
  %v2584 = vrot.slane %v2501, 2
  %v2585 = vsel %vm348, %v2583, %v2584
  %v2586 = vrot.slane %v2494, 2
  %v2587 = vrot.slane %v2502, 2
  %v2588 = vsel %vm348, %v2586, %v2587
  %v2589 = vrot.slane %v2495, 2
  %v2590 = vrot.slane %v2503, 2
  %v2591 = vsel %vm348, %v2589, %v2590
  %2592 = vrot.lane.b32.xlu0 %v2570, 16
  %v2593 = vpop.permute.xlu0 %2592
  %2594 = vrot.lane.b32.xlu0 %v2573, 16
  %v2595 = vpop.permute.xlu0 %2594
  %2596 = vrot.lane.b32.xlu0 %v2576, 16
  %v2597 = vpop.permute.xlu0 %2596
  %2598 = vrot.lane.b32.xlu0 %v2579, 16
  %v2599 = vpop.permute.xlu0 %2598
  %2600 = vrot.lane.b32.xlu0 %v2582, 16
  %v2601 = vpop.permute.xlu0 %2600
  %2602 = vrot.lane.b32.xlu0 %v2585, 16
  %v2603 = vpop.permute.xlu0 %2602
  %2604 = vrot.lane.b32.xlu0 %v2588, 16
  %v2605 = vpop.permute.xlu0 %2604
  %2606 = vrot.lane.b32.xlu0 %v2591, 16
  %v2607 = vpop.permute.xlu0 %2606
  %v2616 = vrot.slane %v2488, 3
  %v2617 = vrot.slane %v2496, 3
  %v2618 = vsel %vm437, %v2616, %v2617
  %v2619 = vrot.slane %v2489, 3
  %v2620 = vrot.slane %v2497, 3
  %v2621 = vsel %vm437, %v2619, %v2620
  %v2622 = vrot.slane %v2490, 3
  %v2623 = vrot.slane %v2498, 3
  %v2624 = vsel %vm437, %v2622, %v2623
  %v2625 = vrot.slane %v2491, 3
  %v2626 = vrot.slane %v2499, 3
  %v2627 = vsel %vm437, %v2625, %v2626
  %v2628 = vrot.slane %v2492, 3
  %v2629 = vrot.slane %v2500, 3
  %v2630 = vsel %vm437, %v2628, %v2629
  %v2631 = vrot.slane %v2493, 3
  %v2632 = vrot.slane %v2501, 3
  %v2633 = vsel %vm437, %v2631, %v2632
  %v2634 = vrot.slane %v2494, 3
  %v2635 = vrot.slane %v2502, 3
  %v2636 = vsel %vm437, %v2634, %v2635
  %v2637 = vrot.slane %v2495, 3
  %v2638 = vrot.slane %v2503, 3
  %v2639 = vsel %vm437, %v2637, %v2638
  %2640 = vrot.lane.b32.xlu0 %v2618, 24
  %v2641 = vpop.permute.xlu0 %2640
  %2642 = vrot.lane.b32.xlu0 %v2621, 24
  %v2643 = vpop.permute.xlu0 %2642
  %2644 = vrot.lane.b32.xlu0 %v2624, 24
  %v2645 = vpop.permute.xlu0 %2644
  %2646 = vrot.lane.b32.xlu0 %v2627, 24
  %v2647 = vpop.permute.xlu0 %2646
  %2648 = vrot.lane.b32.xlu0 %v2630, 24
  %v2649 = vpop.permute.xlu0 %2648
  %2650 = vrot.lane.b32.xlu0 %v2633, 24
  %v2651 = vpop.permute.xlu0 %2650
  %2652 = vrot.lane.b32.xlu0 %v2636, 24
  %v2653 = vpop.permute.xlu0 %2652
  %2654 = vrot.lane.b32.xlu0 %v2639, 24
  %v2655 = vpop.permute.xlu0 %2654
  %v2664 = vrot.slane %v2488, 4
  %v2665 = vrot.slane %v2496, 4
  %v2666 = vsel %vm526, %v2664, %v2665
  %v2667 = vrot.slane %v2489, 4
  %v2668 = vrot.slane %v2497, 4
  %v2669 = vsel %vm526, %v2667, %v2668
  %v2670 = vrot.slane %v2490, 4
  %v2671 = vrot.slane %v2498, 4
  %v2672 = vsel %vm526, %v2670, %v2671
  %v2673 = vrot.slane %v2491, 4
  %v2674 = vrot.slane %v2499, 4
  %v2675 = vsel %vm526, %v2673, %v2674
  %v2676 = vrot.slane %v2492, 4
  %v2677 = vrot.slane %v2500, 4
  %v2678 = vsel %vm526, %v2676, %v2677
  %v2679 = vrot.slane %v2493, 4
  %v2680 = vrot.slane %v2501, 4
  %v2681 = vsel %vm526, %v2679, %v2680
  %v2682 = vrot.slane %v2494, 4
  %v2683 = vrot.slane %v2502, 4
  %v2684 = vsel %vm526, %v2682, %v2683
  %v2685 = vrot.slane %v2495, 4
  %v2686 = vrot.slane %v2503, 4
  %v2687 = vsel %vm526, %v2685, %v2686
  %2688 = vrot.lane.b32.xlu0 %v2666, 32
  %v2689 = vpop.permute.xlu0 %2688
  %2690 = vrot.lane.b32.xlu0 %v2669, 32
  %v2691 = vpop.permute.xlu0 %2690
  %2692 = vrot.lane.b32.xlu0 %v2672, 32
  %v2693 = vpop.permute.xlu0 %2692
  %2694 = vrot.lane.b32.xlu0 %v2675, 32
  %v2695 = vpop.permute.xlu0 %2694
  %2696 = vrot.lane.b32.xlu0 %v2678, 32
  %v2697 = vpop.permute.xlu0 %2696
  %2698 = vrot.lane.b32.xlu0 %v2681, 32
  %v2699 = vpop.permute.xlu0 %2698
  %2700 = vrot.lane.b32.xlu0 %v2684, 32
  %v2701 = vpop.permute.xlu0 %2700
  %2702 = vrot.lane.b32.xlu0 %v2687, 32
  %v2703 = vpop.permute.xlu0 %2702
  %v2712 = vsel %vm632, %v2488, %v2545
  %v2713 = vsel %vm632, %v2489, %v2547
  %v2714 = vsel %vm632, %v2490, %v2549
  %v2715 = vsel %vm632, %v2491, %v2551
  %v2716 = vsel %vm632, %v2492, %v2553
  %v2717 = vsel %vm632, %v2493, %v2555
  %v2718 = vsel %vm632, %v2494, %v2557
  %v2719 = vsel %vm632, %v2495, %v2559
  %v2720 = vsel %vm666, %v2712, %v2593
  %v2721 = vsel %vm666, %v2713, %v2595
  %v2722 = vsel %vm666, %v2714, %v2597
  %v2723 = vsel %vm666, %v2715, %v2599
  %v2724 = vsel %vm666, %v2716, %v2601
  %v2725 = vsel %vm666, %v2717, %v2603
  %v2726 = vsel %vm666, %v2718, %v2605
  %v2727 = vsel %vm666, %v2719, %v2607
  %v2728 = vsel %vm1542, %v2720, %v2641
  %v2729 = vsel %vm1542, %v2721, %v2643
  %v2730 = vsel %vm1542, %v2722, %v2645
  %v2731 = vsel %vm1542, %v2723, %v2647
  %v2732 = vsel %vm1542, %v2724, %v2649
  %v2733 = vsel %vm1542, %v2725, %v2651
  %v2734 = vsel %vm1542, %v2726, %v2653
  %v2735 = vsel %vm1542, %v2727, %v2655
  %v2736 = vsel %vm1559, %v2728, %v2689
  %v2737 = vsel %vm1559, %v2729, %v2691
  %v2738 = vsel %vm1559, %v2730, %v2693
  %v2739 = vsel %vm1559, %v2731, %v2695
  %v2740 = vsel %vm1559, %v2732, %v2697
  %v2741 = vsel %vm1559, %v2733, %v2699
  %v2742 = vsel %vm1559, %v2734, %v2701
  %v2743 = vsel %vm1559, %v2735, %v2703
  %v2744 = vld [vmem:[%s23] sm:$0xff]
  %v2745 = vld [vmem:[%s23 + $0x8] sm:$0xff]
  %v2746 = vld [vmem:[%s23 + $0x10] sm:$0xff]
  %v2747 = vld [vmem:[%s23 + $0x18] sm:$0xff]
  %v2748 = vld [vmem:[%s23 + $0x20] sm:$0xff]
  %v2749 = vld [vmem:[%s25] sm:$0x1]
  %v2751 = vlaneseq
  %v2752 = vshrl.u32 %v2751, 7
  %v2753 = vsub.s32 0, %v2752
  %v2754 = vrot.slane %v2749, %v2753
  %v2757 = vsel %vm1588, %v2736, 0
  %v2760 = vsel %vm1588, %v2737, 0
  %v2763 = vsel %vm1588, %v2738, 0
  %v2766 = vsel %vm1588, %v2739, 0
  %v2769 = vsel %vm1588, %v2740, 0
  %v2772 = vsel %vm1588, %v2741, 0
  %v2775 = vsel %vm1588, %v2742, 0
  %v2778 = vsel %vm1588, %v2743, 0
  %2780 = vmatprep.subr.mxu0 0.0
  %2781 = vmatpush1.msra.mxu0 %v2744
  %2782 = vmatprep.subr.mxu0 0.0
  %2783 = vmatpush1.msra.mxu0 %v2745
  %2784 = vmatprep.subr.mxu0 0.0
  %2785 = vmatpush1.msra.mxu0 %v2746
  %2786 = vmatprep.subr.mxu0 0.0
  %2787 = vmatpush1.msra.mxu0 %v2747
  %2788 = vmatprep.subr.mxu0 0.0
  %2789 = vmatpush1.msra.mxu0 %v2748
  %2790 = vmatprep.subr.mxu0 0.0
  %2791 = vmatpush1.msra.mxu0 0.0
  %2792 = vmatprep.subr.mxu0 0.0
  %2793 = vmatpush1.msra.mxu0 0.0
  %2794 = vmatprep.subr.mxu0 0.0
  %2795 = vmatpush1.msra.mxu0 0.0
  %2796 = vmatprep.subr.mxu0 0.0
  %2797 = vmatpush1.msra.mxu0 0.0
  %2798 = vmatprep.subr.mxu0 0.0
  %2799 = vmatpush1.msra.mxu0 0.0
  %2800 = vmatprep.subr.mxu0 0.0
  %2801 = vmatpush1.msra.mxu0 0.0
  %2802 = vmatprep.subr.mxu0 0.0
  %2803 = vmatpush1.msra.mxu0 0.0
  %2804 = vmatprep.subr.mxu0 0.0
  %2805 = vmatpush1.msra.mxu0 0.0
  %2806 = vmatprep.subr.mxu0 0.0
  %2807 = vmatpush1.msra.mxu0 0.0
  %2808 = vmatprep.subr.mxu0 0.0
  %2809 = vmatpush1.msra.mxu0 0.0
  %2810 = vmatprep.subr.mxu0 0.0
  %2811 = vmatpush1.msra.mxu0 0.0
  %2812 = vmatprep.subr.mxu0 0.0
  %2813 = vmatpush1.msra.mxu0 0.0
  %2814 = vmatprep.subr.mxu0 0.0
  %2815 = vmatpush1.msra.mxu0 0.0
  %2816 = vmatprep.subr.mxu0 0.0
  %2817 = vmatpush1.msra.mxu0 0.0
  %2818 = vmatprep.subr.mxu0 0.0
  %2819 = vmatpush1.msra.mxu0 0.0
  %2820 = vmatprep.subr.mxu0 0.0
  %2821 = vmatpush1.msra.mxu0 0.0
  %2822 = vmatprep.subr.mxu0 0.0
  %2823 = vmatpush1.msra.mxu0 0.0
  %2824 = vmatprep.subr.mxu0 0.0
  %2825 = vmatpush1.msra.mxu0 0.0
  %2826 = vmatprep.subr.mxu0 0.0
  %2827 = vmatpush1.msra.mxu0 0.0
  %2828 = vmatprep.subr.mxu0 0.0
  %2829 = vmatpush1.msra.mxu0 0.0
  %2830 = vmatprep.subr.mxu0 0.0
  %2831 = vmatpush1.msra.mxu0 0.0
  %2832 = vmatprep.subr.mxu0 0.0
  %2833 = vmatpush1.msra.mxu0 0.0
  %2834 = vmatprep.subr.mxu0 0.0
  %2835 = vmatpush1.msra.mxu0 0.0
  %2836 = vmatprep.subr.mxu0 0.0
  %2837 = vmatpush1.msra.mxu0 0.0
  %2838 = vmatprep.subr.mxu0 0.0
  %2839 = vmatpush1.msra.mxu0 0.0
  %2840 = vmatprep.subr.mxu0 0.0
  %2841 = vmatpush1.msra.mxu0 0.0
  %2842 = vmatprep.subr.mxu0 0.0
  %2843 = vmatpush1.msra.mxu0 0.0
  %2844 = vmatprep.mubr.f32.mxu0 0.0
  %2845 = vmatmul.mubr.f32.gmra.mrb[0].mxu0 %v2757
  %v2846 = vpop.f32.mrb[0].mxu0
  %v2847 = vadd.f32 %v2754, %v2846
  %v2848 = vpop.f32.mrb[0].mxu0
  %2849 = vmatprep.mubr.f32.mxu0 0.0
  %2850 = vmatmul.mubr.f32.gmra.mrb[0].mxu0 %v2760
  %v2851 = vpop.f32.mrb[0].mxu0
  %v2852 = vadd.f32 %v2754, %v2851
  %v2853 = vpop.f32.mrb[0].mxu0
  %2854 = vmatprep.mubr.f32.mxu0 0.0
  %2855 = vmatmul.mubr.f32.gmra.mrb[0].mxu0 %v2763
  %v2856 = vpop.f32.mrb[0].mxu0
  %v2857 = vadd.f32 %v2754, %v2856
  %v2858 = vpop.f32.mrb[0].mxu0
  %2859 = vmatprep.mubr.f32.mxu0 0.0
  %2860 = vmatmul.mubr.f32.gmra.mrb[0].mxu0 %v2766
  %v2861 = vpop.f32.mrb[0].mxu0
  %v2862 = vadd.f32 %v2754, %v2861
  %v2863 = vpop.f32.mrb[0].mxu0
  %2864 = vmatprep.mubr.f32.mxu0 0.0
  %2865 = vmatmul.mubr.f32.gmra.mrb[0].mxu0 %v2769
  %v2866 = vpop.f32.mrb[0].mxu0
  %v2867 = vadd.f32 %v2754, %v2866
  %v2868 = vpop.f32.mrb[0].mxu0
  %2869 = vmatprep.mubr.f32.mxu0 0.0
  %2870 = vmatmul.mubr.f32.gmra.mrb[0].mxu0 %v2772
  %v2871 = vpop.f32.mrb[0].mxu0
  %v2872 = vadd.f32 %v2754, %v2871
  %v2873 = vpop.f32.mrb[0].mxu0
  %2874 = vmatprep.mubr.f32.mxu0 0.0
  %2875 = vmatmul.mubr.f32.gmra.mrb[0].mxu0 %v2775
  %v2876 = vpop.f32.mrb[0].mxu0
  %v2877 = vadd.f32 %v2754, %v2876
  %v2878 = vpop.f32.mrb[0].mxu0
  %2879 = vmatprep.mubr.f32.mxu0 0.0
  %2880 = vmatmul.mubr.f32.gmra.mrb[0].mxu0 %v2778
  %v2881 = vpop.f32.mrb[0].mxu0
  %v2882 = vadd.f32 %v2754, %v2881
  %v2883 = vpop.f32.mrb[0].mxu0
  %2884 = vdwg.mxu0
  %v2885 = vsel %vm632, %v2847, 0.0
  %v2886 = vsel %vm632, %v2852, 0.0
  %v2887 = vadd.f32 %v2885, %v2886
  %v2888 = vsel %vm632, %v2857, 0.0
  %v2889 = vadd.f32 %v2887, %v2888
  %v2890 = vsel %vm632, %v2862, 0.0
  %v2891 = vadd.f32 %v2889, %v2890
  %v2892 = vsel %vm632, %v2867, 0.0
  %v2893 = vadd.f32 %v2891, %v2892
  %v2894 = vsel %vm632, %v2872, 0.0
  %v2895 = vadd.f32 %v2893, %v2894
  %v2896 = vsel %vm632, %v2877, 0.0
  %v2897 = vadd.f32 %v2895, %v2896
  %v2898 = vsel %vm632, %v2882, 0.0
  %v2899 = vadd.f32 %v2897, %v2898
  %v2900 = vrot.slane %v2899, 4
  %v2901 = vadd.f32 %v2899, %v2900
  %v2902 = vrot.slane %v2901, 2
  %v2903 = vadd.f32 %v2901, %v2902
  %v2904 = vrot.slane %v2903, 1
  %v2905 = vadd.f32 %v2903, %v2904
  %v2906 = vmul.f32 %v2905, 0.015625
  %v2907 = vsub.f32 %v2847, %v2906
  %v2908 = vsub.f32 %v2852, %v2906
  %v2909 = vsub.f32 %v2857, %v2906
  %v2910 = vsub.f32 %v2862, %v2906
  %v2911 = vsub.f32 %v2867, %v2906
  %v2912 = vsub.f32 %v2872, %v2906
  %v2913 = vsub.f32 %v2877, %v2906
  %v2914 = vsub.f32 %v2882, %v2906
  %v2915 = vmul.f32 %v2907, %v2907
  %v2916 = vmul.f32 %v2908, %v2908
  %v2917 = vmul.f32 %v2909, %v2909
  %v2918 = vmul.f32 %v2910, %v2910
  %v2919 = vmul.f32 %v2911, %v2911
  %v2920 = vmul.f32 %v2912, %v2912
  %v2921 = vmul.f32 %v2913, %v2913
  %v2922 = vmul.f32 %v2914, %v2914
  %v2923 = vsel %vm632, %v2915, 0.0
  %v2924 = vsel %vm632, %v2916, 0.0
  %v2925 = vadd.f32 %v2923, %v2924
  %v2926 = vsel %vm632, %v2917, 0.0
  %v2927 = vadd.f32 %v2925, %v2926
  %v2928 = vsel %vm632, %v2918, 0.0
  %v2929 = vadd.f32 %v2927, %v2928
  %v2930 = vsel %vm632, %v2919, 0.0
  %v2931 = vadd.f32 %v2929, %v2930
  %v2932 = vsel %vm632, %v2920, 0.0
  %v2933 = vadd.f32 %v2931, %v2932
  %v2934 = vsel %vm632, %v2921, 0.0
  %v2935 = vadd.f32 %v2933, %v2934
  %v2936 = vsel %vm632, %v2922, 0.0
  %v2937 = vadd.f32 %v2935, %v2936
  %v2938 = vrot.slane %v2937, 4
  %v2939 = vadd.f32 %v2937, %v2938
  %v2940 = vrot.slane %v2939, 2
  %v2941 = vadd.f32 %v2939, %v2940
  %v2942 = vrot.slane %v2941, 1
  %v2943 = vadd.f32 %v2941, %v2942
  %v2944 = vmul.f32 %v2943, 0.015625
  %v2945 = vadd.f32 %v2944, 1e-05
  %v2946 = vrsqrt.pop %v2945
  %v2947 = vmul.f32 %v2907, %v2946
  %v2948 = vmul.f32 %v2908, %v2946
  %v2949 = vmul.f32 %v2909, %v2946
  %v2950 = vmul.f32 %v2910, %v2946
  %v2951 = vmul.f32 %v2911, %v2946
  %v2952 = vmul.f32 %v2912, %v2946
  %v2953 = vmul.f32 %v2913, %v2946
  %v2954 = vmul.f32 %v2914, %v2946
  %v2955 = vld [vmem:[%s27] sm:$0x1]
  %v2957 = vlaneseq
  %v2958 = vshrl.u32 %v2957, 7
  %v2959 = vsub.s32 0, %v2958
  %v2960 = vrot.slane %v2955, %v2959
  %v2962 = vmul.f32 %v2947, %v2960
  %v2963 = vmul.f32 %v2948, %v2960
  %v2964 = vmul.f32 %v2949, %v2960
  %v2965 = vmul.f32 %v2950, %v2960
  %v2966 = vmul.f32 %v2951, %v2960
  %v2967 = vmul.f32 %v2952, %v2960
  %v2968 = vmul.f32 %v2953, %v2960
  %v2969 = vmul.f32 %v2954, %v2960
  %v2970 = vld [vmem:[%s29] sm:$0x1]
  %v2972 = vlaneseq
  %v2973 = vshrl.u32 %v2972, 7
  %v2974 = vsub.s32 0, %v2973
  %v2975 = vrot.slane %v2970, %v2974
  %v2977 = vadd.f32 %v2962, %v2975
  %v2978 = vadd.f32 %v2963, %v2975
  %v2979 = vadd.f32 %v2964, %v2975
  %v2980 = vadd.f32 %v2965, %v2975
  %v2981 = vadd.f32 %v2966, %v2975
  %v2982 = vadd.f32 %v2967, %v2975
  %v2983 = vadd.f32 %v2968, %v2975
  %v2984 = vadd.f32 %v2969, %v2975
  %v2985 = vsel %vm1954, %v2977, -inf
  %v2986 = vrot.slane %v2985, 4
  %v2987 = vmax.f32 %v2985, %v2986
  %v2988 = vrot.slane %v2987, 2
  %v2989 = vmax.f32 %v2987, %v2988
  %v2990 = vrot.slane %v2989, 1
  %v2991 = vmax.f32 %v2989, %v2990
  %v2992 = vsel %vm1954, %v2978, -inf
  %v2993 = vrot.slane %v2992, 4
  %v2994 = vmax.f32 %v2992, %v2993
  %v2995 = vrot.slane %v2994, 2
  %v2996 = vmax.f32 %v2994, %v2995
  %v2997 = vrot.slane %v2996, 1
  %v2998 = vmax.f32 %v2996, %v2997
  %v2999 = vsel %vm1954, %v2979, -inf
  %v3000 = vrot.slane %v2999, 4
  %v3001 = vmax.f32 %v2999, %v3000
  %v3002 = vrot.slane %v3001, 2
  %v3003 = vmax.f32 %v3001, %v3002
  %v3004 = vrot.slane %v3003, 1
  %v3005 = vmax.f32 %v3003, %v3004
  %v3006 = vsel %vm1954, %v2980, -inf
  %v3007 = vrot.slane %v3006, 4
  %v3008 = vmax.f32 %v3006, %v3007
  %v3009 = vrot.slane %v3008, 2
  %v3010 = vmax.f32 %v3008, %v3009
  %v3011 = vrot.slane %v3010, 1
  %v3012 = vmax.f32 %v3010, %v3011
  %v3013 = vsel %vm1954, %v2981, -inf
  %v3014 = vrot.slane %v3013, 4
  %v3015 = vmax.f32 %v3013, %v3014
  %v3016 = vrot.slane %v3015, 2
  %v3017 = vmax.f32 %v3015, %v3016
  %v3018 = vrot.slane %v3017, 1
  %v3019 = vmax.f32 %v3017, %v3018
  %v3020 = vsel %vm1954, %v2982, -inf
  %v3021 = vrot.slane %v3020, 4
  %v3022 = vmax.f32 %v3020, %v3021
  %v3023 = vrot.slane %v3022, 2
  %v3024 = vmax.f32 %v3022, %v3023
  %v3025 = vrot.slane %v3024, 1
  %v3026 = vmax.f32 %v3024, %v3025
  %v3027 = vsel %vm1954, %v2983, -inf
  %v3028 = vrot.slane %v3027, 4
  %v3029 = vmax.f32 %v3027, %v3028
  %v3030 = vrot.slane %v3029, 2
  %v3031 = vmax.f32 %v3029, %v3030
  %v3032 = vrot.slane %v3031, 1
  %v3033 = vmax.f32 %v3031, %v3032
  %v3034 = vsel %vm1954, %v2984, -inf
  %v3035 = vrot.slane %v3034, 4
  %v3036 = vmax.f32 %v3034, %v3035
  %v3037 = vrot.slane %v3036, 2
  %v3038 = vmax.f32 %v3036, %v3037
  %v3039 = vrot.slane %v3038, 1
  %v3040 = vmax.f32 %v3038, %v3039
  %v3041 = vsel %vm2011, %v2977, -inf
  %v3042 = vrot.slane %v3041, 4
  %v3043 = vmax.f32 %v3041, %v3042
  %v3044 = vrot.slane %v3043, 2
  %v3045 = vmax.f32 %v3043, %v3044
  %v3046 = vrot.slane %v3045, 1
  %v3047 = vmax.f32 %v3045, %v3046
  %v3048 = vsel %vm2011, %v2978, -inf
  %v3049 = vrot.slane %v3048, 4
  %v3050 = vmax.f32 %v3048, %v3049
  %v3051 = vrot.slane %v3050, 2
  %v3052 = vmax.f32 %v3050, %v3051
  %v3053 = vrot.slane %v3052, 1
  %v3054 = vmax.f32 %v3052, %v3053
  %v3055 = vsel %vm2011, %v2979, -inf
  %v3056 = vrot.slane %v3055, 4
  %v3057 = vmax.f32 %v3055, %v3056
  %v3058 = vrot.slane %v3057, 2
  %v3059 = vmax.f32 %v3057, %v3058
  %v3060 = vrot.slane %v3059, 1
  %v3061 = vmax.f32 %v3059, %v3060
  %v3062 = vsel %vm2011, %v2980, -inf
  %v3063 = vrot.slane %v3062, 4
  %v3064 = vmax.f32 %v3062, %v3063
  %v3065 = vrot.slane %v3064, 2
  %v3066 = vmax.f32 %v3064, %v3065
  %v3067 = vrot.slane %v3066, 1
  %v3068 = vmax.f32 %v3066, %v3067
  %v3069 = vsel %vm2011, %v2981, -inf
  %v3070 = vrot.slane %v3069, 4
  %v3071 = vmax.f32 %v3069, %v3070
  %v3072 = vrot.slane %v3071, 2
  %v3073 = vmax.f32 %v3071, %v3072
  %v3074 = vrot.slane %v3073, 1
  %v3075 = vmax.f32 %v3073, %v3074
  %v3076 = vsel %vm2011, %v2982, -inf
  %v3077 = vrot.slane %v3076, 4
  %v3078 = vmax.f32 %v3076, %v3077
  %v3079 = vrot.slane %v3078, 2
  %v3080 = vmax.f32 %v3078, %v3079
  %v3081 = vrot.slane %v3080, 1
  %v3082 = vmax.f32 %v3080, %v3081
  %v3083 = vsel %vm2011, %v2983, -inf
  %v3084 = vrot.slane %v3083, 4
  %v3085 = vmax.f32 %v3083, %v3084
  %v3086 = vrot.slane %v3085, 2
  %v3087 = vmax.f32 %v3085, %v3086
  %v3088 = vrot.slane %v3087, 1
  %v3089 = vmax.f32 %v3087, %v3088
  %v3090 = vsel %vm2011, %v2984, -inf
  %v3091 = vrot.slane %v3090, 4
  %v3092 = vmax.f32 %v3090, %v3091
  %v3093 = vrot.slane %v3092, 2
  %v3094 = vmax.f32 %v3092, %v3093
  %v3095 = vrot.slane %v3094, 1
  %v3096 = vmax.f32 %v3094, %v3095
  %v3097 = vsel %vm2068, %v2977, -inf
  %v3098 = vrot.slane %v3097, 4
  %v3099 = vmax.f32 %v3097, %v3098
  %v3100 = vrot.slane %v3099, 2
  %v3101 = vmax.f32 %v3099, %v3100
  %v3102 = vrot.slane %v3101, 1
  %v3103 = vmax.f32 %v3101, %v3102
  %v3104 = vsel %vm2068, %v2978, -inf
  %v3105 = vrot.slane %v3104, 4
  %v3106 = vmax.f32 %v3104, %v3105
  %v3107 = vrot.slane %v3106, 2
  %v3108 = vmax.f32 %v3106, %v3107
  %v3109 = vrot.slane %v3108, 1
  %v3110 = vmax.f32 %v3108, %v3109
  %v3111 = vsel %vm2068, %v2979, -inf
  %v3112 = vrot.slane %v3111, 4
  %v3113 = vmax.f32 %v3111, %v3112
  %v3114 = vrot.slane %v3113, 2
  %v3115 = vmax.f32 %v3113, %v3114
  %v3116 = vrot.slane %v3115, 1
  %v3117 = vmax.f32 %v3115, %v3116
  %v3118 = vsel %vm2068, %v2980, -inf
  %v3119 = vrot.slane %v3118, 4
  %v3120 = vmax.f32 %v3118, %v3119
  %v3121 = vrot.slane %v3120, 2
  %v3122 = vmax.f32 %v3120, %v3121
  %v3123 = vrot.slane %v3122, 1
  %v3124 = vmax.f32 %v3122, %v3123
  %v3125 = vsel %vm2068, %v2981, -inf
  %v3126 = vrot.slane %v3125, 4
  %v3127 = vmax.f32 %v3125, %v3126
  %v3128 = vrot.slane %v3127, 2
  %v3129 = vmax.f32 %v3127, %v3128
  %v3130 = vrot.slane %v3129, 1
  %v3131 = vmax.f32 %v3129, %v3130
  %v3132 = vsel %vm2068, %v2982, -inf
  %v3133 = vrot.slane %v3132, 4
  %v3134 = vmax.f32 %v3132, %v3133
  %v3135 = vrot.slane %v3134, 2
  %v3136 = vmax.f32 %v3134, %v3135
  %v3137 = vrot.slane %v3136, 1
  %v3138 = vmax.f32 %v3136, %v3137
  %v3139 = vsel %vm2068, %v2983, -inf
  %v3140 = vrot.slane %v3139, 4
  %v3141 = vmax.f32 %v3139, %v3140
  %v3142 = vrot.slane %v3141, 2
  %v3143 = vmax.f32 %v3141, %v3142
  %v3144 = vrot.slane %v3143, 1
  %v3145 = vmax.f32 %v3143, %v3144
  %v3146 = vsel %vm2068, %v2984, -inf
  %v3147 = vrot.slane %v3146, 4
  %v3148 = vmax.f32 %v3146, %v3147
  %v3149 = vrot.slane %v3148, 2
  %v3150 = vmax.f32 %v3148, %v3149
  %v3151 = vrot.slane %v3150, 1
  %v3152 = vmax.f32 %v3150, %v3151
  %v3153 = vsel %vm2125, %v2977, -inf
  %v3154 = vrot.slane %v3153, 4
  %v3155 = vmax.f32 %v3153, %v3154
  %v3156 = vrot.slane %v3155, 2
  %v3157 = vmax.f32 %v3155, %v3156
  %v3158 = vrot.slane %v3157, 1
  %v3159 = vmax.f32 %v3157, %v3158
  %v3160 = vsel %vm2125, %v2978, -inf
  %v3161 = vrot.slane %v3160, 4
  %v3162 = vmax.f32 %v3160, %v3161
  %v3163 = vrot.slane %v3162, 2
  %v3164 = vmax.f32 %v3162, %v3163
  %v3165 = vrot.slane %v3164, 1
  %v3166 = vmax.f32 %v3164, %v3165
  %v3167 = vsel %vm2125, %v2979, -inf
  %v3168 = vrot.slane %v3167, 4
  %v3169 = vmax.f32 %v3167, %v3168
  %v3170 = vrot.slane %v3169, 2
  %v3171 = vmax.f32 %v3169, %v3170
  %v3172 = vrot.slane %v3171, 1
  %v3173 = vmax.f32 %v3171, %v3172
  %v3174 = vsel %vm2125, %v2980, -inf
  %v3175 = vrot.slane %v3174, 4
  %v3176 = vmax.f32 %v3174, %v3175
  %v3177 = vrot.slane %v3176, 2
  %v3178 = vmax.f32 %v3176, %v3177
  %v3179 = vrot.slane %v3178, 1
  %v3180 = vmax.f32 %v3178, %v3179
  %v3181 = vsel %vm2125, %v2981, -inf
  %v3182 = vrot.slane %v3181, 4
  %v3183 = vmax.f32 %v3181, %v3182
  %v3184 = vrot.slane %v3183, 2
  %v3185 = vmax.f32 %v3183, %v3184
  %v3186 = vrot.slane %v3185, 1
  %v3187 = vmax.f32 %v3185, %v3186
  %v3188 = vsel %vm2125, %v2982, -inf
  %v3189 = vrot.slane %v3188, 4
  %v3190 = vmax.f32 %v3188, %v3189
  %v3191 = vrot.slane %v3190, 2
  %v3192 = vmax.f32 %v3190, %v3191
  %v3193 = vrot.slane %v3192, 1
  %v3194 = vmax.f32 %v3192, %v3193
  %v3195 = vsel %vm2125, %v2983, -inf
  %v3196 = vrot.slane %v3195, 4
  %v3197 = vmax.f32 %v3195, %v3196
  %v3198 = vrot.slane %v3197, 2
  %v3199 = vmax.f32 %v3197, %v3198
  %v3200 = vrot.slane %v3199, 1
  %v3201 = vmax.f32 %v3199, %v3200
  %v3202 = vsel %vm2125, %v2984, -inf
  %v3203 = vrot.slane %v3202, 4
  %v3204 = vmax.f32 %v3202, %v3203
  %v3205 = vrot.slane %v3204, 2
  %v3206 = vmax.f32 %v3204, %v3205
  %v3207 = vrot.slane %v3206, 1
  %v3208 = vmax.f32 %v3206, %v3207
  %v3209 = vsel %vm2406, %v2991, %v3047
  %v3210 = vsel %vm2406, %v2998, %v3054
  %v3211 = vsel %vm2406, %v3005, %v3061
  %v3212 = vsel %vm2406, %v3012, %v3068
  %v3213 = vsel %vm2406, %v3019, %v3075
  %v3214 = vsel %vm2406, %v3026, %v3082
  %v3215 = vsel %vm2406, %v3033, %v3089
  %v3216 = vsel %vm2406, %v3040, %v3096
  %v3217 = vsel %vm178, %v3209, %v3103
  %v3218 = vsel %vm178, %v3210, %v3110
  %v3219 = vsel %vm178, %v3211, %v3117
  %v3220 = vsel %vm178, %v3212, %v3124
  %v3221 = vsel %vm178, %v3213, %v3131
  %v3222 = vsel %vm178, %v3214, %v3138
  %v3223 = vsel %vm178, %v3215, %v3145
  %v3224 = vsel %vm178, %v3216, %v3152
  %v3225 = vsel %vm2423, %v3217, %v3159
  %v3226 = vsel %vm2423, %v3218, %v3166
  %v3227 = vsel %vm2423, %v3219, %v3173
  %v3228 = vsel %vm2423, %v3220, %v3180
  %v3229 = vsel %vm2423, %v3221, %v3187
  %v3230 = vsel %vm2423, %v3222, %v3194
  %v3231 = vsel %vm2423, %v3223, %v3201
  %v3232 = vsel %vm2423, %v3224, %v3208
  %v3241 = vrot.slane %v3225, 6
  %v3242 = vrot.slane %v3226, 6
  %v3243 = vrot.slane %v3227, 6
  %v3244 = vrot.slane %v3228, 6
  %v3245 = vrot.slane %v3229, 6
  %v3246 = vrot.slane %v3230, 6
  %v3247 = vrot.slane %v3231, 6
  %v3248 = vrot.slane %v3232, 6
  %v3257 = vsel %vm178, 0.0, %v3241
  %v3258 = vsel %vm178, 0.0, %v3242
  %v3259 = vsel %vm178, 0.0, %v3243
  %v3260 = vsel %vm178, 0.0, %v3244
  %v3261 = vsel %vm178, 0.0, %v3245
  %v3262 = vsel %vm178, 0.0, %v3246
  %v3263 = vsel %vm178, 0.0, %v3247
  %v3264 = vsel %vm178, 0.0, %v3248
  %v3265 = vsel %vm348, %v3257, 0.0
  %v3266 = vsel %vm348, %v3258, 0.0
  %v3267 = vsel %vm348, %v3259, 0.0
  %v3268 = vsel %vm348, %v3260, 0.0
  %v3269 = vsel %vm348, %v3261, 0.0
  %v3270 = vsel %vm348, %v3262, 0.0
  %v3271 = vsel %vm348, %v3263, 0.0
  %v3272 = vsel %vm348, %v3264, 0.0
  %v3281 = vrot.slane %v3265, 1
  %v3282 = vrot.slane %v3266, 1
  %v3283 = vrot.slane %v3267, 1
  %v3284 = vrot.slane %v3268, 1
  %v3285 = vrot.slane %v3269, 1
  %v3286 = vrot.slane %v3270, 1
  %v3287 = vrot.slane %v3271, 1
  %v3288 = vrot.slane %v3272, 1
  %3289 = vrot.lane.b32.xlu0 %v3281, 8
  %v3290 = vpop.permute.xlu0 %3289
  %3291 = vrot.lane.b32.xlu0 %v3282, 8
  %v3292 = vpop.permute.xlu0 %3291
  %3293 = vrot.lane.b32.xlu0 %v3283, 8
  %v3294 = vpop.permute.xlu0 %3293
  %3295 = vrot.lane.b32.xlu0 %v3284, 8
  %v3296 = vpop.permute.xlu0 %3295
  %3297 = vrot.lane.b32.xlu0 %v3285, 8
  %v3298 = vpop.permute.xlu0 %3297
  %3299 = vrot.lane.b32.xlu0 %v3286, 8
  %v3300 = vpop.permute.xlu0 %3299
  %3301 = vrot.lane.b32.xlu0 %v3287, 8
  %v3302 = vpop.permute.xlu0 %3301
  %3303 = vrot.lane.b32.xlu0 %v3288, 8
  %v3304 = vpop.permute.xlu0 %3303
  %v3313 = vrot.slane %v3265, 2
  %v3314 = vrot.slane %v3266, 2
  %v3315 = vrot.slane %v3267, 2
  %v3316 = vrot.slane %v3268, 2
  %v3317 = vrot.slane %v3269, 2
  %v3318 = vrot.slane %v3270, 2
  %v3319 = vrot.slane %v3271, 2
  %v3320 = vrot.slane %v3272, 2
  %3321 = vrot.lane.b32.xlu0 %v3313, 16
  %v3322 = vpop.permute.xlu0 %3321
  %3323 = vrot.lane.b32.xlu0 %v3314, 16
  %v3324 = vpop.permute.xlu0 %3323
  %3325 = vrot.lane.b32.xlu0 %v3315, 16
  %v3326 = vpop.permute.xlu0 %3325
  %3327 = vrot.lane.b32.xlu0 %v3316, 16
  %v3328 = vpop.permute.xlu0 %3327
  %3329 = vrot.lane.b32.xlu0 %v3317, 16
  %v3330 = vpop.permute.xlu0 %3329
  %3331 = vrot.lane.b32.xlu0 %v3318, 16
  %v3332 = vpop.permute.xlu0 %3331
  %3333 = vrot.lane.b32.xlu0 %v3319, 16
  %v3334 = vpop.permute.xlu0 %3333
  %3335 = vrot.lane.b32.xlu0 %v3320, 16
  %v3336 = vpop.permute.xlu0 %3335
  %v3345 = vrot.slane %v3265, 3
  %v3346 = vrot.slane %v3266, 3
  %v3347 = vrot.slane %v3267, 3
  %v3348 = vrot.slane %v3268, 3
  %v3349 = vrot.slane %v3269, 3
  %v3350 = vrot.slane %v3270, 3
  %v3351 = vrot.slane %v3271, 3
  %v3352 = vrot.slane %v3272, 3
  %3353 = vrot.lane.b32.xlu0 %v3345, 24
  %v3354 = vpop.permute.xlu0 %3353
  %3355 = vrot.lane.b32.xlu0 %v3346, 24
  %v3356 = vpop.permute.xlu0 %3355
  %3357 = vrot.lane.b32.xlu0 %v3347, 24
  %v3358 = vpop.permute.xlu0 %3357
  %3359 = vrot.lane.b32.xlu0 %v3348, 24
  %v3360 = vpop.permute.xlu0 %3359
  %3361 = vrot.lane.b32.xlu0 %v3349, 24
  %v3362 = vpop.permute.xlu0 %3361
  %3363 = vrot.lane.b32.xlu0 %v3350, 24
  %v3364 = vpop.permute.xlu0 %3363
  %3365 = vrot.lane.b32.xlu0 %v3351, 24
  %v3366 = vpop.permute.xlu0 %3365
  %3367 = vrot.lane.b32.xlu0 %v3352, 24
  %v3368 = vpop.permute.xlu0 %3367
  %v3377 = vrot.slane %v3265, 4
  %v3378 = vrot.slane %v3266, 4
  %v3379 = vrot.slane %v3267, 4
  %v3380 = vrot.slane %v3268, 4
  %v3381 = vrot.slane %v3269, 4
  %v3382 = vrot.slane %v3270, 4
  %v3383 = vrot.slane %v3271, 4
  %v3384 = vrot.slane %v3272, 4
  %3385 = vrot.lane.b32.xlu0 %v3377, 32
  %v3386 = vpop.permute.xlu0 %3385
  %3387 = vrot.lane.b32.xlu0 %v3378, 32
  %v3388 = vpop.permute.xlu0 %3387
  %3389 = vrot.lane.b32.xlu0 %v3379, 32
  %v3390 = vpop.permute.xlu0 %3389
  %3391 = vrot.lane.b32.xlu0 %v3380, 32
  %v3392 = vpop.permute.xlu0 %3391
  %3393 = vrot.lane.b32.xlu0 %v3381, 32
  %v3394 = vpop.permute.xlu0 %3393
  %3395 = vrot.lane.b32.xlu0 %v3382, 32
  %v3396 = vpop.permute.xlu0 %3395
  %3397 = vrot.lane.b32.xlu0 %v3383, 32
  %v3398 = vpop.permute.xlu0 %3397
  %3399 = vrot.lane.b32.xlu0 %v3384, 32
  %v3400 = vpop.permute.xlu0 %3399
  %v3409 = vsel %vm632, %v3265, %v3290
  %v3410 = vsel %vm632, %v3266, %v3292
  %v3411 = vsel %vm632, %v3267, %v3294
  %v3412 = vsel %vm632, %v3268, %v3296
  %v3413 = vsel %vm632, %v3269, %v3298
  %v3414 = vsel %vm632, %v3270, %v3300
  %v3415 = vsel %vm632, %v3271, %v3302
  %v3416 = vsel %vm632, %v3272, %v3304
  %v3417 = vsel %vm666, %v3409, %v3322
  %v3418 = vsel %vm666, %v3410, %v3324
  %v3419 = vsel %vm666, %v3411, %v3326
  %v3420 = vsel %vm666, %v3412, %v3328
  %v3421 = vsel %vm666, %v3413, %v3330
  %v3422 = vsel %vm666, %v3414, %v3332
  %v3423 = vsel %vm666, %v3415, %v3334
  %v3424 = vsel %vm666, %v3416, %v3336
  %v3425 = vsel %vm1542, %v3417, %v3354
  %v3426 = vsel %vm1542, %v3418, %v3356
  %v3427 = vsel %vm1542, %v3419, %v3358
  %v3428 = vsel %vm1542, %v3420, %v3360
  %v3429 = vsel %vm1542, %v3421, %v3362
  %v3430 = vsel %vm1542, %v3422, %v3364
  %v3431 = vsel %vm1542, %v3423, %v3366
  %v3432 = vsel %vm1542, %v3424, %v3368
  %v3433 = vsel %vm1559, %v3425, %v3386
  %v3434 = vsel %vm1559, %v3426, %v3388
  %v3435 = vsel %vm1559, %v3427, %v3390
  %v3436 = vsel %vm1559, %v3428, %v3392
  %v3437 = vsel %vm1559, %v3429, %v3394
  %v3438 = vsel %vm1559, %v3430, %v3396
  %v3439 = vsel %vm1559, %v3431, %v3398
  %v3440 = vsel %vm1559, %v3432, %v3400
  %v3441 = vld [vmem:[%s31] sm:$0xff]
  %v3442 = vld [vmem:[%s31 + $0x8] sm:$0xff]
  %v3443 = vld [vmem:[%s31 + $0x10] sm:$0xff]
  %v3444 = vld [vmem:[%s31 + $0x18] sm:$0xff]
  %v3445 = vld [vmem:[%s31 + $0x20] sm:$0xff]
  %v3446 = vld [vmem:[%s33] sm:$0x1]
  %v3448 = vlaneseq
  %v3449 = vshrl.u32 %v3448, 7
  %v3450 = vsub.s32 0, %v3449
  %v3451 = vrot.slane %v3446, %v3450
  %v3460 = vcombine.low %v3433, %v3434
  %v3461 = vcombine.low %v3435, %v3436
  %v3462 = vcombine.low %v3437, %v3438
  %v3463 = vcombine.low %v3439, %v3440
  %v3464 = vcombine.low %v3451, %v3451
  %v3466 = vsel %vm1588, %v3460, 0
  %v3468 = vsel %vm1588, %v3461, 0
  %v3470 = vsel %vm1588, %v3462, 0
  %v3472 = vsel %vm1588, %v3463, 0
  %3474 = vmatprep.subr.mxu0 0.0
  %3475 = vmatpush1.msra.mxu0 %v3441
  %3476 = vmatprep.subr.mxu0 0.0
  %3477 = vmatpush1.msra.mxu0 %v3442
  %3478 = vmatprep.subr.mxu0 0.0
  %3479 = vmatpush1.msra.mxu0 %v3443
  %3480 = vmatprep.subr.mxu0 0.0
  %3481 = vmatpush1.msra.mxu0 %v3444
  %3482 = vmatprep.subr.mxu0 0.0
  %3483 = vmatpush1.msra.mxu0 %v3445
  %3484 = vmatprep.subr.mxu0 0.0
  %3485 = vmatpush1.msra.mxu0 0.0
  %3486 = vmatprep.subr.mxu0 0.0
  %3487 = vmatpush1.msra.mxu0 0.0
  %3488 = vmatprep.subr.mxu0 0.0
  %3489 = vmatpush1.msra.mxu0 0.0
  %3490 = vmatprep.subr.mxu0 0.0
  %3491 = vmatpush1.msra.mxu0 0.0
  %3492 = vmatprep.subr.mxu0 0.0
  %3493 = vmatpush1.msra.mxu0 0.0
  %3494 = vmatprep.subr.mxu0 0.0
  %3495 = vmatpush1.msra.mxu0 0.0
  %3496 = vmatprep.subr.mxu0 0.0
  %3497 = vmatpush1.msra.mxu0 0.0
  %3498 = vmatprep.subr.mxu0 0.0
  %3499 = vmatpush1.msra.mxu0 0.0
  %3500 = vmatprep.subr.mxu0 0.0
  %3501 = vmatpush1.msra.mxu0 0.0
  %3502 = vmatprep.subr.mxu0 0.0
  %3503 = vmatpush1.msra.mxu0 0.0
  %3504 = vmatprep.subr.mxu0 0.0
  %3505 = vmatpush1.msra.mxu0 0.0
  %3506 = vmatprep.subr.mxu0 0.0
  %3507 = vmatpush1.msra.mxu0 0.0
  %3508 = vmatprep.subr.mxu0 0.0
  %3509 = vmatpush1.msra.mxu0 0.0
  %3510 = vmatprep.subr.mxu0 0.0
  %3511 = vmatpush1.msra.mxu0 0.0
  %3512 = vmatprep.subr.mxu0 0.0
  %3513 = vmatpush1.msra.mxu0 0.0
  %3514 = vmatprep.subr.mxu0 0.0
  %3515 = vmatpush1.msra.mxu0 0.0
  %3516 = vmatprep.subr.mxu0 0.0
  %3517 = vmatpush1.msra.mxu0 0.0
  %3518 = vmatprep.subr.mxu0 0.0
  %3519 = vmatpush1.msra.mxu0 0.0
  %3520 = vmatprep.subr.mxu0 0.0
  %3521 = vmatpush1.msra.mxu0 0.0
  %3522 = vmatprep.subr.mxu0 0.0
  %3523 = vmatpush1.msra.mxu0 0.0
  %3524 = vmatprep.subr.mxu0 0.0
  %3525 = vmatpush1.msra.mxu0 0.0
  %3526 = vmatprep.subr.mxu0 0.0
  %3527 = vmatpush1.msra.mxu0 0.0
  %3528 = vmatprep.subr.mxu0 0.0
  %3529 = vmatpush1.msra.mxu0 0.0
  %3530 = vmatprep.subr.mxu0 0.0
  %3531 = vmatpush1.msra.mxu0 0.0
  %3532 = vmatprep.subr.mxu0 0.0
  %3533 = vmatpush1.msra.mxu0 0.0
  %3534 = vmatprep.subr.mxu0 0.0
  %3535 = vmatpush1.msra.mxu0 0.0
  %3536 = vmatprep.subr.mxu0 0.0
  %3537 = vmatpush1.msra.mxu0 0.0
  %3538 = vmatprep.mubr.f32.mxu0 0.0
  %3539 = vmatmul.mubr.f32.gmra.mrb[0].mxu0 %v3466
  %v3540 = vpop.f32.mrb[0].mxu0
  %v3541 = vadd.f32 %v3464, %v3540
  %v3542 = vpop.f32.mrb[0].mxu0
  %3543 = vmatprep.mubr.f32.mxu0 0.0
  %3544 = vmatmul.mubr.f32.gmra.mrb[0].mxu0 %v3468
  %v3545 = vpop.f32.mrb[0].mxu0
  %v3546 = vadd.f32 %v3464, %v3545
  %v3547 = vpop.f32.mrb[0].mxu0
  %3548 = vmatprep.mubr.f32.mxu0 0.0
  %3549 = vmatmul.mubr.f32.gmra.mrb[0].mxu0 %v3470
  %v3550 = vpop.f32.mrb[0].mxu0
  %v3551 = vadd.f32 %v3464, %v3550
  %v3552 = vpop.f32.mrb[0].mxu0
  %3553 = vmatprep.mubr.f32.mxu0 0.0
  %3554 = vmatmul.mubr.f32.gmra.mrb[0].mxu0 %v3472
  %v3555 = vpop.f32.mrb[0].mxu0
  %v3556 = vadd.f32 %v3464, %v3555
  %v3557 = vpop.f32.mrb[0].mxu0
  %3558 = vdwg.mxu0
  %v3563 = vcombine.high %v3541, %v3541
  %v3564 = vcombine.high %v3546, %v3546
  %v3565 = vcombine.high %v3551, %v3551
  %v3566 = vcombine.high %v3556, %v3556
  %vm3571 = vcmask 60416
  %v3572 = vsel %vm3571, %v3541, 0.0
  %v3573 = vsel %vm3571, %v3563, 0.0
  %v3574 = vadd.f32 %v3572, %v3573
  %v3575 = vsel %vm3571, %v3546, 0.0
  %v3576 = vadd.f32 %v3574, %v3575
  %v3577 = vsel %vm3571, %v3564, 0.0
  %v3578 = vadd.f32 %v3576, %v3577
  %v3579 = vsel %vm3571, %v3551, 0.0
  %v3580 = vadd.f32 %v3578, %v3579
  %v3581 = vsel %vm3571, %v3565, 0.0
  %v3582 = vadd.f32 %v3580, %v3581
  %v3583 = vsel %vm3571, %v3556, 0.0
  %v3584 = vadd.f32 %v3582, %v3583
  %v3585 = vsel %vm3571, %v3566, 0.0
  %v3586 = vadd.f32 %v3584, %v3585
  %v3587 = vrot.slane %v3586, 4
  %v3588 = vadd.f32 %v3586, %v3587
  %v3589 = vrot.slane %v3588, 2
  %v3590 = vadd.f32 %v3588, %v3589
  %v3591 = vrot.slane %v3590, 1
  %v3592 = vadd.f32 %v3590, %v3591
  %v3593 = vmul.f32 %v3592, 0.03125
  %v3594 = vsub.f32 %v3541, %v3593
  %v3595 = vsub.f32 %v3563, %v3593
  %v3596 = vsub.f32 %v3546, %v3593
  %v3597 = vsub.f32 %v3564, %v3593
  %v3598 = vsub.f32 %v3551, %v3593
  %v3599 = vsub.f32 %v3565, %v3593
  %v3600 = vsub.f32 %v3556, %v3593
  %v3601 = vsub.f32 %v3566, %v3593
  %v3602 = vmul.f32 %v3594, %v3594
  %v3603 = vmul.f32 %v3595, %v3595
  %v3604 = vmul.f32 %v3596, %v3596
  %v3605 = vmul.f32 %v3597, %v3597
  %v3606 = vmul.f32 %v3598, %v3598
  %v3607 = vmul.f32 %v3599, %v3599
  %v3608 = vmul.f32 %v3600, %v3600
  %v3609 = vmul.f32 %v3601, %v3601
  %v3610 = vsel %vm3571, %v3602, 0.0
  %v3611 = vsel %vm3571, %v3603, 0.0
  %v3612 = vadd.f32 %v3610, %v3611
  %v3613 = vsel %vm3571, %v3604, 0.0
  %v3614 = vadd.f32 %v3612, %v3613
  %v3615 = vsel %vm3571, %v3605, 0.0
  %v3616 = vadd.f32 %v3614, %v3615
  %v3617 = vsel %vm3571, %v3606, 0.0
  %v3618 = vadd.f32 %v3616, %v3617
  %v3619 = vsel %vm3571, %v3607, 0.0
  %v3620 = vadd.f32 %v3618, %v3619
  %v3621 = vsel %vm3571, %v3608, 0.0
  %v3622 = vadd.f32 %v3620, %v3621
  %v3623 = vsel %vm3571, %v3609, 0.0
  %v3624 = vadd.f32 %v3622, %v3623
  %v3625 = vrot.slane %v3624, 4
  %v3626 = vadd.f32 %v3624, %v3625
  %v3627 = vrot.slane %v3626, 2
  %v3628 = vadd.f32 %v3626, %v3627
  %v3629 = vrot.slane %v3628, 1
  %v3630 = vadd.f32 %v3628, %v3629
  %v3631 = vmul.f32 %v3630, 0.03125
  %v3632 = vadd.f32 %v3631, 1e-05
  %v3633 = vrsqrt.pop %v3632
  %v3634 = vmul.f32 %v3594, %v3633
  %v3635 = vmul.f32 %v3595, %v3633
  %v3636 = vmul.f32 %v3596, %v3633
  %v3637 = vmul.f32 %v3597, %v3633
  %v3638 = vmul.f32 %v3598, %v3633
  %v3639 = vmul.f32 %v3599, %v3633
  %v3640 = vmul.f32 %v3600, %v3633
  %v3641 = vmul.f32 %v3601, %v3633
  %v3642 = vld [vmem:[%s35] sm:$0x1]
  %v3644 = vlaneseq
  %v3645 = vshrl.u32 %v3644, 7
  %v3646 = vsub.s32 0, %v3645
  %v3647 = vrot.slane %v3642, %v3646
  %v3649 = vmul.f32 %v3634, %v3647
  %v3650 = vmul.f32 %v3635, %v3647
  %v3651 = vmul.f32 %v3636, %v3647
  %v3652 = vmul.f32 %v3637, %v3647
  %v3653 = vmul.f32 %v3638, %v3647
  %v3654 = vmul.f32 %v3639, %v3647
  %v3655 = vmul.f32 %v3640, %v3647
  %v3656 = vmul.f32 %v3641, %v3647
  %v3657 = vld [vmem:[%s37] sm:$0x1]
  %v3659 = vlaneseq
  %v3660 = vshrl.u32 %v3659, 7
  %v3661 = vsub.s32 0, %v3660
  %v3662 = vrot.slane %v3657, %v3661
  %v3664 = vadd.f32 %v3649, %v3662
  %v3665 = vadd.f32 %v3650, %v3662
  %v3666 = vadd.f32 %v3651, %v3662
  %v3667 = vadd.f32 %v3652, %v3662
  %v3668 = vadd.f32 %v3653, %v3662
  %v3669 = vadd.f32 %v3654, %v3662
  %v3670 = vadd.f32 %v3655, %v3662
  %v3671 = vadd.f32 %v3656, %v3662
  %v3680 = vrot.slane %v3664, 6
  %v3681 = vrot.slane %v3665, 6
  %v3682 = vrot.slane %v3666, 6
  %v3683 = vrot.slane %v3667, 6
  %v3684 = vrot.slane %v3668, 6
  %v3685 = vrot.slane %v3669, 6
  %v3686 = vrot.slane %v3670, 6
  %v3687 = vrot.slane %v3671, 6
  %v3696 = vsel %vm178, 0.0, %v3680
  %v3697 = vsel %vm178, 0.0, %v3681
  %v3698 = vsel %vm178, 0.0, %v3682
  %v3699 = vsel %vm178, 0.0, %v3683
  %v3700 = vsel %vm178, 0.0, %v3684
  %v3701 = vsel %vm178, 0.0, %v3685
  %v3702 = vsel %vm178, 0.0, %v3686
  %v3703 = vsel %vm178, 0.0, %v3687
  %v3704 = vsel %vm348, %v3696, 0.0
  %v3705 = vsel %vm348, %v3697, 0.0
  %v3706 = vsel %vm348, %v3698, 0.0
  %v3707 = vsel %vm348, %v3699, 0.0
  %v3708 = vsel %vm348, %v3700, 0.0
  %v3709 = vsel %vm348, %v3701, 0.0
  %v3710 = vsel %vm348, %v3702, 0.0
  %v3711 = vsel %vm348, %v3703, 0.0
  %v3720 = vrot.slane %v3704, 1
  %v3721 = vrot.slane %v3705, 1
  %v3722 = vrot.slane %v3706, 1
  %v3723 = vrot.slane %v3707, 1
  %v3724 = vrot.slane %v3708, 1
  %v3725 = vrot.slane %v3709, 1
  %v3726 = vrot.slane %v3710, 1
  %v3727 = vrot.slane %v3711, 1
  %3728 = vrot.lane.b32.xlu0 %v3720, 8
  %v3729 = vpop.permute.xlu0 %3728
  %3730 = vrot.lane.b32.xlu0 %v3721, 8
  %v3731 = vpop.permute.xlu0 %3730
  %3732 = vrot.lane.b32.xlu0 %v3722, 8
  %v3733 = vpop.permute.xlu0 %3732
  %3734 = vrot.lane.b32.xlu0 %v3723, 8
  %v3735 = vpop.permute.xlu0 %3734
  %3736 = vrot.lane.b32.xlu0 %v3724, 8
  %v3737 = vpop.permute.xlu0 %3736
  %3738 = vrot.lane.b32.xlu0 %v3725, 8
  %v3739 = vpop.permute.xlu0 %3738
  %3740 = vrot.lane.b32.xlu0 %v3726, 8
  %v3741 = vpop.permute.xlu0 %3740
  %3742 = vrot.lane.b32.xlu0 %v3727, 8
  %v3743 = vpop.permute.xlu0 %3742
  %v3752 = vrot.slane %v3704, 2
  %v3753 = vrot.slane %v3705, 2
  %v3754 = vrot.slane %v3706, 2
  %v3755 = vrot.slane %v3707, 2
  %v3756 = vrot.slane %v3708, 2
  %v3757 = vrot.slane %v3709, 2
  %v3758 = vrot.slane %v3710, 2
  %v3759 = vrot.slane %v3711, 2
  %3760 = vrot.lane.b32.xlu0 %v3752, 16
  %v3761 = vpop.permute.xlu0 %3760
  %3762 = vrot.lane.b32.xlu0 %v3753, 16
  %v3763 = vpop.permute.xlu0 %3762
  %3764 = vrot.lane.b32.xlu0 %v3754, 16
  %v3765 = vpop.permute.xlu0 %3764
  %3766 = vrot.lane.b32.xlu0 %v3755, 16
  %v3767 = vpop.permute.xlu0 %3766
  %3768 = vrot.lane.b32.xlu0 %v3756, 16
  %v3769 = vpop.permute.xlu0 %3768
  %3770 = vrot.lane.b32.xlu0 %v3757, 16
  %v3771 = vpop.permute.xlu0 %3770
  %3772 = vrot.lane.b32.xlu0 %v3758, 16
  %v3773 = vpop.permute.xlu0 %3772
  %3774 = vrot.lane.b32.xlu0 %v3759, 16
  %v3775 = vpop.permute.xlu0 %3774
  %v3784 = vrot.slane %v3704, 3
  %v3785 = vrot.slane %v3705, 3
  %v3786 = vrot.slane %v3706, 3
  %v3787 = vrot.slane %v3707, 3
  %v3788 = vrot.slane %v3708, 3
  %v3789 = vrot.slane %v3709, 3
  %v3790 = vrot.slane %v3710, 3
  %v3791 = vrot.slane %v3711, 3
  %3792 = vrot.lane.b32.xlu0 %v3784, 24
  %v3793 = vpop.permute.xlu0 %3792
  %3794 = vrot.lane.b32.xlu0 %v3785, 24
  %v3795 = vpop.permute.xlu0 %3794
  %3796 = vrot.lane.b32.xlu0 %v3786, 24
  %v3797 = vpop.permute.xlu0 %3796
  %3798 = vrot.lane.b32.xlu0 %v3787, 24
  %v3799 = vpop.permute.xlu0 %3798
  %3800 = vrot.lane.b32.xlu0 %v3788, 24
  %v3801 = vpop.permute.xlu0 %3800
  %3802 = vrot.lane.b32.xlu0 %v3789, 24
  %v3803 = vpop.permute.xlu0 %3802
  %3804 = vrot.lane.b32.xlu0 %v3790, 24
  %v3805 = vpop.permute.xlu0 %3804
  %3806 = vrot.lane.b32.xlu0 %v3791, 24
  %v3807 = vpop.permute.xlu0 %3806
  %v3816 = vrot.slane %v3704, 4
  %v3817 = vrot.slane %v3705, 4
  %v3818 = vrot.slane %v3706, 4
  %v3819 = vrot.slane %v3707, 4
  %v3820 = vrot.slane %v3708, 4
  %v3821 = vrot.slane %v3709, 4
  %v3822 = vrot.slane %v3710, 4
  %v3823 = vrot.slane %v3711, 4
  %3824 = vrot.lane.b32.xlu0 %v3816, 32
  %v3825 = vpop.permute.xlu0 %3824
  %3826 = vrot.lane.b32.xlu0 %v3817, 32
  %v3827 = vpop.permute.xlu0 %3826
  %3828 = vrot.lane.b32.xlu0 %v3818, 32
  %v3829 = vpop.permute.xlu0 %3828
  %3830 = vrot.lane.b32.xlu0 %v3819, 32
  %v3831 = vpop.permute.xlu0 %3830
  %3832 = vrot.lane.b32.xlu0 %v3820, 32
  %v3833 = vpop.permute.xlu0 %3832
  %3834 = vrot.lane.b32.xlu0 %v3821, 32
  %v3835 = vpop.permute.xlu0 %3834
  %3836 = vrot.lane.b32.xlu0 %v3822, 32
  %v3837 = vpop.permute.xlu0 %3836
  %3838 = vrot.lane.b32.xlu0 %v3823, 32
  %v3839 = vpop.permute.xlu0 %3838
  %v3848 = vsel %vm632, %v3704, %v3729
  %v3849 = vsel %vm632, %v3705, %v3731
  %v3850 = vsel %vm632, %v3706, %v3733
  %v3851 = vsel %vm632, %v3707, %v3735
  %v3852 = vsel %vm632, %v3708, %v3737
  %v3853 = vsel %vm632, %v3709, %v3739
  %v3854 = vsel %vm632, %v3710, %v3741
  %v3855 = vsel %vm632, %v3711, %v3743
  %v3856 = vsel %vm666, %v3848, %v3761
  %v3857 = vsel %vm666, %v3849, %v3763
  %v3858 = vsel %vm666, %v3850, %v3765
  %v3859 = vsel %vm666, %v3851, %v3767
  %v3860 = vsel %vm666, %v3852, %v3769
  %v3861 = vsel %vm666, %v3853, %v3771
  %v3862 = vsel %vm666, %v3854, %v3773
  %v3863 = vsel %vm666, %v3855, %v3775
  %v3864 = vsel %vm1542, %v3856, %v3793
  %v3865 = vsel %vm1542, %v3857, %v3795
  %v3866 = vsel %vm1542, %v3858, %v3797
  %v3867 = vsel %vm1542, %v3859, %v3799
  %v3868 = vsel %vm1542, %v3860, %v3801
  %v3869 = vsel %vm1542, %v3861, %v3803
  %v3870 = vsel %vm1542, %v3862, %v3805
  %v3871 = vsel %vm1542, %v3863, %v3807
  %v3872 = vsel %vm1559, %v3864, %v3825
  %v3873 = vsel %vm1559, %v3865, %v3827
  %v3874 = vsel %vm1559, %v3866, %v3829
  %v3875 = vsel %vm1559, %v3867, %v3831
  %v3876 = vsel %vm1559, %v3868, %v3833
  %v3877 = vsel %vm1559, %v3869, %v3835
  %v3878 = vsel %vm1559, %v3870, %v3837
  %v3879 = vsel %vm1559, %v3871, %v3839
  %v3880 = vld [vmem:[%s39] sm:$0xff]
  %v3881 = vld [vmem:[%s39 + $0x8] sm:$0xff]
  %v3882 = vld [vmem:[%s39 + $0x10] sm:$0xff]
  %v3883 = vld [vmem:[%s39 + $0x18] sm:$0xff]
  %v3884 = vld [vmem:[%s39 + $0x20] sm:$0xff]
  %v3885 = vld [vmem:[%s41] sm:$0x1]
  %v3887 = vlaneseq
  %v3888 = vshrl.u32 %v3887, 7
  %v3889 = vsub.s32 0, %v3888
  %v3890 = vrot.slane %v3885, %v3889
  %v3899 = vcombine.low %v3872, %v3873
  %v3900 = vcombine.low %v3874, %v3875
  %v3901 = vcombine.low %v3876, %v3877
  %v3902 = vcombine.low %v3878, %v3879
  %v3903 = vcombine.low %v3890, %v3890
  %v3905 = vsel %vm1588, %v3899, 0
  %v3907 = vsel %vm1588, %v3900, 0
  %v3909 = vsel %vm1588, %v3901, 0
  %v3911 = vsel %vm1588, %v3902, 0
  %3913 = vmatprep.subr.mxu0 0.0
  %3914 = vmatpush1.msra.mxu0 %v3880
  %3915 = vmatprep.subr.mxu0 0.0
  %3916 = vmatpush1.msra.mxu0 %v3881
  %3917 = vmatprep.subr.mxu0 0.0
  %3918 = vmatpush1.msra.mxu0 %v3882
  %3919 = vmatprep.subr.mxu0 0.0
  %3920 = vmatpush1.msra.mxu0 %v3883
  %3921 = vmatprep.subr.mxu0 0.0
  %3922 = vmatpush1.msra.mxu0 %v3884
  %3923 = vmatprep.subr.mxu0 0.0
  %3924 = vmatpush1.msra.mxu0 0.0
  %3925 = vmatprep.subr.mxu0 0.0
  %3926 = vmatpush1.msra.mxu0 0.0
  %3927 = vmatprep.subr.mxu0 0.0
  %3928 = vmatpush1.msra.mxu0 0.0
  %3929 = vmatprep.subr.mxu0 0.0
  %3930 = vmatpush1.msra.mxu0 0.0
  %3931 = vmatprep.subr.mxu0 0.0
  %3932 = vmatpush1.msra.mxu0 0.0
  %3933 = vmatprep.subr.mxu0 0.0
  %3934 = vmatpush1.msra.mxu0 0.0
  %3935 = vmatprep.subr.mxu0 0.0
  %3936 = vmatpush1.msra.mxu0 0.0
  %3937 = vmatprep.subr.mxu0 0.0
  %3938 = vmatpush1.msra.mxu0 0.0
  %3939 = vmatprep.subr.mxu0 0.0
  %3940 = vmatpush1.msra.mxu0 0.0
  %3941 = vmatprep.subr.mxu0 0.0
  %3942 = vmatpush1.msra.mxu0 0.0
  %3943 = vmatprep.subr.mxu0 0.0
  %3944 = vmatpush1.msra.mxu0 0.0
  %3945 = vmatprep.subr.mxu0 0.0
  %3946 = vmatpush1.msra.mxu0 0.0
  %3947 = vmatprep.subr.mxu0 0.0
  %3948 = vmatpush1.msra.mxu0 0.0
  %3949 = vmatprep.subr.mxu0 0.0
  %3950 = vmatpush1.msra.mxu0 0.0
  %3951 = vmatprep.subr.mxu0 0.0
  %3952 = vmatpush1.msra.mxu0 0.0
  %3953 = vmatprep.subr.mxu0 0.0
  %3954 = vmatpush1.msra.mxu0 0.0
  %3955 = vmatprep.subr.mxu0 0.0
  %3956 = vmatpush1.msra.mxu0 0.0
  %3957 = vmatprep.subr.mxu0 0.0
  %3958 = vmatpush1.msra.mxu0 0.0
  %3959 = vmatprep.subr.mxu0 0.0
  %3960 = vmatpush1.msra.mxu0 0.0
  %3961 = vmatprep.subr.mxu0 0.0
  %3962 = vmatpush1.msra.mxu0 0.0
  %3963 = vmatprep.subr.mxu0 0.0
  %3964 = vmatpush1.msra.mxu0 0.0
  %3965 = vmatprep.subr.mxu0 0.0
  %3966 = vmatpush1.msra.mxu0 0.0
  %3967 = vmatprep.subr.mxu0 0.0
  %3968 = vmatpush1.msra.mxu0 0.0
  %3969 = vmatprep.subr.mxu0 0.0
  %3970 = vmatpush1.msra.mxu0 0.0
  %3971 = vmatprep.subr.mxu0 0.0
  %3972 = vmatpush1.msra.mxu0 0.0
  %3973 = vmatprep.subr.mxu0 0.0
  %3974 = vmatpush1.msra.mxu0 0.0
  %3975 = vmatprep.subr.mxu0 0.0
  %3976 = vmatpush1.msra.mxu0 0.0
  %3977 = vmatprep.mubr.f32.mxu0 0.0
  %3978 = vmatmul.mubr.f32.gmra.mrb[0].mxu0 %v3905
  %v3979 = vpop.f32.mrb[0].mxu0
  %v3980 = vadd.f32 %v3903, %v3979
  %v3981 = vpop.f32.mrb[0].mxu0
  %3982 = vmatprep.mubr.f32.mxu0 0.0
  %3983 = vmatmul.mubr.f32.gmra.mrb[0].mxu0 %v3907
  %v3984 = vpop.f32.mrb[0].mxu0
  %v3985 = vadd.f32 %v3903, %v3984
  %v3986 = vpop.f32.mrb[0].mxu0
  %3987 = vmatprep.mubr.f32.mxu0 0.0
  %3988 = vmatmul.mubr.f32.gmra.mrb[0].mxu0 %v3909
  %v3989 = vpop.f32.mrb[0].mxu0
  %v3990 = vadd.f32 %v3903, %v3989
  %v3991 = vpop.f32.mrb[0].mxu0
  %3992 = vmatprep.mubr.f32.mxu0 0.0
  %3993 = vmatmul.mubr.f32.gmra.mrb[0].mxu0 %v3911
  %v3994 = vpop.f32.mrb[0].mxu0
  %v3995 = vadd.f32 %v3903, %v3994
  %v3996 = vpop.f32.mrb[0].mxu0
  %3997 = vdwg.mxu0
  %v4002 = vcombine.high %v3980, %v3980
  %v4003 = vcombine.high %v3985, %v3985
  %v4004 = vcombine.high %v3990, %v3990
  %v4005 = vcombine.high %v3995, %v3995
  %v4010 = vsel %vm3571, %v3980, 0.0
  %v4011 = vsel %vm3571, %v4002, 0.0
  %v4012 = vadd.f32 %v4010, %v4011
  %v4013 = vsel %vm3571, %v3985, 0.0
  %v4014 = vadd.f32 %v4012, %v4013
  %v4015 = vsel %vm3571, %v4003, 0.0
  %v4016 = vadd.f32 %v4014, %v4015
  %v4017 = vsel %vm3571, %v3990, 0.0
  %v4018 = vadd.f32 %v4016, %v4017
  %v4019 = vsel %vm3571, %v4004, 0.0
  %v4020 = vadd.f32 %v4018, %v4019
  %v4021 = vsel %vm3571, %v3995, 0.0
  %v4022 = vadd.f32 %v4020, %v4021
  %v4023 = vsel %vm3571, %v4005, 0.0
  %v4024 = vadd.f32 %v4022, %v4023
  %v4025 = vrot.slane %v4024, 4
  %v4026 = vadd.f32 %v4024, %v4025
  %v4027 = vrot.slane %v4026, 2
  %v4028 = vadd.f32 %v4026, %v4027
  %v4029 = vrot.slane %v4028, 1
  %v4030 = vadd.f32 %v4028, %v4029
  %v4031 = vmul.f32 %v4030, 0.03125
  %v4032 = vsub.f32 %v3980, %v4031
  %v4033 = vsub.f32 %v4002, %v4031
  %v4034 = vsub.f32 %v3985, %v4031
  %v4035 = vsub.f32 %v4003, %v4031
  %v4036 = vsub.f32 %v3990, %v4031
  %v4037 = vsub.f32 %v4004, %v4031
  %v4038 = vsub.f32 %v3995, %v4031
  %v4039 = vsub.f32 %v4005, %v4031
  %v4040 = vmul.f32 %v4032, %v4032
  %v4041 = vmul.f32 %v4033, %v4033
  %v4042 = vmul.f32 %v4034, %v4034
  %v4043 = vmul.f32 %v4035, %v4035
  %v4044 = vmul.f32 %v4036, %v4036
  %v4045 = vmul.f32 %v4037, %v4037
  %v4046 = vmul.f32 %v4038, %v4038
  %v4047 = vmul.f32 %v4039, %v4039
  %v4048 = vsel %vm3571, %v4040, 0.0
  %v4049 = vsel %vm3571, %v4041, 0.0
  %v4050 = vadd.f32 %v4048, %v4049
  %v4051 = vsel %vm3571, %v4042, 0.0
  %v4052 = vadd.f32 %v4050, %v4051
  %v4053 = vsel %vm3571, %v4043, 0.0
  %v4054 = vadd.f32 %v4052, %v4053
  %v4055 = vsel %vm3571, %v4044, 0.0
  %v4056 = vadd.f32 %v4054, %v4055
  %v4057 = vsel %vm3571, %v4045, 0.0
  %v4058 = vadd.f32 %v4056, %v4057
  %v4059 = vsel %vm3571, %v4046, 0.0
  %v4060 = vadd.f32 %v4058, %v4059
  %v4061 = vsel %vm3571, %v4047, 0.0
  %v4062 = vadd.f32 %v4060, %v4061
  %v4063 = vrot.slane %v4062, 4
  %v4064 = vadd.f32 %v4062, %v4063
  %v4065 = vrot.slane %v4064, 2
  %v4066 = vadd.f32 %v4064, %v4065
  %v4067 = vrot.slane %v4066, 1
  %v4068 = vadd.f32 %v4066, %v4067
  %v4069 = vmul.f32 %v4068, 0.03125
  %v4070 = vadd.f32 %v4069, 1e-05
  %v4071 = vrsqrt.pop %v4070
  %v4072 = vmul.f32 %v4032, %v4071
  %v4073 = vmul.f32 %v4033, %v4071
  %v4074 = vmul.f32 %v4034, %v4071
  %v4075 = vmul.f32 %v4035, %v4071
  %v4076 = vmul.f32 %v4036, %v4071
  %v4077 = vmul.f32 %v4037, %v4071
  %v4078 = vmul.f32 %v4038, %v4071
  %v4079 = vmul.f32 %v4039, %v4071
  %v4080 = vld [vmem:[%s43] sm:$0x1]
  %v4082 = vlaneseq
  %v4083 = vshrl.u32 %v4082, 7
  %v4084 = vsub.s32 0, %v4083
  %v4085 = vrot.slane %v4080, %v4084
  %v4087 = vmul.f32 %v4072, %v4085
  %v4088 = vmul.f32 %v4073, %v4085
  %v4089 = vmul.f32 %v4074, %v4085
  %v4090 = vmul.f32 %v4075, %v4085
  %v4091 = vmul.f32 %v4076, %v4085
  %v4092 = vmul.f32 %v4077, %v4085
  %v4093 = vmul.f32 %v4078, %v4085
  %v4094 = vmul.f32 %v4079, %v4085
  %v4095 = vld [vmem:[%s45] sm:$0x1]
  %v4097 = vlaneseq
  %v4098 = vshrl.u32 %v4097, 7
  %v4099 = vsub.s32 0, %v4098
  %v4100 = vrot.slane %v4095, %v4099
  %v4102 = vadd.f32 %v4087, %v4100
  %v4103 = vadd.f32 %v4088, %v4100
  %v4104 = vadd.f32 %v4089, %v4100
  %v4105 = vadd.f32 %v4090, %v4100
  %v4106 = vadd.f32 %v4091, %v4100
  %v4107 = vadd.f32 %v4092, %v4100
  %v4108 = vadd.f32 %v4093, %v4100
  %v4109 = vadd.f32 %v4094, %v4100
  %4110 = vrot.lane.b32.xlu0 %v3664, 8
  %v4111 = vpop.permute.xlu0 %4110
  %4112 = vrot.lane.b32.xlu0 %v3665, 8
  %v4113 = vpop.permute.xlu0 %4112
  %4114 = vrot.lane.b32.xlu0 %v3666, 8
  %v4115 = vpop.permute.xlu0 %4114
  %4116 = vrot.lane.b32.xlu0 %v3667, 8
  %v4117 = vpop.permute.xlu0 %4116
  %4118 = vrot.lane.b32.xlu0 %v3668, 8
  %v4119 = vpop.permute.xlu0 %4118
  %4120 = vrot.lane.b32.xlu0 %v3669, 8
  %v4121 = vpop.permute.xlu0 %4120
  %4122 = vrot.lane.b32.xlu0 %v3670, 8
  %v4123 = vpop.permute.xlu0 %4122
  %4124 = vrot.lane.b32.xlu0 %v3671, 8
  %v4125 = vpop.permute.xlu0 %4124
  %v4134 = vsel %vm632, %v4102, %v4111
  %v4135 = vsel %vm632, %v4103, %v4113
  %v4136 = vsel %vm632, %v4104, %v4115
  %v4137 = vsel %vm632, %v4105, %v4117
  %v4138 = vsel %vm632, %v4106, %v4119
  %v4139 = vsel %vm632, %v4107, %v4121
  %v4140 = vsel %vm632, %v4108, %v4123
  %v4141 = vsel %vm632, %v4109, %v4125
  %v4150 = vrot.slane %v4134, 6
  %v4151 = vrot.slane %v4135, 6
  %v4152 = vrot.slane %v4136, 6
  %v4153 = vrot.slane %v4137, 6
  %v4154 = vrot.slane %v4138, 6
  %v4155 = vrot.slane %v4139, 6
  %v4156 = vrot.slane %v4140, 6
  %v4157 = vrot.slane %v4141, 6
  %v4166 = vsel %vm178, 0.0, %v4150
  %v4167 = vsel %vm178, 0.0, %v4151
  %v4168 = vsel %vm178, 0.0, %v4152
  %v4169 = vsel %vm178, 0.0, %v4153
  %v4170 = vsel %vm178, 0.0, %v4154
  %v4171 = vsel %vm178, 0.0, %v4155
  %v4172 = vsel %vm178, 0.0, %v4156
  %v4173 = vsel %vm178, 0.0, %v4157
  %v4174 = vsel %vm348, %v4166, 0.0
  %v4175 = vsel %vm348, %v4167, 0.0
  %v4176 = vsel %vm348, %v4168, 0.0
  %v4177 = vsel %vm348, %v4169, 0.0
  %v4178 = vsel %vm348, %v4170, 0.0
  %v4179 = vsel %vm348, %v4171, 0.0
  %v4180 = vsel %vm348, %v4172, 0.0
  %v4181 = vsel %vm348, %v4173, 0.0
  %v4190 = vrot.slane %v4174, 1
  %v4191 = vrot.slane %v4175, 1
  %v4192 = vrot.slane %v4176, 1
  %v4193 = vrot.slane %v4177, 1
  %v4194 = vrot.slane %v4178, 1
  %v4195 = vrot.slane %v4179, 1
  %v4196 = vrot.slane %v4180, 1
  %v4197 = vrot.slane %v4181, 1
  %4198 = vrot.lane.b32.xlu0 %v4190, 16
  %v4199 = vpop.permute.xlu0 %4198
  %4200 = vrot.lane.b32.xlu0 %v4191, 16
  %v4201 = vpop.permute.xlu0 %4200
  %4202 = vrot.lane.b32.xlu0 %v4192, 16
  %v4203 = vpop.permute.xlu0 %4202
  %4204 = vrot.lane.b32.xlu0 %v4193, 16
  %v4205 = vpop.permute.xlu0 %4204
  %4206 = vrot.lane.b32.xlu0 %v4194, 16
  %v4207 = vpop.permute.xlu0 %4206
  %4208 = vrot.lane.b32.xlu0 %v4195, 16
  %v4209 = vpop.permute.xlu0 %4208
  %4210 = vrot.lane.b32.xlu0 %v4196, 16
  %v4211 = vpop.permute.xlu0 %4210
  %4212 = vrot.lane.b32.xlu0 %v4197, 16
  %v4213 = vpop.permute.xlu0 %4212
  %v4222 = vrot.slane %v4174, 2
  %v4223 = vrot.slane %v4175, 2
  %v4224 = vrot.slane %v4176, 2
  %v4225 = vrot.slane %v4177, 2
  %v4226 = vrot.slane %v4178, 2
  %v4227 = vrot.slane %v4179, 2
  %v4228 = vrot.slane %v4180, 2
  %v4229 = vrot.slane %v4181, 2
  %4230 = vrot.lane.b32.xlu0 %v4222, 32
  %v4231 = vpop.permute.xlu0 %4230
  %4232 = vrot.lane.b32.xlu0 %v4223, 32
  %v4233 = vpop.permute.xlu0 %4232
  %4234 = vrot.lane.b32.xlu0 %v4224, 32
  %v4235 = vpop.permute.xlu0 %4234
  %4236 = vrot.lane.b32.xlu0 %v4225, 32
  %v4237 = vpop.permute.xlu0 %4236
  %4238 = vrot.lane.b32.xlu0 %v4226, 32
  %v4239 = vpop.permute.xlu0 %4238
  %4240 = vrot.lane.b32.xlu0 %v4227, 32
  %v4241 = vpop.permute.xlu0 %4240
  %4242 = vrot.lane.b32.xlu0 %v4228, 32
  %v4243 = vpop.permute.xlu0 %4242
  %4244 = vrot.lane.b32.xlu0 %v4229, 32
  %v4245 = vpop.permute.xlu0 %4244
  %v4254 = vrot.slane %v4174, 3
  %v4255 = vrot.slane %v4175, 3
  %v4256 = vrot.slane %v4176, 3
  %v4257 = vrot.slane %v4177, 3
  %v4258 = vrot.slane %v4178, 3
  %v4259 = vrot.slane %v4179, 3
  %v4260 = vrot.slane %v4180, 3
  %v4261 = vrot.slane %v4181, 3
  %4262 = vrot.lane.b32.xlu0 %v4254, 48
  %v4263 = vpop.permute.xlu0 %4262
  %4264 = vrot.lane.b32.xlu0 %v4255, 48
  %v4265 = vpop.permute.xlu0 %4264
  %4266 = vrot.lane.b32.xlu0 %v4256, 48
  %v4267 = vpop.permute.xlu0 %4266
  %4268 = vrot.lane.b32.xlu0 %v4257, 48
  %v4269 = vpop.permute.xlu0 %4268
  %4270 = vrot.lane.b32.xlu0 %v4258, 48
  %v4271 = vpop.permute.xlu0 %4270
  %4272 = vrot.lane.b32.xlu0 %v4259, 48
  %v4273 = vpop.permute.xlu0 %4272
  %4274 = vrot.lane.b32.xlu0 %v4260, 48
  %v4275 = vpop.permute.xlu0 %4274
  %4276 = vrot.lane.b32.xlu0 %v4261, 48
  %v4277 = vpop.permute.xlu0 %4276
  %v4286 = vrot.slane %v4174, 4
  %v4287 = vrot.slane %v4175, 4
  %v4288 = vrot.slane %v4176, 4
  %v4289 = vrot.slane %v4177, 4
  %v4290 = vrot.slane %v4178, 4
  %v4291 = vrot.slane %v4179, 4
  %v4292 = vrot.slane %v4180, 4
  %v4293 = vrot.slane %v4181, 4
  %4294 = vrot.lane.b32.xlu0 %v4286, 64
  %v4295 = vpop.permute.xlu0 %4294
  %4296 = vrot.lane.b32.xlu0 %v4287, 64
  %v4297 = vpop.permute.xlu0 %4296
  %4298 = vrot.lane.b32.xlu0 %v4288, 64
  %v4299 = vpop.permute.xlu0 %4298
  %4300 = vrot.lane.b32.xlu0 %v4289, 64
  %v4301 = vpop.permute.xlu0 %4300
  %4302 = vrot.lane.b32.xlu0 %v4290, 64
  %v4303 = vpop.permute.xlu0 %4302
  %4304 = vrot.lane.b32.xlu0 %v4291, 64
  %v4305 = vpop.permute.xlu0 %4304
  %4306 = vrot.lane.b32.xlu0 %v4292, 64
  %v4307 = vpop.permute.xlu0 %4306
  %4308 = vrot.lane.b32.xlu0 %v4293, 64
  %v4309 = vpop.permute.xlu0 %4308
  %v4318 = vsel %vm666, %v4174, %v4199
  %v4319 = vsel %vm666, %v4175, %v4201
  %v4320 = vsel %vm666, %v4176, %v4203
  %v4321 = vsel %vm666, %v4177, %v4205
  %v4322 = vsel %vm666, %v4178, %v4207
  %v4323 = vsel %vm666, %v4179, %v4209
  %v4324 = vsel %vm666, %v4180, %v4211
  %v4325 = vsel %vm666, %v4181, %v4213
  %v4326 = vsel %vm1559, %v4318, %v4231
  %v4327 = vsel %vm1559, %v4319, %v4233
  %v4328 = vsel %vm1559, %v4320, %v4235
  %v4329 = vsel %vm1559, %v4321, %v4237
  %v4330 = vsel %vm1559, %v4322, %v4239
  %v4331 = vsel %vm1559, %v4323, %v4241
  %v4332 = vsel %vm1559, %v4324, %v4243
  %v4333 = vsel %vm1559, %v4325, %v4245
  %vm4334 = vcmask 392192
  %v4335 = vsel %vm4334, %v4326, %v4263
  %v4336 = vsel %vm4334, %v4327, %v4265
  %v4337 = vsel %vm4334, %v4328, %v4267
  %v4338 = vsel %vm4334, %v4329, %v4269
  %v4339 = vsel %vm4334, %v4330, %v4271
  %v4340 = vsel %vm4334, %v4331, %v4273
  %v4341 = vsel %vm4334, %v4332, %v4275
  %v4342 = vsel %vm4334, %v4333, %v4277
  %vm4343 = vcmask 523264
  %v4344 = vsel %vm4343, %v4335, %v4295
  %v4345 = vsel %vm4343, %v4336, %v4297
  %v4346 = vsel %vm4343, %v4337, %v4299
  %v4347 = vsel %vm4343, %v4338, %v4301
  %v4348 = vsel %vm4343, %v4339, %v4303
  %v4349 = vsel %vm4343, %v4340, %v4305
  %v4350 = vsel %vm4343, %v4341, %v4307
  %v4351 = vsel %vm4343, %v4342, %v4309
  %v4352 = vld [vmem:[%s63] sm:$0xff]
  %v4353 = vld [vmem:[%s63 + $0x8] sm:$0xff]
  %v4354 = vld [vmem:[%s63 + $0x10] sm:$0xff]
  %v4355 = vld [vmem:[%s63 + $0x18] sm:$0xff]
  %v4356 = vld [vmem:[%s63 + $0x20] sm:$0xff]
  %v4357 = vld [vmem:[%s63 + $0x28] sm:$0xff]
  %v4358 = vld [vmem:[%s63 + $0x30] sm:$0xff]
  %v4359 = vld [vmem:[%s63 + $0x38] sm:$0xff]
  %v4360 = vld [vmem:[%s63 + $0x40] sm:$0xff]
  %v4361 = vld [vmem:[%s63 + $0x48] sm:$0xff]
  %v4362 = vld [vmem:[%s65] sm:$0x1]
  %v4364 = vlaneseq
  %v4365 = vshrl.u32 %v4364, 7
  %v4366 = vsub.s32 0, %v4365
  %v4367 = vrot.slane %v4362, %v4366
  %v4376 = vcombine.low %v4344, %v4345
  %v4377 = vcombine.low %v4346, %v4347
  %v4378 = vcombine.low %v4348, %v4349
  %v4379 = vcombine.low %v4350, %v4351
  %v4380 = vcombine.low %v4367, %v4367
  %vm4382 = vcmask 654336
  %v4383 = vsel %vm4382, %v4376, 0
  %v4385 = vsel %vm4382, %v4377, 0
  %v4387 = vsel %vm4382, %v4378, 0
  %v4389 = vsel %vm4382, %v4379, 0
  %4391 = vmatprep.subr.mxu0 0.0
  %4392 = vmatpush1.msra.mxu0 %v4352
  %4393 = vmatprep.subr.mxu0 0.0
  %4394 = vmatpush1.msra.mxu0 %v4353
  %4395 = vmatprep.subr.mxu0 0.0
  %4396 = vmatpush1.msra.mxu0 %v4354
  %4397 = vmatprep.subr.mxu0 0.0
  %4398 = vmatpush1.msra.mxu0 %v4355
  %4399 = vmatprep.subr.mxu0 0.0
  %4400 = vmatpush1.msra.mxu0 %v4356
  %4401 = vmatprep.subr.mxu0 0.0
  %4402 = vmatpush1.msra.mxu0 %v4357
  %4403 = vmatprep.subr.mxu0 0.0
  %4404 = vmatpush1.msra.mxu0 %v4358
  %4405 = vmatprep.subr.mxu0 0.0
  %4406 = vmatpush1.msra.mxu0 %v4359
  %4407 = vmatprep.subr.mxu0 0.0
  %4408 = vmatpush1.msra.mxu0 %v4360
  %4409 = vmatprep.subr.mxu0 0.0
  %4410 = vmatpush1.msra.mxu0 %v4361
  %4411 = vmatprep.subr.mxu0 0.0
  %4412 = vmatpush1.msra.mxu0 0.0
  %4413 = vmatprep.subr.mxu0 0.0
  %4414 = vmatpush1.msra.mxu0 0.0
  %4415 = vmatprep.subr.mxu0 0.0
  %4416 = vmatpush1.msra.mxu0 0.0
  %4417 = vmatprep.subr.mxu0 0.0
  %4418 = vmatpush1.msra.mxu0 0.0
  %4419 = vmatprep.subr.mxu0 0.0
  %4420 = vmatpush1.msra.mxu0 0.0
  %4421 = vmatprep.subr.mxu0 0.0
  %4422 = vmatpush1.msra.mxu0 0.0
  %4423 = vmatprep.subr.mxu0 0.0
  %4424 = vmatpush1.msra.mxu0 0.0
  %4425 = vmatprep.subr.mxu0 0.0
  %4426 = vmatpush1.msra.mxu0 0.0
  %4427 = vmatprep.subr.mxu0 0.0
  %4428 = vmatpush1.msra.mxu0 0.0
  %4429 = vmatprep.subr.mxu0 0.0
  %4430 = vmatpush1.msra.mxu0 0.0
  %4431 = vmatprep.subr.mxu0 0.0
  %4432 = vmatpush1.msra.mxu0 0.0
  %4433 = vmatprep.subr.mxu0 0.0
  %4434 = vmatpush1.msra.mxu0 0.0
  %4435 = vmatprep.subr.mxu0 0.0
  %4436 = vmatpush1.msra.mxu0 0.0
  %4437 = vmatprep.subr.mxu0 0.0
  %4438 = vmatpush1.msra.mxu0 0.0
  %4439 = vmatprep.subr.mxu0 0.0
  %4440 = vmatpush1.msra.mxu0 0.0
  %4441 = vmatprep.subr.mxu0 0.0
  %4442 = vmatpush1.msra.mxu0 0.0
  %4443 = vmatprep.subr.mxu0 0.0
  %4444 = vmatpush1.msra.mxu0 0.0
  %4445 = vmatprep.subr.mxu0 0.0
  %4446 = vmatpush1.msra.mxu0 0.0
  %4447 = vmatprep.subr.mxu0 0.0
  %4448 = vmatpush1.msra.mxu0 0.0
  %4449 = vmatprep.subr.mxu0 0.0
  %4450 = vmatpush1.msra.mxu0 0.0
  %4451 = vmatprep.subr.mxu0 0.0
  %4452 = vmatpush1.msra.mxu0 0.0
  %4453 = vmatprep.subr.mxu0 0.0
  %4454 = vmatpush1.msra.mxu0 0.0
  %4455 = vmatprep.mubr.f32.mxu0 0.0
  %4456 = vmatmul.mubr.f32.gmra.mrb[0].mxu0 %v4383
  %v4457 = vpop.f32.mrb[0].mxu0
  %v4458 = vadd.f32 %v4380, %v4457
  %v4459 = vpop.f32.mrb[0].mxu0
  %4460 = vmatprep.mubr.f32.mxu0 0.0
  %4461 = vmatmul.mubr.f32.gmra.mrb[0].mxu0 %v4385
  %v4462 = vpop.f32.mrb[0].mxu0
  %v4463 = vadd.f32 %v4380, %v4462
  %v4464 = vpop.f32.mrb[0].mxu0
  %4465 = vmatprep.mubr.f32.mxu0 0.0
  %4466 = vmatmul.mubr.f32.gmra.mrb[0].mxu0 %v4387
  %v4467 = vpop.f32.mrb[0].mxu0
  %v4468 = vadd.f32 %v4380, %v4467
  %v4469 = vpop.f32.mrb[0].mxu0
  %4470 = vmatprep.mubr.f32.mxu0 0.0
  %4471 = vmatmul.mubr.f32.gmra.mrb[0].mxu0 %v4389
  %v4472 = vpop.f32.mrb[0].mxu0
  %v4473 = vadd.f32 %v4380, %v4472
  %v4474 = vpop.f32.mrb[0].mxu0
  %4475 = vdwg.mxu0
  %v4480 = vcombine.high %v4458, %v4458
  %v4481 = vcombine.high %v4463, %v4463
  %v4482 = vcombine.high %v4468, %v4468
  %v4483 = vcombine.high %v4473, %v4473
  %v4488 = vsel %vm3571, %v4458, 0.0
  %v4489 = vsel %vm3571, %v4480, 0.0
  %v4490 = vadd.f32 %v4488, %v4489
  %v4491 = vsel %vm3571, %v4463, 0.0
  %v4492 = vadd.f32 %v4490, %v4491
  %v4493 = vsel %vm3571, %v4481, 0.0
  %v4494 = vadd.f32 %v4492, %v4493
  %v4495 = vsel %vm3571, %v4468, 0.0
  %v4496 = vadd.f32 %v4494, %v4495
  %v4497 = vsel %vm3571, %v4482, 0.0
  %v4498 = vadd.f32 %v4496, %v4497
  %v4499 = vsel %vm3571, %v4473, 0.0
  %v4500 = vadd.f32 %v4498, %v4499
  %v4501 = vsel %vm3571, %v4483, 0.0
  %v4502 = vadd.f32 %v4500, %v4501
  %v4503 = vrot.slane %v4502, 4
  %v4504 = vadd.f32 %v4502, %v4503
  %v4505 = vrot.slane %v4504, 2
  %v4506 = vadd.f32 %v4504, %v4505
  %v4507 = vrot.slane %v4506, 1
  %v4508 = vadd.f32 %v4506, %v4507
  %v4509 = vmul.f32 %v4508, 0.03125
  %v4510 = vsub.f32 %v4458, %v4509
  %v4511 = vsub.f32 %v4480, %v4509
  %v4512 = vsub.f32 %v4463, %v4509
  %v4513 = vsub.f32 %v4481, %v4509
  %v4514 = vsub.f32 %v4468, %v4509
  %v4515 = vsub.f32 %v4482, %v4509
  %v4516 = vsub.f32 %v4473, %v4509
  %v4517 = vsub.f32 %v4483, %v4509
  %v4518 = vmul.f32 %v4510, %v4510
  %v4519 = vmul.f32 %v4511, %v4511
  %v4520 = vmul.f32 %v4512, %v4512
  %v4521 = vmul.f32 %v4513, %v4513
  %v4522 = vmul.f32 %v4514, %v4514
  %v4523 = vmul.f32 %v4515, %v4515
  %v4524 = vmul.f32 %v4516, %v4516
  %v4525 = vmul.f32 %v4517, %v4517
  %v4526 = vsel %vm3571, %v4518, 0.0
  %v4527 = vsel %vm3571, %v4519, 0.0
  %v4528 = vadd.f32 %v4526, %v4527
  %v4529 = vsel %vm3571, %v4520, 0.0
  %v4530 = vadd.f32 %v4528, %v4529
  %v4531 = vsel %vm3571, %v4521, 0.0
  %v4532 = vadd.f32 %v4530, %v4531
  %v4533 = vsel %vm3571, %v4522, 0.0
  %v4534 = vadd.f32 %v4532, %v4533
  %v4535 = vsel %vm3571, %v4523, 0.0
  %v4536 = vadd.f32 %v4534, %v4535
  %v4537 = vsel %vm3571, %v4524, 0.0
  %v4538 = vadd.f32 %v4536, %v4537
  %v4539 = vsel %vm3571, %v4525, 0.0
  %v4540 = vadd.f32 %v4538, %v4539
  %v4541 = vrot.slane %v4540, 4
  %v4542 = vadd.f32 %v4540, %v4541
  %v4543 = vrot.slane %v4542, 2
  %v4544 = vadd.f32 %v4542, %v4543
  %v4545 = vrot.slane %v4544, 1
  %v4546 = vadd.f32 %v4544, %v4545
  %v4547 = vmul.f32 %v4546, 0.03125
  %v4548 = vadd.f32 %v4547, 1e-05
  %v4549 = vrsqrt.pop %v4548
  %v4550 = vmul.f32 %v4510, %v4549
  %v4551 = vmul.f32 %v4511, %v4549
  %v4552 = vmul.f32 %v4512, %v4549
  %v4553 = vmul.f32 %v4513, %v4549
  %v4554 = vmul.f32 %v4514, %v4549
  %v4555 = vmul.f32 %v4515, %v4549
  %v4556 = vmul.f32 %v4516, %v4549
  %v4557 = vmul.f32 %v4517, %v4549
  %v4558 = vld [vmem:[%s67] sm:$0x1]
  %v4560 = vlaneseq
  %v4561 = vshrl.u32 %v4560, 7
  %v4562 = vsub.s32 0, %v4561
  %v4563 = vrot.slane %v4558, %v4562
  %v4565 = vmul.f32 %v4550, %v4563
  %v4566 = vmul.f32 %v4551, %v4563
  %v4567 = vmul.f32 %v4552, %v4563
  %v4568 = vmul.f32 %v4553, %v4563
  %v4569 = vmul.f32 %v4554, %v4563
  %v4570 = vmul.f32 %v4555, %v4563
  %v4571 = vmul.f32 %v4556, %v4563
  %v4572 = vmul.f32 %v4557, %v4563
  %v4573 = vld [vmem:[%s69] sm:$0x1]
  %v4575 = vlaneseq
  %v4576 = vshrl.u32 %v4575, 7
  %v4577 = vsub.s32 0, %v4576
  %v4578 = vrot.slane %v4573, %v4577
  %v4580 = vadd.f32 %v4565, %v4578
  %v4581 = vadd.f32 %v4566, %v4578
  %v4582 = vadd.f32 %v4567, %v4578
  %v4583 = vadd.f32 %v4568, %v4578
  %v4584 = vadd.f32 %v4569, %v4578
  %v4585 = vadd.f32 %v4570, %v4578
  %v4586 = vadd.f32 %v4571, %v4578
  %v4587 = vadd.f32 %v4572, %v4578
  %v4588 = vld [vmem:[%s3] sm:$0xff]
  %v4590 = vsel %vm615, %v4588, 0
  %v4593 = vsel %vm526, %v4580, 0
  %4595 = vmatprep.subr.mxu0 0.0
  %4596 = vmatpush1.msra.mxu0 %v4593
  %4597 = vmatprep.subr.mxu0 0.0
  %4598 = vmatpush1.msra.mxu0 0.0
  %4599 = vmatprep.subr.mxu0 0.0
  %4600 = vmatpush1.msra.mxu0 0.0
  %4601 = vmatprep.subr.mxu0 0.0
  %4602 = vmatpush1.msra.mxu0 0.0
  %4603 = vmatprep.subr.mxu0 0.0
  %4604 = vmatpush1.msra.mxu0 0.0
  %4605 = vmatprep.subr.mxu0 0.0
  %4606 = vmatpush1.msra.mxu0 0.0
  %4607 = vmatprep.subr.mxu0 0.0
  %4608 = vmatpush1.msra.mxu0 0.0
  %4609 = vmatprep.subr.mxu0 0.0
  %4610 = vmatpush1.msra.mxu0 0.0
  %4611 = vmatprep.subr.mxu0 0.0
  %4612 = vmatpush1.msra.mxu0 0.0
  %4613 = vmatprep.subr.mxu0 0.0
  %4614 = vmatpush1.msra.mxu0 0.0
  %4615 = vmatprep.subr.mxu0 0.0
  %4616 = vmatpush1.msra.mxu0 0.0
  %4617 = vmatprep.subr.mxu0 0.0
  %4618 = vmatpush1.msra.mxu0 0.0
  %4619 = vmatprep.subr.mxu0 0.0
  %4620 = vmatpush1.msra.mxu0 0.0
  %4621 = vmatprep.subr.mxu0 0.0
  %4622 = vmatpush1.msra.mxu0 0.0
  %4623 = vmatprep.subr.mxu0 0.0
  %4624 = vmatpush1.msra.mxu0 0.0
  %4625 = vmatprep.subr.mxu0 0.0
  %4626 = vmatpush1.msra.mxu0 0.0
  %4627 = vmatprep.subr.mxu0 0.0
  %4628 = vmatpush1.msra.mxu0 0.0
  %4629 = vmatprep.subr.mxu0 0.0
  %4630 = vmatpush1.msra.mxu0 0.0
  %4631 = vmatprep.subr.mxu0 0.0
  %4632 = vmatpush1.msra.mxu0 0.0
  %4633 = vmatprep.subr.mxu0 0.0
  %4634 = vmatpush1.msra.mxu0 0.0
  %4635 = vmatprep.subr.mxu0 0.0
  %4636 = vmatpush1.msra.mxu0 0.0
  %4637 = vmatprep.subr.mxu0 0.0
  %4638 = vmatpush1.msra.mxu0 0.0
  %4639 = vmatprep.subr.mxu0 0.0
  %4640 = vmatpush1.msra.mxu0 0.0
  %4641 = vmatprep.subr.mxu0 0.0
  %4642 = vmatpush1.msra.mxu0 0.0
  %4643 = vmatprep.subr.mxu0 0.0
  %4644 = vmatpush1.msra.mxu0 0.0
  %4645 = vmatprep.subr.mxu0 0.0
  %4646 = vmatpush1.msra.mxu0 0.0
  %4647 = vmatprep.subr.mxu0 0.0
  %4648 = vmatpush1.msra.mxu0 0.0
  %4649 = vmatprep.subr.mxu0 0.0
  %4650 = vmatpush1.msra.mxu0 0.0
  %4651 = vmatprep.subr.mxu0 0.0
  %4652 = vmatpush1.msra.mxu0 0.0
  %4653 = vmatprep.subr.mxu0 0.0
  %4654 = vmatpush1.msra.mxu0 0.0
  %4655 = vmatprep.subr.mxu0 0.0
  %4656 = vmatpush1.msra.mxu0 0.0
  %4657 = vmatprep.subr.mxu0 0.0
  %4658 = vmatpush1.msra.mxu0 0.0
  %4659 = vmatprep.mubr.f32.mxu0 0.0
  %4660 = vmatmul.mubr.f32.gmra.mrb[0].mxu0 %v4590
  %v4661 = vpop.f32.mrb[0].mxu0
  %v4662 = vadd.f32 0.0, %v4661
  %v4663 = vpop.f32.mrb[0].mxu0
  %4664 = vdwg.mxu0
  %v4666 = vsel %vm526, %v4581, 0
  %4668 = vmatprep.subr.mxu0 0.0
  %4669 = vmatpush1.msra.mxu0 %v4666
  %4670 = vmatprep.subr.mxu0 0.0
  %4671 = vmatpush1.msra.mxu0 0.0
  %4672 = vmatprep.subr.mxu0 0.0
  %4673 = vmatpush1.msra.mxu0 0.0
  %4674 = vmatprep.subr.mxu0 0.0
  %4675 = vmatpush1.msra.mxu0 0.0
  %4676 = vmatprep.subr.mxu0 0.0
  %4677 = vmatpush1.msra.mxu0 0.0
  %4678 = vmatprep.subr.mxu0 0.0
  %4679 = vmatpush1.msra.mxu0 0.0
  %4680 = vmatprep.subr.mxu0 0.0
  %4681 = vmatpush1.msra.mxu0 0.0
  %4682 = vmatprep.subr.mxu0 0.0
  %4683 = vmatpush1.msra.mxu0 0.0
  %4684 = vmatprep.subr.mxu0 0.0
  %4685 = vmatpush1.msra.mxu0 0.0
  %4686 = vmatprep.subr.mxu0 0.0
  %4687 = vmatpush1.msra.mxu0 0.0
  %4688 = vmatprep.subr.mxu0 0.0
  %4689 = vmatpush1.msra.mxu0 0.0
  %4690 = vmatprep.subr.mxu0 0.0
  %4691 = vmatpush1.msra.mxu0 0.0
  %4692 = vmatprep.subr.mxu0 0.0
  %4693 = vmatpush1.msra.mxu0 0.0
  %4694 = vmatprep.subr.mxu0 0.0
  %4695 = vmatpush1.msra.mxu0 0.0
  %4696 = vmatprep.subr.mxu0 0.0
  %4697 = vmatpush1.msra.mxu0 0.0
  %4698 = vmatprep.subr.mxu0 0.0
  %4699 = vmatpush1.msra.mxu0 0.0
  %4700 = vmatprep.subr.mxu0 0.0
  %4701 = vmatpush1.msra.mxu0 0.0
  %4702 = vmatprep.subr.mxu0 0.0
  %4703 = vmatpush1.msra.mxu0 0.0
  %4704 = vmatprep.subr.mxu0 0.0
  %4705 = vmatpush1.msra.mxu0 0.0
  %4706 = vmatprep.subr.mxu0 0.0
  %4707 = vmatpush1.msra.mxu0 0.0
  %4708 = vmatprep.subr.mxu0 0.0
  %4709 = vmatpush1.msra.mxu0 0.0
  %4710 = vmatprep.subr.mxu0 0.0
  %4711 = vmatpush1.msra.mxu0 0.0
  %4712 = vmatprep.subr.mxu0 0.0
  %4713 = vmatpush1.msra.mxu0 0.0
  %4714 = vmatprep.subr.mxu0 0.0
  %4715 = vmatpush1.msra.mxu0 0.0
  %4716 = vmatprep.subr.mxu0 0.0
  %4717 = vmatpush1.msra.mxu0 0.0
  %4718 = vmatprep.subr.mxu0 0.0
  %4719 = vmatpush1.msra.mxu0 0.0
  %4720 = vmatprep.subr.mxu0 0.0
  %4721 = vmatpush1.msra.mxu0 0.0
  %4722 = vmatprep.subr.mxu0 0.0
  %4723 = vmatpush1.msra.mxu0 0.0
  %4724 = vmatprep.subr.mxu0 0.0
  %4725 = vmatpush1.msra.mxu0 0.0
  %4726 = vmatprep.subr.mxu0 0.0
  %4727 = vmatpush1.msra.mxu0 0.0
  %4728 = vmatprep.subr.mxu0 0.0
  %4729 = vmatpush1.msra.mxu0 0.0
  %4730 = vmatprep.subr.mxu0 0.0
  %4731 = vmatpush1.msra.mxu0 0.0
  %4732 = vmatprep.mubr.f32.mxu0 0.0
  %4733 = vmatmul.mubr.f32.gmra.mrb[0].mxu0 %v4590
  %v4734 = vpop.f32.mrb[0].mxu0
  %v4735 = vadd.f32 0.0, %v4734
  %v4736 = vpop.f32.mrb[0].mxu0
  %4737 = vdwg.mxu0
  %v4739 = vsel %vm526, %v4582, 0
  %4741 = vmatprep.subr.mxu0 0.0
  %4742 = vmatpush1.msra.mxu0 %v4739
  %4743 = vmatprep.subr.mxu0 0.0
  %4744 = vmatpush1.msra.mxu0 0.0
  %4745 = vmatprep.subr.mxu0 0.0
  %4746 = vmatpush1.msra.mxu0 0.0
  %4747 = vmatprep.subr.mxu0 0.0
  %4748 = vmatpush1.msra.mxu0 0.0
  %4749 = vmatprep.subr.mxu0 0.0
  %4750 = vmatpush1.msra.mxu0 0.0
  %4751 = vmatprep.subr.mxu0 0.0
  %4752 = vmatpush1.msra.mxu0 0.0
  %4753 = vmatprep.subr.mxu0 0.0
  %4754 = vmatpush1.msra.mxu0 0.0
  %4755 = vmatprep.subr.mxu0 0.0
  %4756 = vmatpush1.msra.mxu0 0.0
  %4757 = vmatprep.subr.mxu0 0.0
  %4758 = vmatpush1.msra.mxu0 0.0
  %4759 = vmatprep.subr.mxu0 0.0
  %4760 = vmatpush1.msra.mxu0 0.0
  %4761 = vmatprep.subr.mxu0 0.0
  %4762 = vmatpush1.msra.mxu0 0.0
  %4763 = vmatprep.subr.mxu0 0.0
  %4764 = vmatpush1.msra.mxu0 0.0
  %4765 = vmatprep.subr.mxu0 0.0
  %4766 = vmatpush1.msra.mxu0 0.0
  %4767 = vmatprep.subr.mxu0 0.0
  %4768 = vmatpush1.msra.mxu0 0.0
  %4769 = vmatprep.subr.mxu0 0.0
  %4770 = vmatpush1.msra.mxu0 0.0
  %4771 = vmatprep.subr.mxu0 0.0
  %4772 = vmatpush1.msra.mxu0 0.0
  %4773 = vmatprep.subr.mxu0 0.0
  %4774 = vmatpush1.msra.mxu0 0.0
  %4775 = vmatprep.subr.mxu0 0.0
  %4776 = vmatpush1.msra.mxu0 0.0
  %4777 = vmatprep.subr.mxu0 0.0
  %4778 = vmatpush1.msra.mxu0 0.0
  %4779 = vmatprep.subr.mxu0 0.0
  %4780 = vmatpush1.msra.mxu0 0.0
  %4781 = vmatprep.subr.mxu0 0.0
  %4782 = vmatpush1.msra.mxu0 0.0
  %4783 = vmatprep.subr.mxu0 0.0
  %4784 = vmatpush1.msra.mxu0 0.0
  %4785 = vmatprep.subr.mxu0 0.0
  %4786 = vmatpush1.msra.mxu0 0.0
  %4787 = vmatprep.subr.mxu0 0.0
  %4788 = vmatpush1.msra.mxu0 0.0
  %4789 = vmatprep.subr.mxu0 0.0
  %4790 = vmatpush1.msra.mxu0 0.0
  %4791 = vmatprep.subr.mxu0 0.0
  %4792 = vmatpush1.msra.mxu0 0.0
  %4793 = vmatprep.subr.mxu0 0.0
  %4794 = vmatpush1.msra.mxu0 0.0
  %4795 = vmatprep.subr.mxu0 0.0
  %4796 = vmatpush1.msra.mxu0 0.0
  %4797 = vmatprep.subr.mxu0 0.0
  %4798 = vmatpush1.msra.mxu0 0.0
  %4799 = vmatprep.subr.mxu0 0.0
  %4800 = vmatpush1.msra.mxu0 0.0
  %4801 = vmatprep.subr.mxu0 0.0
  %4802 = vmatpush1.msra.mxu0 0.0
  %4803 = vmatprep.subr.mxu0 0.0
  %4804 = vmatpush1.msra.mxu0 0.0
  %4805 = vmatprep.mubr.f32.mxu0 0.0
  %4806 = vmatmul.mubr.f32.gmra.mrb[0].mxu0 %v4590
  %v4807 = vpop.f32.mrb[0].mxu0
  %v4808 = vadd.f32 0.0, %v4807
  %v4809 = vpop.f32.mrb[0].mxu0
  %4810 = vdwg.mxu0
  %v4812 = vsel %vm526, %v4583, 0
  %4814 = vmatprep.subr.mxu0 0.0
  %4815 = vmatpush1.msra.mxu0 %v4812
  %4816 = vmatprep.subr.mxu0 0.0
  %4817 = vmatpush1.msra.mxu0 0.0
  %4818 = vmatprep.subr.mxu0 0.0
  %4819 = vmatpush1.msra.mxu0 0.0
  %4820 = vmatprep.subr.mxu0 0.0
  %4821 = vmatpush1.msra.mxu0 0.0
  %4822 = vmatprep.subr.mxu0 0.0
  %4823 = vmatpush1.msra.mxu0 0.0
  %4824 = vmatprep.subr.mxu0 0.0
  %4825 = vmatpush1.msra.mxu0 0.0
  %4826 = vmatprep.subr.mxu0 0.0
  %4827 = vmatpush1.msra.mxu0 0.0
  %4828 = vmatprep.subr.mxu0 0.0
  %4829 = vmatpush1.msra.mxu0 0.0
  %4830 = vmatprep.subr.mxu0 0.0
  %4831 = vmatpush1.msra.mxu0 0.0
  %4832 = vmatprep.subr.mxu0 0.0
  %4833 = vmatpush1.msra.mxu0 0.0
  %4834 = vmatprep.subr.mxu0 0.0
  %4835 = vmatpush1.msra.mxu0 0.0
  %4836 = vmatprep.subr.mxu0 0.0
  %4837 = vmatpush1.msra.mxu0 0.0
  %4838 = vmatprep.subr.mxu0 0.0
  %4839 = vmatpush1.msra.mxu0 0.0
  %4840 = vmatprep.subr.mxu0 0.0
  %4841 = vmatpush1.msra.mxu0 0.0
  %4842 = vmatprep.subr.mxu0 0.0
  %4843 = vmatpush1.msra.mxu0 0.0
  %4844 = vmatprep.subr.mxu0 0.0
  %4845 = vmatpush1.msra.mxu0 0.0
  %4846 = vmatprep.subr.mxu0 0.0
  %4847 = vmatpush1.msra.mxu0 0.0
  %4848 = vmatprep.subr.mxu0 0.0
  %4849 = vmatpush1.msra.mxu0 0.0
  %4850 = vmatprep.subr.mxu0 0.0
  %4851 = vmatpush1.msra.mxu0 0.0
  %4852 = vmatprep.subr.mxu0 0.0
  %4853 = vmatpush1.msra.mxu0 0.0
  %4854 = vmatprep.subr.mxu0 0.0
  %4855 = vmatpush1.msra.mxu0 0.0
  %4856 = vmatprep.subr.mxu0 0.0
  %4857 = vmatpush1.msra.mxu0 0.0
  %4858 = vmatprep.subr.mxu0 0.0
  %4859 = vmatpush1.msra.mxu0 0.0
  %4860 = vmatprep.subr.mxu0 0.0
  %4861 = vmatpush1.msra.mxu0 0.0
  %4862 = vmatprep.subr.mxu0 0.0
  %4863 = vmatpush1.msra.mxu0 0.0
  %4864 = vmatprep.subr.mxu0 0.0
  %4865 = vmatpush1.msra.mxu0 0.0
  %4866 = vmatprep.subr.mxu0 0.0
  %4867 = vmatpush1.msra.mxu0 0.0
  %4868 = vmatprep.subr.mxu0 0.0
  %4869 = vmatpush1.msra.mxu0 0.0
  %4870 = vmatprep.subr.mxu0 0.0
  %4871 = vmatpush1.msra.mxu0 0.0
  %4872 = vmatprep.subr.mxu0 0.0
  %4873 = vmatpush1.msra.mxu0 0.0
  %4874 = vmatprep.subr.mxu0 0.0
  %4875 = vmatpush1.msra.mxu0 0.0
  %4876 = vmatprep.subr.mxu0 0.0
  %4877 = vmatpush1.msra.mxu0 0.0
  %4878 = vmatprep.mubr.f32.mxu0 0.0
  %4879 = vmatmul.mubr.f32.gmra.mrb[0].mxu0 %v4590
  %v4880 = vpop.f32.mrb[0].mxu0
  %v4881 = vadd.f32 0.0, %v4880
  %v4882 = vpop.f32.mrb[0].mxu0
  %4883 = vdwg.mxu0
  %v4885 = vsel %vm526, %v4584, 0
  %4887 = vmatprep.subr.mxu0 0.0
  %4888 = vmatpush1.msra.mxu0 %v4885
  %4889 = vmatprep.subr.mxu0 0.0
  %4890 = vmatpush1.msra.mxu0 0.0
  %4891 = vmatprep.subr.mxu0 0.0
  %4892 = vmatpush1.msra.mxu0 0.0
  %4893 = vmatprep.subr.mxu0 0.0
  %4894 = vmatpush1.msra.mxu0 0.0
  %4895 = vmatprep.subr.mxu0 0.0
  %4896 = vmatpush1.msra.mxu0 0.0
  %4897 = vmatprep.subr.mxu0 0.0
  %4898 = vmatpush1.msra.mxu0 0.0
  %4899 = vmatprep.subr.mxu0 0.0
  %4900 = vmatpush1.msra.mxu0 0.0
  %4901 = vmatprep.subr.mxu0 0.0
  %4902 = vmatpush1.msra.mxu0 0.0
  %4903 = vmatprep.subr.mxu0 0.0
  %4904 = vmatpush1.msra.mxu0 0.0
  %4905 = vmatprep.subr.mxu0 0.0
  %4906 = vmatpush1.msra.mxu0 0.0
  %4907 = vmatprep.subr.mxu0 0.0
  %4908 = vmatpush1.msra.mxu0 0.0
  %4909 = vmatprep.subr.mxu0 0.0
  %4910 = vmatpush1.msra.mxu0 0.0
  %4911 = vmatprep.subr.mxu0 0.0
  %4912 = vmatpush1.msra.mxu0 0.0
  %4913 = vmatprep.subr.mxu0 0.0
  %4914 = vmatpush1.msra.mxu0 0.0
  %4915 = vmatprep.subr.mxu0 0.0
  %4916 = vmatpush1.msra.mxu0 0.0
  %4917 = vmatprep.subr.mxu0 0.0
  %4918 = vmatpush1.msra.mxu0 0.0
  %4919 = vmatprep.subr.mxu0 0.0
  %4920 = vmatpush1.msra.mxu0 0.0
  %4921 = vmatprep.subr.mxu0 0.0
  %4922 = vmatpush1.msra.mxu0 0.0
  %4923 = vmatprep.subr.mxu0 0.0
  %4924 = vmatpush1.msra.mxu0 0.0
  %4925 = vmatprep.subr.mxu0 0.0
  %4926 = vmatpush1.msra.mxu0 0.0
  %4927 = vmatprep.subr.mxu0 0.0
  %4928 = vmatpush1.msra.mxu0 0.0
  %4929 = vmatprep.subr.mxu0 0.0
  %4930 = vmatpush1.msra.mxu0 0.0
  %4931 = vmatprep.subr.mxu0 0.0
  %4932 = vmatpush1.msra.mxu0 0.0
  %4933 = vmatprep.subr.mxu0 0.0
  %4934 = vmatpush1.msra.mxu0 0.0
  %4935 = vmatprep.subr.mxu0 0.0
  %4936 = vmatpush1.msra.mxu0 0.0
  %4937 = vmatprep.subr.mxu0 0.0
  %4938 = vmatpush1.msra.mxu0 0.0
  %4939 = vmatprep.subr.mxu0 0.0
  %4940 = vmatpush1.msra.mxu0 0.0
  %4941 = vmatprep.subr.mxu0 0.0
  %4942 = vmatpush1.msra.mxu0 0.0
  %4943 = vmatprep.subr.mxu0 0.0
  %4944 = vmatpush1.msra.mxu0 0.0
  %4945 = vmatprep.subr.mxu0 0.0
  %4946 = vmatpush1.msra.mxu0 0.0
  %4947 = vmatprep.subr.mxu0 0.0
  %4948 = vmatpush1.msra.mxu0 0.0
  %4949 = vmatprep.subr.mxu0 0.0
  %4950 = vmatpush1.msra.mxu0 0.0
  %4951 = vmatprep.mubr.f32.mxu0 0.0
  %4952 = vmatmul.mubr.f32.gmra.mrb[0].mxu0 %v4590
  %v4953 = vpop.f32.mrb[0].mxu0
  %v4954 = vadd.f32 0.0, %v4953
  %v4955 = vpop.f32.mrb[0].mxu0
  %4956 = vdwg.mxu0
  %v4958 = vsel %vm526, %v4585, 0
  %4960 = vmatprep.subr.mxu0 0.0
  %4961 = vmatpush1.msra.mxu0 %v4958
  %4962 = vmatprep.subr.mxu0 0.0
  %4963 = vmatpush1.msra.mxu0 0.0
  %4964 = vmatprep.subr.mxu0 0.0
  %4965 = vmatpush1.msra.mxu0 0.0
  %4966 = vmatprep.subr.mxu0 0.0
  %4967 = vmatpush1.msra.mxu0 0.0
  %4968 = vmatprep.subr.mxu0 0.0
  %4969 = vmatpush1.msra.mxu0 0.0
  %4970 = vmatprep.subr.mxu0 0.0
  %4971 = vmatpush1.msra.mxu0 0.0
  %4972 = vmatprep.subr.mxu0 0.0
  %4973 = vmatpush1.msra.mxu0 0.0
  %4974 = vmatprep.subr.mxu0 0.0
  %4975 = vmatpush1.msra.mxu0 0.0
  %4976 = vmatprep.subr.mxu0 0.0
  %4977 = vmatpush1.msra.mxu0 0.0
  %4978 = vmatprep.subr.mxu0 0.0
  %4979 = vmatpush1.msra.mxu0 0.0
  %4980 = vmatprep.subr.mxu0 0.0
  %4981 = vmatpush1.msra.mxu0 0.0
  %4982 = vmatprep.subr.mxu0 0.0
  %4983 = vmatpush1.msra.mxu0 0.0
  %4984 = vmatprep.subr.mxu0 0.0
  %4985 = vmatpush1.msra.mxu0 0.0
  %4986 = vmatprep.subr.mxu0 0.0
  %4987 = vmatpush1.msra.mxu0 0.0
  %4988 = vmatprep.subr.mxu0 0.0
  %4989 = vmatpush1.msra.mxu0 0.0
  %4990 = vmatprep.subr.mxu0 0.0
  %4991 = vmatpush1.msra.mxu0 0.0
  %4992 = vmatprep.subr.mxu0 0.0
  %4993 = vmatpush1.msra.mxu0 0.0
  %4994 = vmatprep.subr.mxu0 0.0
  %4995 = vmatpush1.msra.mxu0 0.0
  %4996 = vmatprep.subr.mxu0 0.0
  %4997 = vmatpush1.msra.mxu0 0.0
  %4998 = vmatprep.subr.mxu0 0.0
  %4999 = vmatpush1.msra.mxu0 0.0
  %5000 = vmatprep.subr.mxu0 0.0
  %5001 = vmatpush1.msra.mxu0 0.0
  %5002 = vmatprep.subr.mxu0 0.0
  %5003 = vmatpush1.msra.mxu0 0.0
  %5004 = vmatprep.subr.mxu0 0.0
  %5005 = vmatpush1.msra.mxu0 0.0
  %5006 = vmatprep.subr.mxu0 0.0
  %5007 = vmatpush1.msra.mxu0 0.0
  %5008 = vmatprep.subr.mxu0 0.0
  %5009 = vmatpush1.msra.mxu0 0.0
  %5010 = vmatprep.subr.mxu0 0.0
  %5011 = vmatpush1.msra.mxu0 0.0
  %5012 = vmatprep.subr.mxu0 0.0
  %5013 = vmatpush1.msra.mxu0 0.0
  %5014 = vmatprep.subr.mxu0 0.0
  %5015 = vmatpush1.msra.mxu0 0.0
  %5016 = vmatprep.subr.mxu0 0.0
  %5017 = vmatpush1.msra.mxu0 0.0
  %5018 = vmatprep.subr.mxu0 0.0
  %5019 = vmatpush1.msra.mxu0 0.0
  %5020 = vmatprep.subr.mxu0 0.0
  %5021 = vmatpush1.msra.mxu0 0.0
  %5022 = vmatprep.subr.mxu0 0.0
  %5023 = vmatpush1.msra.mxu0 0.0
  %5024 = vmatprep.mubr.f32.mxu0 0.0
  %5025 = vmatmul.mubr.f32.gmra.mrb[0].mxu0 %v4590
  %v5026 = vpop.f32.mrb[0].mxu0
  %v5027 = vadd.f32 0.0, %v5026
  %v5028 = vpop.f32.mrb[0].mxu0
  %5029 = vdwg.mxu0
  %v5031 = vsel %vm526, %v4586, 0
  %5033 = vmatprep.subr.mxu0 0.0
  %5034 = vmatpush1.msra.mxu0 %v5031
  %5035 = vmatprep.subr.mxu0 0.0
  %5036 = vmatpush1.msra.mxu0 0.0
  %5037 = vmatprep.subr.mxu0 0.0
  %5038 = vmatpush1.msra.mxu0 0.0
  %5039 = vmatprep.subr.mxu0 0.0
  %5040 = vmatpush1.msra.mxu0 0.0
  %5041 = vmatprep.subr.mxu0 0.0
  %5042 = vmatpush1.msra.mxu0 0.0
  %5043 = vmatprep.subr.mxu0 0.0
  %5044 = vmatpush1.msra.mxu0 0.0
  %5045 = vmatprep.subr.mxu0 0.0
  %5046 = vmatpush1.msra.mxu0 0.0
  %5047 = vmatprep.subr.mxu0 0.0
  %5048 = vmatpush1.msra.mxu0 0.0
  %5049 = vmatprep.subr.mxu0 0.0
  %5050 = vmatpush1.msra.mxu0 0.0
  %5051 = vmatprep.subr.mxu0 0.0
  %5052 = vmatpush1.msra.mxu0 0.0
  %5053 = vmatprep.subr.mxu0 0.0
  %5054 = vmatpush1.msra.mxu0 0.0
  %5055 = vmatprep.subr.mxu0 0.0
  %5056 = vmatpush1.msra.mxu0 0.0
  %5057 = vmatprep.subr.mxu0 0.0
  %5058 = vmatpush1.msra.mxu0 0.0
  %5059 = vmatprep.subr.mxu0 0.0
  %5060 = vmatpush1.msra.mxu0 0.0
  %5061 = vmatprep.subr.mxu0 0.0
  %5062 = vmatpush1.msra.mxu0 0.0
  %5063 = vmatprep.subr.mxu0 0.0
  %5064 = vmatpush1.msra.mxu0 0.0
  %5065 = vmatprep.subr.mxu0 0.0
  %5066 = vmatpush1.msra.mxu0 0.0
  %5067 = vmatprep.subr.mxu0 0.0
  %5068 = vmatpush1.msra.mxu0 0.0
  %5069 = vmatprep.subr.mxu0 0.0
  %5070 = vmatpush1.msra.mxu0 0.0
  %5071 = vmatprep.subr.mxu0 0.0
  %5072 = vmatpush1.msra.mxu0 0.0
  %5073 = vmatprep.subr.mxu0 0.0
  %5074 = vmatpush1.msra.mxu0 0.0
  %5075 = vmatprep.subr.mxu0 0.0
  %5076 = vmatpush1.msra.mxu0 0.0
  %5077 = vmatprep.subr.mxu0 0.0
  %5078 = vmatpush1.msra.mxu0 0.0
  %5079 = vmatprep.subr.mxu0 0.0
  %5080 = vmatpush1.msra.mxu0 0.0
  %5081 = vmatprep.subr.mxu0 0.0
  %5082 = vmatpush1.msra.mxu0 0.0
  %5083 = vmatprep.subr.mxu0 0.0
  %5084 = vmatpush1.msra.mxu0 0.0
  %5085 = vmatprep.subr.mxu0 0.0
  %5086 = vmatpush1.msra.mxu0 0.0
  %5087 = vmatprep.subr.mxu0 0.0
  %5088 = vmatpush1.msra.mxu0 0.0
  %5089 = vmatprep.subr.mxu0 0.0
  %5090 = vmatpush1.msra.mxu0 0.0
  %5091 = vmatprep.subr.mxu0 0.0
  %5092 = vmatpush1.msra.mxu0 0.0
  %5093 = vmatprep.subr.mxu0 0.0
  %5094 = vmatpush1.msra.mxu0 0.0
  %5095 = vmatprep.subr.mxu0 0.0
  %5096 = vmatpush1.msra.mxu0 0.0
  %5097 = vmatprep.mubr.f32.mxu0 0.0
  %5098 = vmatmul.mubr.f32.gmra.mrb[0].mxu0 %v4590
  %v5099 = vpop.f32.mrb[0].mxu0
  %v5100 = vadd.f32 0.0, %v5099
  %v5101 = vpop.f32.mrb[0].mxu0
  %5102 = vdwg.mxu0
  %v5104 = vsel %vm526, %v4587, 0
  %5106 = vmatprep.subr.mxu0 0.0
  %5107 = vmatpush1.msra.mxu0 %v5104
  %5108 = vmatprep.subr.mxu0 0.0
  %5109 = vmatpush1.msra.mxu0 0.0
  %5110 = vmatprep.subr.mxu0 0.0
  %5111 = vmatpush1.msra.mxu0 0.0
  %5112 = vmatprep.subr.mxu0 0.0
  %5113 = vmatpush1.msra.mxu0 0.0
  %5114 = vmatprep.subr.mxu0 0.0
  %5115 = vmatpush1.msra.mxu0 0.0
  %5116 = vmatprep.subr.mxu0 0.0
  %5117 = vmatpush1.msra.mxu0 0.0
  %5118 = vmatprep.subr.mxu0 0.0
  %5119 = vmatpush1.msra.mxu0 0.0
  %5120 = vmatprep.subr.mxu0 0.0
  %5121 = vmatpush1.msra.mxu0 0.0
  %5122 = vmatprep.subr.mxu0 0.0
  %5123 = vmatpush1.msra.mxu0 0.0
  %5124 = vmatprep.subr.mxu0 0.0
  %5125 = vmatpush1.msra.mxu0 0.0
  %5126 = vmatprep.subr.mxu0 0.0
  %5127 = vmatpush1.msra.mxu0 0.0
  %5128 = vmatprep.subr.mxu0 0.0
  %5129 = vmatpush1.msra.mxu0 0.0
  %5130 = vmatprep.subr.mxu0 0.0
  %5131 = vmatpush1.msra.mxu0 0.0
  %5132 = vmatprep.subr.mxu0 0.0
  %5133 = vmatpush1.msra.mxu0 0.0
  %5134 = vmatprep.subr.mxu0 0.0
  %5135 = vmatpush1.msra.mxu0 0.0
  %5136 = vmatprep.subr.mxu0 0.0
  %5137 = vmatpush1.msra.mxu0 0.0
  %5138 = vmatprep.subr.mxu0 0.0
  %5139 = vmatpush1.msra.mxu0 0.0
  %5140 = vmatprep.subr.mxu0 0.0
  %5141 = vmatpush1.msra.mxu0 0.0
  %5142 = vmatprep.subr.mxu0 0.0
  %5143 = vmatpush1.msra.mxu0 0.0
  %5144 = vmatprep.subr.mxu0 0.0
  %5145 = vmatpush1.msra.mxu0 0.0
  %5146 = vmatprep.subr.mxu0 0.0
  %5147 = vmatpush1.msra.mxu0 0.0
  %5148 = vmatprep.subr.mxu0 0.0
  %5149 = vmatpush1.msra.mxu0 0.0
  %5150 = vmatprep.subr.mxu0 0.0
  %5151 = vmatpush1.msra.mxu0 0.0
  %5152 = vmatprep.subr.mxu0 0.0
  %5153 = vmatpush1.msra.mxu0 0.0
  %5154 = vmatprep.subr.mxu0 0.0
  %5155 = vmatpush1.msra.mxu0 0.0
  %5156 = vmatprep.subr.mxu0 0.0
  %5157 = vmatpush1.msra.mxu0 0.0
  %5158 = vmatprep.subr.mxu0 0.0
  %5159 = vmatpush1.msra.mxu0 0.0
  %5160 = vmatprep.subr.mxu0 0.0
  %5161 = vmatpush1.msra.mxu0 0.0
  %5162 = vmatprep.subr.mxu0 0.0
  %5163 = vmatpush1.msra.mxu0 0.0
  %5164 = vmatprep.subr.mxu0 0.0
  %5165 = vmatpush1.msra.mxu0 0.0
  %5166 = vmatprep.subr.mxu0 0.0
  %5167 = vmatpush1.msra.mxu0 0.0
  %5168 = vmatprep.subr.mxu0 0.0
  %5169 = vmatpush1.msra.mxu0 0.0
  %5170 = vmatprep.mubr.f32.mxu0 0.0
  %5171 = vmatmul.mubr.f32.gmra.mrb[0].mxu0 %v4590
  %v5172 = vpop.f32.mrb[0].mxu0
  %v5173 = vadd.f32 0.0, %v5172
  %v5174 = vpop.f32.mrb[0].mxu0
  %5175 = vdwg.mxu0
  %5184 = vrot.lane.b32.xlu0 %v2977, 8
  %v5185 = vpop.permute.xlu0 %5184
  %5186 = vrot.lane.b32.xlu0 %v2978, 8
  %v5187 = vpop.permute.xlu0 %5186
  %5188 = vrot.lane.b32.xlu0 %v2979, 8
  %v5189 = vpop.permute.xlu0 %5188
  %5190 = vrot.lane.b32.xlu0 %v2980, 8
  %v5191 = vpop.permute.xlu0 %5190
  %5192 = vrot.lane.b32.xlu0 %v2981, 8
  %v5193 = vpop.permute.xlu0 %5192
  %5194 = vrot.lane.b32.xlu0 %v2982, 8
  %v5195 = vpop.permute.xlu0 %5194
  %5196 = vrot.lane.b32.xlu0 %v2983, 8
  %v5197 = vpop.permute.xlu0 %5196
  %5198 = vrot.lane.b32.xlu0 %v2984, 8
  %v5199 = vpop.permute.xlu0 %5198
  %v5208 = vsel %vm632, %v4662, %v5185
  %v5209 = vsel %vm632, %v4735, %v5187
  %v5210 = vsel %vm632, %v4808, %v5189
  %v5211 = vsel %vm632, %v4881, %v5191
  %v5212 = vsel %vm632, %v4954, %v5193
  %v5213 = vsel %vm632, %v5027, %v5195
  %v5214 = vsel %vm632, %v5100, %v5197
  %v5215 = vsel %vm632, %v5173, %v5199
  %v5224 = vrot.slane %v5208, 6
  %v5225 = vrot.slane %v5209, 6
  %v5226 = vrot.slane %v5210, 6
  %v5227 = vrot.slane %v5211, 6
  %v5228 = vrot.slane %v5212, 6
  %v5229 = vrot.slane %v5213, 6
  %v5230 = vrot.slane %v5214, 6
  %v5231 = vrot.slane %v5215, 6
  %v5240 = vsel %vm178, 0.0, %v5224
  %v5241 = vsel %vm178, 0.0, %v5225
  %v5242 = vsel %vm178, 0.0, %v5226
  %v5243 = vsel %vm178, 0.0, %v5227
  %v5244 = vsel %vm178, 0.0, %v5228
  %v5245 = vsel %vm178, 0.0, %v5229
  %v5246 = vsel %vm178, 0.0, %v5230
  %v5247 = vsel %vm178, 0.0, %v5231
  %v5248 = vsel %vm178, %v5224, 0.0
  %v5249 = vsel %vm178, %v5225, 0.0
  %v5250 = vsel %vm178, %v5226, 0.0
  %v5251 = vsel %vm178, %v5227, 0.0
  %v5252 = vsel %vm178, %v5228, 0.0
  %v5253 = vsel %vm178, %v5229, 0.0
  %v5254 = vsel %vm178, %v5230, 0.0
  %v5255 = vsel %vm178, %v5231, 0.0
  %v5272 = vrot.slane %v5240, 1
  %v5273 = vrot.slane %v5248, 1
  %v5274 = vsel %vm259, %v5272, %v5273
  %v5275 = vrot.slane %v5241, 1
  %v5276 = vrot.slane %v5249, 1
  %v5277 = vsel %vm259, %v5275, %v5276
  %v5278 = vrot.slane %v5242, 1
  %v5279 = vrot.slane %v5250, 1
  %v5280 = vsel %vm259, %v5278, %v5279
  %v5281 = vrot.slane %v5243, 1
  %v5282 = vrot.slane %v5251, 1
  %v5283 = vsel %vm259, %v5281, %v5282
  %v5284 = vrot.slane %v5244, 1
  %v5285 = vrot.slane %v5252, 1
  %v5286 = vsel %vm259, %v5284, %v5285
  %v5287 = vrot.slane %v5245, 1
  %v5288 = vrot.slane %v5253, 1
  %v5289 = vsel %vm259, %v5287, %v5288
  %v5290 = vrot.slane %v5246, 1
  %v5291 = vrot.slane %v5254, 1
  %v5292 = vsel %vm259, %v5290, %v5291
  %v5293 = vrot.slane %v5247, 1
  %v5294 = vrot.slane %v5255, 1
  %v5295 = vsel %vm259, %v5293, %v5294
  %5296 = vrot.lane.b32.xlu0 %v5274, 16
  %v5297 = vpop.permute.xlu0 %5296
  %5298 = vrot.lane.b32.xlu0 %v5277, 16
  %v5299 = vpop.permute.xlu0 %5298
  %5300 = vrot.lane.b32.xlu0 %v5280, 16
  %v5301 = vpop.permute.xlu0 %5300
  %5302 = vrot.lane.b32.xlu0 %v5283, 16
  %v5303 = vpop.permute.xlu0 %5302
  %5304 = vrot.lane.b32.xlu0 %v5286, 16
  %v5305 = vpop.permute.xlu0 %5304
  %5306 = vrot.lane.b32.xlu0 %v5289, 16
  %v5307 = vpop.permute.xlu0 %5306
  %5308 = vrot.lane.b32.xlu0 %v5292, 16
  %v5309 = vpop.permute.xlu0 %5308
  %5310 = vrot.lane.b32.xlu0 %v5295, 16
  %v5311 = vpop.permute.xlu0 %5310
  %v5320 = vrot.slane %v5240, 2
  %v5321 = vrot.slane %v5248, 2
  %v5322 = vsel %vm348, %v5320, %v5321
  %v5323 = vrot.slane %v5241, 2
  %v5324 = vrot.slane %v5249, 2
  %v5325 = vsel %vm348, %v5323, %v5324
  %v5326 = vrot.slane %v5242, 2
  %v5327 = vrot.slane %v5250, 2
  %v5328 = vsel %vm348, %v5326, %v5327
  %v5329 = vrot.slane %v5243, 2
  %v5330 = vrot.slane %v5251, 2
  %v5331 = vsel %vm348, %v5329, %v5330
  %v5332 = vrot.slane %v5244, 2
  %v5333 = vrot.slane %v5252, 2
  %v5334 = vsel %vm348, %v5332, %v5333
  %v5335 = vrot.slane %v5245, 2
  %v5336 = vrot.slane %v5253, 2
  %v5337 = vsel %vm348, %v5335, %v5336
  %v5338 = vrot.slane %v5246, 2
  %v5339 = vrot.slane %v5254, 2
  %v5340 = vsel %vm348, %v5338, %v5339
  %v5341 = vrot.slane %v5247, 2
  %v5342 = vrot.slane %v5255, 2
  %v5343 = vsel %vm348, %v5341, %v5342
  %5344 = vrot.lane.b32.xlu0 %v5322, 32
  %v5345 = vpop.permute.xlu0 %5344
  %5346 = vrot.lane.b32.xlu0 %v5325, 32
  %v5347 = vpop.permute.xlu0 %5346
  %5348 = vrot.lane.b32.xlu0 %v5328, 32
  %v5349 = vpop.permute.xlu0 %5348
  %5350 = vrot.lane.b32.xlu0 %v5331, 32
  %v5351 = vpop.permute.xlu0 %5350
  %5352 = vrot.lane.b32.xlu0 %v5334, 32
  %v5353 = vpop.permute.xlu0 %5352
  %5354 = vrot.lane.b32.xlu0 %v5337, 32
  %v5355 = vpop.permute.xlu0 %5354
  %5356 = vrot.lane.b32.xlu0 %v5340, 32
  %v5357 = vpop.permute.xlu0 %5356
  %5358 = vrot.lane.b32.xlu0 %v5343, 32
  %v5359 = vpop.permute.xlu0 %5358
  %v5368 = vrot.slane %v5240, 3
  %v5369 = vrot.slane %v5248, 3
  %v5370 = vsel %vm437, %v5368, %v5369
  %v5371 = vrot.slane %v5241, 3
  %v5372 = vrot.slane %v5249, 3
  %v5373 = vsel %vm437, %v5371, %v5372
  %v5374 = vrot.slane %v5242, 3
  %v5375 = vrot.slane %v5250, 3
  %v5376 = vsel %vm437, %v5374, %v5375
  %v5377 = vrot.slane %v5243, 3
  %v5378 = vrot.slane %v5251, 3
  %v5379 = vsel %vm437, %v5377, %v5378
  %v5380 = vrot.slane %v5244, 3
  %v5381 = vrot.slane %v5252, 3
  %v5382 = vsel %vm437, %v5380, %v5381
  %v5383 = vrot.slane %v5245, 3
  %v5384 = vrot.slane %v5253, 3
  %v5385 = vsel %vm437, %v5383, %v5384
  %v5386 = vrot.slane %v5246, 3
  %v5387 = vrot.slane %v5254, 3
  %v5388 = vsel %vm437, %v5386, %v5387
  %v5389 = vrot.slane %v5247, 3
  %v5390 = vrot.slane %v5255, 3
  %v5391 = vsel %vm437, %v5389, %v5390
  %5392 = vrot.lane.b32.xlu0 %v5370, 48
  %v5393 = vpop.permute.xlu0 %5392
  %5394 = vrot.lane.b32.xlu0 %v5373, 48
  %v5395 = vpop.permute.xlu0 %5394
  %5396 = vrot.lane.b32.xlu0 %v5376, 48
  %v5397 = vpop.permute.xlu0 %5396
  %5398 = vrot.lane.b32.xlu0 %v5379, 48
  %v5399 = vpop.permute.xlu0 %5398
  %5400 = vrot.lane.b32.xlu0 %v5382, 48
  %v5401 = vpop.permute.xlu0 %5400
  %5402 = vrot.lane.b32.xlu0 %v5385, 48
  %v5403 = vpop.permute.xlu0 %5402
  %5404 = vrot.lane.b32.xlu0 %v5388, 48
  %v5405 = vpop.permute.xlu0 %5404
  %5406 = vrot.lane.b32.xlu0 %v5391, 48
  %v5407 = vpop.permute.xlu0 %5406
  %v5416 = vrot.slane %v5240, 4
  %v5417 = vrot.slane %v5248, 4
  %v5418 = vsel %vm526, %v5416, %v5417
  %v5419 = vrot.slane %v5241, 4
  %v5420 = vrot.slane %v5249, 4
  %v5421 = vsel %vm526, %v5419, %v5420
  %v5422 = vrot.slane %v5242, 4
  %v5423 = vrot.slane %v5250, 4
  %v5424 = vsel %vm526, %v5422, %v5423
  %v5425 = vrot.slane %v5243, 4
  %v5426 = vrot.slane %v5251, 4
  %v5427 = vsel %vm526, %v5425, %v5426
  %v5428 = vrot.slane %v5244, 4
  %v5429 = vrot.slane %v5252, 4
  %v5430 = vsel %vm526, %v5428, %v5429
  %v5431 = vrot.slane %v5245, 4
  %v5432 = vrot.slane %v5253, 4
  %v5433 = vsel %vm526, %v5431, %v5432
  %v5434 = vrot.slane %v5246, 4
  %v5435 = vrot.slane %v5254, 4
  %v5436 = vsel %vm526, %v5434, %v5435
  %v5437 = vrot.slane %v5247, 4
  %v5438 = vrot.slane %v5255, 4
  %v5439 = vsel %vm526, %v5437, %v5438
  %5440 = vrot.lane.b32.xlu0 %v5418, 64
  %v5441 = vpop.permute.xlu0 %5440
  %5442 = vrot.lane.b32.xlu0 %v5421, 64
  %v5443 = vpop.permute.xlu0 %5442
  %5444 = vrot.lane.b32.xlu0 %v5424, 64
  %v5445 = vpop.permute.xlu0 %5444
  %5446 = vrot.lane.b32.xlu0 %v5427, 64
  %v5447 = vpop.permute.xlu0 %5446
  %5448 = vrot.lane.b32.xlu0 %v5430, 64
  %v5449 = vpop.permute.xlu0 %5448
  %5450 = vrot.lane.b32.xlu0 %v5433, 64
  %v5451 = vpop.permute.xlu0 %5450
  %5452 = vrot.lane.b32.xlu0 %v5436, 64
  %v5453 = vpop.permute.xlu0 %5452
  %5454 = vrot.lane.b32.xlu0 %v5439, 64
  %v5455 = vpop.permute.xlu0 %5454
  %v5464 = vsel %vm666, %v5240, %v5297
  %v5465 = vsel %vm666, %v5241, %v5299
  %v5466 = vsel %vm666, %v5242, %v5301
  %v5467 = vsel %vm666, %v5243, %v5303
  %v5468 = vsel %vm666, %v5244, %v5305
  %v5469 = vsel %vm666, %v5245, %v5307
  %v5470 = vsel %vm666, %v5246, %v5309
  %v5471 = vsel %vm666, %v5247, %v5311
  %v5472 = vsel %vm1559, %v5464, %v5345
  %v5473 = vsel %vm1559, %v5465, %v5347
  %v5474 = vsel %vm1559, %v5466, %v5349
  %v5475 = vsel %vm1559, %v5467, %v5351
  %v5476 = vsel %vm1559, %v5468, %v5353
  %v5477 = vsel %vm1559, %v5469, %v5355
  %v5478 = vsel %vm1559, %v5470, %v5357
  %v5479 = vsel %vm1559, %v5471, %v5359
  %v5480 = vsel %vm4334, %v5472, %v5393
  %v5481 = vsel %vm4334, %v5473, %v5395
  %v5482 = vsel %vm4334, %v5474, %v5397
  %v5483 = vsel %vm4334, %v5475, %v5399
  %v5484 = vsel %vm4334, %v5476, %v5401
  %v5485 = vsel %vm4334, %v5477, %v5403
  %v5486 = vsel %vm4334, %v5478, %v5405
  %v5487 = vsel %vm4334, %v5479, %v5407
  %v5488 = vsel %vm4343, %v5480, %v5441
  %v5489 = vsel %vm4343, %v5481, %v5443
  %v5490 = vsel %vm4343, %v5482, %v5445
  %v5491 = vsel %vm4343, %v5483, %v5447
  %v5492 = vsel %vm4343, %v5484, %v5449
  %v5493 = vsel %vm4343, %v5485, %v5451
  %v5494 = vsel %vm4343, %v5486, %v5453
  %v5495 = vsel %vm4343, %v5487, %v5455
  %v5496 = vld [vmem:[%s55] sm:$0xff]
  %v5497 = vld [vmem:[%s55 + $0x8] sm:$0xff]
  %v5498 = vld [vmem:[%s55 + $0x10] sm:$0xff]
  %v5499 = vld [vmem:[%s55 + $0x18] sm:$0xff]
  %v5500 = vld [vmem:[%s55 + $0x20] sm:$0xff]
  %v5501 = vld [vmem:[%s55 + $0x28] sm:$0xff]
  %v5502 = vld [vmem:[%s55 + $0x30] sm:$0xff]
  %v5503 = vld [vmem:[%s55 + $0x38] sm:$0xff]
  %v5504 = vld [vmem:[%s55 + $0x40] sm:$0xff]
  %v5505 = vld [vmem:[%s55 + $0x48] sm:$0xff]
  %v5506 = vld [vmem:[%s57] sm:$0x1]
  %v5508 = vlaneseq
  %v5509 = vshrl.u32 %v5508, 7
  %v5510 = vsub.s32 0, %v5509
  %v5511 = vrot.slane %v5506, %v5510
  %v5514 = vsel %vm4382, %v5488, 0
  %v5517 = vsel %vm4382, %v5489, 0
  %v5520 = vsel %vm4382, %v5490, 0
  %v5523 = vsel %vm4382, %v5491, 0
  %v5526 = vsel %vm4382, %v5492, 0
  %v5529 = vsel %vm4382, %v5493, 0
  %v5532 = vsel %vm4382, %v5494, 0
  %v5535 = vsel %vm4382, %v5495, 0
  %5537 = vmatprep.subr.mxu0 0.0
  %5538 = vmatpush1.msra.mxu0 %v5496
  %5539 = vmatprep.subr.mxu0 0.0
  %5540 = vmatpush1.msra.mxu0 %v5497
  %5541 = vmatprep.subr.mxu0 0.0
  %5542 = vmatpush1.msra.mxu0 %v5498
  %5543 = vmatprep.subr.mxu0 0.0
  %5544 = vmatpush1.msra.mxu0 %v5499
  %5545 = vmatprep.subr.mxu0 0.0
  %5546 = vmatpush1.msra.mxu0 %v5500
  %5547 = vmatprep.subr.mxu0 0.0
  %5548 = vmatpush1.msra.mxu0 %v5501
  %5549 = vmatprep.subr.mxu0 0.0
  %5550 = vmatpush1.msra.mxu0 %v5502
  %5551 = vmatprep.subr.mxu0 0.0
  %5552 = vmatpush1.msra.mxu0 %v5503
  %5553 = vmatprep.subr.mxu0 0.0
  %5554 = vmatpush1.msra.mxu0 %v5504
  %5555 = vmatprep.subr.mxu0 0.0
  %5556 = vmatpush1.msra.mxu0 %v5505
  %5557 = vmatprep.subr.mxu0 0.0
  %5558 = vmatpush1.msra.mxu0 0.0
  %5559 = vmatprep.subr.mxu0 0.0
  %5560 = vmatpush1.msra.mxu0 0.0
  %5561 = vmatprep.subr.mxu0 0.0
  %5562 = vmatpush1.msra.mxu0 0.0
  %5563 = vmatprep.subr.mxu0 0.0
  %5564 = vmatpush1.msra.mxu0 0.0
  %5565 = vmatprep.subr.mxu0 0.0
  %5566 = vmatpush1.msra.mxu0 0.0
  %5567 = vmatprep.subr.mxu0 0.0
  %5568 = vmatpush1.msra.mxu0 0.0
  %5569 = vmatprep.subr.mxu0 0.0
  %5570 = vmatpush1.msra.mxu0 0.0
  %5571 = vmatprep.subr.mxu0 0.0
  %5572 = vmatpush1.msra.mxu0 0.0
  %5573 = vmatprep.subr.mxu0 0.0
  %5574 = vmatpush1.msra.mxu0 0.0
  %5575 = vmatprep.subr.mxu0 0.0
  %5576 = vmatpush1.msra.mxu0 0.0
  %5577 = vmatprep.subr.mxu0 0.0
  %5578 = vmatpush1.msra.mxu0 0.0
  %5579 = vmatprep.subr.mxu0 0.0
  %5580 = vmatpush1.msra.mxu0 0.0
  %5581 = vmatprep.subr.mxu0 0.0
  %5582 = vmatpush1.msra.mxu0 0.0
  %5583 = vmatprep.subr.mxu0 0.0
  %5584 = vmatpush1.msra.mxu0 0.0
  %5585 = vmatprep.subr.mxu0 0.0
  %5586 = vmatpush1.msra.mxu0 0.0
  %5587 = vmatprep.subr.mxu0 0.0
  %5588 = vmatpush1.msra.mxu0 0.0
  %5589 = vmatprep.subr.mxu0 0.0
  %5590 = vmatpush1.msra.mxu0 0.0
  %5591 = vmatprep.subr.mxu0 0.0
  %5592 = vmatpush1.msra.mxu0 0.0
  %5593 = vmatprep.subr.mxu0 0.0
  %5594 = vmatpush1.msra.mxu0 0.0
  %5595 = vmatprep.subr.mxu0 0.0
  %5596 = vmatpush1.msra.mxu0 0.0
  %5597 = vmatprep.subr.mxu0 0.0
  %5598 = vmatpush1.msra.mxu0 0.0
  %5599 = vmatprep.subr.mxu0 0.0
  %5600 = vmatpush1.msra.mxu0 0.0
  %5601 = vmatprep.mubr.f32.mxu0 0.0
  %5602 = vmatmul.mubr.f32.gmra.mrb[0].mxu0 %v5514
  %v5603 = vpop.f32.mrb[0].mxu0
  %v5604 = vadd.f32 %v5511, %v5603
  %v5605 = vpop.f32.mrb[0].mxu0
  %5606 = vmatprep.mubr.f32.mxu0 0.0
  %5607 = vmatmul.mubr.f32.gmra.mrb[0].mxu0 %v5517
  %v5608 = vpop.f32.mrb[0].mxu0
  %v5609 = vadd.f32 %v5511, %v5608
  %v5610 = vpop.f32.mrb[0].mxu0
  %5611 = vmatprep.mubr.f32.mxu0 0.0
  %5612 = vmatmul.mubr.f32.gmra.mrb[0].mxu0 %v5520
  %v5613 = vpop.f32.mrb[0].mxu0
  %v5614 = vadd.f32 %v5511, %v5613
  %v5615 = vpop.f32.mrb[0].mxu0
  %5616 = vmatprep.mubr.f32.mxu0 0.0
  %5617 = vmatmul.mubr.f32.gmra.mrb[0].mxu0 %v5523
  %v5618 = vpop.f32.mrb[0].mxu0
  %v5619 = vadd.f32 %v5511, %v5618
  %v5620 = vpop.f32.mrb[0].mxu0
  %5621 = vmatprep.mubr.f32.mxu0 0.0
  %5622 = vmatmul.mubr.f32.gmra.mrb[0].mxu0 %v5526
  %v5623 = vpop.f32.mrb[0].mxu0
  %v5624 = vadd.f32 %v5511, %v5623
  %v5625 = vpop.f32.mrb[0].mxu0
  %5626 = vmatprep.mubr.f32.mxu0 0.0
  %5627 = vmatmul.mubr.f32.gmra.mrb[0].mxu0 %v5529
  %v5628 = vpop.f32.mrb[0].mxu0
  %v5629 = vadd.f32 %v5511, %v5628
  %v5630 = vpop.f32.mrb[0].mxu0
  %5631 = vmatprep.mubr.f32.mxu0 0.0
  %5632 = vmatmul.mubr.f32.gmra.mrb[0].mxu0 %v5532
  %v5633 = vpop.f32.mrb[0].mxu0
  %v5634 = vadd.f32 %v5511, %v5633
  %v5635 = vpop.f32.mrb[0].mxu0
  %5636 = vmatprep.mubr.f32.mxu0 0.0
  %5637 = vmatmul.mubr.f32.gmra.mrb[0].mxu0 %v5535
  %v5638 = vpop.f32.mrb[0].mxu0
  %v5639 = vadd.f32 %v5511, %v5638
  %v5640 = vpop.f32.mrb[0].mxu0
  %5641 = vdwg.mxu0
  %v5642 = vsel %vm632, %v5604, 0.0
  %v5643 = vsel %vm632, %v5609, 0.0
  %v5644 = vadd.f32 %v5642, %v5643
  %v5645 = vsel %vm632, %v5614, 0.0
  %v5646 = vadd.f32 %v5644, %v5645
  %v5647 = vsel %vm632, %v5619, 0.0
  %v5648 = vadd.f32 %v5646, %v5647
  %v5649 = vsel %vm632, %v5624, 0.0
  %v5650 = vadd.f32 %v5648, %v5649
  %v5651 = vsel %vm632, %v5629, 0.0
  %v5652 = vadd.f32 %v5650, %v5651
  %v5653 = vsel %vm632, %v5634, 0.0
  %v5654 = vadd.f32 %v5652, %v5653
  %v5655 = vsel %vm632, %v5639, 0.0
  %v5656 = vadd.f32 %v5654, %v5655
  %v5657 = vrot.slane %v5656, 4
  %v5658 = vadd.f32 %v5656, %v5657
  %v5659 = vrot.slane %v5658, 2
  %v5660 = vadd.f32 %v5658, %v5659
  %v5661 = vrot.slane %v5660, 1
  %v5662 = vadd.f32 %v5660, %v5661
  %v5663 = vmul.f32 %v5662, 0.015625
  %v5664 = vsub.f32 %v5604, %v5663
  %v5665 = vsub.f32 %v5609, %v5663
  %v5666 = vsub.f32 %v5614, %v5663
  %v5667 = vsub.f32 %v5619, %v5663
  %v5668 = vsub.f32 %v5624, %v5663
  %v5669 = vsub.f32 %v5629, %v5663
  %v5670 = vsub.f32 %v5634, %v5663
  %v5671 = vsub.f32 %v5639, %v5663
  %v5672 = vmul.f32 %v5664, %v5664
  %v5673 = vmul.f32 %v5665, %v5665
  %v5674 = vmul.f32 %v5666, %v5666
  %v5675 = vmul.f32 %v5667, %v5667
  %v5676 = vmul.f32 %v5668, %v5668
  %v5677 = vmul.f32 %v5669, %v5669
  %v5678 = vmul.f32 %v5670, %v5670
  %v5679 = vmul.f32 %v5671, %v5671
  %v5680 = vsel %vm632, %v5672, 0.0
  %v5681 = vsel %vm632, %v5673, 0.0
  %v5682 = vadd.f32 %v5680, %v5681
  %v5683 = vsel %vm632, %v5674, 0.0
  %v5684 = vadd.f32 %v5682, %v5683
  %v5685 = vsel %vm632, %v5675, 0.0
  %v5686 = vadd.f32 %v5684, %v5685
  %v5687 = vsel %vm632, %v5676, 0.0
  %v5688 = vadd.f32 %v5686, %v5687
  %v5689 = vsel %vm632, %v5677, 0.0
  %v5690 = vadd.f32 %v5688, %v5689
  %v5691 = vsel %vm632, %v5678, 0.0
  %v5692 = vadd.f32 %v5690, %v5691
  %v5693 = vsel %vm632, %v5679, 0.0
  %v5694 = vadd.f32 %v5692, %v5693
  %v5695 = vrot.slane %v5694, 4
  %v5696 = vadd.f32 %v5694, %v5695
  %v5697 = vrot.slane %v5696, 2
  %v5698 = vadd.f32 %v5696, %v5697
  %v5699 = vrot.slane %v5698, 1
  %v5700 = vadd.f32 %v5698, %v5699
  %v5701 = vmul.f32 %v5700, 0.015625
  %v5702 = vadd.f32 %v5701, 1e-05
  %v5703 = vrsqrt.pop %v5702
  %v5704 = vmul.f32 %v5664, %v5703
  %v5705 = vmul.f32 %v5665, %v5703
  %v5706 = vmul.f32 %v5666, %v5703
  %v5707 = vmul.f32 %v5667, %v5703
  %v5708 = vmul.f32 %v5668, %v5703
  %v5709 = vmul.f32 %v5669, %v5703
  %v5710 = vmul.f32 %v5670, %v5703
  %v5711 = vmul.f32 %v5671, %v5703
  %v5712 = vld [vmem:[%s59] sm:$0x1]
  %v5714 = vlaneseq
  %v5715 = vshrl.u32 %v5714, 7
  %v5716 = vsub.s32 0, %v5715
  %v5717 = vrot.slane %v5712, %v5716
  %v5719 = vmul.f32 %v5704, %v5717
  %v5720 = vmul.f32 %v5705, %v5717
  %v5721 = vmul.f32 %v5706, %v5717
  %v5722 = vmul.f32 %v5707, %v5717
  %v5723 = vmul.f32 %v5708, %v5717
  %v5724 = vmul.f32 %v5709, %v5717
  %v5725 = vmul.f32 %v5710, %v5717
  %v5726 = vmul.f32 %v5711, %v5717
  %v5727 = vld [vmem:[%s61] sm:$0x1]
  %v5729 = vlaneseq
  %v5730 = vshrl.u32 %v5729, 7
  %v5731 = vsub.s32 0, %v5730
  %v5732 = vrot.slane %v5727, %v5731
  %v5734 = vadd.f32 %v5719, %v5732
  %v5735 = vadd.f32 %v5720, %v5732
  %v5736 = vadd.f32 %v5721, %v5732
  %v5737 = vadd.f32 %v5722, %v5732
  %v5738 = vadd.f32 %v5723, %v5732
  %v5739 = vadd.f32 %v5724, %v5732
  %v5740 = vadd.f32 %v5725, %v5732
  %v5741 = vadd.f32 %v5726, %v5732
  %v5742 = vld [vmem:[%s5] sm:$0xff]
  %v5743 = vld [vmem:[%s5 + $0x8] sm:$0xff]
  %v5745 = vsel %vm632, %v5742, 0
  %v5748 = vsel %vm632, %v5743, 0
  %5750 = vmatprep.subr.mxu0 0.0
  %5751 = vmatpush1.msra.mxu0 %v5734
  %5752 = vmatprep.subr.mxu0 0.0
  %5753 = vmatpush1.msra.mxu0 0.0
  %5754 = vmatprep.subr.mxu0 0.0
  %5755 = vmatpush1.msra.mxu0 0.0
  %5756 = vmatprep.subr.mxu0 0.0
  %5757 = vmatpush1.msra.mxu0 0.0
  %5758 = vmatprep.subr.mxu0 0.0
  %5759 = vmatpush1.msra.mxu0 0.0
  %5760 = vmatprep.subr.mxu0 0.0
  %5761 = vmatpush1.msra.mxu0 0.0
  %5762 = vmatprep.subr.mxu0 0.0
  %5763 = vmatpush1.msra.mxu0 0.0
  %5764 = vmatprep.subr.mxu0 0.0
  %5765 = vmatpush1.msra.mxu0 0.0
  %5766 = vmatprep.subr.mxu0 0.0
  %5767 = vmatpush1.msra.mxu0 0.0
  %5768 = vmatprep.subr.mxu0 0.0
  %5769 = vmatpush1.msra.mxu0 0.0
  %5770 = vmatprep.subr.mxu0 0.0
  %5771 = vmatpush1.msra.mxu0 0.0
  %5772 = vmatprep.subr.mxu0 0.0
  %5773 = vmatpush1.msra.mxu0 0.0
  %5774 = vmatprep.subr.mxu0 0.0
  %5775 = vmatpush1.msra.mxu0 0.0
  %5776 = vmatprep.subr.mxu0 0.0
  %5777 = vmatpush1.msra.mxu0 0.0
  %5778 = vmatprep.subr.mxu0 0.0
  %5779 = vmatpush1.msra.mxu0 0.0
  %5780 = vmatprep.subr.mxu0 0.0
  %5781 = vmatpush1.msra.mxu0 0.0
  %5782 = vmatprep.subr.mxu0 0.0
  %5783 = vmatpush1.msra.mxu0 0.0
  %5784 = vmatprep.subr.mxu0 0.0
  %5785 = vmatpush1.msra.mxu0 0.0
  %5786 = vmatprep.subr.mxu0 0.0
  %5787 = vmatpush1.msra.mxu0 0.0
  %5788 = vmatprep.subr.mxu0 0.0
  %5789 = vmatpush1.msra.mxu0 0.0
  %5790 = vmatprep.subr.mxu0 0.0
  %5791 = vmatpush1.msra.mxu0 0.0
  %5792 = vmatprep.subr.mxu0 0.0
  %5793 = vmatpush1.msra.mxu0 0.0
  %5794 = vmatprep.subr.mxu0 0.0
  %5795 = vmatpush1.msra.mxu0 0.0
  %5796 = vmatprep.subr.mxu0 0.0
  %5797 = vmatpush1.msra.mxu0 0.0
  %5798 = vmatprep.subr.mxu0 0.0
  %5799 = vmatpush1.msra.mxu0 0.0
  %5800 = vmatprep.subr.mxu0 0.0
  %5801 = vmatpush1.msra.mxu0 0.0
  %5802 = vmatprep.subr.mxu0 0.0
  %5803 = vmatpush1.msra.mxu0 0.0
  %5804 = vmatprep.subr.mxu0 0.0
  %5805 = vmatpush1.msra.mxu0 0.0
  %5806 = vmatprep.subr.mxu0 0.0
  %5807 = vmatpush1.msra.mxu0 0.0
  %5808 = vmatprep.subr.mxu0 0.0
  %5809 = vmatpush1.msra.mxu0 0.0
  %5810 = vmatprep.subr.mxu0 0.0
  %5811 = vmatpush1.msra.mxu0 0.0
  %5812 = vmatprep.subr.mxu0 0.0
  %5813 = vmatpush1.msra.mxu0 0.0
  %5814 = vmatprep.mubr.f32.mxu0 0.0
  %5815 = vmatmul.mubr.f32.gmra.mrb[0].mxu0 %v5745
  %v5816 = vpop.f32.mrb[0].mxu0
  %v5817 = vadd.f32 0.0, %v5816
  %v5818 = vpop.f32.mrb[0].mxu0
  %5819 = vmatprep.mubr.f32.mxu0 0.0
  %5820 = vmatmul.mubr.f32.gmra.mrb[0].mxu0 %v5748
  %v5821 = vpop.f32.mrb[0].mxu0
  %v5822 = vadd.f32 0.0, %v5821
  %v5823 = vpop.f32.mrb[0].mxu0
  %5824 = vdwg.mxu0
  %5825 = vmatprep.subr.mxu0 0.0
  %5826 = vmatpush1.msra.mxu0 %v5735
  %5827 = vmatprep.subr.mxu0 0.0
  %5828 = vmatpush1.msra.mxu0 0.0
  %5829 = vmatprep.subr.mxu0 0.0
  %5830 = vmatpush1.msra.mxu0 0.0
  %5831 = vmatprep.subr.mxu0 0.0
  %5832 = vmatpush1.msra.mxu0 0.0
  %5833 = vmatprep.subr.mxu0 0.0
  %5834 = vmatpush1.msra.mxu0 0.0
  %5835 = vmatprep.subr.mxu0 0.0
  %5836 = vmatpush1.msra.mxu0 0.0
  %5837 = vmatprep.subr.mxu0 0.0
  %5838 = vmatpush1.msra.mxu0 0.0
  %5839 = vmatprep.subr.mxu0 0.0
  %5840 = vmatpush1.msra.mxu0 0.0
  %5841 = vmatprep.subr.mxu0 0.0
  %5842 = vmatpush1.msra.mxu0 0.0
  %5843 = vmatprep.subr.mxu0 0.0
  %5844 = vmatpush1.msra.mxu0 0.0
  %5845 = vmatprep.subr.mxu0 0.0
  %5846 = vmatpush1.msra.mxu0 0.0
  %5847 = vmatprep.subr.mxu0 0.0
  %5848 = vmatpush1.msra.mxu0 0.0
  %5849 = vmatprep.subr.mxu0 0.0
  %5850 = vmatpush1.msra.mxu0 0.0
  %5851 = vmatprep.subr.mxu0 0.0
  %5852 = vmatpush1.msra.mxu0 0.0
  %5853 = vmatprep.subr.mxu0 0.0
  %5854 = vmatpush1.msra.mxu0 0.0
  %5855 = vmatprep.subr.mxu0 0.0
  %5856 = vmatpush1.msra.mxu0 0.0
  %5857 = vmatprep.subr.mxu0 0.0
  %5858 = vmatpush1.msra.mxu0 0.0
  %5859 = vmatprep.subr.mxu0 0.0
  %5860 = vmatpush1.msra.mxu0 0.0
  %5861 = vmatprep.subr.mxu0 0.0
  %5862 = vmatpush1.msra.mxu0 0.0
  %5863 = vmatprep.subr.mxu0 0.0
  %5864 = vmatpush1.msra.mxu0 0.0
  %5865 = vmatprep.subr.mxu0 0.0
  %5866 = vmatpush1.msra.mxu0 0.0
  %5867 = vmatprep.subr.mxu0 0.0
  %5868 = vmatpush1.msra.mxu0 0.0
  %5869 = vmatprep.subr.mxu0 0.0
  %5870 = vmatpush1.msra.mxu0 0.0
  %5871 = vmatprep.subr.mxu0 0.0
  %5872 = vmatpush1.msra.mxu0 0.0
  %5873 = vmatprep.subr.mxu0 0.0
  %5874 = vmatpush1.msra.mxu0 0.0
  %5875 = vmatprep.subr.mxu0 0.0
  %5876 = vmatpush1.msra.mxu0 0.0
  %5877 = vmatprep.subr.mxu0 0.0
  %5878 = vmatpush1.msra.mxu0 0.0
  %5879 = vmatprep.subr.mxu0 0.0
  %5880 = vmatpush1.msra.mxu0 0.0
  %5881 = vmatprep.subr.mxu0 0.0
  %5882 = vmatpush1.msra.mxu0 0.0
  %5883 = vmatprep.subr.mxu0 0.0
  %5884 = vmatpush1.msra.mxu0 0.0
  %5885 = vmatprep.subr.mxu0 0.0
  %5886 = vmatpush1.msra.mxu0 0.0
  %5887 = vmatprep.subr.mxu0 0.0
  %5888 = vmatpush1.msra.mxu0 0.0
  %5889 = vmatprep.mubr.f32.mxu0 0.0
  %5890 = vmatmul.mubr.f32.gmra.mrb[0].mxu0 %v5745
  %v5891 = vpop.f32.mrb[0].mxu0
  %v5892 = vadd.f32 0.0, %v5891
  %v5893 = vpop.f32.mrb[0].mxu0
  %5894 = vmatprep.mubr.f32.mxu0 0.0
  %5895 = vmatmul.mubr.f32.gmra.mrb[0].mxu0 %v5748
  %v5896 = vpop.f32.mrb[0].mxu0
  %v5897 = vadd.f32 0.0, %v5896
  %v5898 = vpop.f32.mrb[0].mxu0
  %5899 = vdwg.mxu0
  %5900 = vmatprep.subr.mxu0 0.0
  %5901 = vmatpush1.msra.mxu0 %v5736
  %5902 = vmatprep.subr.mxu0 0.0
  %5903 = vmatpush1.msra.mxu0 0.0
  %5904 = vmatprep.subr.mxu0 0.0
  %5905 = vmatpush1.msra.mxu0 0.0
  %5906 = vmatprep.subr.mxu0 0.0
  %5907 = vmatpush1.msra.mxu0 0.0
  %5908 = vmatprep.subr.mxu0 0.0
  %5909 = vmatpush1.msra.mxu0 0.0
  %5910 = vmatprep.subr.mxu0 0.0
  %5911 = vmatpush1.msra.mxu0 0.0
  %5912 = vmatprep.subr.mxu0 0.0
  %5913 = vmatpush1.msra.mxu0 0.0
  %5914 = vmatprep.subr.mxu0 0.0
  %5915 = vmatpush1.msra.mxu0 0.0
  %5916 = vmatprep.subr.mxu0 0.0
  %5917 = vmatpush1.msra.mxu0 0.0
  %5918 = vmatprep.subr.mxu0 0.0
  %5919 = vmatpush1.msra.mxu0 0.0
  %5920 = vmatprep.subr.mxu0 0.0
  %5921 = vmatpush1.msra.mxu0 0.0
  %5922 = vmatprep.subr.mxu0 0.0
  %5923 = vmatpush1.msra.mxu0 0.0
  %5924 = vmatprep.subr.mxu0 0.0
  %5925 = vmatpush1.msra.mxu0 0.0
  %5926 = vmatprep.subr.mxu0 0.0
  %5927 = vmatpush1.msra.mxu0 0.0
  %5928 = vmatprep.subr.mxu0 0.0
  %5929 = vmatpush1.msra.mxu0 0.0
  %5930 = vmatprep.subr.mxu0 0.0
  %5931 = vmatpush1.msra.mxu0 0.0
  %5932 = vmatprep.subr.mxu0 0.0
  %5933 = vmatpush1.msra.mxu0 0.0
  %5934 = vmatprep.subr.mxu0 0.0
  %5935 = vmatpush1.msra.mxu0 0.0
  %5936 = vmatprep.subr.mxu0 0.0
  %5937 = vmatpush1.msra.mxu0 0.0
  %5938 = vmatprep.subr.mxu0 0.0
  %5939 = vmatpush1.msra.mxu0 0.0
  %5940 = vmatprep.subr.mxu0 0.0
  %5941 = vmatpush1.msra.mxu0 0.0
  %5942 = vmatprep.subr.mxu0 0.0
  %5943 = vmatpush1.msra.mxu0 0.0
  %5944 = vmatprep.subr.mxu0 0.0
  %5945 = vmatpush1.msra.mxu0 0.0
  %5946 = vmatprep.subr.mxu0 0.0
  %5947 = vmatpush1.msra.mxu0 0.0
  %5948 = vmatprep.subr.mxu0 0.0
  %5949 = vmatpush1.msra.mxu0 0.0
  %5950 = vmatprep.subr.mxu0 0.0
  %5951 = vmatpush1.msra.mxu0 0.0
  %5952 = vmatprep.subr.mxu0 0.0
  %5953 = vmatpush1.msra.mxu0 0.0
  %5954 = vmatprep.subr.mxu0 0.0
  %5955 = vmatpush1.msra.mxu0 0.0
  %5956 = vmatprep.subr.mxu0 0.0
  %5957 = vmatpush1.msra.mxu0 0.0
  %5958 = vmatprep.subr.mxu0 0.0
  %5959 = vmatpush1.msra.mxu0 0.0
  %5960 = vmatprep.subr.mxu0 0.0
  %5961 = vmatpush1.msra.mxu0 0.0
  %5962 = vmatprep.subr.mxu0 0.0
  %5963 = vmatpush1.msra.mxu0 0.0
  %5964 = vmatprep.mubr.f32.mxu0 0.0
  %5965 = vmatmul.mubr.f32.gmra.mrb[0].mxu0 %v5745
  %v5966 = vpop.f32.mrb[0].mxu0
  %v5967 = vadd.f32 0.0, %v5966
  %v5968 = vpop.f32.mrb[0].mxu0
  %5969 = vmatprep.mubr.f32.mxu0 0.0
  %5970 = vmatmul.mubr.f32.gmra.mrb[0].mxu0 %v5748
  %v5971 = vpop.f32.mrb[0].mxu0
  %v5972 = vadd.f32 0.0, %v5971
  %v5973 = vpop.f32.mrb[0].mxu0
  %5974 = vdwg.mxu0
  %5975 = vmatprep.subr.mxu0 0.0
  %5976 = vmatpush1.msra.mxu0 %v5737
  %5977 = vmatprep.subr.mxu0 0.0
  %5978 = vmatpush1.msra.mxu0 0.0
  %5979 = vmatprep.subr.mxu0 0.0
  %5980 = vmatpush1.msra.mxu0 0.0
  %5981 = vmatprep.subr.mxu0 0.0
  %5982 = vmatpush1.msra.mxu0 0.0
  %5983 = vmatprep.subr.mxu0 0.0
  %5984 = vmatpush1.msra.mxu0 0.0
  %5985 = vmatprep.subr.mxu0 0.0
  %5986 = vmatpush1.msra.mxu0 0.0
  %5987 = vmatprep.subr.mxu0 0.0
  %5988 = vmatpush1.msra.mxu0 0.0
  %5989 = vmatprep.subr.mxu0 0.0
  %5990 = vmatpush1.msra.mxu0 0.0
  %5991 = vmatprep.subr.mxu0 0.0
  %5992 = vmatpush1.msra.mxu0 0.0
  %5993 = vmatprep.subr.mxu0 0.0
  %5994 = vmatpush1.msra.mxu0 0.0
  %5995 = vmatprep.subr.mxu0 0.0
  %5996 = vmatpush1.msra.mxu0 0.0
  %5997 = vmatprep.subr.mxu0 0.0
  %5998 = vmatpush1.msra.mxu0 0.0
  %5999 = vmatprep.subr.mxu0 0.0
  %6000 = vmatpush1.msra.mxu0 0.0
  %6001 = vmatprep.subr.mxu0 0.0
  %6002 = vmatpush1.msra.mxu0 0.0
  %6003 = vmatprep.subr.mxu0 0.0
  %6004 = vmatpush1.msra.mxu0 0.0
  %6005 = vmatprep.subr.mxu0 0.0
  %6006 = vmatpush1.msra.mxu0 0.0
  %6007 = vmatprep.subr.mxu0 0.0
  %6008 = vmatpush1.msra.mxu0 0.0
  %6009 = vmatprep.subr.mxu0 0.0
  %6010 = vmatpush1.msra.mxu0 0.0
  %6011 = vmatprep.subr.mxu0 0.0
  %6012 = vmatpush1.msra.mxu0 0.0
  %6013 = vmatprep.subr.mxu0 0.0
  %6014 = vmatpush1.msra.mxu0 0.0
  %6015 = vmatprep.subr.mxu0 0.0
  %6016 = vmatpush1.msra.mxu0 0.0
  %6017 = vmatprep.subr.mxu0 0.0
  %6018 = vmatpush1.msra.mxu0 0.0
  %6019 = vmatprep.subr.mxu0 0.0
  %6020 = vmatpush1.msra.mxu0 0.0
  %6021 = vmatprep.subr.mxu0 0.0
  %6022 = vmatpush1.msra.mxu0 0.0
  %6023 = vmatprep.subr.mxu0 0.0
  %6024 = vmatpush1.msra.mxu0 0.0
  %6025 = vmatprep.subr.mxu0 0.0
  %6026 = vmatpush1.msra.mxu0 0.0
  %6027 = vmatprep.subr.mxu0 0.0
  %6028 = vmatpush1.msra.mxu0 0.0
  %6029 = vmatprep.subr.mxu0 0.0
  %6030 = vmatpush1.msra.mxu0 0.0
  %6031 = vmatprep.subr.mxu0 0.0
  %6032 = vmatpush1.msra.mxu0 0.0
  %6033 = vmatprep.subr.mxu0 0.0
  %6034 = vmatpush1.msra.mxu0 0.0
  %6035 = vmatprep.subr.mxu0 0.0
  %6036 = vmatpush1.msra.mxu0 0.0
  %6037 = vmatprep.subr.mxu0 0.0
  %6038 = vmatpush1.msra.mxu0 0.0
  %6039 = vmatprep.mubr.f32.mxu0 0.0
  %6040 = vmatmul.mubr.f32.gmra.mrb[0].mxu0 %v5745
  %v6041 = vpop.f32.mrb[0].mxu0
  %v6042 = vadd.f32 0.0, %v6041
  %v6043 = vpop.f32.mrb[0].mxu0
  %6044 = vmatprep.mubr.f32.mxu0 0.0
  %6045 = vmatmul.mubr.f32.gmra.mrb[0].mxu0 %v5748
  %v6046 = vpop.f32.mrb[0].mxu0
  %v6047 = vadd.f32 0.0, %v6046
  %v6048 = vpop.f32.mrb[0].mxu0
  %6049 = vdwg.mxu0
  %6050 = vmatprep.subr.mxu0 0.0
  %6051 = vmatpush1.msra.mxu0 %v5738
  %6052 = vmatprep.subr.mxu0 0.0
  %6053 = vmatpush1.msra.mxu0 0.0
  %6054 = vmatprep.subr.mxu0 0.0
  %6055 = vmatpush1.msra.mxu0 0.0
  %6056 = vmatprep.subr.mxu0 0.0
  %6057 = vmatpush1.msra.mxu0 0.0
  %6058 = vmatprep.subr.mxu0 0.0
  %6059 = vmatpush1.msra.mxu0 0.0
  %6060 = vmatprep.subr.mxu0 0.0
  %6061 = vmatpush1.msra.mxu0 0.0
  %6062 = vmatprep.subr.mxu0 0.0
  %6063 = vmatpush1.msra.mxu0 0.0
  %6064 = vmatprep.subr.mxu0 0.0
  %6065 = vmatpush1.msra.mxu0 0.0
  %6066 = vmatprep.subr.mxu0 0.0
  %6067 = vmatpush1.msra.mxu0 0.0
  %6068 = vmatprep.subr.mxu0 0.0
  %6069 = vmatpush1.msra.mxu0 0.0
  %6070 = vmatprep.subr.mxu0 0.0
  %6071 = vmatpush1.msra.mxu0 0.0
  %6072 = vmatprep.subr.mxu0 0.0
  %6073 = vmatpush1.msra.mxu0 0.0
  %6074 = vmatprep.subr.mxu0 0.0
  %6075 = vmatpush1.msra.mxu0 0.0
  %6076 = vmatprep.subr.mxu0 0.0
  %6077 = vmatpush1.msra.mxu0 0.0
  %6078 = vmatprep.subr.mxu0 0.0
  %6079 = vmatpush1.msra.mxu0 0.0
  %6080 = vmatprep.subr.mxu0 0.0
  %6081 = vmatpush1.msra.mxu0 0.0
  %6082 = vmatprep.subr.mxu0 0.0
  %6083 = vmatpush1.msra.mxu0 0.0
  %6084 = vmatprep.subr.mxu0 0.0
  %6085 = vmatpush1.msra.mxu0 0.0
  %6086 = vmatprep.subr.mxu0 0.0
  %6087 = vmatpush1.msra.mxu0 0.0
  %6088 = vmatprep.subr.mxu0 0.0
  %6089 = vmatpush1.msra.mxu0 0.0
  %6090 = vmatprep.subr.mxu0 0.0
  %6091 = vmatpush1.msra.mxu0 0.0
  %6092 = vmatprep.subr.mxu0 0.0
  %6093 = vmatpush1.msra.mxu0 0.0
  %6094 = vmatprep.subr.mxu0 0.0
  %6095 = vmatpush1.msra.mxu0 0.0
  %6096 = vmatprep.subr.mxu0 0.0
  %6097 = vmatpush1.msra.mxu0 0.0
  %6098 = vmatprep.subr.mxu0 0.0
  %6099 = vmatpush1.msra.mxu0 0.0
  %6100 = vmatprep.subr.mxu0 0.0
  %6101 = vmatpush1.msra.mxu0 0.0
  %6102 = vmatprep.subr.mxu0 0.0
  %6103 = vmatpush1.msra.mxu0 0.0
  %6104 = vmatprep.subr.mxu0 0.0
  %6105 = vmatpush1.msra.mxu0 0.0
  %6106 = vmatprep.subr.mxu0 0.0
  %6107 = vmatpush1.msra.mxu0 0.0
  %6108 = vmatprep.subr.mxu0 0.0
  %6109 = vmatpush1.msra.mxu0 0.0
  %6110 = vmatprep.subr.mxu0 0.0
  %6111 = vmatpush1.msra.mxu0 0.0
  %6112 = vmatprep.subr.mxu0 0.0
  %6113 = vmatpush1.msra.mxu0 0.0
  %6114 = vmatprep.mubr.f32.mxu0 0.0
  %6115 = vmatmul.mubr.f32.gmra.mrb[0].mxu0 %v5745
  %v6116 = vpop.f32.mrb[0].mxu0
  %v6117 = vadd.f32 0.0, %v6116
  %v6118 = vpop.f32.mrb[0].mxu0
  %6119 = vmatprep.mubr.f32.mxu0 0.0
  %6120 = vmatmul.mubr.f32.gmra.mrb[0].mxu0 %v5748
  %v6121 = vpop.f32.mrb[0].mxu0
  %v6122 = vadd.f32 0.0, %v6121
  %v6123 = vpop.f32.mrb[0].mxu0
  %6124 = vdwg.mxu0
  %6125 = vmatprep.subr.mxu0 0.0
  %6126 = vmatpush1.msra.mxu0 %v5739
  %6127 = vmatprep.subr.mxu0 0.0
  %6128 = vmatpush1.msra.mxu0 0.0
  %6129 = vmatprep.subr.mxu0 0.0
  %6130 = vmatpush1.msra.mxu0 0.0
  %6131 = vmatprep.subr.mxu0 0.0
  %6132 = vmatpush1.msra.mxu0 0.0
  %6133 = vmatprep.subr.mxu0 0.0
  %6134 = vmatpush1.msra.mxu0 0.0
  %6135 = vmatprep.subr.mxu0 0.0
  %6136 = vmatpush1.msra.mxu0 0.0
  %6137 = vmatprep.subr.mxu0 0.0
  %6138 = vmatpush1.msra.mxu0 0.0
  %6139 = vmatprep.subr.mxu0 0.0
  %6140 = vmatpush1.msra.mxu0 0.0
  %6141 = vmatprep.subr.mxu0 0.0
  %6142 = vmatpush1.msra.mxu0 0.0
  %6143 = vmatprep.subr.mxu0 0.0
  %6144 = vmatpush1.msra.mxu0 0.0
  %6145 = vmatprep.subr.mxu0 0.0
  %6146 = vmatpush1.msra.mxu0 0.0
  %6147 = vmatprep.subr.mxu0 0.0
  %6148 = vmatpush1.msra.mxu0 0.0
  %6149 = vmatprep.subr.mxu0 0.0
  %6150 = vmatpush1.msra.mxu0 0.0
  %6151 = vmatprep.subr.mxu0 0.0
  %6152 = vmatpush1.msra.mxu0 0.0
  %6153 = vmatprep.subr.mxu0 0.0
  %6154 = vmatpush1.msra.mxu0 0.0
  %6155 = vmatprep.subr.mxu0 0.0
  %6156 = vmatpush1.msra.mxu0 0.0
  %6157 = vmatprep.subr.mxu0 0.0
  %6158 = vmatpush1.msra.mxu0 0.0
  %6159 = vmatprep.subr.mxu0 0.0
  %6160 = vmatpush1.msra.mxu0 0.0
  %6161 = vmatprep.subr.mxu0 0.0
  %6162 = vmatpush1.msra.mxu0 0.0
  %6163 = vmatprep.subr.mxu0 0.0
  %6164 = vmatpush1.msra.mxu0 0.0
  %6165 = vmatprep.subr.mxu0 0.0
  %6166 = vmatpush1.msra.mxu0 0.0
  %6167 = vmatprep.subr.mxu0 0.0
  %6168 = vmatpush1.msra.mxu0 0.0
  %6169 = vmatprep.subr.mxu0 0.0
  %6170 = vmatpush1.msra.mxu0 0.0
  %6171 = vmatprep.subr.mxu0 0.0
  %6172 = vmatpush1.msra.mxu0 0.0
  %6173 = vmatprep.subr.mxu0 0.0
  %6174 = vmatpush1.msra.mxu0 0.0
  %6175 = vmatprep.subr.mxu0 0.0
  %6176 = vmatpush1.msra.mxu0 0.0
  %6177 = vmatprep.subr.mxu0 0.0
  %6178 = vmatpush1.msra.mxu0 0.0
  %6179 = vmatprep.subr.mxu0 0.0
  %6180 = vmatpush1.msra.mxu0 0.0
  %6181 = vmatprep.subr.mxu0 0.0
  %6182 = vmatpush1.msra.mxu0 0.0
  %6183 = vmatprep.subr.mxu0 0.0
  %6184 = vmatpush1.msra.mxu0 0.0
  %6185 = vmatprep.subr.mxu0 0.0
  %6186 = vmatpush1.msra.mxu0 0.0
  %6187 = vmatprep.subr.mxu0 0.0
  %6188 = vmatpush1.msra.mxu0 0.0
  %6189 = vmatprep.mubr.f32.mxu0 0.0
  %6190 = vmatmul.mubr.f32.gmra.mrb[0].mxu0 %v5745
  %v6191 = vpop.f32.mrb[0].mxu0
  %v6192 = vadd.f32 0.0, %v6191
  %v6193 = vpop.f32.mrb[0].mxu0
  %6194 = vmatprep.mubr.f32.mxu0 0.0
  %6195 = vmatmul.mubr.f32.gmra.mrb[0].mxu0 %v5748
  %v6196 = vpop.f32.mrb[0].mxu0
  %v6197 = vadd.f32 0.0, %v6196
  %v6198 = vpop.f32.mrb[0].mxu0
  %6199 = vdwg.mxu0
  %6200 = vmatprep.subr.mxu0 0.0
  %6201 = vmatpush1.msra.mxu0 %v5740
  %6202 = vmatprep.subr.mxu0 0.0
  %6203 = vmatpush1.msra.mxu0 0.0
  %6204 = vmatprep.subr.mxu0 0.0
  %6205 = vmatpush1.msra.mxu0 0.0
  %6206 = vmatprep.subr.mxu0 0.0
  %6207 = vmatpush1.msra.mxu0 0.0
  %6208 = vmatprep.subr.mxu0 0.0
  %6209 = vmatpush1.msra.mxu0 0.0
  %6210 = vmatprep.subr.mxu0 0.0
  %6211 = vmatpush1.msra.mxu0 0.0
  %6212 = vmatprep.subr.mxu0 0.0
  %6213 = vmatpush1.msra.mxu0 0.0
  %6214 = vmatprep.subr.mxu0 0.0
  %6215 = vmatpush1.msra.mxu0 0.0
  %6216 = vmatprep.subr.mxu0 0.0
  %6217 = vmatpush1.msra.mxu0 0.0
  %6218 = vmatprep.subr.mxu0 0.0
  %6219 = vmatpush1.msra.mxu0 0.0
  %6220 = vmatprep.subr.mxu0 0.0
  %6221 = vmatpush1.msra.mxu0 0.0
  %6222 = vmatprep.subr.mxu0 0.0
  %6223 = vmatpush1.msra.mxu0 0.0
  %6224 = vmatprep.subr.mxu0 0.0
  %6225 = vmatpush1.msra.mxu0 0.0
  %6226 = vmatprep.subr.mxu0 0.0
  %6227 = vmatpush1.msra.mxu0 0.0
  %6228 = vmatprep.subr.mxu0 0.0
  %6229 = vmatpush1.msra.mxu0 0.0
  %6230 = vmatprep.subr.mxu0 0.0
  %6231 = vmatpush1.msra.mxu0 0.0
  %6232 = vmatprep.subr.mxu0 0.0
  %6233 = vmatpush1.msra.mxu0 0.0
  %6234 = vmatprep.subr.mxu0 0.0
  %6235 = vmatpush1.msra.mxu0 0.0
  %6236 = vmatprep.subr.mxu0 0.0
  %6237 = vmatpush1.msra.mxu0 0.0
  %6238 = vmatprep.subr.mxu0 0.0
  %6239 = vmatpush1.msra.mxu0 0.0
  %6240 = vmatprep.subr.mxu0 0.0
  %6241 = vmatpush1.msra.mxu0 0.0
  %6242 = vmatprep.subr.mxu0 0.0
  %6243 = vmatpush1.msra.mxu0 0.0
  %6244 = vmatprep.subr.mxu0 0.0
  %6245 = vmatpush1.msra.mxu0 0.0
  %6246 = vmatprep.subr.mxu0 0.0
  %6247 = vmatpush1.msra.mxu0 0.0
  %6248 = vmatprep.subr.mxu0 0.0
  %6249 = vmatpush1.msra.mxu0 0.0
  %6250 = vmatprep.subr.mxu0 0.0
  %6251 = vmatpush1.msra.mxu0 0.0
  %6252 = vmatprep.subr.mxu0 0.0
  %6253 = vmatpush1.msra.mxu0 0.0
  %6254 = vmatprep.subr.mxu0 0.0
  %6255 = vmatpush1.msra.mxu0 0.0
  %6256 = vmatprep.subr.mxu0 0.0
  %6257 = vmatpush1.msra.mxu0 0.0
  %6258 = vmatprep.subr.mxu0 0.0
  %6259 = vmatpush1.msra.mxu0 0.0
  %6260 = vmatprep.subr.mxu0 0.0
  %6261 = vmatpush1.msra.mxu0 0.0
  %6262 = vmatprep.subr.mxu0 0.0
  %6263 = vmatpush1.msra.mxu0 0.0
  %6264 = vmatprep.mubr.f32.mxu0 0.0
  %6265 = vmatmul.mubr.f32.gmra.mrb[0].mxu0 %v5745
  %v6266 = vpop.f32.mrb[0].mxu0
  %v6267 = vadd.f32 0.0, %v6266
  %v6268 = vpop.f32.mrb[0].mxu0
  %6269 = vmatprep.mubr.f32.mxu0 0.0
  %6270 = vmatmul.mubr.f32.gmra.mrb[0].mxu0 %v5748
  %v6271 = vpop.f32.mrb[0].mxu0
  %v6272 = vadd.f32 0.0, %v6271
  %v6273 = vpop.f32.mrb[0].mxu0
  %6274 = vdwg.mxu0
  %6275 = vmatprep.subr.mxu0 0.0
  %6276 = vmatpush1.msra.mxu0 %v5741
  %6277 = vmatprep.subr.mxu0 0.0
  %6278 = vmatpush1.msra.mxu0 0.0
  %6279 = vmatprep.subr.mxu0 0.0
  %6280 = vmatpush1.msra.mxu0 0.0
  %6281 = vmatprep.subr.mxu0 0.0
  %6282 = vmatpush1.msra.mxu0 0.0
  %6283 = vmatprep.subr.mxu0 0.0
  %6284 = vmatpush1.msra.mxu0 0.0
  %6285 = vmatprep.subr.mxu0 0.0
  %6286 = vmatpush1.msra.mxu0 0.0
  %6287 = vmatprep.subr.mxu0 0.0
  %6288 = vmatpush1.msra.mxu0 0.0
  %6289 = vmatprep.subr.mxu0 0.0
  %6290 = vmatpush1.msra.mxu0 0.0
  %6291 = vmatprep.subr.mxu0 0.0
  %6292 = vmatpush1.msra.mxu0 0.0
  %6293 = vmatprep.subr.mxu0 0.0
  %6294 = vmatpush1.msra.mxu0 0.0
  %6295 = vmatprep.subr.mxu0 0.0
  %6296 = vmatpush1.msra.mxu0 0.0
  %6297 = vmatprep.subr.mxu0 0.0
  %6298 = vmatpush1.msra.mxu0 0.0
  %6299 = vmatprep.subr.mxu0 0.0
  %6300 = vmatpush1.msra.mxu0 0.0
  %6301 = vmatprep.subr.mxu0 0.0
  %6302 = vmatpush1.msra.mxu0 0.0
  %6303 = vmatprep.subr.mxu0 0.0
  %6304 = vmatpush1.msra.mxu0 0.0
  %6305 = vmatprep.subr.mxu0 0.0
  %6306 = vmatpush1.msra.mxu0 0.0
  %6307 = vmatprep.subr.mxu0 0.0
  %6308 = vmatpush1.msra.mxu0 0.0
  %6309 = vmatprep.subr.mxu0 0.0
  %6310 = vmatpush1.msra.mxu0 0.0
  %6311 = vmatprep.subr.mxu0 0.0
  %6312 = vmatpush1.msra.mxu0 0.0
  %6313 = vmatprep.subr.mxu0 0.0
  %6314 = vmatpush1.msra.mxu0 0.0
  %6315 = vmatprep.subr.mxu0 0.0
  %6316 = vmatpush1.msra.mxu0 0.0
  %6317 = vmatprep.subr.mxu0 0.0
  %6318 = vmatpush1.msra.mxu0 0.0
  %6319 = vmatprep.subr.mxu0 0.0
  %6320 = vmatpush1.msra.mxu0 0.0
  %6321 = vmatprep.subr.mxu0 0.0
  %6322 = vmatpush1.msra.mxu0 0.0
  %6323 = vmatprep.subr.mxu0 0.0
  %6324 = vmatpush1.msra.mxu0 0.0
  %6325 = vmatprep.subr.mxu0 0.0
  %6326 = vmatpush1.msra.mxu0 0.0
  %6327 = vmatprep.subr.mxu0 0.0
  %6328 = vmatpush1.msra.mxu0 0.0
  %6329 = vmatprep.subr.mxu0 0.0
  %6330 = vmatpush1.msra.mxu0 0.0
  %6331 = vmatprep.subr.mxu0 0.0
  %6332 = vmatpush1.msra.mxu0 0.0
  %6333 = vmatprep.subr.mxu0 0.0
  %6334 = vmatpush1.msra.mxu0 0.0
  %6335 = vmatprep.subr.mxu0 0.0
  %6336 = vmatpush1.msra.mxu0 0.0
  %6337 = vmatprep.subr.mxu0 0.0
  %6338 = vmatpush1.msra.mxu0 0.0
  %6339 = vmatprep.mubr.f32.mxu0 0.0
  %6340 = vmatmul.mubr.f32.gmra.mrb[0].mxu0 %v5745
  %v6341 = vpop.f32.mrb[0].mxu0
  %v6342 = vadd.f32 0.0, %v6341
  %v6343 = vpop.f32.mrb[0].mxu0
  %6344 = vmatprep.mubr.f32.mxu0 0.0
  %6345 = vmatmul.mubr.f32.gmra.mrb[0].mxu0 %v5748
  %v6346 = vpop.f32.mrb[0].mxu0
  %v6347 = vadd.f32 0.0, %v6346
  %v6348 = vpop.f32.mrb[0].mxu0
  %6349 = vdwg.mxu0
  %6366 = vrot.lane.b32.xlu0 %v1938, 8
  %v6367 = vpop.permute.xlu0 %6366
  %6368 = vrot.lane.b32.xlu0 %v1939, 8
  %v6369 = vpop.permute.xlu0 %6368
  %6370 = vrot.lane.b32.xlu0 %v1940, 8
  %v6371 = vpop.permute.xlu0 %6370
  %6372 = vrot.lane.b32.xlu0 %v1941, 8
  %v6373 = vpop.permute.xlu0 %6372
  %6374 = vrot.lane.b32.xlu0 %v1942, 8
  %v6375 = vpop.permute.xlu0 %6374
  %6376 = vrot.lane.b32.xlu0 %v1943, 8
  %v6377 = vpop.permute.xlu0 %6376
  %6378 = vrot.lane.b32.xlu0 %v1944, 8
  %v6379 = vpop.permute.xlu0 %6378
  %6380 = vrot.lane.b32.xlu0 %v1945, 8
  %v6381 = vpop.permute.xlu0 %6380
  %6382 = vrot.lane.b32.xlu0 %v1946, 8
  %v6383 = vpop.permute.xlu0 %6382
  %6384 = vrot.lane.b32.xlu0 %v1947, 8
  %v6385 = vpop.permute.xlu0 %6384
  %6386 = vrot.lane.b32.xlu0 %v1948, 8
  %v6387 = vpop.permute.xlu0 %6386
  %6388 = vrot.lane.b32.xlu0 %v1949, 8
  %v6389 = vpop.permute.xlu0 %6388
  %6390 = vrot.lane.b32.xlu0 %v1950, 8
  %v6391 = vpop.permute.xlu0 %6390
  %6392 = vrot.lane.b32.xlu0 %v1951, 8
  %v6393 = vpop.permute.xlu0 %6392
  %6394 = vrot.lane.b32.xlu0 %v1952, 8
  %v6395 = vpop.permute.xlu0 %6394
  %6396 = vrot.lane.b32.xlu0 %v1953, 8
  %v6397 = vpop.permute.xlu0 %6396
  %v6414 = vsel %vm632, %v5817, %v6367
  %v6415 = vsel %vm632, %v5822, %v6369
  %v6416 = vsel %vm632, %v5892, %v6371
  %v6417 = vsel %vm632, %v5897, %v6373
  %v6418 = vsel %vm632, %v5967, %v6375
  %v6419 = vsel %vm632, %v5972, %v6377
  %v6420 = vsel %vm632, %v6042, %v6379
  %v6421 = vsel %vm632, %v6047, %v6381
  %v6422 = vsel %vm632, %v6117, %v6383
  %v6423 = vsel %vm632, %v6122, %v6385
  %v6424 = vsel %vm632, %v6192, %v6387
  %v6425 = vsel %vm632, %v6197, %v6389
  %v6426 = vsel %vm632, %v6267, %v6391
  %v6427 = vsel %vm632, %v6272, %v6393
  %v6428 = vsel %vm632, %v6342, %v6395
  %v6429 = vsel %vm632, %v6347, %v6397
  %v6446 = vrot.slane %v6414, 6
  %v6447 = vrot.slane %v6415, 6
  %v6448 = vsel %vm178, %v6446, %v6447
  %v6449 = vrot.slane %v6416, 6
  %v6450 = vrot.slane %v6417, 6
  %v6451 = vsel %vm178, %v6449, %v6450
  %v6452 = vrot.slane %v6418, 6
  %v6453 = vrot.slane %v6419, 6
  %v6454 = vsel %vm178, %v6452, %v6453
  %v6455 = vrot.slane %v6420, 6
  %v6456 = vrot.slane %v6421, 6
  %v6457 = vsel %vm178, %v6455, %v6456
  %v6458 = vrot.slane %v6422, 6
  %v6459 = vrot.slane %v6423, 6
  %v6460 = vsel %vm178, %v6458, %v6459
  %v6461 = vrot.slane %v6424, 6
  %v6462 = vrot.slane %v6425, 6
  %v6463 = vsel %vm178, %v6461, %v6462
  %v6464 = vrot.slane %v6426, 6
  %v6465 = vrot.slane %v6427, 6
  %v6466 = vsel %vm178, %v6464, %v6465
  %v6467 = vrot.slane %v6428, 6
  %v6468 = vrot.slane %v6429, 6
  %v6469 = vsel %vm178, %v6467, %v6468
  %v6494 = vsel %vm178, 0.0, %v6446
  %v6495 = vsel %vm178, 0.0, %v6449
  %v6496 = vsel %vm178, 0.0, %v6452
  %v6497 = vsel %vm178, 0.0, %v6455
  %v6498 = vsel %vm178, 0.0, %v6458
  %v6499 = vsel %vm178, 0.0, %v6461
  %v6500 = vsel %vm178, 0.0, %v6464
  %v6501 = vsel %vm178, 0.0, %v6467
  %v6502 = vsel %vm178, %v6447, 0.0
  %v6503 = vsel %vm178, %v6450, 0.0
  %v6504 = vsel %vm178, %v6453, 0.0
  %v6505 = vsel %vm178, %v6456, 0.0
  %v6506 = vsel %vm178, %v6459, 0.0
  %v6507 = vsel %vm178, %v6462, 0.0
  %v6508 = vsel %vm178, %v6465, 0.0
  %v6509 = vsel %vm178, %v6468, 0.0
  %v6526 = vrot.slane %v6494, 1
  %v6527 = vrot.slane %v6448, 1
  %v6528 = vsel %vm259, %v6526, %v6527
  %v6529 = vrot.slane %v6502, 1
  %v6530 = vsel %vm259, %v6527, %v6529
  %v6531 = vrot.slane %v6495, 1
  %v6532 = vrot.slane %v6451, 1
  %v6533 = vsel %vm259, %v6531, %v6532
  %v6534 = vrot.slane %v6503, 1
  %v6535 = vsel %vm259, %v6532, %v6534
  %v6536 = vrot.slane %v6496, 1
  %v6537 = vrot.slane %v6454, 1
  %v6538 = vsel %vm259, %v6536, %v6537
  %v6539 = vrot.slane %v6504, 1
  %v6540 = vsel %vm259, %v6537, %v6539
  %v6541 = vrot.slane %v6497, 1
  %v6542 = vrot.slane %v6457, 1
  %v6543 = vsel %vm259, %v6541, %v6542
  %v6544 = vrot.slane %v6505, 1
  %v6545 = vsel %vm259, %v6542, %v6544
  %v6546 = vrot.slane %v6498, 1
  %v6547 = vrot.slane %v6460, 1
  %v6548 = vsel %vm259, %v6546, %v6547
  %v6549 = vrot.slane %v6506, 1
  %v6550 = vsel %vm259, %v6547, %v6549
  %v6551 = vrot.slane %v6499, 1
  %v6552 = vrot.slane %v6463, 1
  %v6553 = vsel %vm259, %v6551, %v6552
  %v6554 = vrot.slane %v6507, 1
  %v6555 = vsel %vm259, %v6552, %v6554
  %v6556 = vrot.slane %v6500, 1
  %v6557 = vrot.slane %v6466, 1
  %v6558 = vsel %vm259, %v6556, %v6557
  %v6559 = vrot.slane %v6508, 1
  %v6560 = vsel %vm259, %v6557, %v6559
  %v6561 = vrot.slane %v6501, 1
  %v6562 = vrot.slane %v6469, 1
  %v6563 = vsel %vm259, %v6561, %v6562
  %v6564 = vrot.slane %v6509, 1
  %v6565 = vsel %vm259, %v6562, %v6564
  %6566 = vrot.lane.b32.xlu0 %v6528, 16
  %v6567 = vpop.permute.xlu0 %6566
  %6568 = vrot.lane.b32.xlu0 %v6530, 16
  %v6569 = vpop.permute.xlu0 %6568
  %6570 = vrot.lane.b32.xlu0 %v6533, 16
  %v6571 = vpop.permute.xlu0 %6570
  %6572 = vrot.lane.b32.xlu0 %v6535, 16
  %v6573 = vpop.permute.xlu0 %6572
  %6574 = vrot.lane.b32.xlu0 %v6538, 16
  %v6575 = vpop.permute.xlu0 %6574
  %6576 = vrot.lane.b32.xlu0 %v6540, 16
  %v6577 = vpop.permute.xlu0 %6576
  %6578 = vrot.lane.b32.xlu0 %v6543, 16
  %v6579 = vpop.permute.xlu0 %6578
  %6580 = vrot.lane.b32.xlu0 %v6545, 16
  %v6581 = vpop.permute.xlu0 %6580
  %6582 = vrot.lane.b32.xlu0 %v6548, 16
  %v6583 = vpop.permute.xlu0 %6582
  %6584 = vrot.lane.b32.xlu0 %v6550, 16
  %v6585 = vpop.permute.xlu0 %6584
  %6586 = vrot.lane.b32.xlu0 %v6553, 16
  %v6587 = vpop.permute.xlu0 %6586
  %6588 = vrot.lane.b32.xlu0 %v6555, 16
  %v6589 = vpop.permute.xlu0 %6588
  %6590 = vrot.lane.b32.xlu0 %v6558, 16
  %v6591 = vpop.permute.xlu0 %6590
  %6592 = vrot.lane.b32.xlu0 %v6560, 16
  %v6593 = vpop.permute.xlu0 %6592
  %6594 = vrot.lane.b32.xlu0 %v6563, 16
  %v6595 = vpop.permute.xlu0 %6594
  %6596 = vrot.lane.b32.xlu0 %v6565, 16
  %v6597 = vpop.permute.xlu0 %6596
  %v6614 = vrot.slane %v6494, 2
  %v6615 = vrot.slane %v6448, 2
  %v6616 = vsel %vm348, %v6614, %v6615
  %v6617 = vrot.slane %v6502, 2
  %v6618 = vsel %vm348, %v6615, %v6617
  %v6619 = vrot.slane %v6495, 2
  %v6620 = vrot.slane %v6451, 2
  %v6621 = vsel %vm348, %v6619, %v6620
  %v6622 = vrot.slane %v6503, 2
  %v6623 = vsel %vm348, %v6620, %v6622
  %v6624 = vrot.slane %v6496, 2
  %v6625 = vrot.slane %v6454, 2
  %v6626 = vsel %vm348, %v6624, %v6625
  %v6627 = vrot.slane %v6504, 2
  %v6628 = vsel %vm348, %v6625, %v6627
  %v6629 = vrot.slane %v6497, 2
  %v6630 = vrot.slane %v6457, 2
  %v6631 = vsel %vm348, %v6629, %v6630
  %v6632 = vrot.slane %v6505, 2
  %v6633 = vsel %vm348, %v6630, %v6632
  %v6634 = vrot.slane %v6498, 2
  %v6635 = vrot.slane %v6460, 2
  %v6636 = vsel %vm348, %v6634, %v6635
  %v6637 = vrot.slane %v6506, 2
  %v6638 = vsel %vm348, %v6635, %v6637
  %v6639 = vrot.slane %v6499, 2
  %v6640 = vrot.slane %v6463, 2
  %v6641 = vsel %vm348, %v6639, %v6640
  %v6642 = vrot.slane %v6507, 2
  %v6643 = vsel %vm348, %v6640, %v6642
  %v6644 = vrot.slane %v6500, 2
  %v6645 = vrot.slane %v6466, 2
  %v6646 = vsel %vm348, %v6644, %v6645
  %v6647 = vrot.slane %v6508, 2
  %v6648 = vsel %vm348, %v6645, %v6647
  %v6649 = vrot.slane %v6501, 2
  %v6650 = vrot.slane %v6469, 2
  %v6651 = vsel %vm348, %v6649, %v6650
  %v6652 = vrot.slane %v6509, 2
  %v6653 = vsel %vm348, %v6650, %v6652
  %6654 = vrot.lane.b32.xlu0 %v6616, 32
  %v6655 = vpop.permute.xlu0 %6654
  %6656 = vrot.lane.b32.xlu0 %v6618, 32
  %v6657 = vpop.permute.xlu0 %6656
  %6658 = vrot.lane.b32.xlu0 %v6621, 32
  %v6659 = vpop.permute.xlu0 %6658
  %6660 = vrot.lane.b32.xlu0 %v6623, 32
  %v6661 = vpop.permute.xlu0 %6660
  %6662 = vrot.lane.b32.xlu0 %v6626, 32
  %v6663 = vpop.permute.xlu0 %6662
  %6664 = vrot.lane.b32.xlu0 %v6628, 32
  %v6665 = vpop.permute.xlu0 %6664
  %6666 = vrot.lane.b32.xlu0 %v6631, 32
  %v6667 = vpop.permute.xlu0 %6666
  %6668 = vrot.lane.b32.xlu0 %v6633, 32
  %v6669 = vpop.permute.xlu0 %6668
  %6670 = vrot.lane.b32.xlu0 %v6636, 32
  %v6671 = vpop.permute.xlu0 %6670
  %6672 = vrot.lane.b32.xlu0 %v6638, 32
  %v6673 = vpop.permute.xlu0 %6672
  %6674 = vrot.lane.b32.xlu0 %v6641, 32
  %v6675 = vpop.permute.xlu0 %6674
  %6676 = vrot.lane.b32.xlu0 %v6643, 32
  %v6677 = vpop.permute.xlu0 %6676
  %6678 = vrot.lane.b32.xlu0 %v6646, 32
  %v6679 = vpop.permute.xlu0 %6678
  %6680 = vrot.lane.b32.xlu0 %v6648, 32
  %v6681 = vpop.permute.xlu0 %6680
  %6682 = vrot.lane.b32.xlu0 %v6651, 32
  %v6683 = vpop.permute.xlu0 %6682
  %6684 = vrot.lane.b32.xlu0 %v6653, 32
  %v6685 = vpop.permute.xlu0 %6684
  %v6702 = vrot.slane %v6494, 3
  %v6703 = vrot.slane %v6448, 3
  %v6704 = vsel %vm437, %v6702, %v6703
  %v6705 = vrot.slane %v6502, 3
  %v6706 = vsel %vm437, %v6703, %v6705
  %v6707 = vrot.slane %v6495, 3
  %v6708 = vrot.slane %v6451, 3
  %v6709 = vsel %vm437, %v6707, %v6708
  %v6710 = vrot.slane %v6503, 3
  %v6711 = vsel %vm437, %v6708, %v6710
  %v6712 = vrot.slane %v6496, 3
  %v6713 = vrot.slane %v6454, 3
  %v6714 = vsel %vm437, %v6712, %v6713
  %v6715 = vrot.slane %v6504, 3
  %v6716 = vsel %vm437, %v6713, %v6715
  %v6717 = vrot.slane %v6497, 3
  %v6718 = vrot.slane %v6457, 3
  %v6719 = vsel %vm437, %v6717, %v6718
  %v6720 = vrot.slane %v6505, 3
  %v6721 = vsel %vm437, %v6718, %v6720
  %v6722 = vrot.slane %v6498, 3
  %v6723 = vrot.slane %v6460, 3
  %v6724 = vsel %vm437, %v6722, %v6723
  %v6725 = vrot.slane %v6506, 3
  %v6726 = vsel %vm437, %v6723, %v6725
  %v6727 = vrot.slane %v6499, 3
  %v6728 = vrot.slane %v6463, 3
  %v6729 = vsel %vm437, %v6727, %v6728
  %v6730 = vrot.slane %v6507, 3
  %v6731 = vsel %vm437, %v6728, %v6730
  %v6732 = vrot.slane %v6500, 3
  %v6733 = vrot.slane %v6466, 3
  %v6734 = vsel %vm437, %v6732, %v6733
  %v6735 = vrot.slane %v6508, 3
  %v6736 = vsel %vm437, %v6733, %v6735
  %v6737 = vrot.slane %v6501, 3
  %v6738 = vrot.slane %v6469, 3
  %v6739 = vsel %vm437, %v6737, %v6738
  %v6740 = vrot.slane %v6509, 3
  %v6741 = vsel %vm437, %v6738, %v6740
  %6742 = vrot.lane.b32.xlu0 %v6704, 48
  %v6743 = vpop.permute.xlu0 %6742
  %6744 = vrot.lane.b32.xlu0 %v6706, 48
  %v6745 = vpop.permute.xlu0 %6744
  %6746 = vrot.lane.b32.xlu0 %v6709, 48
  %v6747 = vpop.permute.xlu0 %6746
  %6748 = vrot.lane.b32.xlu0 %v6711, 48
  %v6749 = vpop.permute.xlu0 %6748
  %6750 = vrot.lane.b32.xlu0 %v6714, 48
  %v6751 = vpop.permute.xlu0 %6750
  %6752 = vrot.lane.b32.xlu0 %v6716, 48
  %v6753 = vpop.permute.xlu0 %6752
  %6754 = vrot.lane.b32.xlu0 %v6719, 48
  %v6755 = vpop.permute.xlu0 %6754
  %6756 = vrot.lane.b32.xlu0 %v6721, 48
  %v6757 = vpop.permute.xlu0 %6756
  %6758 = vrot.lane.b32.xlu0 %v6724, 48
  %v6759 = vpop.permute.xlu0 %6758
  %6760 = vrot.lane.b32.xlu0 %v6726, 48
  %v6761 = vpop.permute.xlu0 %6760
  %6762 = vrot.lane.b32.xlu0 %v6729, 48
  %v6763 = vpop.permute.xlu0 %6762
  %6764 = vrot.lane.b32.xlu0 %v6731, 48
  %v6765 = vpop.permute.xlu0 %6764
  %6766 = vrot.lane.b32.xlu0 %v6734, 48
  %v6767 = vpop.permute.xlu0 %6766
  %6768 = vrot.lane.b32.xlu0 %v6736, 48
  %v6769 = vpop.permute.xlu0 %6768
  %6770 = vrot.lane.b32.xlu0 %v6739, 48
  %v6771 = vpop.permute.xlu0 %6770
  %6772 = vrot.lane.b32.xlu0 %v6741, 48
  %v6773 = vpop.permute.xlu0 %6772
  %v6790 = vrot.slane %v6494, 4
  %v6791 = vrot.slane %v6448, 4
  %v6792 = vsel %vm526, %v6790, %v6791
  %v6793 = vrot.slane %v6502, 4
  %v6794 = vsel %vm526, %v6791, %v6793
  %v6795 = vrot.slane %v6495, 4
  %v6796 = vrot.slane %v6451, 4
  %v6797 = vsel %vm526, %v6795, %v6796
  %v6798 = vrot.slane %v6503, 4
  %v6799 = vsel %vm526, %v6796, %v6798
  %v6800 = vrot.slane %v6496, 4
  %v6801 = vrot.slane %v6454, 4
  %v6802 = vsel %vm526, %v6800, %v6801
  %v6803 = vrot.slane %v6504, 4
  %v6804 = vsel %vm526, %v6801, %v6803
  %v6805 = vrot.slane %v6497, 4
  %v6806 = vrot.slane %v6457, 4
  %v6807 = vsel %vm526, %v6805, %v6806
  %v6808 = vrot.slane %v6505, 4
  %v6809 = vsel %vm526, %v6806, %v6808
  %v6810 = vrot.slane %v6498, 4
  %v6811 = vrot.slane %v6460, 4
  %v6812 = vsel %vm526, %v6810, %v6811
  %v6813 = vrot.slane %v6506, 4
  %v6814 = vsel %vm526, %v6811, %v6813
  %v6815 = vrot.slane %v6499, 4
  %v6816 = vrot.slane %v6463, 4
  %v6817 = vsel %vm526, %v6815, %v6816
  %v6818 = vrot.slane %v6507, 4
  %v6819 = vsel %vm526, %v6816, %v6818
  %v6820 = vrot.slane %v6500, 4
  %v6821 = vrot.slane %v6466, 4
  %v6822 = vsel %vm526, %v6820, %v6821
  %v6823 = vrot.slane %v6508, 4
  %v6824 = vsel %vm526, %v6821, %v6823
  %v6825 = vrot.slane %v6501, 4
  %v6826 = vrot.slane %v6469, 4
  %v6827 = vsel %vm526, %v6825, %v6826
  %v6828 = vrot.slane %v6509, 4
  %v6829 = vsel %vm526, %v6826, %v6828
  %6830 = vrot.lane.b32.xlu0 %v6792, 64
  %v6831 = vpop.permute.xlu0 %6830
  %6832 = vrot.lane.b32.xlu0 %v6794, 64
  %v6833 = vpop.permute.xlu0 %6832
  %6834 = vrot.lane.b32.xlu0 %v6797, 64
  %v6835 = vpop.permute.xlu0 %6834
  %6836 = vrot.lane.b32.xlu0 %v6799, 64
  %v6837 = vpop.permute.xlu0 %6836
  %6838 = vrot.lane.b32.xlu0 %v6802, 64
  %v6839 = vpop.permute.xlu0 %6838
  %6840 = vrot.lane.b32.xlu0 %v6804, 64
  %v6841 = vpop.permute.xlu0 %6840
  %6842 = vrot.lane.b32.xlu0 %v6807, 64
  %v6843 = vpop.permute.xlu0 %6842
  %6844 = vrot.lane.b32.xlu0 %v6809, 64
  %v6845 = vpop.permute.xlu0 %6844
  %6846 = vrot.lane.b32.xlu0 %v6812, 64
  %v6847 = vpop.permute.xlu0 %6846
  %6848 = vrot.lane.b32.xlu0 %v6814, 64
  %v6849 = vpop.permute.xlu0 %6848
  %6850 = vrot.lane.b32.xlu0 %v6817, 64
  %v6851 = vpop.permute.xlu0 %6850
  %6852 = vrot.lane.b32.xlu0 %v6819, 64
  %v6853 = vpop.permute.xlu0 %6852
  %6854 = vrot.lane.b32.xlu0 %v6822, 64
  %v6855 = vpop.permute.xlu0 %6854
  %6856 = vrot.lane.b32.xlu0 %v6824, 64
  %v6857 = vpop.permute.xlu0 %6856
  %6858 = vrot.lane.b32.xlu0 %v6827, 64
  %v6859 = vpop.permute.xlu0 %6858
  %6860 = vrot.lane.b32.xlu0 %v6829, 64
  %v6861 = vpop.permute.xlu0 %6860
  %v6878 = vsel %vm666, %v6494, %v6567
  %v6879 = vsel %vm666, %v6448, %v6569
  %v6880 = vsel %vm666, %v6495, %v6571
  %v6881 = vsel %vm666, %v6451, %v6573
  %v6882 = vsel %vm666, %v6496, %v6575
  %v6883 = vsel %vm666, %v6454, %v6577
  %v6884 = vsel %vm666, %v6497, %v6579
  %v6885 = vsel %vm666, %v6457, %v6581
  %v6886 = vsel %vm666, %v6498, %v6583
  %v6887 = vsel %vm666, %v6460, %v6585
  %v6888 = vsel %vm666, %v6499, %v6587
  %v6889 = vsel %vm666, %v6463, %v6589
  %v6890 = vsel %vm666, %v6500, %v6591
  %v6891 = vsel %vm666, %v6466, %v6593
  %v6892 = vsel %vm666, %v6501, %v6595
  %v6893 = vsel %vm666, %v6469, %v6597
  %v6894 = vsel %vm1559, %v6878, %v6655
  %v6895 = vsel %vm1559, %v6879, %v6657
  %v6896 = vsel %vm1559, %v6880, %v6659
  %v6897 = vsel %vm1559, %v6881, %v6661
  %v6898 = vsel %vm1559, %v6882, %v6663
  %v6899 = vsel %vm1559, %v6883, %v6665
  %v6900 = vsel %vm1559, %v6884, %v6667
  %v6901 = vsel %vm1559, %v6885, %v6669
  %v6902 = vsel %vm1559, %v6886, %v6671
  %v6903 = vsel %vm1559, %v6887, %v6673
  %v6904 = vsel %vm1559, %v6888, %v6675
  %v6905 = vsel %vm1559, %v6889, %v6677
  %v6906 = vsel %vm1559, %v6890, %v6679
  %v6907 = vsel %vm1559, %v6891, %v6681
  %v6908 = vsel %vm1559, %v6892, %v6683
  %v6909 = vsel %vm1559, %v6893, %v6685
  %v6910 = vsel %vm4334, %v6894, %v6743
  %v6911 = vsel %vm4334, %v6895, %v6745
  %v6912 = vsel %vm4334, %v6896, %v6747
  %v6913 = vsel %vm4334, %v6897, %v6749
  %v6914 = vsel %vm4334, %v6898, %v6751
  %v6915 = vsel %vm4334, %v6899, %v6753
  %v6916 = vsel %vm4334, %v6900, %v6755
  %v6917 = vsel %vm4334, %v6901, %v6757
  %v6918 = vsel %vm4334, %v6902, %v6759
  %v6919 = vsel %vm4334, %v6903, %v6761
  %v6920 = vsel %vm4334, %v6904, %v6763
  %v6921 = vsel %vm4334, %v6905, %v6765
  %v6922 = vsel %vm4334, %v6906, %v6767
  %v6923 = vsel %vm4334, %v6907, %v6769
  %v6924 = vsel %vm4334, %v6908, %v6771
  %v6925 = vsel %vm4334, %v6909, %v6773
  %v6926 = vsel %vm4343, %v6910, %v6831
  %v6927 = vsel %vm4343, %v6911, %v6833
  %v6928 = vsel %vm4343, %v6912, %v6835
  %v6929 = vsel %vm4343, %v6913, %v6837
  %v6930 = vsel %vm4343, %v6914, %v6839
  %v6931 = vsel %vm4343, %v6915, %v6841
  %v6932 = vsel %vm4343, %v6916, %v6843
  %v6933 = vsel %vm4343, %v6917, %v6845
  %v6934 = vsel %vm4343, %v6918, %v6847
  %v6935 = vsel %vm4343, %v6919, %v6849
  %v6936 = vsel %vm4343, %v6920, %v6851
  %v6937 = vsel %vm4343, %v6921, %v6853
  %v6938 = vsel %vm4343, %v6922, %v6855
  %v6939 = vsel %vm4343, %v6923, %v6857
  %v6940 = vsel %vm4343, %v6924, %v6859
  %v6941 = vsel %vm4343, %v6925, %v6861
  %v6942 = vld [vmem:[%s47] sm:$0xff]
  %v6943 = vld [vmem:[%s47 + $0x8] sm:$0xff]
  %v6944 = vld [vmem:[%s47 + $0x10] sm:$0xff]
  %v6945 = vld [vmem:[%s47 + $0x18] sm:$0xff]
  %v6946 = vld [vmem:[%s47 + $0x20] sm:$0xff]
  %v6947 = vld [vmem:[%s47 + $0x28] sm:$0xff]
  %v6948 = vld [vmem:[%s47 + $0x30] sm:$0xff]
  %v6949 = vld [vmem:[%s47 + $0x38] sm:$0xff]
  %v6950 = vld [vmem:[%s47 + $0x40] sm:$0xff]
  %v6951 = vld [vmem:[%s47 + $0x48] sm:$0xff]
  %v6952 = vld [vmem:[%s49] sm:$0x1]
  %v6954 = vlaneseq
  %v6955 = vshrl.u32 %v6954, 7
  %v6956 = vsub.s32 0, %v6955
  %v6957 = vrot.slane %v6952, %v6956
  %v6960 = vsel %vm4382, %v6926, 0
  %v6963 = vsel %vm4382, %v6927, 0
  %v6966 = vsel %vm4382, %v6928, 0
  %v6969 = vsel %vm4382, %v6929, 0
  %v6972 = vsel %vm4382, %v6930, 0
  %v6975 = vsel %vm4382, %v6931, 0
  %v6978 = vsel %vm4382, %v6932, 0
  %v6981 = vsel %vm4382, %v6933, 0
  %v6984 = vsel %vm4382, %v6934, 0
  %v6987 = vsel %vm4382, %v6935, 0
  %v6990 = vsel %vm4382, %v6936, 0
  %v6993 = vsel %vm4382, %v6937, 0
  %v6996 = vsel %vm4382, %v6938, 0
  %v6999 = vsel %vm4382, %v6939, 0
  %v7002 = vsel %vm4382, %v6940, 0
  %v7005 = vsel %vm4382, %v6941, 0
  %7007 = vmatprep.subr.mxu0 0.0
  %7008 = vmatpush1.msra.mxu0 %v6942
  %7009 = vmatprep.subr.mxu0 0.0
  %7010 = vmatpush1.msra.mxu0 %v6943
  %7011 = vmatprep.subr.mxu0 0.0
  %7012 = vmatpush1.msra.mxu0 %v6944
  %7013 = vmatprep.subr.mxu0 0.0
  %7014 = vmatpush1.msra.mxu0 %v6945
  %7015 = vmatprep.subr.mxu0 0.0
  %7016 = vmatpush1.msra.mxu0 %v6946
  %7017 = vmatprep.subr.mxu0 0.0
  %7018 = vmatpush1.msra.mxu0 %v6947
  %7019 = vmatprep.subr.mxu0 0.0
  %7020 = vmatpush1.msra.mxu0 %v6948
  %7021 = vmatprep.subr.mxu0 0.0
  %7022 = vmatpush1.msra.mxu0 %v6949
  %7023 = vmatprep.subr.mxu0 0.0
  %7024 = vmatpush1.msra.mxu0 %v6950
  %7025 = vmatprep.subr.mxu0 0.0
  %7026 = vmatpush1.msra.mxu0 %v6951
  %7027 = vmatprep.subr.mxu0 0.0
  %7028 = vmatpush1.msra.mxu0 0.0
  %7029 = vmatprep.subr.mxu0 0.0
  %7030 = vmatpush1.msra.mxu0 0.0
  %7031 = vmatprep.subr.mxu0 0.0
  %7032 = vmatpush1.msra.mxu0 0.0
  %7033 = vmatprep.subr.mxu0 0.0
  %7034 = vmatpush1.msra.mxu0 0.0
  %7035 = vmatprep.subr.mxu0 0.0
  %7036 = vmatpush1.msra.mxu0 0.0
  %7037 = vmatprep.subr.mxu0 0.0
  %7038 = vmatpush1.msra.mxu0 0.0
  %7039 = vmatprep.subr.mxu0 0.0
  %7040 = vmatpush1.msra.mxu0 0.0
  %7041 = vmatprep.subr.mxu0 0.0
  %7042 = vmatpush1.msra.mxu0 0.0
  %7043 = vmatprep.subr.mxu0 0.0
  %7044 = vmatpush1.msra.mxu0 0.0
  %7045 = vmatprep.subr.mxu0 0.0
  %7046 = vmatpush1.msra.mxu0 0.0
  %7047 = vmatprep.subr.mxu0 0.0
  %7048 = vmatpush1.msra.mxu0 0.0
  %7049 = vmatprep.subr.mxu0 0.0
  %7050 = vmatpush1.msra.mxu0 0.0
  %7051 = vmatprep.subr.mxu0 0.0
  %7052 = vmatpush1.msra.mxu0 0.0
  %7053 = vmatprep.subr.mxu0 0.0
  %7054 = vmatpush1.msra.mxu0 0.0
  %7055 = vmatprep.subr.mxu0 0.0
  %7056 = vmatpush1.msra.mxu0 0.0
  %7057 = vmatprep.subr.mxu0 0.0
  %7058 = vmatpush1.msra.mxu0 0.0
  %7059 = vmatprep.subr.mxu0 0.0
  %7060 = vmatpush1.msra.mxu0 0.0
  %7061 = vmatprep.subr.mxu0 0.0
  %7062 = vmatpush1.msra.mxu0 0.0
  %7063 = vmatprep.subr.mxu0 0.0
  %7064 = vmatpush1.msra.mxu0 0.0
  %7065 = vmatprep.subr.mxu0 0.0
  %7066 = vmatpush1.msra.mxu0 0.0
  %7067 = vmatprep.subr.mxu0 0.0
  %7068 = vmatpush1.msra.mxu0 0.0
  %7069 = vmatprep.subr.mxu0 0.0
  %7070 = vmatpush1.msra.mxu0 0.0
  %7071 = vmatprep.mubr.f32.mxu0 0.0
  %7072 = vmatmul.mubr.f32.gmra.mrb[0].mxu0 %v6960
  %v7073 = vpop.f32.mrb[0].mxu0
  %v7074 = vadd.f32 %v6957, %v7073
  %v7075 = vpop.f32.mrb[0].mxu0
  %7076 = vmatprep.mubr.f32.mxu0 0.0
  %7077 = vmatmul.mubr.f32.gmra.mrb[0].mxu0 %v6963
  %v7078 = vpop.f32.mrb[0].mxu0
  %v7079 = vadd.f32 %v6957, %v7078
  %v7080 = vpop.f32.mrb[0].mxu0
  %7081 = vmatprep.mubr.f32.mxu0 0.0
  %7082 = vmatmul.mubr.f32.gmra.mrb[0].mxu0 %v6966
  %v7083 = vpop.f32.mrb[0].mxu0
  %v7084 = vadd.f32 %v6957, %v7083
  %v7085 = vpop.f32.mrb[0].mxu0
  %7086 = vmatprep.mubr.f32.mxu0 0.0
  %7087 = vmatmul.mubr.f32.gmra.mrb[0].mxu0 %v6969
  %v7088 = vpop.f32.mrb[0].mxu0
  %v7089 = vadd.f32 %v6957, %v7088
  %v7090 = vpop.f32.mrb[0].mxu0
  %7091 = vmatprep.mubr.f32.mxu0 0.0
  %7092 = vmatmul.mubr.f32.gmra.mrb[0].mxu0 %v6972
  %v7093 = vpop.f32.mrb[0].mxu0
  %v7094 = vadd.f32 %v6957, %v7093
  %v7095 = vpop.f32.mrb[0].mxu0
  %7096 = vmatprep.mubr.f32.mxu0 0.0
  %7097 = vmatmul.mubr.f32.gmra.mrb[0].mxu0 %v6975
  %v7098 = vpop.f32.mrb[0].mxu0
  %v7099 = vadd.f32 %v6957, %v7098
  %v7100 = vpop.f32.mrb[0].mxu0
  %7101 = vmatprep.mubr.f32.mxu0 0.0
  %7102 = vmatmul.mubr.f32.gmra.mrb[0].mxu0 %v6978
  %v7103 = vpop.f32.mrb[0].mxu0
  %v7104 = vadd.f32 %v6957, %v7103
  %v7105 = vpop.f32.mrb[0].mxu0
  %7106 = vmatprep.mubr.f32.mxu0 0.0
  %7107 = vmatmul.mubr.f32.gmra.mrb[0].mxu0 %v6981
  %v7108 = vpop.f32.mrb[0].mxu0
  %v7109 = vadd.f32 %v6957, %v7108
  %v7110 = vpop.f32.mrb[0].mxu0
  %7111 = vmatprep.mubr.f32.mxu0 0.0
  %7112 = vmatmul.mubr.f32.gmra.mrb[0].mxu0 %v6984
  %v7113 = vpop.f32.mrb[0].mxu0
  %v7114 = vadd.f32 %v6957, %v7113
  %v7115 = vpop.f32.mrb[0].mxu0
  %7116 = vmatprep.mubr.f32.mxu0 0.0
  %7117 = vmatmul.mubr.f32.gmra.mrb[0].mxu0 %v6987
  %v7118 = vpop.f32.mrb[0].mxu0
  %v7119 = vadd.f32 %v6957, %v7118
  %v7120 = vpop.f32.mrb[0].mxu0
  %7121 = vmatprep.mubr.f32.mxu0 0.0
  %7122 = vmatmul.mubr.f32.gmra.mrb[0].mxu0 %v6990
  %v7123 = vpop.f32.mrb[0].mxu0
  %v7124 = vadd.f32 %v6957, %v7123
  %v7125 = vpop.f32.mrb[0].mxu0
  %7126 = vmatprep.mubr.f32.mxu0 0.0
  %7127 = vmatmul.mubr.f32.gmra.mrb[0].mxu0 %v6993
  %v7128 = vpop.f32.mrb[0].mxu0
  %v7129 = vadd.f32 %v6957, %v7128
  %v7130 = vpop.f32.mrb[0].mxu0
  %7131 = vmatprep.mubr.f32.mxu0 0.0
  %7132 = vmatmul.mubr.f32.gmra.mrb[0].mxu0 %v6996
  %v7133 = vpop.f32.mrb[0].mxu0
  %v7134 = vadd.f32 %v6957, %v7133
  %v7135 = vpop.f32.mrb[0].mxu0
  %7136 = vmatprep.mubr.f32.mxu0 0.0
  %7137 = vmatmul.mubr.f32.gmra.mrb[0].mxu0 %v6999
  %v7138 = vpop.f32.mrb[0].mxu0
  %v7139 = vadd.f32 %v6957, %v7138
  %v7140 = vpop.f32.mrb[0].mxu0
  %7141 = vmatprep.mubr.f32.mxu0 0.0
  %7142 = vmatmul.mubr.f32.gmra.mrb[0].mxu0 %v7002
  %v7143 = vpop.f32.mrb[0].mxu0
  %v7144 = vadd.f32 %v6957, %v7143
  %v7145 = vpop.f32.mrb[0].mxu0
  %7146 = vmatprep.mubr.f32.mxu0 0.0
  %7147 = vmatmul.mubr.f32.gmra.mrb[0].mxu0 %v7005
  %v7148 = vpop.f32.mrb[0].mxu0
  %v7149 = vadd.f32 %v6957, %v7148
  %v7150 = vpop.f32.mrb[0].mxu0
  %7151 = vdwg.mxu0
  %v7152 = vsel %vm632, %v7074, 0.0
  %v7153 = vsel %vm632, %v7079, 0.0
  %v7154 = vadd.f32 %v7152, %v7153
  %v7155 = vsel %vm632, %v7084, 0.0
  %v7156 = vadd.f32 %v7154, %v7155
  %v7157 = vsel %vm632, %v7089, 0.0
  %v7158 = vadd.f32 %v7156, %v7157
  %v7159 = vsel %vm632, %v7094, 0.0
  %v7160 = vadd.f32 %v7158, %v7159
  %v7161 = vsel %vm632, %v7099, 0.0
  %v7162 = vadd.f32 %v7160, %v7161
  %v7163 = vsel %vm632, %v7104, 0.0
  %v7164 = vadd.f32 %v7162, %v7163
  %v7165 = vsel %vm632, %v7109, 0.0
  %v7166 = vadd.f32 %v7164, %v7165
  %v7167 = vsel %vm632, %v7114, 0.0
  %v7168 = vadd.f32 %v7166, %v7167
  %v7169 = vsel %vm632, %v7119, 0.0
  %v7170 = vadd.f32 %v7168, %v7169
  %v7171 = vsel %vm632, %v7124, 0.0
  %v7172 = vadd.f32 %v7170, %v7171
  %v7173 = vsel %vm632, %v7129, 0.0
  %v7174 = vadd.f32 %v7172, %v7173
  %v7175 = vsel %vm632, %v7134, 0.0
  %v7176 = vadd.f32 %v7174, %v7175
  %v7177 = vsel %vm632, %v7139, 0.0
  %v7178 = vadd.f32 %v7176, %v7177
  %v7179 = vsel %vm632, %v7144, 0.0
  %v7180 = vadd.f32 %v7178, %v7179
  %v7181 = vsel %vm632, %v7149, 0.0
  %v7182 = vadd.f32 %v7180, %v7181
  %v7183 = vrot.slane %v7182, 4
  %v7184 = vadd.f32 %v7182, %v7183
  %v7185 = vrot.slane %v7184, 2
  %v7186 = vadd.f32 %v7184, %v7185
  %v7187 = vrot.slane %v7186, 1
  %v7188 = vadd.f32 %v7186, %v7187
  %v7189 = vmul.f32 %v7188, 0.0078125
  %v7190 = vsub.f32 %v7074, %v7189
  %v7191 = vsub.f32 %v7079, %v7189
  %v7192 = vsub.f32 %v7084, %v7189
  %v7193 = vsub.f32 %v7089, %v7189
  %v7194 = vsub.f32 %v7094, %v7189
  %v7195 = vsub.f32 %v7099, %v7189
  %v7196 = vsub.f32 %v7104, %v7189
  %v7197 = vsub.f32 %v7109, %v7189
  %v7198 = vsub.f32 %v7114, %v7189
  %v7199 = vsub.f32 %v7119, %v7189
  %v7200 = vsub.f32 %v7124, %v7189
  %v7201 = vsub.f32 %v7129, %v7189
  %v7202 = vsub.f32 %v7134, %v7189
  %v7203 = vsub.f32 %v7139, %v7189
  %v7204 = vsub.f32 %v7144, %v7189
  %v7205 = vsub.f32 %v7149, %v7189
  %v7206 = vmul.f32 %v7190, %v7190
  %v7207 = vmul.f32 %v7191, %v7191
  %v7208 = vmul.f32 %v7192, %v7192
  %v7209 = vmul.f32 %v7193, %v7193
  %v7210 = vmul.f32 %v7194, %v7194
  %v7211 = vmul.f32 %v7195, %v7195
  %v7212 = vmul.f32 %v7196, %v7196
  %v7213 = vmul.f32 %v7197, %v7197
  %v7214 = vmul.f32 %v7198, %v7198
  %v7215 = vmul.f32 %v7199, %v7199
  %v7216 = vmul.f32 %v7200, %v7200
  %v7217 = vmul.f32 %v7201, %v7201
  %v7218 = vmul.f32 %v7202, %v7202
  %v7219 = vmul.f32 %v7203, %v7203
  %v7220 = vmul.f32 %v7204, %v7204
  %v7221 = vmul.f32 %v7205, %v7205
  %v7222 = vsel %vm632, %v7206, 0.0
  %v7223 = vsel %vm632, %v7207, 0.0
  %v7224 = vadd.f32 %v7222, %v7223
  %v7225 = vsel %vm632, %v7208, 0.0
  %v7226 = vadd.f32 %v7224, %v7225
  %v7227 = vsel %vm632, %v7209, 0.0
  %v7228 = vadd.f32 %v7226, %v7227
  %v7229 = vsel %vm632, %v7210, 0.0
  %v7230 = vadd.f32 %v7228, %v7229
  %v7231 = vsel %vm632, %v7211, 0.0
  %v7232 = vadd.f32 %v7230, %v7231
  %v7233 = vsel %vm632, %v7212, 0.0
  %v7234 = vadd.f32 %v7232, %v7233
  %v7235 = vsel %vm632, %v7213, 0.0
  %v7236 = vadd.f32 %v7234, %v7235
  %v7237 = vsel %vm632, %v7214, 0.0
  %v7238 = vadd.f32 %v7236, %v7237
  %v7239 = vsel %vm632, %v7215, 0.0
  %v7240 = vadd.f32 %v7238, %v7239
  %v7241 = vsel %vm632, %v7216, 0.0
  %v7242 = vadd.f32 %v7240, %v7241
  %v7243 = vsel %vm632, %v7217, 0.0
  %v7244 = vadd.f32 %v7242, %v7243
  %v7245 = vsel %vm632, %v7218, 0.0
  %v7246 = vadd.f32 %v7244, %v7245
  %v7247 = vsel %vm632, %v7219, 0.0
  %v7248 = vadd.f32 %v7246, %v7247
  %v7249 = vsel %vm632, %v7220, 0.0
  %v7250 = vadd.f32 %v7248, %v7249
  %v7251 = vsel %vm632, %v7221, 0.0
  %v7252 = vadd.f32 %v7250, %v7251
  %v7253 = vrot.slane %v7252, 4
  %v7254 = vadd.f32 %v7252, %v7253
  %v7255 = vrot.slane %v7254, 2
  %v7256 = vadd.f32 %v7254, %v7255
  %v7257 = vrot.slane %v7256, 1
  %v7258 = vadd.f32 %v7256, %v7257
  %v7259 = vmul.f32 %v7258, 0.0078125
  %v7260 = vadd.f32 %v7259, 1e-05
  %v7261 = vrsqrt.pop %v7260
  %v7262 = vmul.f32 %v7190, %v7261
  %v7263 = vmul.f32 %v7191, %v7261
  %v7264 = vmul.f32 %v7192, %v7261
  %v7265 = vmul.f32 %v7193, %v7261
  %v7266 = vmul.f32 %v7194, %v7261
  %v7267 = vmul.f32 %v7195, %v7261
  %v7268 = vmul.f32 %v7196, %v7261
  %v7269 = vmul.f32 %v7197, %v7261
  %v7270 = vmul.f32 %v7198, %v7261
  %v7271 = vmul.f32 %v7199, %v7261
  %v7272 = vmul.f32 %v7200, %v7261
  %v7273 = vmul.f32 %v7201, %v7261
  %v7274 = vmul.f32 %v7202, %v7261
  %v7275 = vmul.f32 %v7203, %v7261
  %v7276 = vmul.f32 %v7204, %v7261
  %v7277 = vmul.f32 %v7205, %v7261
  %v7278 = vld [vmem:[%s51] sm:$0x1]
  %v7280 = vlaneseq
  %v7281 = vshrl.u32 %v7280, 7
  %v7282 = vsub.s32 0, %v7281
  %v7283 = vrot.slane %v7278, %v7282
  %v7285 = vmul.f32 %v7262, %v7283
  %v7286 = vmul.f32 %v7263, %v7283
  %v7287 = vmul.f32 %v7264, %v7283
  %v7288 = vmul.f32 %v7265, %v7283
  %v7289 = vmul.f32 %v7266, %v7283
  %v7290 = vmul.f32 %v7267, %v7283
  %v7291 = vmul.f32 %v7268, %v7283
  %v7292 = vmul.f32 %v7269, %v7283
  %v7293 = vmul.f32 %v7270, %v7283
  %v7294 = vmul.f32 %v7271, %v7283
  %v7295 = vmul.f32 %v7272, %v7283
  %v7296 = vmul.f32 %v7273, %v7283
  %v7297 = vmul.f32 %v7274, %v7283
  %v7298 = vmul.f32 %v7275, %v7283
  %v7299 = vmul.f32 %v7276, %v7283
  %v7300 = vmul.f32 %v7277, %v7283
  %v7301 = vld [vmem:[%s53] sm:$0x1]
  %v7303 = vlaneseq
  %v7304 = vshrl.u32 %v7303, 7
  %v7305 = vsub.s32 0, %v7304
  %v7306 = vrot.slane %v7301, %v7305
  %v7308 = vadd.f32 %v7285, %v7306
  %v7309 = vadd.f32 %v7286, %v7306
  %v7310 = vadd.f32 %v7287, %v7306
  %v7311 = vadd.f32 %v7288, %v7306
  %v7312 = vadd.f32 %v7289, %v7306
  %v7313 = vadd.f32 %v7290, %v7306
  %v7314 = vadd.f32 %v7291, %v7306
  %v7315 = vadd.f32 %v7292, %v7306
  %v7316 = vadd.f32 %v7293, %v7306
  %v7317 = vadd.f32 %v7294, %v7306
  %v7318 = vadd.f32 %v7295, %v7306
  %v7319 = vadd.f32 %v7296, %v7306
  %v7320 = vadd.f32 %v7297, %v7306
  %v7321 = vadd.f32 %v7298, %v7306
  %v7322 = vadd.f32 %v7299, %v7306
  %v7323 = vadd.f32 %v7300, %v7306
  %v7324 = vadd.f32 %v7308, %v1046
  %v7325 = vadd.f32 %v7309, %v1047
  %v7326 = vadd.f32 %v7310, %v1048
  %v7327 = vadd.f32 %v7311, %v1049
  %v7328 = vadd.f32 %v7312, %v1050
  %v7329 = vadd.f32 %v7313, %v1051
  %v7330 = vadd.f32 %v7314, %v1052
  %v7331 = vadd.f32 %v7315, %v1053
  %v7332 = vadd.f32 %v7316, %v1054
  %v7333 = vadd.f32 %v7317, %v1055
  %v7334 = vadd.f32 %v7318, %v1056
  %v7335 = vadd.f32 %v7319, %v1057
  %v7336 = vadd.f32 %v7320, %v1058
  %v7337 = vadd.f32 %v7321, %v1059
  %v7338 = vadd.f32 %v7322, %v1060
  %v7339 = vadd.f32 %v7323, %v1061
  %7340 = vst.msk [vmem:[%s71] sm:$0xff] %vm632, %v7324
  %7341 = vst.msk [vmem:[%s71 + $0x8] sm:$0xff] %vm632, %v7325
  %7342 = vst.msk [vmem:[%s71 + $0x10] sm:$0xff] %vm632, %v7326
  %7343 = vst.msk [vmem:[%s71 + $0x18] sm:$0xff] %vm632, %v7327
  %7344 = vst.msk [vmem:[%s71 + $0x20] sm:$0xff] %vm632, %v7328
  %7345 = vst.msk [vmem:[%s71 + $0x28] sm:$0xff] %vm632, %v7329
  %7346 = vst.msk [vmem:[%s71 + $0x30] sm:$0xff] %vm632, %v7330
  %7347 = vst.msk [vmem:[%s71 + $0x38] sm:$0xff] %vm632, %v7331
  %7348 = vst.msk [vmem:[%s71 + $0x40] sm:$0xff] %vm632, %v7332
  %7349 = vst.msk [vmem:[%s71 + $0x48] sm:$0xff] %vm632, %v7333
  %7350 = vst.msk [vmem:[%s71 + $0x50] sm:$0xff] %vm632, %v7334
  %7351 = vst.msk [vmem:[%s71 + $0x58] sm:$0xff] %vm632, %v7335
  %7352 = vst.msk [vmem:[%s71 + $0x60] sm:$0xff] %vm632, %v7336
  %7353 = vst.msk [vmem:[%s71 + $0x68] sm:$0xff] %vm632, %v7337
  %7354 = vst.msk [vmem:[%s71 + $0x70] sm:$0xff] %vm632, %v7338
  %7355 = vst.msk [vmem:[%s71 + $0x78] sm:$0xff] %vm632, %v7339
  // Predicated region
  $region142: #{creat_u_encoder_forward.1} parent=0 // pred_check
    _
  $region143: #{creat_u_encoder_forward.1} parent=0 // pred_check_branch
    %7357 = sbr.rel (0) target = $region145
  $region144: #{creat_u_encoder_forward.1} parent=0 // pred_region
    _
  $region145: #{creat_u_encoder_forward.1} parent=0 // pred_fallthru
    _
  // Predicated region
  $region146: #{creat_u_encoder_forward.1} parent=0 // pred_check
    _
  $region147: #{creat_u_encoder_forward.1} parent=0 // pred_check_branch
    %7359 = sbr.rel (0) target = $region149
  $region148: #{creat_u_encoder_forward.1} parent=0 // pred_region
    _
  $region149: #{creat_u_encoder_forward.1} parent=0 // pred_fallthru
    _

</llo_original>
